<compile_context>
chip_gen: v7x
topology: tpu7x:2x2x1
jax: 0.10.0
libtpu: 0.0.40
codegen_flags: <defaults>
</compile_context>

<pallas_src>
import functools

import jax
import jax.numpy as jnp
from jax import lax
from jax.experimental import pallas as pl
from jax.experimental.pallas import tpu as pltpu


def _round_up(x, m):
    return (x + m - 1) // m * m


def _pick_cout_tile(c):
    # Keep tiles multiples of 128 (MXU lane width on all generations).  Tiling
    # only kicks in for production-sized channel counts (e.g. C=512 on v7x);
    # tiny / unaligned C (like the toy C=8 below) stays untiled.
    if c > 256 and c % 256 == 0:
        return 256
    return c


# ----------------------------------------------------------------------------
# Fused kernel: 3x3 conv (taps = shifted slices of the flat padded image)
#               + masked InstanceNorm + AdaIN (+ReLU) (+residual).
# One grid step == (one batch element, one Cout tile).
# ----------------------------------------------------------------------------
def _adain_conv_kernel(x_ref, w_ref, st_ref, *rest,
                       apply_relu, add_residual, h, w, wp, eps):
    """
    x_ref  : (PF, Cin)     bf16  reflect-padded activation, flattened row-major
             with row stride wp (W+2 rounded up to a multiple of 8) + slack.
    w_ref  : (9, Cin, Ct)  bf16  conv weights per tap (t = 3*dh + dw).
    st_ref : (2, Ct)       f32   row0 = gamma, row1 = beta (AdaIN style).
    rest   : (res_ref, out_ref) if add_residual else (out_ref,), both (L, Ct).
    """
    if add_residual:
        res_ref, out_ref = rest
    else:
        (out_ref,) = rest

    L = h * wp                 # flat length of the padded-width output layout
    span = (h + 2) * wp        # window length covering all dh shifts

    # Only 3 dw-shifted windows are materialized (the unaligned part of the tap
    # offsets); the dh offsets below are static multiples of wp (wp % 8 == 0),
    # i.e. cheap sublane-aligned sub-slices of those windows.
    shifted = [x_ref[dw:dw + span, :] for dw in range(3)]

    # Tap-by-tap MXU accumulation: bf16 operands, f32 accumulation.  No
    # in-kernel patch / weight concatenation.
    acc = None
    for dh in range(3):
        base = dh * wp                                   # static, multiple of 8
        for dw in range(3):
            tap = shifted[dw][base:base + L, :]                       # (L, Cin)
            part = jnp.dot(tap, w_ref[3 * dh + dw],
                           preferred_element_type=jnp.float32)        # (L, Ct)
            acc = part if acc is None else acc + part

    # Validity mask built in-kernel: columns j >= W of each wp-wide row are junk
    # from the padded-width layout and must not enter the InstanceNorm stats.
    col = lax.broadcasted_iota(jnp.int32, (h, wp, 1), 1).reshape(L, 1)
    valid = (col < w).astype(jnp.float32)                             # (L, 1)

    inv_n = 1.0 / float(h * w)
    mean = jnp.sum(acc * valid, axis=0, keepdims=True) * inv_n        # (1, Ct)
    cen = acc - mean
    var = jnp.sum((cen * cen) * valid, axis=0, keepdims=True) * inv_n

    # AdaIN with the IN scale folded in: y = cen * (gamma * rsqrt(var+eps)) + beta.
    gamma = st_ref[0:1, :]
    beta = st_ref[1:2, :]
    y = cen * (gamma * lax.rsqrt(var + eps)) + beta

    if apply_relu:
        y = jnp.maximum(y, 0.0)
    if add_residual:
        y = y + res_ref[...]

    out_ref[...] = y.astype(out_ref.dtype)


# ----------------------------------------------------------------------------
# Wrapper glue (pure XLA, bf16 passes only).
# ----------------------------------------------------------------------------
def _pad_flatten_bf16(x_nhwc, wp, pf):
    """reflect-pad -> pad row stride to wp -> flatten row-major -> slack, bf16."""
    n, h, w, c = x_nhwc.shape
    xp = jnp.pad(x_nhwc, ((0, 0), (1, 1), (1, 1), (0, 0)), mode="reflect")
    xp = jnp.pad(xp, ((0, 0), (0, 0), (0, wp - (w + 2)), (0, 0)))
    xpf = xp.reshape(n, (h + 2) * wp, c)
    xpf = jnp.pad(xpf, ((0, 0), (0, pf - (h + 2) * wp), (0, 0)))
    return xpf.astype(jnp.bfloat16)


def _vmem_limit_bytes(pf, L, span, c, ct, add_residual, out_bytes):
    est = 0
    est += 2 * pf * c * 2                      # activation, double-buffered bf16
    est += 2 * 9 * c * ct * 2                  # conv weights (bf16)
    est += 2 * 2 * max(ct, 128) * 4            # style (lane-padded)
    est += 2 * L * ct * out_bytes              # output, double-buffered
    if add_residual:
        est += 2 * L * ct * 4                  # residual (f32)
    est += 3 * span * c * 2                    # dw-shifted windows (bf16)
    est += 4 * L * ct * 4                      # acc / cen / y temporaries (f32)
    est = int(est * 1.5)                       # headroom for compiler scratch
    # >=32 MiB is available on all generations; 64 MiB is v7x's physical per-TC.
    return min(max(est, 32 * 1024 * 1024), 64 * 1024 * 1024)


def _conv_in_style_block(xpf_bf16, w_taps_bf16, style, res_flat, *,
                         h, w, wp, apply_relu, out_dtype):
    """One (pad -> conv3x3 -> InstanceNorm -> AdaIN [-> ReLU] [+residual]) block."""
    n, pf, c = xpf_bf16.shape
    cout = w_taps_bf16.shape[-1]
    L = h * wp
    span = (h + 2) * wp
    ct = _pick_cout_tile(cout)
    n_ct = cout // ct

    add_residual = res_flat is not None
    inputs = [xpf_bf16, w_taps_bf16, style]
    in_specs = [
        pl.BlockSpec((pl.Squeezed(), pf, c), lambda i, j: (i, 0, 0)),   # activation
        pl.BlockSpec((9, c, ct), lambda i, j: (0, 0, j)),               # conv weights
        pl.BlockSpec((pl.Squeezed(), 2, ct), lambda i, j: (i, 0, j)),   # gamma / beta
    ]
    if add_residual:
        inputs.append(res_flat)
        in_specs.append(pl.BlockSpec((pl.Squeezed(), L, ct), lambda i, j: (i, 0, j)))

    kernel = functools.partial(_adain_conv_kernel,
                               apply_relu=apply_relu, add_residual=add_residual,
                               h=h, w=w, wp=wp, eps=1e-8)

    out_bytes = jnp.dtype(out_dtype).itemsize
    out_flat = pl.pallas_call(
        kernel,
        out_shape=jax.ShapeDtypeStruct((n, L, cout), out_dtype),
        grid=(n, n_ct),
        in_specs=in_specs,
        out_specs=pl.BlockSpec((pl.Squeezed(), L, ct), lambda i, j: (i, 0, j)),
        compiler_params=pltpu.CompilerParams(
            dimension_semantics=("parallel", "parallel"),
            vmem_limit_bytes=_vmem_limit_bytes(pf, L, span, c, ct,
                                               add_residual, out_bytes)),
    )(*inputs)
    return out_flat     # (n, L, cout), junk columns j in [W, wp)


# ----------------------------------------------------------------------------
# Full ResnetBlock_Adain forward.
# ----------------------------------------------------------------------------
def resnet_block_adain(x_nchw, latent, params):
    """x_nchw: (N, C, H, W) float32;  latent: (N, latent_size) float32."""
    x = jnp.transpose(x_nchw, (0, 2, 3, 1)).astype(jnp.float32)      # NCHW -> NHWC
    n, h, w, c = x.shape
    wp = _round_up(w + 2, 8)          # sublane-aligned flat row stride
    pf = (h + 2) * wp + 8             # flat padded-input length + slack
    L = h * wp

    # Style MLPs (tiny linears -> plain XLA).  Packed (N, 2, C): row0=gamma, row1=beta.
    style1 = (latent @ params["lin1_w"].T + params["lin1_b"]).reshape(n, 2, c)
    style2 = (latent @ params["lin2_w"].T + params["lin2_b"]).reshape(n, 2, c)

    # Conv weights as 9 taps (t = 3*kh + kw), bf16 for the MXU.  The conv biases
    # are NOT needed: a per-channel constant added before InstanceNorm is exactly
    # cancelled by the mean subtraction.
    w1 = params["w1_hwio"].reshape(9, c, c).astype(jnp.bfloat16)
    w2 = params["w2_hwio"].reshape(9, c, c).astype(jnp.bfloat16)

    # Block 1: conv + IN + style + ReLU.  Output stays bf16 (block 2 feeds the
    # MXU in bf16 anyway) to halve the inter-block HBM traffic.
    xpf1 = _pad_flatten_bf16(x, wp, pf)
    y1 = _conv_in_style_block(xpf1, w1, style1, None, h=h, w=w, wp=wp,
                              apply_relu=True, out_dtype=jnp.bfloat16)

    # Block 2 input: drop the junk columns of block-1's output and re-pad (bf16).
    y1_nhwc = y1.reshape(n, h, wp, c)[:, :, :w, :]
    xpf2 = _pad_flatten_bf16(y1_nhwc, wp, pf)

    # Residual = original x in the padded-width flat layout (kept f32 so the skip
    # path does not lose precision; it is added to the f32 accumulator in-kernel).
    res_flat = jnp.pad(x, ((0, 0), (0, 0), (0, wp - w), (0, 0))).reshape(n, L, c)

    # Block 2: conv + IN + style + residual add.
    out_flat = _conv_in_style_block(xpf2, w2, style2, res_flat, h=h, w=w, wp=wp,
                                    apply_relu=False, out_dtype=jnp.float32)

    out = out_flat.reshape(n, h, wp, c)[:, :, :w, :]
    return jnp.transpose(out, (0, 3, 1, 2))                          # NHWC -> NCHW


# ----------------------------------------------------------------------------
# Pure-JAX reference (matches PyTorch semantics) for validation.
# ----------------------------------------------------------------------------
def _ref_forward(x_nchw, latent, params):
    c = x_nchw.shape[1]

    def conv_in(x, w_oihw, b):
        xpad = jnp.pad(x, ((0, 0), (0, 0), (1, 1), (1, 1)), mode="reflect")
        y = lax.conv_general_dilated(
            xpad, w_oihw, (1, 1), "VALID",
            dimension_numbers=("NCHW", "OIHW", "NCHW"))
        y = y + b[None, :, None, None]
        mean = jnp.mean(y, axis=(2, 3), keepdims=True)
        cen = y - mean
        var = jnp.mean(cen * cen, axis=(2, 3), keepdims=True)
        return cen * lax.rsqrt(var + 1e-8)

    def style(x, lw, lb):
        s = latent @ lw.T + lb
        g = s[:, :c][:, :, None, None]
        bt = s[:, c:][:, :, None, None]
        return g * x + bt

    y = conv_in(x_nchw, params["w1_oihw"], params["b1"])
    y = style(y, params["lin1_w"], params["lin1_b"])
    y = jnp.maximum(y, 0.0)
    y = conv_in(y, params["w2_oihw"], params["b2"])
    y = style(y, params["lin2_w"], params["lin2_b"])
    return x_nchw + y


# ----------------------------------------------------------------------------
def _init_params(key, dim, latent_size):
    ks = jax.random.split(key, 8)
    scale_conv = 1.0 / (3.0 * jnp.sqrt(float(dim)))
    scale_lin = 1.0 / jnp.sqrt(float(latent_size))
    w1_oihw = scale_conv * jax.random.normal(ks[0], (dim, dim, 3, 3), jnp.float32)
    w2_oihw = scale_conv * jax.random.normal(ks[1], (dim, dim, 3, 3), jnp.float32)
    return {
        "w1_oihw": w1_oihw,
        "w2_oihw": w2_oihw,
        # HWIO layout for the kernel (kh, kw, cin, cout).
        "w1_hwio": jnp.transpose(w1_oihw, (2, 3, 1, 0)),
        "w2_hwio": jnp.transpose(w2_oihw, (2, 3, 1, 0)),
        "b1": 0.1 * jax.random.normal(ks[2], (dim,), jnp.float32),
        "b2": 0.1 * jax.random.normal(ks[3], (dim,), jnp.float32),
        "lin1_w": scale_lin * jax.random.normal(ks[4], (2 * dim, latent_size), jnp.float32),
        "lin1_b": 0.1 * jax.random.normal(ks[5], (2 * dim,), jnp.float32),
        "lin2_w": scale_lin * jax.random.normal(ks[6], (2 * dim, latent_size), jnp.float32),
        "lin2_b": 0.1 * jax.random.normal(ks[7], (2 * dim,), jnp.float32),
    }


if __name__ == "__main__":
    N, DIM, H, W = 2, 8, 16, 16
    LATENT = 16

    key = jax.random.PRNGKey(0)
    kx, kl, kp = jax.random.split(key, 3)
    x = jax.random.normal(kx, (N, DIM, H, W), jnp.float32)   # NCHW like PyTorch
    dlatents = jax.random.normal(kl, (N, LATENT), jnp.float32)
    params = _init_params(kp, DIM, LATENT)

    out = jax.jit(resnet_block_adain)(x, dlatents, params)
    out = jax.block_until_ready(out)

    ref = _ref_forward(x, dlatents, params)
    ref = jax.block_until_ready(ref)

    assert out.shape == (N, DIM, H, W)
    # Tolerance reflects bf16 MXU operands / bf16 inter-block handoff
    # (accumulation, IN stats and the residual add stay f32).
    max_err = float(jnp.max(jnp.abs(out - ref)))
    assert jnp.allclose(out, ref, atol=5e-2, rtol=5e-2), max_err

    print("KERNEL_OK")
</pallas_src>

<mosaic_0001>
module attributes {stable_mosaic.version = 11 : i64} {
  func.func @_adain_conv_kernel(%arg0: i32, %arg1: i32, %arg2: memref<1x440x8xbf16, #tpu.memory_space<vmem>>, %arg3: memref<9x8x8xbf16, #tpu.memory_space<vmem>>, %arg4: memref<1x2x8xf32, #tpu.memory_space<vmem>>, %arg5: memref<1x384x8xbf16, #tpu.memory_space<vmem>>) attributes {dimension_semantics = [#tpu.dimension_semantics<parallel>, #tpu.dimension_semantics<parallel>], iteration_bounds = array<i64: 2, 1>, scalar_prefetch = 0 : i64, scratch_operands = 0 : i64, tpu.core_type = #tpu.core_type<tc>, window_params = [{transform_indices = @transform_0, window_bounds = array<i64: 1, 440, 8>}, {transform_indices = @transform_1, window_bounds = array<i64: 9, 8, 8>}, {transform_indices = @transform_2, window_bounds = array<i64: 1, 2, 8>}, {transform_indices = @transform_3, window_bounds = array<i64: 1, 384, 8>}]} {
    %c0 = arith.constant 0 : index
    %c0_0 = arith.constant 0 : index
    %c0_1 = arith.constant 0 : index
    %0 = vector.load %arg2[%c0, %c0_0, %c0_1] : memref<1x440x8xbf16, #tpu.memory_space<vmem>>, vector<1x432x8xbf16>
    %1 = vector.shape_cast %0 : vector<1x432x8xbf16> to vector<432x8xbf16>
    %c0_2 = arith.constant 0 : index
    %c1 = arith.constant 1 : index
    %c0_3 = arith.constant 0 : index
    %2 = vector.load %arg2[%c0_2, %c1, %c0_3] : memref<1x440x8xbf16, #tpu.memory_space<vmem>>, vector<1x432x8xbf16>
    %3 = vector.shape_cast %2 : vector<1x432x8xbf16> to vector<432x8xbf16>
    %c0_4 = arith.constant 0 : index
    %c2 = arith.constant 2 : index
    %c0_5 = arith.constant 0 : index
    %4 = vector.load %arg2[%c0_4, %c2, %c0_5] : memref<1x440x8xbf16, #tpu.memory_space<vmem>>, vector<1x432x8xbf16>
    %5 = vector.shape_cast %4 : vector<1x432x8xbf16> to vector<432x8xbf16>
    %6 = vector.extract_strided_slice %1 {offsets = [0, 0], sizes = [384, 8], strides = [1, 1]} : vector<432x8xbf16> to vector<384x8xbf16>
    %c0_6 = arith.constant 0 : index
    %c0_7 = arith.constant 0 : index
    %c0_8 = arith.constant 0 : index
    %7 = vector.load %arg3[%c0_6, %c0_7, %c0_8] : memref<9x8x8xbf16, #tpu.memory_space<vmem>>, vector<1x8x8xbf16>
    %8 = vector.shape_cast %7 : vector<1x8x8xbf16> to vector<8x8xbf16>
    %cst = arith.constant dense<0.000000e+00> : vector<384x8xf32>
    %9 = tpu.matmul %6, %8, %cst {dimension_numbers = #tpu.dot_dimension_numbers<[1], [0], [0], [1], [0, 0, 1, 1], [], []>} : vector<384x8xbf16>, vector<8x8xbf16>, vector<384x8xf32> -> vector<384x8xf32>
    %10 = vector.extract_strided_slice %3 {offsets = [0, 0], sizes = [384, 8], strides = [1, 1]} : vector<432x8xbf16> to vector<384x8xbf16>
    %c1_9 = arith.constant 1 : index
    %c0_10 = arith.constant 0 : index
    %c0_11 = arith.constant 0 : index
    %11 = vector.load %arg3[%c1_9, %c0_10, %c0_11] : memref<9x8x8xbf16, #tpu.memory_space<vmem>>, vector<1x8x8xbf16>
    %12 = vector.shape_cast %11 : vector<1x8x8xbf16> to vector<8x8xbf16>
    %cst_12 = arith.constant dense<0.000000e+00> : vector<384x8xf32>
    %13 = tpu.matmul %10, %12, %cst_12 {dimension_numbers = #tpu.dot_dimension_numbers<[1], [0], [0], [1], [0, 0, 1, 1], [], []>} : vector<384x8xbf16>, vector<8x8xbf16>, vector<384x8xf32> -> vector<384x8xf32>
    %14 = arith.addf %9, %13 : vector<384x8xf32>
    %15 = vector.extract_strided_slice %5 {offsets = [0, 0], sizes = [384, 8], strides = [1, 1]} : vector<432x8xbf16> to vector<384x8xbf16>
    %c2_13 = arith.constant 2 : index
    %c0_14 = arith.constant 0 : index
    %c0_15 = arith.constant 0 : index
    %16 = vector.load %arg3[%c2_13, %c0_14, %c0_15] : memref<9x8x8xbf16, #tpu.memory_space<vmem>>, vector<1x8x8xbf16>
    %17 = vector.shape_cast %16 : vector<1x8x8xbf16> to vector<8x8xbf16>
    %cst_16 = arith.constant dense<0.000000e+00> : vector<384x8xf32>
    %18 = tpu.matmul %15, %17, %cst_16 {dimension_numbers = #tpu.dot_dimension_numbers<[1], [0], [0], [1], [0, 0, 1, 1], [], []>} : vector<384x8xbf16>, vector<8x8xbf16>, vector<384x8xf32> -> vector<384x8xf32>
    %19 = arith.addf %14, %18 : vector<384x8xf32>
    %20 = vector.extract_strided_slice %1 {offsets = [24, 0], sizes = [384, 8], strides = [1, 1]} : vector<432x8xbf16> to vector<384x8xbf16>
    %c3 = arith.constant 3 : index
    %c0_17 = arith.constant 0 : index
    %c0_18 = arith.constant 0 : index
    %21 = vector.load %arg3[%c3, %c0_17, %c0_18] : memref<9x8x8xbf16, #tpu.memory_space<vmem>>, vector<1x8x8xbf16>
    %22 = vector.shape_cast %21 : vector<1x8x8xbf16> to vector<8x8xbf16>
    %cst_19 = arith.constant dense<0.000000e+00> : vector<384x8xf32>
    %23 = tpu.matmul %20, %22, %cst_19 {dimension_numbers = #tpu.dot_dimension_numbers<[1], [0], [0], [1], [0, 0, 1, 1], [], []>} : vector<384x8xbf16>, vector<8x8xbf16>, vector<384x8xf32> -> vector<384x8xf32>
    %24 = arith.addf %19, %23 : vector<384x8xf32>
    %25 = vector.extract_strided_slice %3 {offsets = [24, 0], sizes = [384, 8], strides = [1, 1]} : vector<432x8xbf16> to vector<384x8xbf16>
    %c4 = arith.constant 4 : index
    %c0_20 = arith.constant 0 : index
    %c0_21 = arith.constant 0 : index
    %26 = vector.load %arg3[%c4, %c0_20, %c0_21] : memref<9x8x8xbf16, #tpu.memory_space<vmem>>, vector<1x8x8xbf16>
    %27 = vector.shape_cast %26 : vector<1x8x8xbf16> to vector<8x8xbf16>
    %cst_22 = arith.constant dense<0.000000e+00> : vector<384x8xf32>
    %28 = tpu.matmul %25, %27, %cst_22 {dimension_numbers = #tpu.dot_dimension_numbers<[1], [0], [0], [1], [0, 0, 1, 1], [], []>} : vector<384x8xbf16>, vector<8x8xbf16>, vector<384x8xf32> -> vector<384x8xf32>
    %29 = arith.addf %24, %28 : vector<384x8xf32>
    %30 = vector.extract_strided_slice %5 {offsets = [24, 0], sizes = [384, 8], strides = [1, 1]} : vector<432x8xbf16> to vector<384x8xbf16>
    %c5 = arith.constant 5 : index
    %c0_23 = arith.constant 0 : index
    %c0_24 = arith.constant 0 : index
    %31 = vector.load %arg3[%c5, %c0_23, %c0_24] : memref<9x8x8xbf16, #tpu.memory_space<vmem>>, vector<1x8x8xbf16>
    %32 = vector.shape_cast %31 : vector<1x8x8xbf16> to vector<8x8xbf16>
    %cst_25 = arith.constant dense<0.000000e+00> : vector<384x8xf32>
    %33 = tpu.matmul %30, %32, %cst_25 {dimension_numbers = #tpu.dot_dimension_numbers<[1], [0], [0], [1], [0, 0, 1, 1], [], []>} : vector<384x8xbf16>, vector<8x8xbf16>, vector<384x8xf32> -> vector<384x8xf32>
    %34 = arith.addf %29, %33 : vector<384x8xf32>
    %35 = vector.extract_strided_slice %1 {offsets = [48, 0], sizes = [384, 8], strides = [1, 1]} : vector<432x8xbf16> to vector<384x8xbf16>
    %c6 = arith.constant 6 : index
    %c0_26 = arith.constant 0 : index
    %c0_27 = arith.constant 0 : index
    %36 = vector.load %arg3[%c6, %c0_26, %c0_27] : memref<9x8x8xbf16, #tpu.memory_space<vmem>>, vector<1x8x8xbf16>
    %37 = vector.shape_cast %36 : vector<1x8x8xbf16> to vector<8x8xbf16>
    %cst_28 = arith.constant dense<0.000000e+00> : vector<384x8xf32>
    %38 = tpu.matmul %35, %37, %cst_28 {dimension_numbers = #tpu.dot_dimension_numbers<[1], [0], [0], [1], [0, 0, 1, 1], [], []>} : vector<384x8xbf16>, vector<8x8xbf16>, vector<384x8xf32> -> vector<384x8xf32>
    %39 = arith.addf %34, %38 : vector<384x8xf32>
    %40 = vector.extract_strided_slice %3 {offsets = [48, 0], sizes = [384, 8], strides = [1, 1]} : vector<432x8xbf16> to vector<384x8xbf16>
    %c7 = arith.constant 7 : index
    %c0_29 = arith.constant 0 : index
    %c0_30 = arith.constant 0 : index
    %41 = vector.load %arg3[%c7, %c0_29, %c0_30] : memref<9x8x8xbf16, #tpu.memory_space<vmem>>, vector<1x8x8xbf16>
    %42 = vector.shape_cast %41 : vector<1x8x8xbf16> to vector<8x8xbf16>
    %cst_31 = arith.constant dense<0.000000e+00> : vector<384x8xf32>
    %43 = tpu.matmul %40, %42, %cst_31 {dimension_numbers = #tpu.dot_dimension_numbers<[1], [0], [0], [1], [0, 0, 1, 1], [], []>} : vector<384x8xbf16>, vector<8x8xbf16>, vector<384x8xf32> -> vector<384x8xf32>
    %44 = arith.addf %39, %43 : vector<384x8xf32>
    %45 = vector.extract_strided_slice %5 {offsets = [48, 0], sizes = [384, 8], strides = [1, 1]} : vector<432x8xbf16> to vector<384x8xbf16>
    %c8 = arith.constant 8 : index
    %c0_32 = arith.constant 0 : index
    %c0_33 = arith.constant 0 : index
    %46 = vector.load %arg3[%c8, %c0_32, %c0_33] : memref<9x8x8xbf16, #tpu.memory_space<vmem>>, vector<1x8x8xbf16>
    %47 = vector.shape_cast %46 : vector<1x8x8xbf16> to vector<8x8xbf16>
    %cst_34 = arith.constant dense<0.000000e+00> : vector<384x8xf32>
    %48 = tpu.matmul %45, %47, %cst_34 {dimension_numbers = #tpu.dot_dimension_numbers<[1], [0], [0], [1], [0, 0, 1, 1], [], []>} : vector<384x8xbf16>, vector<8x8xbf16>, vector<384x8xf32> -> vector<384x8xf32>
    %49 = arith.addf %44, %48 : vector<384x8xf32>
    %50 = tpu.iota {dimensions = array<i32: 1>} : vector<16x24x1xi32>
    %51 = vector.shape_cast %50 : vector<16x24x1xi32> to vector<384x1xi32>
    %c16_i32 = arith.constant 16 : i32
    %52 = vector.broadcast %c16_i32 : i32 to vector<384x1xi32>
    %53 = arith.cmpi slt, %51, %52 : vector<384x1xi32>
    %54 = arith.extui %53 : vector<384x1xi1> to vector<384x1xi32>
    %55 = arith.sitofp %54 : vector<384x1xi32> to vector<384x1xf32>
    %56 = vector.broadcast %55 : vector<384x1xf32> to vector<384x8xf32>
    %57 = arith.mulf %49, %56 : vector<384x8xf32>
    %cst_35 = arith.constant dense<0.000000e+00> : vector<8xf32>
    %58 = vector.multi_reduction <add>, %57, %cst_35 [0] : vector<384x8xf32> to vector<8xf32>
    %59 = vector.shape_cast %58 : vector<8xf32> to vector<1x8xf32>
    %cst_36 = arith.constant 3.906250e-03 : f32
    %60 = vector.broadcast %cst_36 : f32 to vector<1x8xf32>
    %61 = arith.mulf %59, %60 : vector<1x8xf32>
    %62 = vector.broadcast %61 : vector<1x8xf32> to vector<384x8xf32>
    %63 = arith.subf %49, %62 : vector<384x8xf32>
    %64 = arith.mulf %63, %63 : vector<384x8xf32>
    %65 = vector.broadcast %55 : vector<384x1xf32> to vector<384x8xf32>
    %66 = arith.mulf %64, %65 : vector<384x8xf32>
    %cst_37 = arith.constant dense<0.000000e+00> : vector<8xf32>
    %67 = vector.multi_reduction <add>, %66, %cst_37 [0] : vector<384x8xf32> to vector<8xf32>
    %68 = vector.shape_cast %67 : vector<8xf32> to vector<1x8xf32>
    %cst_38 = arith.constant 3.906250e-03 : f32
    %69 = vector.broadcast %cst_38 : f32 to vector<1x8xf32>
    %70 = arith.mulf %68, %69 : vector<1x8xf32>
    %c0_39 = arith.constant 0 : index
    %c0_40 = arith.constant 0 : index
    %c0_41 = arith.constant 0 : index
    %71 = vector.load %arg4[%c0_39, %c0_40, %c0_41] : memref<1x2x8xf32, #tpu.memory_space<vmem>>, vector<1x1x8xf32>
    %72 = vector.shape_cast %71 : vector<1x1x8xf32> to vector<1x8xf32>
    %c0_42 = arith.constant 0 : index
    %c1_43 = arith.constant 1 : index
    %c0_44 = arith.constant 0 : index
    %73 = vector.load %arg4[%c0_42, %c1_43, %c0_44] : memref<1x2x8xf32, #tpu.memory_space<vmem>>, vector<1x1x8xf32>
    %74 = vector.shape_cast %73 : vector<1x1x8xf32> to vector<1x8xf32>
    %cst_45 = arith.constant 9.99999993E-9 : f32
    %75 = vector.broadcast %cst_45 : f32 to vector<1x8xf32>
    %76 = arith.addf %70, %75 : vector<1x8xf32>
    %77 = math.rsqrt %76 : vector<1x8xf32>
    %78 = arith.mulf %72, %77 : vector<1x8xf32>
    %79 = vector.broadcast %78 : vector<1x8xf32> to vector<384x8xf32>
    %80 = arith.mulf %63, %79 : vector<384x8xf32>
    %81 = vector.broadcast %74 : vector<1x8xf32> to vector<384x8xf32>
    %82 = arith.addf %80, %81 : vector<384x8xf32>
    %cst_46 = arith.constant 0.000000e+00 : f32
    %83 = vector.broadcast %cst_46 : f32 to vector<384x8xf32>
    %84 = arith.maximumf %82, %83 : vector<384x8xf32>
    %85 = arith.truncf %84 : vector<384x8xf32> to vector<384x8xbf16>
    %c0_47 = arith.constant 0 : index
    %c0_48 = arith.constant 0 : index
    %c0_49 = arith.constant 0 : index
    %86 = vector.load %arg5[%c0_47, %c0_48, %c0_49] : memref<1x384x8xbf16, #tpu.memory_space<vmem>>, vector<1x384x8xbf16>
    %87 = vector.shape_cast %86 : vector<1x384x8xbf16> to vector<384x8xbf16>
    %88 = vector.shape_cast %85 : vector<384x8xbf16> to vector<1x384x8xbf16>
    tpu.vector_store %arg5[%c0_47, %c0_48, %c0_49], %88 {strides = array<i32>} : memref<1x384x8xbf16, #tpu.memory_space<vmem>>, vector<1x384x8xbf16>,
    return
  }
  func.func @transform_0(%arg0: i32, %arg1: i32) -> (i32, i32, i32) {
    %c0_i32 = arith.constant 0 : i32
    %c0_i32_0 = arith.constant 0 : i32
    %c0_i32_1 = arith.constant 0 : i32
    return %arg0, %c0_i32, %c0_i32_0 : i32, i32, i32
  }
  func.func @transform_1(%arg0: i32, %arg1: i32) -> (i32, i32, i32) {
    %c0_i32 = arith.constant 0 : i32
    %c0_i32_0 = arith.constant 0 : i32
    %c0_i32_1 = arith.constant 0 : i32
    return %c0_i32, %c0_i32_0, %arg1 : i32, i32, i32
  }
  func.func @transform_2(%arg0: i32, %arg1: i32) -> (i32, i32, i32) {
    %c0_i32 = arith.constant 0 : i32
    %c0_i32_0 = arith.constant 0 : i32
    return %arg0, %c0_i32, %arg1 : i32, i32, i32
  }
  func.func @transform_3(%arg0: i32, %arg1: i32) -> (i32, i32, i32) {
    %c0_i32 = arith.constant 0 : i32
    %c0_i32_0 = arith.constant 0 : i32
    return %arg0, %c0_i32, %arg1 : i32, i32, i32
  }
}

module attributes {stable_mosaic.version = 11 : i64} {
  func.func @_adain_conv_kernel(%arg0: i32, %arg1: i32, %arg2: memref<1x440x8xbf16, #tpu.memory_space<vmem>>, %arg3: memref<9x8x8xbf16, #tpu.memory_space<vmem>>, %arg4: memref<1x2x8xf32, #tpu.memory_space<vmem>>, %arg5: memref<1x384x8xf32, #tpu.memory_space<vmem>>, %arg6: memref<1x384x8xf32, #tpu.memory_space<vmem>>) attributes {dimension_semantics = [#tpu.dimension_semantics<parallel>, #tpu.dimension_semantics<parallel>], iteration_bounds = array<i64: 2, 1>, scalar_prefetch = 0 : i64, scratch_operands = 0 : i64, tpu.core_type = #tpu.core_type<tc>, window_params = [{transform_indices = @transform_0, window_bounds = array<i64: 1, 440, 8>}, {transform_indices = @transform_1, window_bounds = array<i64: 9, 8, 8>}, {transform_indices = @transform_2, window_bounds = array<i64: 1, 2, 8>}, {transform_indices = @transform_3, window_bounds = array<i64: 1, 384, 8>}, {transform_indices = @transform_4, window_bounds = array<i64: 1, 384, 8>}]} {
    %c0 = arith.constant 0 : index
    %c0_0 = arith.constant 0 : index
    %c0_1 = arith.constant 0 : index
    %0 = vector.load %arg2[%c0, %c0_0, %c0_1] : memref<1x440x8xbf16, #tpu.memory_space<vmem>>, vector<1x432x8xbf16>
    %1 = vector.shape_cast %0 : vector<1x432x8xbf16> to vector<432x8xbf16>
    %c0_2 = arith.constant 0 : index
    %c1 = arith.constant 1 : index
    %c0_3 = arith.constant 0 : index
    %2 = vector.load %arg2[%c0_2, %c1, %c0_3] : memref<1x440x8xbf16, #tpu.memory_space<vmem>>, vector<1x432x8xbf16>
    %3 = vector.shape_cast %2 : vector<1x432x8xbf16> to vector<432x8xbf16>
    %c0_4 = arith.constant 0 : index
    %c2 = arith.constant 2 : index
    %c0_5 = arith.constant 0 : index
    %4 = vector.load %arg2[%c0_4, %c2, %c0_5] : memref<1x440x8xbf16, #tpu.memory_space<vmem>>, vector<1x432x8xbf16>
    %5 = vector.shape_cast %4 : vector<1x432x8xbf16> to vector<432x8xbf16>
    %6 = vector.extract_strided_slice %1 {offsets = [0, 0], sizes = [384, 8], strides = [1, 1]} : vector<432x8xbf16> to vector<384x8xbf16>
    %c0_6 = arith.constant 0 : index
    %c0_7 = arith.constant 0 : index
    %c0_8 = arith.constant 0 : index
    %7 = vector.load %arg3[%c0_6, %c0_7, %c0_8] : memref<9x8x8xbf16, #tpu.memory_space<vmem>>, vector<1x8x8xbf16>
    %8 = vector.shape_cast %7 : vector<1x8x8xbf16> to vector<8x8xbf16>
    %cst = arith.constant dense<0.000000e+00> : vector<384x8xf32>
    %9 = tpu.matmul %6, %8, %cst {dimension_numbers = #tpu.dot_dimension_numbers<[1], [0], [0], [1], [0, 0, 1, 1], [], []>} : vector<384x8xbf16>, vector<8x8xbf16>, vector<384x8xf32> -> vector<384x8xf32>
    %10 = vector.extract_strided_slice %3 {offsets = [0, 0], sizes = [384, 8], strides = [1, 1]} : vector<432x8xbf16> to vector<384x8xbf16>
    %c1_9 = arith.constant 1 : index
    %c0_10 = arith.constant 0 : index
    %c0_11 = arith.constant 0 : index
    %11 = vector.load %arg3[%c1_9, %c0_10, %c0_11] : memref<9x8x8xbf16, #tpu.memory_space<vmem>>, vector<1x8x8xbf16>
    %12 = vector.shape_cast %11 : vector<1x8x8xbf16> to vector<8x8xbf16>
    %cst_12 = arith.constant dense<0.000000e+00> : vector<384x8xf32>
    %13 = tpu.matmul %10, %12, %cst_12 {dimension_numbers = #tpu.dot_dimension_numbers<[1], [0], [0], [1], [0, 0, 1, 1], [], []>} : vector<384x8xbf16>, vector<8x8xbf16>, vector<384x8xf32> -> vector<384x8xf32>
    %14 = arith.addf %9, %13 : vector<384x8xf32>
    %15 = vector.extract_strided_slice %5 {offsets = [0, 0], sizes = [384, 8], strides = [1, 1]} : vector<432x8xbf16> to vector<384x8xbf16>
    %c2_13 = arith.constant 2 : index
    %c0_14 = arith.constant 0 : index
    %c0_15 = arith.constant 0 : index
    %16 = vector.load %arg3[%c2_13, %c0_14, %c0_15] : memref<9x8x8xbf16, #tpu.memory_space<vmem>>, vector<1x8x8xbf16>
    %17 = vector.shape_cast %16 : vector<1x8x8xbf16> to vector<8x8xbf16>
    %cst_16 = arith.constant dense<0.000000e+00> : vector<384x8xf32>
    %18 = tpu.matmul %15, %17, %cst_16 {dimension_numbers = #tpu.dot_dimension_numbers<[1], [0], [0], [1], [0, 0, 1, 1], [], []>} : vector<384x8xbf16>, vector<8x8xbf16>, vector<384x8xf32> -> vector<384x8xf32>
    %19 = arith.addf %14, %18 : vector<384x8xf32>
    %20 = vector.extract_strided_slice %1 {offsets = [24, 0], sizes = [384, 8], strides = [1, 1]} : vector<432x8xbf16> to vector<384x8xbf16>
    %c3 = arith.constant 3 : index
    %c0_17 = arith.constant 0 : index
    %c0_18 = arith.constant 0 : index
    %21 = vector.load %arg3[%c3, %c0_17, %c0_18] : memref<9x8x8xbf16, #tpu.memory_space<vmem>>, vector<1x8x8xbf16>
    %22 = vector.shape_cast %21 : vector<1x8x8xbf16> to vector<8x8xbf16>
    %cst_19 = arith.constant dense<0.000000e+00> : vector<384x8xf32>
    %23 = tpu.matmul %20, %22, %cst_19 {dimension_numbers = #tpu.dot_dimension_numbers<[1], [0], [0], [1], [0, 0, 1, 1], [], []>} : vector<384x8xbf16>, vector<8x8xbf16>, vector<384x8xf32> -> vector<384x8xf32>
    %24 = arith.addf %19, %23 : vector<384x8xf32>
    %25 = vector.extract_strided_slice %3 {offsets = [24, 0], sizes = [384, 8], strides = [1, 1]} : vector<432x8xbf16> to vector<384x8xbf16>
    %c4 = arith.constant 4 : index
    %c0_20 = arith.constant 0 : index
    %c0_21 = arith.constant 0 : index
    %26 = vector.load %arg3[%c4, %c0_20, %c0_21] : memref<9x8x8xbf16, #tpu.memory_space<vmem>>, vector<1x8x8xbf16>
    %27 = vector.shape_cast %26 : vector<1x8x8xbf16> to vector<8x8xbf16>
    %cst_22 = arith.constant dense<0.000000e+00> : vector<384x8xf32>
    %28 = tpu.matmul %25, %27, %cst_22 {dimension_numbers = #tpu.dot_dimension_numbers<[1], [0], [0], [1], [0, 0, 1, 1], [], []>} : vector<384x8xbf16>, vector<8x8xbf16>, vector<384x8xf32> -> vector<384x8xf32>
    %29 = arith.addf %24, %28 : vector<384x8xf32>
    %30 = vector.extract_strided_slice %5 {offsets = [24, 0], sizes = [384, 8], strides = [1, 1]} : vector<432x8xbf16> to vector<384x8xbf16>
    %c5 = arith.constant 5 : index
    %c0_23 = arith.constant 0 : index
    %c0_24 = arith.constant 0 : index
    %31 = vector.load %arg3[%c5, %c0_23, %c0_24] : memref<9x8x8xbf16, #tpu.memory_space<vmem>>, vector<1x8x8xbf16>
    %32 = vector.shape_cast %31 : vector<1x8x8xbf16> to vector<8x8xbf16>
    %cst_25 = arith.constant dense<0.000000e+00> : vector<384x8xf32>
    %33 = tpu.matmul %30, %32, %cst_25 {dimension_numbers = #tpu.dot_dimension_numbers<[1], [0], [0], [1], [0, 0, 1, 1], [], []>} : vector<384x8xbf16>, vector<8x8xbf16>, vector<384x8xf32> -> vector<384x8xf32>
    %34 = arith.addf %29, %33 : vector<384x8xf32>
    %35 = vector.extract_strided_slice %1 {offsets = [48, 0], sizes = [384, 8], strides = [1, 1]} : vector<432x8xbf16> to vector<384x8xbf16>
    %c6 = arith.constant 6 : index
    %c0_26 = arith.constant 0 : index
    %c0_27 = arith.constant 0 : index
    %36 = vector.load %arg3[%c6, %c0_26, %c0_27] : memref<9x8x8xbf16, #tpu.memory_space<vmem>>, vector<1x8x8xbf16>
    %37 = vector.shape_cast %36 : vector<1x8x8xbf16> to vector<8x8xbf16>
    %cst_28 = arith.constant dense<0.000000e+00> : vector<384x8xf32>
    %38 = tpu.matmul %35, %37, %cst_28 {dimension_numbers = #tpu.dot_dimension_numbers<[1], [0], [0], [1], [0, 0, 1, 1], [], []>} : vector<384x8xbf16>, vector<8x8xbf16>, vector<384x8xf32> -> vector<384x8xf32>
    %39 = arith.addf %34, %38 : vector<384x8xf32>
    %40 = vector.extract_strided_slice %3 {offsets = [48, 0], sizes = [384, 8], strides = [1, 1]} : vector<432x8xbf16> to vector<384x8xbf16>
    %c7 = arith.constant 7 : index
    %c0_29 = arith.constant 0 : index
    %c0_30 = arith.constant 0 : index
    %41 = vector.load %arg3[%c7, %c0_29, %c0_30] : memref<9x8x8xbf16, #tpu.memory_space<vmem>>, vector<1x8x8xbf16>
    %42 = vector.shape_cast %41 : vector<1x8x8xbf16> to vector<8x8xbf16>
    %cst_31 = arith.constant dense<0.000000e+00> : vector<384x8xf32>
    %43 = tpu.matmul %40, %42, %cst_31 {dimension_numbers = #tpu.dot_dimension_numbers<[1], [0], [0], [1], [0, 0, 1, 1], [], []>} : vector<384x8xbf16>, vector<8x8xbf16>, vector<384x8xf32> -> vector<384x8xf32>
    %44 = arith.addf %39, %43 : vector<384x8xf32>
    %45 = vector.extract_strided_slice %5 {offsets = [48, 0], sizes = [384, 8], strides = [1, 1]} : vector<432x8xbf16> to vector<384x8xbf16>
    %c8 = arith.constant 8 : index
    %c0_32 = arith.constant 0 : index
    %c0_33 = arith.constant 0 : index
    %46 = vector.load %arg3[%c8, %c0_32, %c0_33] : memref<9x8x8xbf16, #tpu.memory_space<vmem>>, vector<1x8x8xbf16>
    %47 = vector.shape_cast %46 : vector<1x8x8xbf16> to vector<8x8xbf16>
    %cst_34 = arith.constant dense<0.000000e+00> : vector<384x8xf32>
    %48 = tpu.matmul %45, %47, %cst_34 {dimension_numbers = #tpu.dot_dimension_numbers<[1], [0], [0], [1], [0, 0, 1, 1], [], []>} : vector<384x8xbf16>, vector<8x8xbf16>, vector<384x8xf32> -> vector<384x8xf32>
    %49 = arith.addf %44, %48 : vector<384x8xf32>
    %50 = tpu.iota {dimensions = array<i32: 1>} : vector<16x24x1xi32>
    %51 = vector.shape_cast %50 : vector<16x24x1xi32> to vector<384x1xi32>
    %c16_i32 = arith.constant 16 : i32
    %52 = vector.broadcast %c16_i32 : i32 to vector<384x1xi32>
    %53 = arith.cmpi slt, %51, %52 : vector<384x1xi32>
    %54 = arith.extui %53 : vector<384x1xi1> to vector<384x1xi32>
    %55 = arith.sitofp %54 : vector<384x1xi32> to vector<384x1xf32>
    %56 = vector.broadcast %55 : vector<384x1xf32> to vector<384x8xf32>
    %57 = arith.mulf %49, %56 : vector<384x8xf32>
    %cst_35 = arith.constant dense<0.000000e+00> : vector<8xf32>
    %58 = vector.multi_reduction <add>, %57, %cst_35 [0] : vector<384x8xf32> to vector<8xf32>
    %59 = vector.shape_cast %58 : vector<8xf32> to vector<1x8xf32>
    %cst_36 = arith.constant 3.906250e-03 : f32
    %60 = vector.broadcast %cst_36 : f32 to vector<1x8xf32>
    %61 = arith.mulf %59, %60 : vector<1x8xf32>
    %62 = vector.broadcast %61 : vector<1x8xf32> to vector<384x8xf32>
    %63 = arith.subf %49, %62 : vector<384x8xf32>
    %64 = arith.mulf %63, %63 : vector<384x8xf32>
    %65 = vector.broadcast %55 : vector<384x1xf32> to vector<384x8xf32>
    %66 = arith.mulf %64, %65 : vector<384x8xf32>
    %cst_37 = arith.constant dense<0.000000e+00> : vector<8xf32>
    %67 = vector.multi_reduction <add>, %66, %cst_37 [0] : vector<384x8xf32> to vector<8xf32>
    %68 = vector.shape_cast %67 : vector<8xf32> to vector<1x8xf32>
    %cst_38 = arith.constant 3.906250e-03 : f32
    %69 = vector.broadcast %cst_38 : f32 to vector<1x8xf32>
    %70 = arith.mulf %68, %69 : vector<1x8xf32>
    %c0_39 = arith.constant 0 : index
    %c0_40 = arith.constant 0 : index
    %c0_41 = arith.constant 0 : index
    %71 = vector.load %arg4[%c0_39, %c0_40, %c0_41] : memref<1x2x8xf32, #tpu.memory_space<vmem>>, vector<1x1x8xf32>
    %72 = vector.shape_cast %71 : vector<1x1x8xf32> to vector<1x8xf32>
    %c0_42 = arith.constant 0 : index
    %c1_43 = arith.constant 1 : index
    %c0_44 = arith.constant 0 : index
    %73 = vector.load %arg4[%c0_42, %c1_43, %c0_44] : memref<1x2x8xf32, #tpu.memory_space<vmem>>, vector<1x1x8xf32>
    %74 = vector.shape_cast %73 : vector<1x1x8xf32> to vector<1x8xf32>
    %cst_45 = arith.constant 9.99999993E-9 : f32
    %75 = vector.broadcast %cst_45 : f32 to vector<1x8xf32>
    %76 = arith.addf %70, %75 : vector<1x8xf32>
    %77 = math.rsqrt %76 : vector<1x8xf32>
    %78 = arith.mulf %72, %77 : vector<1x8xf32>
    %79 = vector.broadcast %78 : vector<1x8xf32> to vector<384x8xf32>
    %80 = arith.mulf %63, %79 : vector<384x8xf32>
    %81 = vector.broadcast %74 : vector<1x8xf32> to vector<384x8xf32>
    %82 = arith.addf %80, %81 : vector<384x8xf32>
    %c0_46 = arith.constant 0 : index
    %c0_47 = arith.constant 0 : index
    %c0_48 = arith.constant 0 : index
    %83 = vector.load %arg5[%c0_46, %c0_47, %c0_48] : memref<1x384x8xf32, #tpu.memory_space<vmem>>, vector<1x384x8xf32>
    %84 = vector.shape_cast %83 : vector<1x384x8xf32> to vector<384x8xf32>
    %85 = arith.addf %82, %84 : vector<384x8xf32>
    %c0_49 = arith.constant 0 : index
    %c0_50 = arith.constant 0 : index
    %c0_51 = arith.constant 0 : index
    %86 = vector.load %arg6[%c0_49, %c0_50, %c0_51] : memref<1x384x8xf32, #tpu.memory_space<vmem>>, vector<1x384x8xf32>
    %87 = vector.shape_cast %86 : vector<1x384x8xf32> to vector<384x8xf32>
    %88 = vector.shape_cast %85 : vector<384x8xf32> to vector<1x384x8xf32>
    tpu.vector_store %arg6[%c0_49, %c0_50, %c0_51], %88 {strides = array<i32>} : memref<1x384x8xf32, #tpu.memory_space<vmem>>, vector<1x384x8xf32>,
    return
  }
  func.func @transform_0(%arg0: i32, %arg1: i32) -> (i32, i32, i32) {
    %c0_i32 = arith.constant 0 : i32
    %c0_i32_0 = arith.constant 0 : i32
    %c0_i32_1 = arith.constant 0 : i32
    return %arg0, %c0_i32, %c0_i32_0 : i32, i32, i32
  }
  func.func @transform_1(%arg0: i32, %arg1: i32) -> (i32, i32, i32) {
    %c0_i32 = arith.constant 0 : i32
    %c0_i32_0 = arith.constant 0 : i32
    %c0_i32_1 = arith.constant 0 : i32
    return %c0_i32, %c0_i32_0, %arg1 : i32, i32, i32
  }
  func.func @transform_2(%arg0: i32, %arg1: i32) -> (i32, i32, i32) {
    %c0_i32 = arith.constant 0 : i32
    %c0_i32_0 = arith.constant 0 : i32
    return %arg0, %c0_i32, %arg1 : i32, i32, i32
  }
  func.func @transform_3(%arg0: i32, %arg1: i32) -> (i32, i32, i32) {
    %c0_i32 = arith.constant 0 : i32
    %c0_i32_0 = arith.constant 0 : i32
    return %arg0, %c0_i32, %arg1 : i32, i32, i32
  }
  func.func @transform_4(%arg0: i32, %arg1: i32) -> (i32, i32, i32) {
    %c0_i32 = arith.constant 0 : i32
    %c0_i32_0 = arith.constant 0 : i32
    return %arg0, %c0_i32, %arg1 : i32, i32, i32
  }
}

</mosaic_0001>

<llo_original>
// kernel: resnet_block_adain.2
$region0: #{resnet_block_adain.2}
  #allocation0 [shape = 'u32[]', space=smem, size = 0x4, offset = 0x4, fixed_abs, tag = 'smem constant byte address 0x4 - core index']
  #allocation1 [shape = 'u32[144,128]{1,0:T(1,128)}', space=vmem, size = 0x12000, scoped, tag = 'internal scratch']
  %s0 = inlined_call_operand.vmem [shape: bf16[2,440,8], index: 0, kind: input, shape index: {}]
  %s1 = inlined_call_operand.vmem [shape: bf16[9,8,8], index: 1, kind: input, shape index: {}]
  %s2 = inlined_call_operand.vmem [shape: f32[2,2,8], index: 2, kind: input, shape index: {}]
  %s3 = inlined_call_operand.vmem [shape: bf16[2,384,8], index: 3, kind: output, shape index: {}]
  %s4 = sld [smem:[#allocation0]]
  $region45: #{resnet_block_adain.2} parent=0
    _
  %s6 = ssub.s32 1, %s4
  %s7 = scalar_select 0, %s6, %s4
  loop: start=0, step=1, limit=4
  $region2: #{resnet_block_adain.2} parent=0 // loop_pre_header
    _
  $region3: #{resnet_block_adain.2} parent=0 // loop_header
    %s9 = sphi 0, %s13
    %p10 = scmp.ge.s32.totalorder %s9, 4
    %s16 = sphi 0, %s28
    %s17 = sphi 0, %s24
    %s18 = sphi 0, %s16
    %s19 = sphi 0, %s17
    %s20 = sphi 0, %s18
    %s21 = sphi 0, %s19
    %s31 = sphi 0, %s33
    %s34 = sphi 0, %s31
    %s35 = sphi 0, %s34
    %s51 = sphi 0, %s35
    %s57 = sphi 0, %s59
    %s60 = sphi 0, %s57
    %s61 = sphi 0, %s60
    %s77 = sphi 0, %s61
    %s85 = sphi 0, %s87
    %s88 = sphi 0, %s85
    %s89 = sphi 0, %s88
    %s105 = sphi 0, %s89
    %s113 = sphi 0, %s115
    %s116 = sphi 0, %s113
    %s117 = sphi 0, %s116
    %s133 = sphi 0, %s117
  $region4: #{resnet_block_adain.2} parent=0 // loop_header_branch
    %12 = sbr.rel (%p10) target = $region8
  $region5: #{resnet_block_adain.2} parent=0 // loop_body
    %s14 = ssub.s32 %s9, 1
    %s15 = ssub.s32 %s9, 2
    %s22 = sadd.s32 1, %s17
    %p23 = scmp.ge.s32.totalorder %s22, 1
    %s24 = scalar_select %p23, 0, %s22
    %s25 = sadd.s32 1, %s16
    %s26 = scalar_select %p23, %s25, %s16
    %p27 = scmp.ge.s32.totalorder %s26, 2
    %s28 = scalar_select %p27, 0, %s26
    %s29 = ssub.s32 %s16, %s28
    %p30 = scmp.eq.s32.totalorder %s29, 0
    %s32 = sadd.s32 %s31, 1
    %s33 = scalar_select %p30, %s31, %s32
    %p36 = pneg %p30
    %p37 = scmp.eq.s32.totalorder %s9, 1
    %p38 = por %p36, %p37
    %p39 = scmp.ne.s32.totalorder %s31, %s34
    %p40 = scmp.eq.s32.totalorder %s9, 0
    %p41 = por %p39, %p40
    %p42 = scmp.ne.s32.totalorder %s31, %s34
    %p43 = scmp.eq.s32.totalorder %s14, 1
    %p44 = por %p42, %p43
    %p45 = scmp.ne.s32.totalorder %s34, %s35
    %p46 = scmp.eq.s32.totalorder %s14, 0
    %p47 = por %p45, %p46
    %p48 = scmp.ne.s32.totalorder %s34, %s35
    %p49 = scmp.eq.s32.totalorder %s15, 1
    %p50 = por %p48, %p49
    %p52 = scmp.ne.s32.totalorder %s35, %s51
    %p53 = scmp.eq.s32.totalorder %s15, 0
    %p54 = por %p52, %p53
    %s55 = ssub.s32 %s17, %s24
    %p56 = scmp.eq.s32.totalorder %s55, 0
    %s58 = sadd.s32 %s57, 1
    %s59 = scalar_select %p56, %s57, %s58
    %p62 = pneg %p56
    %p63 = scmp.eq.s32.totalorder %s9, 1
    %p64 = por %p62, %p63
    %p65 = scmp.ne.s32.totalorder %s57, %s60
    %p66 = scmp.eq.s32.totalorder %s9, 0
    %p67 = por %p65, %p66
    %p68 = scmp.ne.s32.totalorder %s57, %s60
    %p69 = scmp.eq.s32.totalorder %s14, 1
    %p70 = por %p68, %p69
    %p71 = scmp.ne.s32.totalorder %s60, %s61
    %p72 = scmp.eq.s32.totalorder %s14, 0
    %p73 = por %p71, %p72
    %p74 = scmp.ne.s32.totalorder %s60, %s61
    %p75 = scmp.eq.s32.totalorder %s15, 1
    %p76 = por %p74, %p75
    %p78 = scmp.ne.s32.totalorder %s61, %s77
    %p79 = scmp.eq.s32.totalorder %s15, 0
    %p80 = por %p78, %p79
    %s81 = ssub.s32 %s16, %s28
    %s82 = ssub.s32 %s17, %s24
    %s83 = sor.u32 %s81, %s82
    %p84 = scmp.eq.s32.totalorder %s83, 0
    %s86 = sadd.s32 %s85, 1
    %s87 = scalar_select %p84, %s85, %s86
    %p90 = pneg %p84
    %p91 = scmp.eq.s32.totalorder %s9, 1
    %p92 = por %p90, %p91
    %p93 = scmp.ne.s32.totalorder %s85, %s88
    %p94 = scmp.eq.s32.totalorder %s9, 0
    %p95 = por %p93, %p94
    %p96 = scmp.ne.s32.totalorder %s85, %s88
    %p97 = scmp.eq.s32.totalorder %s14, 1
    %p98 = por %p96, %p97
    %p99 = scmp.ne.s32.totalorder %s88, %s89
    %p100 = scmp.eq.s32.totalorder %s14, 0
    %p101 = por %p99, %p100
    %p102 = scmp.ne.s32.totalorder %s88, %s89
    %p103 = scmp.eq.s32.totalorder %s15, 1
    %p104 = por %p102, %p103
    %p106 = scmp.ne.s32.totalorder %s89, %s105
    %p107 = scmp.eq.s32.totalorder %s15, 0
    %p108 = por %p106, %p107
    %s109 = ssub.s32 %s16, %s28
    %s110 = ssub.s32 %s17, %s24
    %s111 = sor.u32 %s109, %s110
    %p112 = scmp.eq.s32.totalorder %s111, 0
    %s114 = sadd.s32 %s113, 1
    %s115 = scalar_select %p112, %s113, %s114
    %p118 = pneg %p112
    %p119 = scmp.eq.s32.totalorder %s9, 1
    %p120 = por %p118, %p119
    %p121 = scmp.ne.s32.totalorder %s113, %s116
    %p122 = scmp.eq.s32.totalorder %s9, 0
    %p123 = por %p121, %p122
    %p124 = scmp.ne.s32.totalorder %s113, %s116
    %p125 = scmp.eq.s32.totalorder %s14, 1
    %p126 = por %p124, %p125
    %p127 = scmp.ne.s32.totalorder %s116, %s117
    %p128 = scmp.eq.s32.totalorder %s14, 0
    %p129 = por %p127, %p128
    %p130 = scmp.ne.s32.totalorder %s116, %s117
    %p131 = scmp.eq.s32.totalorder %s15, 1
    %p132 = por %p130, %p131
    %p134 = scmp.ne.s32.totalorder %s117, %s133
    %p135 = scmp.eq.s32.totalorder %s15, 0
    %p136 = por %p134, %p135
    %p137 = scmp.le.s32.totalorder 1, %s9
    %p138 = scmp.lt.s32.totalorder %s9, 3
    %p139 = pnand %p137, %p138
    %p140 = pneg %p139
    // Predicated region
    $region9: #{resnet_block_adain.2} parent=5 // pred_check
      _
    $region10: #{resnet_block_adain.2} parent=5 // pred_check_branch
      %142 = sbr.rel (%p139) target = $region12
    $region11: #{resnet_block_adain.2} parent=5 // pred_region
      %s143 = ssub.s32 %s9, 1
      // Predicated region
      $region13: #{resnet_block_adain.2} parent=11 // pred_check
        %p144 = pneg %p73
      $region14: #{resnet_block_adain.2} parent=11 // pred_check_branch
        %146 = sbr.rel (%p144) target = $region16
      $region15: #{resnet_block_adain.2} parent=11 // pred_region
        %p147 = scmp.lt.s32.totalorder %s19, 0
        %s148 = scalar_select %p147, %s19, 0
        %s149 = smul.addr %s148, 4
        %s150 = scalar_lea.vmem %s1, %s149
      $region16: #{resnet_block_adain.2} parent=11 // pred_fallthru
        _
    $region12: #{resnet_block_adain.2} parent=5 // pred_fallthru
      _
    %p151 = scmp.lt.s32.totalorder %s9, 2
    // Predicated region
    $region17: #{resnet_block_adain.2} parent=5 // pred_check
      %p152 = pneg %p151
    $region18: #{resnet_block_adain.2} parent=5 // pred_check_branch
      %154 = sbr.rel (%p152) target = $region20
    $region19: #{resnet_block_adain.2} parent=5 // pred_region
      // Predicated region
      $region21: #{resnet_block_adain.2} parent=19 // pred_check
        %p155 = pneg %p41
      $region22: #{resnet_block_adain.2} parent=19 // pred_check_branch
        %157 = sbr.rel (%p155) target = $region24
      $region23: #{resnet_block_adain.2} parent=19 // pred_region
        %p158 = scmp.lt.s32.totalorder %s16, 1
        %s159 = scalar_select %p158, %s16, 1
        %s160 = smul.addr %s159, 55
        %s161 = smul.addr %s160, 4
        %s162 = scalar_lea.vmem %s0, %s161
      $region24: #{resnet_block_adain.2} parent=19 // pred_fallthru
        _
      // Predicated region
      $region25: #{resnet_block_adain.2} parent=19 // pred_check
        %p163 = pneg %p95
      $region26: #{resnet_block_adain.2} parent=19 // pred_check_branch
        %165 = sbr.rel (%p163) target = $region28
      $region27: #{resnet_block_adain.2} parent=19 // pred_region
        %p166 = scmp.lt.s32.totalorder %s16, 1
        %s167 = scalar_select %p166, %s16, 1
        %p168 = scmp.lt.s32.totalorder %s17, 0
        %s169 = scalar_select %p168, %s17, 0
        %s170 = sadd.s32 %s169, %s167
        %s171 = smul.addr %s170, 2
        %s172 = scalar_lea.vmem %s2, %s171
      $region28: #{resnet_block_adain.2} parent=19 // pred_fallthru
        _
    $region20: #{resnet_block_adain.2} parent=5 // pred_fallthru
      _
    %p173 = scmp.le.s32.totalorder 1, %s9
    %p174 = scmp.lt.s32.totalorder %s9, 3
    %p175 = pnand %p173, %p174
    %p176 = pneg %p175
    // Predicated region
    $region29: #{resnet_block_adain.2} parent=5 // pred_check
      _
    $region30: #{resnet_block_adain.2} parent=5 // pred_check_branch
      %178 = sbr.rel (%p175) target = $region32
    $region31: #{resnet_block_adain.2} parent=5 // pred_region
      %s179 = ssub.s32 %s9, 1
      %p180 = scmp.lt.s32.totalorder %s18, 1
      %s181 = scalar_select %p180, %s18, 1
      %s182 = smul.addr %s181, 55
      %s183 = smul.addr %s182, 4
      %s184 = scalar_lea.vmem %s0, %s183
      %p185 = pneg %p47
      %p186 = pneg %p44
      %p187 = scmp.lt.s32.totalorder %s19, 0
      %s188 = scalar_select %p187, %s19, 0
      %s189 = smul.addr %s188, 4
      %s190 = scalar_lea.vmem %s1, %s189
      %p191 = pneg %p73
      %p192 = pneg %p70
      %p193 = scmp.lt.s32.totalorder %s18, 1
      %s194 = scalar_select %p193, %s18, 1
      %p195 = scmp.lt.s32.totalorder %s19, 0
      %s196 = scalar_select %p195, %s19, 0
      %s197 = sadd.s32 %s196, %s194
      %s198 = smul.addr %s197, 2
      %s199 = scalar_lea.vmem %s2, %s198
      %p200 = pneg %p101
      %p201 = pneg %p98
      %p202 = pneg %p129
      %p203 = pneg %p126
      %p204 = scmp.lt.s32.totalorder %s18, 1
      %s205 = scalar_select %p204, %s18, 1
      %p206 = scmp.lt.s32.totalorder %s19, 0
      %s207 = scalar_select %p206, %s19, 0
      %s208 = smul.addr %s205, 48
      %s209 = sadd.s32 %s207, %s208
      %s210 = smul.addr %s209, 4
      %s211 = scalar_lea.vmem %s3, %s210
      %p212 = scmp.lt.s32.totalorder %s18, 1
      %s213 = scalar_select %p212, %s18, 1
      %s214 = smul.addr %s213, 55
      %s215 = smul.addr %s214, 4
      %s216 = scalar_lea.vmem %s0, %s215
      %p217 = scmp.lt.s32.totalorder %s19, 0
      %s218 = scalar_select %p217, %s19, 0
      %s219 = smul.addr %s218, 4
      %s220 = scalar_lea.vmem %s1, %s219
      %p221 = scmp.lt.s32.totalorder %s18, 1
      %s222 = scalar_select %p221, %s18, 1
      %p223 = scmp.lt.s32.totalorder %s19, 0
      %s224 = scalar_select %p223, %s19, 0
      %s225 = sadd.s32 %s224, %s222
      %s226 = smul.addr %s225, 2
      %s227 = scalar_lea.vmem %s2, %s226
      %p228 = scmp.lt.s32.totalorder %s18, 1
      %s229 = scalar_select %p228, %s18, 1
      %p230 = scmp.lt.s32.totalorder %s19, 0
      %s231 = scalar_select %p230, %s19, 0
      %s232 = smul.addr %s229, 48
      %s233 = sadd.s32 %s231, %s232
      %s234 = smul.addr %s233, 4
      %s235 = scalar_lea.vmem %s3, %s234
      %v237 = vld [vmem:[%s216] sm:$0xf]
      %v238 = vld [vmem:[%s216 + $0x4] sm:$0xf]
      %v239 = vld [vmem:[%s216 + $0x8] sm:$0xf]
      %v240 = vld [vmem:[%s216 + $0xc] sm:$0xf]
      %v241 = vld [vmem:[%s216 + $0x10] sm:$0xf]
      %v242 = vld [vmem:[%s216 + $0x14] sm:$0xf]
      %v243 = vld [vmem:[%s216 + $0x18] sm:$0xf]
      %v244 = vld [vmem:[%s216 + $0x1c] sm:$0xf]
      %v245 = vld [vmem:[%s216 + $0x20] sm:$0xf]
      %v246 = vld [vmem:[%s216 + $0x24] sm:$0xf]
      %v247 = vld [vmem:[%s216 + $0x28] sm:$0xf]
      %v248 = vld [vmem:[%s216 + $0x2c] sm:$0xf]
      %v249 = vld [vmem:[%s216 + $0x30] sm:$0xf]
      %v250 = vld [vmem:[%s216 + $0x34] sm:$0xf]
      %v251 = vld [vmem:[%s216 + $0x38] sm:$0xf]
      %v252 = vld [vmem:[%s216 + $0x3c] sm:$0xf]
      %v253 = vld [vmem:[%s216 + $0x40] sm:$0xf]
      %v254 = vld [vmem:[%s216 + $0x44] sm:$0xf]
      %v255 = vld [vmem:[%s216 + $0x48] sm:$0xf]
      %v256 = vld [vmem:[%s216 + $0x4c] sm:$0xf]
      %v257 = vld [vmem:[%s216 + $0x50] sm:$0xf]
      %v258 = vld [vmem:[%s216 + $0x54] sm:$0xf]
      %v259 = vld [vmem:[%s216 + $0x58] sm:$0xf]
      %v260 = vld [vmem:[%s216 + $0x5c] sm:$0xf]
      %v261 = vld [vmem:[%s216 + $0x60] sm:$0xf]
      %v262 = vld [vmem:[%s216 + $0x64] sm:$0xf]
      %v263 = vld [vmem:[%s216 + $0x68] sm:$0xf]
      %v264 = vld [vmem:[%s216 + $0x6c] sm:$0xf]
      %v265 = vld [vmem:[%s216 + $0x70] sm:$0xf]
      %v266 = vld [vmem:[%s216 + $0x74] sm:$0xf]
      %v267 = vld [vmem:[%s216 + $0x78] sm:$0xf]
      %v268 = vld [vmem:[%s216 + $0x7c] sm:$0xf]
      %v269 = vld [vmem:[%s216 + $0x80] sm:$0xf]
      %v270 = vld [vmem:[%s216 + $0x84] sm:$0xf]
      %v271 = vld [vmem:[%s216 + $0x88] sm:$0xf]
      %v272 = vld [vmem:[%s216 + $0x8c] sm:$0xf]
      %v273 = vld [vmem:[%s216 + $0x90] sm:$0xf]
      %v274 = vld [vmem:[%s216 + $0x94] sm:$0xf]
      %v275 = vld [vmem:[%s216 + $0x98] sm:$0xf]
      %v276 = vld [vmem:[%s216 + $0x9c] sm:$0xf]
      %v277 = vld [vmem:[%s216 + $0xa0] sm:$0xf]
      %v278 = vld [vmem:[%s216 + $0xa4] sm:$0xf]
      %v279 = vld [vmem:[%s216 + $0xa8] sm:$0xf]
      %v280 = vld [vmem:[%s216 + $0xac] sm:$0xf]
      %v281 = vld [vmem:[%s216 + $0xb0] sm:$0xf]
      %v282 = vld [vmem:[%s216 + $0xb4] sm:$0xf]
      %v283 = vld [vmem:[%s216 + $0xb8] sm:$0xf]
      %v284 = vld [vmem:[%s216 + $0xbc] sm:$0xf]
      %v285 = vld [vmem:[%s216 + $0xc0] sm:$0xf]
      %v286 = vld [vmem:[%s216 + $0xc4] sm:$0xf]
      %v287 = vld [vmem:[%s216 + $0xc8] sm:$0xf]
      %v288 = vld [vmem:[%s216 + $0xcc] sm:$0xf]
      %v289 = vld [vmem:[%s216 + $0xd0] sm:$0xf]
      %v290 = vld [vmem:[%s216 + $0xd4] sm:$0xf]
      %v291 = vld [vmem:[%s216 + $0xd8] sm:$0x1]
      %v292 = vld [vmem:[%s216] sm:$0xe]
      %v293 = vld [vmem:[%s220] sm:$0xf]
      %s294 = scalar_lea.vmem %s220, 4
      %v295 = vld [vmem:[%s294] sm:$0xf]
      %v345 = vunpack.c.l.b16 %v237
      %v346 = vunpack.c.l.b16 %v238
      %v347 = vunpack.c.l.b16 %v239
      %v348 = vunpack.c.l.b16 %v240
      %v349 = vunpack.c.l.b16 %v241
      %v350 = vunpack.c.l.b16 %v242
      %v351 = vunpack.c.l.b16 %v243
      %v352 = vunpack.c.l.b16 %v244
      %v353 = vunpack.c.l.b16 %v245
      %v354 = vunpack.c.l.b16 %v246
      %v355 = vunpack.c.l.b16 %v247
      %v356 = vunpack.c.l.b16 %v248
      %v357 = vunpack.c.l.b16 %v249
      %v358 = vunpack.c.l.b16 %v250
      %v359 = vunpack.c.l.b16 %v251
      %v360 = vunpack.c.l.b16 %v252
      %v361 = vunpack.c.l.b16 %v253
      %v362 = vunpack.c.l.b16 %v254
      %v363 = vunpack.c.l.b16 %v255
      %v364 = vunpack.c.l.b16 %v256
      %v365 = vunpack.c.l.b16 %v257
      %v366 = vunpack.c.l.b16 %v258
      %v367 = vunpack.c.l.b16 %v259
      %v368 = vunpack.c.l.b16 %v260
      %v369 = vunpack.c.l.b16 %v261
      %v370 = vunpack.c.l.b16 %v262
      %v371 = vunpack.c.l.b16 %v263
      %v372 = vunpack.c.l.b16 %v264
      %v373 = vunpack.c.l.b16 %v265
      %v374 = vunpack.c.l.b16 %v266
      %v375 = vunpack.c.l.b16 %v267
      %v376 = vunpack.c.l.b16 %v268
      %v377 = vunpack.c.l.b16 %v269
      %v378 = vunpack.c.l.b16 %v270
      %v379 = vunpack.c.l.b16 %v271
      %v380 = vunpack.c.l.b16 %v272
      %v381 = vunpack.c.l.b16 %v273
      %v382 = vunpack.c.l.b16 %v274
      %v383 = vunpack.c.l.b16 %v275
      %v384 = vunpack.c.l.b16 %v276
      %v385 = vunpack.c.l.b16 %v277
      %v386 = vunpack.c.l.b16 %v278
      %v387 = vunpack.c.l.b16 %v279
      %v388 = vunpack.c.l.b16 %v280
      %v389 = vunpack.c.l.b16 %v281
      %v390 = vunpack.c.l.b16 %v282
      %v391 = vunpack.c.l.b16 %v283
      %v392 = vunpack.c.l.b16 %v284
      %v393 = vunpack.c.l.b16 %v285
      %v394 = vpack.c.b16 %v346, %v345
      %v395 = vpack.c.b16 %v348, %v347
      %v396 = vpack.c.b16 %v350, %v349
      %v397 = vpack.c.b16 %v352, %v351
      %v398 = vpack.c.b16 %v354, %v353
      %v399 = vpack.c.b16 %v356, %v355
      %v400 = vpack.c.b16 %v358, %v357
      %v401 = vpack.c.b16 %v360, %v359
      %v402 = vpack.c.b16 %v362, %v361
      %v403 = vpack.c.b16 %v364, %v363
      %v404 = vpack.c.b16 %v366, %v365
      %v405 = vpack.c.b16 %v368, %v367
      %v406 = vpack.c.b16 %v370, %v369
      %v407 = vpack.c.b16 %v372, %v371
      %v408 = vpack.c.b16 %v374, %v373
      %v409 = vpack.c.b16 %v376, %v375
      %v410 = vpack.c.b16 %v378, %v377
      %v411 = vpack.c.b16 %v380, %v379
      %v412 = vpack.c.b16 %v382, %v381
      %v413 = vpack.c.b16 %v384, %v383
      %v414 = vpack.c.b16 %v386, %v385
      %v415 = vpack.c.b16 %v388, %v387
      %v416 = vpack.c.b16 %v390, %v389
      %v417 = vpack.c.b16 %v392, %v391
      %v418 = vpack.c.b16 %v393, %v393
      %vm419 = vsmask.f32 7424
      %v421 = vshrl.u32 %v394, 16
      %v423 = vshll.u32 %v394, 16
      %v425 = vrot.slane %v423, 1
      %v426 = vor.u32 %v421, %v425
      %v428 = vshll.u32 %v395, 16
      %v430 = vrot.slane %v428, 1
      %v431 = vsel %vm419, %v426, %v430
      %v432 = vshrl.u32 %v395, 16
      %v434 = vor.u32 %v432, %v430
      %v436 = vshll.u32 %v396, 16
      %v438 = vrot.slane %v436, 1
      %v439 = vsel %vm419, %v434, %v438
      %v440 = vshrl.u32 %v396, 16
      %v442 = vor.u32 %v440, %v438
      %v444 = vshll.u32 %v397, 16
      %v446 = vrot.slane %v444, 1
      %v447 = vsel %vm419, %v442, %v446
      %v448 = vshrl.u32 %v397, 16
      %v450 = vor.u32 %v448, %v446
      %v452 = vshll.u32 %v398, 16
      %v454 = vrot.slane %v452, 1
      %v455 = vsel %vm419, %v450, %v454
      %v456 = vshrl.u32 %v398, 16
      %v458 = vor.u32 %v456, %v454
      %v460 = vshll.u32 %v399, 16
      %v462 = vrot.slane %v460, 1
      %v463 = vsel %vm419, %v458, %v462
      %v464 = vshrl.u32 %v399, 16
      %v466 = vor.u32 %v464, %v462
      %v468 = vshll.u32 %v400, 16
      %v470 = vrot.slane %v468, 1
      %v471 = vsel %vm419, %v466, %v470
      %v472 = vshrl.u32 %v400, 16
      %v474 = vor.u32 %v472, %v470
      %v476 = vshll.u32 %v401, 16
      %v478 = vrot.slane %v476, 1
      %v479 = vsel %vm419, %v474, %v478
      %v480 = vshrl.u32 %v401, 16
      %v482 = vor.u32 %v480, %v478
      %v484 = vshll.u32 %v402, 16
      %v486 = vrot.slane %v484, 1
      %v487 = vsel %vm419, %v482, %v486
      %v488 = vshrl.u32 %v402, 16
      %v490 = vor.u32 %v488, %v486
      %v492 = vshll.u32 %v403, 16
      %v494 = vrot.slane %v492, 1
      %v495 = vsel %vm419, %v490, %v494
      %v496 = vshrl.u32 %v403, 16
      %v498 = vor.u32 %v496, %v494
      %v500 = vshll.u32 %v404, 16
      %v502 = vrot.slane %v500, 1
      %v503 = vsel %vm419, %v498, %v502
      %v504 = vshrl.u32 %v404, 16
      %v506 = vor.u32 %v504, %v502
      %v508 = vshll.u32 %v405, 16
      %v510 = vrot.slane %v508, 1
      %v511 = vsel %vm419, %v506, %v510
      %v512 = vshrl.u32 %v405, 16
      %v514 = vor.u32 %v512, %v510
      %v516 = vshll.u32 %v406, 16
      %v518 = vrot.slane %v516, 1
      %v519 = vsel %vm419, %v514, %v518
      %v520 = vshrl.u32 %v406, 16
      %v522 = vor.u32 %v520, %v518
      %v524 = vshll.u32 %v407, 16
      %v526 = vrot.slane %v524, 1
      %v527 = vsel %vm419, %v522, %v526
      %v528 = vshrl.u32 %v407, 16
      %v530 = vor.u32 %v528, %v526
      %v532 = vshll.u32 %v408, 16
      %v534 = vrot.slane %v532, 1
      %v535 = vsel %vm419, %v530, %v534
      %v536 = vshrl.u32 %v408, 16
      %v538 = vor.u32 %v536, %v534
      %v540 = vshll.u32 %v409, 16
      %v542 = vrot.slane %v540, 1
      %v543 = vsel %vm419, %v538, %v542
      %v544 = vshrl.u32 %v409, 16
      %v546 = vor.u32 %v544, %v542
      %v548 = vshll.u32 %v410, 16
      %v550 = vrot.slane %v548, 1
      %v551 = vsel %vm419, %v546, %v550
      %v552 = vshrl.u32 %v410, 16
      %v554 = vor.u32 %v552, %v550
      %v556 = vshll.u32 %v411, 16
      %v558 = vrot.slane %v556, 1
      %v559 = vsel %vm419, %v554, %v558
      %v560 = vshrl.u32 %v411, 16
      %v562 = vor.u32 %v560, %v558
      %v564 = vshll.u32 %v412, 16
      %v566 = vrot.slane %v564, 1
      %v567 = vsel %vm419, %v562, %v566
      %v568 = vshrl.u32 %v412, 16
      %v570 = vor.u32 %v568, %v566
      %v572 = vshll.u32 %v413, 16
      %v574 = vrot.slane %v572, 1
      %v575 = vsel %vm419, %v570, %v574
      %v576 = vshrl.u32 %v413, 16
      %v578 = vor.u32 %v576, %v574
      %v580 = vshll.u32 %v414, 16
      %v582 = vrot.slane %v580, 1
      %v583 = vsel %vm419, %v578, %v582
      %v584 = vshrl.u32 %v414, 16
      %v586 = vor.u32 %v584, %v582
      %v588 = vshll.u32 %v415, 16
      %v590 = vrot.slane %v588, 1
      %v591 = vsel %vm419, %v586, %v590
      %v592 = vshrl.u32 %v415, 16
      %v594 = vor.u32 %v592, %v590
      %v596 = vshll.u32 %v416, 16
      %v598 = vrot.slane %v596, 1
      %v599 = vsel %vm419, %v594, %v598
      %v600 = vshrl.u32 %v416, 16
      %v602 = vor.u32 %v600, %v598
      %v604 = vshll.u32 %v417, 16
      %v606 = vrot.slane %v604, 1
      %v607 = vsel %vm419, %v602, %v606
      %v608 = vshrl.u32 %v417, 16
      %v610 = vor.u32 %v608, %v606
      %v612 = vshll.u32 %v418, 16
      %v614 = vrot.slane %v612, 1
      %v615 = vsel %vm419, %v610, %v614
      %vm616 = vcmask 64512
      %v618 = vsel %vm616, %v431, 0
      %v621 = vsel %vm616, %v439, 0
      %v624 = vsel %vm616, %v447, 0
      %v627 = vsel %vm616, %v455, 0
      %v630 = vsel %vm616, %v463, 0
      %v633 = vsel %vm616, %v471, 0
      %v636 = vsel %vm616, %v479, 0
      %v639 = vsel %vm616, %v487, 0
      %v642 = vsel %vm616, %v495, 0
      %v645 = vsel %vm616, %v503, 0
      %v648 = vsel %vm616, %v511, 0
      %v651 = vsel %vm616, %v519, 0
      %v654 = vsel %vm616, %v527, 0
      %v657 = vsel %vm616, %v535, 0
      %v660 = vsel %vm616, %v543, 0
      %v663 = vsel %vm616, %v551, 0
      %v666 = vsel %vm616, %v559, 0
      %v669 = vsel %vm616, %v567, 0
      %v672 = vsel %vm616, %v575, 0
      %v675 = vsel %vm616, %v583, 0
      %v678 = vsel %vm616, %v591, 0
      %v681 = vsel %vm616, %v599, 0
      %v684 = vsel %vm616, %v607, 0
      %v687 = vsel %vm616, %v615, 0
      %vm689 = vcmask 1043456
      %v691 = vsel %vm689, %v295, 0
      %693 = vmatprep.subr.bf16.mxu0 0
      %694 = vmatpush1.bf16.msra.mxu0 %v691
      %695 = vmatprep.subr.bf16.mxu0 0
      %696 = vmatpush1.bf16.msra.mxu0 0
      %697 = vmatprep.subr.bf16.mxu0 0
      %698 = vmatpush1.bf16.msra.mxu0 0
      %699 = vmatprep.subr.bf16.mxu0 0
      %700 = vmatpush1.bf16.msra.mxu0 0
      %701 = vmatprep.subr.bf16.mxu0 0
      %702 = vmatpush1.bf16.msra.mxu0 0
      %703 = vmatprep.subr.bf16.mxu0 0
      %704 = vmatpush1.bf16.msra.mxu0 0
      %705 = vmatprep.subr.bf16.mxu0 0
      %706 = vmatpush1.bf16.msra.mxu0 0
      %707 = vmatprep.subr.bf16.mxu0 0
      %708 = vmatpush1.bf16.msra.mxu0 0
      %709 = vmatprep.subr.bf16.mxu0 0
      %710 = vmatpush1.bf16.msra.mxu0 0
      %711 = vmatprep.subr.bf16.mxu0 0
      %712 = vmatpush1.bf16.msra.mxu0 0
      %713 = vmatprep.subr.bf16.mxu0 0
      %714 = vmatpush1.bf16.msra.mxu0 0
      %715 = vmatprep.subr.bf16.mxu0 0
      %716 = vmatpush1.bf16.msra.mxu0 0
      %717 = vmatprep.subr.bf16.mxu0 0
      %718 = vmatpush1.bf16.msra.mxu0 0
      %719 = vmatprep.subr.bf16.mxu0 0
      %720 = vmatpush1.bf16.msra.mxu0 0
      %721 = vmatprep.subr.bf16.mxu0 0
      %722 = vmatpush1.bf16.msra.mxu0 0
      %723 = vmatprep.subr.bf16.mxu0 0
      %724 = vmatpush1.bf16.msra.mxu0 0
      %725 = vmatprep.mubr.bf16.mxu0 0
      %726 = vmatmul.mubr.bf16.gmra.mrb[0].mxu0 %v618
      %v727 = vpop.f32.mrb[0].mxu0
      %v728 = vadd.f32 0.0, %v727
      %v729 = vpop.f32.mrb[0].mxu0
      %v730 = vpop.f32.mrb[0].mxu0
      %v731 = vadd.f32 0.0, %v730
      %v732 = vpop.f32.mrb[0].mxu0
      %733 = vmatprep.mubr.bf16.mxu0 0
      %734 = vmatmul.mubr.bf16.gmra.mrb[0].mxu0 %v621
      %v735 = vpop.f32.mrb[0].mxu0
      %v736 = vadd.f32 0.0, %v735
      %v737 = vpop.f32.mrb[0].mxu0
      %v738 = vpop.f32.mrb[0].mxu0
      %v739 = vadd.f32 0.0, %v738
      %v740 = vpop.f32.mrb[0].mxu0
      %741 = vmatprep.mubr.bf16.mxu0 0
      %742 = vmatmul.mubr.bf16.gmra.mrb[0].mxu0 %v624
      %v743 = vpop.f32.mrb[0].mxu0
      %v744 = vadd.f32 0.0, %v743
      %v745 = vpop.f32.mrb[0].mxu0
      %v746 = vpop.f32.mrb[0].mxu0
      %v747 = vadd.f32 0.0, %v746
      %v748 = vpop.f32.mrb[0].mxu0
      %749 = vmatprep.mubr.bf16.mxu0 0
      %750 = vmatmul.mubr.bf16.gmra.mrb[0].mxu0 %v627
      %v751 = vpop.f32.mrb[0].mxu0
      %v752 = vadd.f32 0.0, %v751
      %v753 = vpop.f32.mrb[0].mxu0
      %v754 = vpop.f32.mrb[0].mxu0
      %v755 = vadd.f32 0.0, %v754
      %v756 = vpop.f32.mrb[0].mxu0
      %757 = vmatprep.mubr.bf16.mxu0 0
      %758 = vmatmul.mubr.bf16.gmra.mrb[0].mxu0 %v630
      %v759 = vpop.f32.mrb[0].mxu0
      %v760 = vadd.f32 0.0, %v759
      %v761 = vpop.f32.mrb[0].mxu0
      %v762 = vpop.f32.mrb[0].mxu0
      %v763 = vadd.f32 0.0, %v762
      %v764 = vpop.f32.mrb[0].mxu0
      %765 = vmatprep.mubr.bf16.mxu0 0
      %766 = vmatmul.mubr.bf16.gmra.mrb[0].mxu0 %v633
      %v767 = vpop.f32.mrb[0].mxu0
      %v768 = vadd.f32 0.0, %v767
      %v769 = vpop.f32.mrb[0].mxu0
      %v770 = vpop.f32.mrb[0].mxu0
      %v771 = vadd.f32 0.0, %v770
      %v772 = vpop.f32.mrb[0].mxu0
      %773 = vmatprep.mubr.bf16.mxu0 0
      %774 = vmatmul.mubr.bf16.gmra.mrb[0].mxu0 %v636
      %v775 = vpop.f32.mrb[0].mxu0
      %v776 = vadd.f32 0.0, %v775
      %v777 = vpop.f32.mrb[0].mxu0
      %v778 = vpop.f32.mrb[0].mxu0
      %v779 = vadd.f32 0.0, %v778
      %v780 = vpop.f32.mrb[0].mxu0
      %781 = vmatprep.mubr.bf16.mxu0 0
      %782 = vmatmul.mubr.bf16.gmra.mrb[0].mxu0 %v639
      %v783 = vpop.f32.mrb[0].mxu0
      %v784 = vadd.f32 0.0, %v783
      %v785 = vpop.f32.mrb[0].mxu0
      %v786 = vpop.f32.mrb[0].mxu0
      %v787 = vadd.f32 0.0, %v786
      %v788 = vpop.f32.mrb[0].mxu0
      %789 = vmatprep.mubr.bf16.mxu0 0
      %790 = vmatmul.mubr.bf16.gmra.mrb[0].mxu0 %v642
      %v791 = vpop.f32.mrb[0].mxu0
      %v792 = vadd.f32 0.0, %v791
      %v793 = vpop.f32.mrb[0].mxu0
      %v794 = vpop.f32.mrb[0].mxu0
      %v795 = vadd.f32 0.0, %v794
      %v796 = vpop.f32.mrb[0].mxu0
      %797 = vmatprep.mubr.bf16.mxu0 0
      %798 = vmatmul.mubr.bf16.gmra.mrb[0].mxu0 %v645
      %v799 = vpop.f32.mrb[0].mxu0
      %v800 = vadd.f32 0.0, %v799
      %v801 = vpop.f32.mrb[0].mxu0
      %v802 = vpop.f32.mrb[0].mxu0
      %v803 = vadd.f32 0.0, %v802
      %v804 = vpop.f32.mrb[0].mxu0
      %805 = vmatprep.mubr.bf16.mxu0 0
      %806 = vmatmul.mubr.bf16.gmra.mrb[0].mxu0 %v648
      %v807 = vpop.f32.mrb[0].mxu0
      %v808 = vadd.f32 0.0, %v807
      %v809 = vpop.f32.mrb[0].mxu0
      %v810 = vpop.f32.mrb[0].mxu0
      %v811 = vadd.f32 0.0, %v810
      %v812 = vpop.f32.mrb[0].mxu0
      %813 = vmatprep.mubr.bf16.mxu0 0
      %814 = vmatmul.mubr.bf16.gmra.mrb[0].mxu0 %v651
      %v815 = vpop.f32.mrb[0].mxu0
      %v816 = vadd.f32 0.0, %v815
      %v817 = vpop.f32.mrb[0].mxu0
      %v818 = vpop.f32.mrb[0].mxu0
      %v819 = vadd.f32 0.0, %v818
      %v820 = vpop.f32.mrb[0].mxu0
      %821 = vmatprep.mubr.bf16.mxu0 0
      %822 = vmatmul.mubr.bf16.gmra.mrb[0].mxu0 %v654
      %v823 = vpop.f32.mrb[0].mxu0
      %v824 = vadd.f32 0.0, %v823
      %v825 = vpop.f32.mrb[0].mxu0
      %v826 = vpop.f32.mrb[0].mxu0
      %v827 = vadd.f32 0.0, %v826
      %v828 = vpop.f32.mrb[0].mxu0
      %829 = vmatprep.mubr.bf16.mxu0 0
      %830 = vmatmul.mubr.bf16.gmra.mrb[0].mxu0 %v657
      %v831 = vpop.f32.mrb[0].mxu0
      %v832 = vadd.f32 0.0, %v831
      %v833 = vpop.f32.mrb[0].mxu0
      %v834 = vpop.f32.mrb[0].mxu0
      %v835 = vadd.f32 0.0, %v834
      %v836 = vpop.f32.mrb[0].mxu0
      %837 = vmatprep.mubr.bf16.mxu0 0
      %838 = vmatmul.mubr.bf16.gmra.mrb[0].mxu0 %v660
      %v839 = vpop.f32.mrb[0].mxu0
      %v840 = vadd.f32 0.0, %v839
      %v841 = vpop.f32.mrb[0].mxu0
      %v842 = vpop.f32.mrb[0].mxu0
      %v843 = vadd.f32 0.0, %v842
      %v844 = vpop.f32.mrb[0].mxu0
      %845 = vmatprep.mubr.bf16.mxu0 0
      %846 = vmatmul.mubr.bf16.gmra.mrb[0].mxu0 %v663
      %v847 = vpop.f32.mrb[0].mxu0
      %v848 = vadd.f32 0.0, %v847
      %v849 = vpop.f32.mrb[0].mxu0
      %v850 = vpop.f32.mrb[0].mxu0
      %v851 = vadd.f32 0.0, %v850
      %v852 = vpop.f32.mrb[0].mxu0
      %853 = vmatprep.mubr.bf16.mxu0 0
      %854 = vmatmul.mubr.bf16.gmra.mrb[0].mxu0 %v666
      %v855 = vpop.f32.mrb[0].mxu0
      %v856 = vadd.f32 0.0, %v855
      %v857 = vpop.f32.mrb[0].mxu0
      %v858 = vpop.f32.mrb[0].mxu0
      %v859 = vadd.f32 0.0, %v858
      %v860 = vpop.f32.mrb[0].mxu0
      %861 = vmatprep.mubr.bf16.mxu0 0
      %862 = vmatmul.mubr.bf16.gmra.mrb[0].mxu0 %v669
      %v863 = vpop.f32.mrb[0].mxu0
      %v864 = vadd.f32 0.0, %v863
      %v865 = vpop.f32.mrb[0].mxu0
      %v866 = vpop.f32.mrb[0].mxu0
      %v867 = vadd.f32 0.0, %v866
      %v868 = vpop.f32.mrb[0].mxu0
      %869 = vmatprep.mubr.bf16.mxu0 0
      %870 = vmatmul.mubr.bf16.gmra.mrb[0].mxu0 %v672
      %v871 = vpop.f32.mrb[0].mxu0
      %v872 = vadd.f32 0.0, %v871
      %v873 = vpop.f32.mrb[0].mxu0
      %v874 = vpop.f32.mrb[0].mxu0
      %v875 = vadd.f32 0.0, %v874
      %v876 = vpop.f32.mrb[0].mxu0
      %877 = vmatprep.mubr.bf16.mxu0 0
      %878 = vmatmul.mubr.bf16.gmra.mrb[0].mxu0 %v675
      %v879 = vpop.f32.mrb[0].mxu0
      %v880 = vadd.f32 0.0, %v879
      %v881 = vpop.f32.mrb[0].mxu0
      %v882 = vpop.f32.mrb[0].mxu0
      %v883 = vadd.f32 0.0, %v882
      %v884 = vpop.f32.mrb[0].mxu0
      %885 = vmatprep.mubr.bf16.mxu0 0
      %886 = vmatmul.mubr.bf16.gmra.mrb[0].mxu0 %v678
      %v887 = vpop.f32.mrb[0].mxu0
      %v888 = vadd.f32 0.0, %v887
      %v889 = vpop.f32.mrb[0].mxu0
      %v890 = vpop.f32.mrb[0].mxu0
      %v891 = vadd.f32 0.0, %v890
      %v892 = vpop.f32.mrb[0].mxu0
      %893 = vmatprep.mubr.bf16.mxu0 0
      %894 = vmatmul.mubr.bf16.gmra.mrb[0].mxu0 %v681
      %v895 = vpop.f32.mrb[0].mxu0
      %v896 = vadd.f32 0.0, %v895
      %v897 = vpop.f32.mrb[0].mxu0
      %v898 = vpop.f32.mrb[0].mxu0
      %v899 = vadd.f32 0.0, %v898
      %v900 = vpop.f32.mrb[0].mxu0
      %901 = vmatprep.mubr.bf16.mxu0 0
      %902 = vmatmul.mubr.bf16.gmra.mrb[0].mxu0 %v684
      %v903 = vpop.f32.mrb[0].mxu0
      %v904 = vadd.f32 0.0, %v903
      %v905 = vpop.f32.mrb[0].mxu0
      %v906 = vpop.f32.mrb[0].mxu0
      %v907 = vadd.f32 0.0, %v906
      %v908 = vpop.f32.mrb[0].mxu0
      %909 = vmatprep.mubr.bf16.mxu0 0
      %910 = vmatmul.mubr.bf16.gmra.mrb[0].mxu0 %v687
      %v911 = vpop.f32.mrb[0].mxu0
      %v912 = vadd.f32 0.0, %v911
      %v913 = vpop.f32.mrb[0].mxu0
      %v914 = vpop.f32.mrb[0].mxu0
      %v915 = vadd.f32 0.0, %v914
      %v916 = vpop.f32.mrb[0].mxu0
      %917 = vdwg.mxu0
      %v918 = vsel %vm616, %v394, 0
      %v920 = vsel %vm616, %v395, 0
      %v922 = vsel %vm616, %v396, 0
      %v924 = vsel %vm616, %v397, 0
      %v926 = vsel %vm616, %v398, 0
      %v928 = vsel %vm616, %v399, 0
      %v930 = vsel %vm616, %v400, 0
      %v932 = vsel %vm616, %v401, 0
      %v934 = vsel %vm616, %v402, 0
      %v936 = vsel %vm616, %v403, 0
      %v938 = vsel %vm616, %v404, 0
      %v940 = vsel %vm616, %v405, 0
      %v942 = vsel %vm616, %v406, 0
      %v944 = vsel %vm616, %v407, 0
      %v946 = vsel %vm616, %v408, 0
      %v948 = vsel %vm616, %v409, 0
      %v950 = vsel %vm616, %v410, 0
      %v952 = vsel %vm616, %v411, 0
      %v954 = vsel %vm616, %v412, 0
      %v956 = vsel %vm616, %v413, 0
      %v958 = vsel %vm616, %v414, 0
      %v960 = vsel %vm616, %v415, 0
      %v962 = vsel %vm616, %v416, 0
      %v964 = vsel %vm616, %v417, 0
      %v967 = vsel %vm689, %v293, 0
      %969 = vmatprep.subr.bf16.mxu0 0
      %970 = vmatpush1.bf16.msra.mxu0 %v967
      %971 = vmatprep.subr.bf16.mxu0 0
      %972 = vmatpush1.bf16.msra.mxu0 0
      %973 = vmatprep.subr.bf16.mxu0 0
      %974 = vmatpush1.bf16.msra.mxu0 0
      %975 = vmatprep.subr.bf16.mxu0 0
      %976 = vmatpush1.bf16.msra.mxu0 0
      %977 = vmatprep.subr.bf16.mxu0 0
      %978 = vmatpush1.bf16.msra.mxu0 0
      %979 = vmatprep.subr.bf16.mxu0 0
      %980 = vmatpush1.bf16.msra.mxu0 0
      %981 = vmatprep.subr.bf16.mxu0 0
      %982 = vmatpush1.bf16.msra.mxu0 0
      %983 = vmatprep.subr.bf16.mxu0 0
      %984 = vmatpush1.bf16.msra.mxu0 0
      %985 = vmatprep.subr.bf16.mxu0 0
      %986 = vmatpush1.bf16.msra.mxu0 0
      %987 = vmatprep.subr.bf16.mxu0 0
      %988 = vmatpush1.bf16.msra.mxu0 0
      %989 = vmatprep.subr.bf16.mxu0 0
      %990 = vmatpush1.bf16.msra.mxu0 0
      %991 = vmatprep.subr.bf16.mxu0 0
      %992 = vmatpush1.bf16.msra.mxu0 0
      %993 = vmatprep.subr.bf16.mxu0 0
      %994 = vmatpush1.bf16.msra.mxu0 0
      %995 = vmatprep.subr.bf16.mxu0 0
      %996 = vmatpush1.bf16.msra.mxu0 0
      %997 = vmatprep.subr.bf16.mxu0 0
      %998 = vmatpush1.bf16.msra.mxu0 0
      %999 = vmatprep.subr.bf16.mxu0 0
      %1000 = vmatpush1.bf16.msra.mxu0 0
      %1001 = vmatprep.mubr.bf16.mxu0 0
      %1002 = vmatmul.mubr.bf16.gmra.mrb[0].mxu0 %v918
      %v1003 = vpop.f32.mrb[0].mxu0
      %v1004 = vadd.f32 %v728, %v1003
      %v1005 = vpop.f32.mrb[0].mxu0
      %v1006 = vpop.f32.mrb[0].mxu0
      %v1007 = vadd.f32 %v731, %v1006
      %v1008 = vpop.f32.mrb[0].mxu0
      %1009 = vmatprep.mubr.bf16.mxu0 0
      %1010 = vmatmul.mubr.bf16.gmra.mrb[0].mxu0 %v920
      %v1011 = vpop.f32.mrb[0].mxu0
      %v1012 = vadd.f32 %v736, %v1011
      %v1013 = vpop.f32.mrb[0].mxu0
      %v1014 = vpop.f32.mrb[0].mxu0
      %v1015 = vadd.f32 %v739, %v1014
      %v1016 = vpop.f32.mrb[0].mxu0
      %1017 = vmatprep.mubr.bf16.mxu0 0
      %1018 = vmatmul.mubr.bf16.gmra.mrb[0].mxu0 %v922
      %v1019 = vpop.f32.mrb[0].mxu0
      %v1020 = vadd.f32 %v744, %v1019
      %v1021 = vpop.f32.mrb[0].mxu0
      %v1022 = vpop.f32.mrb[0].mxu0
      %v1023 = vadd.f32 %v747, %v1022
      %v1024 = vpop.f32.mrb[0].mxu0
      %1025 = vmatprep.mubr.bf16.mxu0 0
      %1026 = vmatmul.mubr.bf16.gmra.mrb[0].mxu0 %v924
      %v1027 = vpop.f32.mrb[0].mxu0
      %v1028 = vadd.f32 %v752, %v1027
      %v1029 = vpop.f32.mrb[0].mxu0
      %v1030 = vpop.f32.mrb[0].mxu0
      %v1031 = vadd.f32 %v755, %v1030
      %v1032 = vpop.f32.mrb[0].mxu0
      %1033 = vmatprep.mubr.bf16.mxu0 0
      %1034 = vmatmul.mubr.bf16.gmra.mrb[0].mxu0 %v926
      %v1035 = vpop.f32.mrb[0].mxu0
      %v1036 = vadd.f32 %v760, %v1035
      %v1037 = vpop.f32.mrb[0].mxu0
      %v1038 = vpop.f32.mrb[0].mxu0
      %v1039 = vadd.f32 %v763, %v1038
      %v1040 = vpop.f32.mrb[0].mxu0
      %1041 = vmatprep.mubr.bf16.mxu0 0
      %1042 = vmatmul.mubr.bf16.gmra.mrb[0].mxu0 %v928
      %v1043 = vpop.f32.mrb[0].mxu0
      %v1044 = vadd.f32 %v768, %v1043
      %v1045 = vpop.f32.mrb[0].mxu0
      %v1046 = vpop.f32.mrb[0].mxu0
      %v1047 = vadd.f32 %v771, %v1046
      %v1048 = vpop.f32.mrb[0].mxu0
      %1049 = vmatprep.mubr.bf16.mxu0 0
      %1050 = vmatmul.mubr.bf16.gmra.mrb[0].mxu0 %v930
      %v1051 = vpop.f32.mrb[0].mxu0
      %v1052 = vadd.f32 %v776, %v1051
      %v1053 = vpop.f32.mrb[0].mxu0
      %v1054 = vpop.f32.mrb[0].mxu0
      %v1055 = vadd.f32 %v779, %v1054
      %v1056 = vpop.f32.mrb[0].mxu0
      %1057 = vmatprep.mubr.bf16.mxu0 0
      %1058 = vmatmul.mubr.bf16.gmra.mrb[0].mxu0 %v932
      %v1059 = vpop.f32.mrb[0].mxu0
      %v1060 = vadd.f32 %v784, %v1059
      %v1061 = vpop.f32.mrb[0].mxu0
      %v1062 = vpop.f32.mrb[0].mxu0
      %v1063 = vadd.f32 %v787, %v1062
      %v1064 = vpop.f32.mrb[0].mxu0
      %1065 = vmatprep.mubr.bf16.mxu0 0
      %1066 = vmatmul.mubr.bf16.gmra.mrb[0].mxu0 %v934
      %v1067 = vpop.f32.mrb[0].mxu0
      %v1068 = vadd.f32 %v792, %v1067
      %v1069 = vpop.f32.mrb[0].mxu0
      %v1070 = vpop.f32.mrb[0].mxu0
      %v1071 = vadd.f32 %v795, %v1070
      %v1072 = vpop.f32.mrb[0].mxu0
      %1073 = vmatprep.mubr.bf16.mxu0 0
      %1074 = vmatmul.mubr.bf16.gmra.mrb[0].mxu0 %v936
      %v1075 = vpop.f32.mrb[0].mxu0
      %v1076 = vadd.f32 %v800, %v1075
      %v1077 = vpop.f32.mrb[0].mxu0
      %v1078 = vpop.f32.mrb[0].mxu0
      %v1079 = vadd.f32 %v803, %v1078
      %v1080 = vpop.f32.mrb[0].mxu0
      %1081 = vmatprep.mubr.bf16.mxu0 0
      %1082 = vmatmul.mubr.bf16.gmra.mrb[0].mxu0 %v938
      %v1083 = vpop.f32.mrb[0].mxu0
      %v1084 = vadd.f32 %v808, %v1083
      %v1085 = vpop.f32.mrb[0].mxu0
      %v1086 = vpop.f32.mrb[0].mxu0
      %v1087 = vadd.f32 %v811, %v1086
      %v1088 = vpop.f32.mrb[0].mxu0
      %1089 = vmatprep.mubr.bf16.mxu0 0
      %1090 = vmatmul.mubr.bf16.gmra.mrb[0].mxu0 %v940
      %v1091 = vpop.f32.mrb[0].mxu0
      %v1092 = vadd.f32 %v816, %v1091
      %v1093 = vpop.f32.mrb[0].mxu0
      %v1094 = vpop.f32.mrb[0].mxu0
      %v1095 = vadd.f32 %v819, %v1094
      %v1096 = vpop.f32.mrb[0].mxu0
      %1097 = vmatprep.mubr.bf16.mxu0 0
      %1098 = vmatmul.mubr.bf16.gmra.mrb[0].mxu0 %v942
      %v1099 = vpop.f32.mrb[0].mxu0
      %v1100 = vadd.f32 %v824, %v1099
      %v1101 = vpop.f32.mrb[0].mxu0
      %v1102 = vpop.f32.mrb[0].mxu0
      %v1103 = vadd.f32 %v827, %v1102
      %v1104 = vpop.f32.mrb[0].mxu0
      %1105 = vmatprep.mubr.bf16.mxu0 0
      %1106 = vmatmul.mubr.bf16.gmra.mrb[0].mxu0 %v944
      %v1107 = vpop.f32.mrb[0].mxu0
      %v1108 = vadd.f32 %v832, %v1107
      %v1109 = vpop.f32.mrb[0].mxu0
      %v1110 = vpop.f32.mrb[0].mxu0
      %v1111 = vadd.f32 %v835, %v1110
      %v1112 = vpop.f32.mrb[0].mxu0
      %1113 = vmatprep.mubr.bf16.mxu0 0
      %1114 = vmatmul.mubr.bf16.gmra.mrb[0].mxu0 %v946
      %v1115 = vpop.f32.mrb[0].mxu0
      %v1116 = vadd.f32 %v840, %v1115
      %v1117 = vpop.f32.mrb[0].mxu0
      %v1118 = vpop.f32.mrb[0].mxu0
      %v1119 = vadd.f32 %v843, %v1118
      %v1120 = vpop.f32.mrb[0].mxu0
      %1121 = vmatprep.mubr.bf16.mxu0 0
      %1122 = vmatmul.mubr.bf16.gmra.mrb[0].mxu0 %v948
      %v1123 = vpop.f32.mrb[0].mxu0
      %v1124 = vadd.f32 %v848, %v1123
      %v1125 = vpop.f32.mrb[0].mxu0
      %v1126 = vpop.f32.mrb[0].mxu0
      %v1127 = vadd.f32 %v851, %v1126
      %v1128 = vpop.f32.mrb[0].mxu0
      %1129 = vmatprep.mubr.bf16.mxu0 0
      %1130 = vmatmul.mubr.bf16.gmra.mrb[0].mxu0 %v950
      %v1131 = vpop.f32.mrb[0].mxu0
      %v1132 = vadd.f32 %v856, %v1131
      %v1133 = vpop.f32.mrb[0].mxu0
      %v1134 = vpop.f32.mrb[0].mxu0
      %v1135 = vadd.f32 %v859, %v1134
      %v1136 = vpop.f32.mrb[0].mxu0
      %1137 = vmatprep.mubr.bf16.mxu0 0
      %1138 = vmatmul.mubr.bf16.gmra.mrb[0].mxu0 %v952
      %v1139 = vpop.f32.mrb[0].mxu0
      %v1140 = vadd.f32 %v864, %v1139
      %v1141 = vpop.f32.mrb[0].mxu0
      %v1142 = vpop.f32.mrb[0].mxu0
      %v1143 = vadd.f32 %v867, %v1142
      %v1144 = vpop.f32.mrb[0].mxu0
      %1145 = vmatprep.mubr.bf16.mxu0 0
      %1146 = vmatmul.mubr.bf16.gmra.mrb[0].mxu0 %v954
      %v1147 = vpop.f32.mrb[0].mxu0
      %v1148 = vadd.f32 %v872, %v1147
      %v1149 = vpop.f32.mrb[0].mxu0
      %v1150 = vpop.f32.mrb[0].mxu0
      %v1151 = vadd.f32 %v875, %v1150
      %v1152 = vpop.f32.mrb[0].mxu0
      %1153 = vmatprep.mubr.bf16.mxu0 0
      %1154 = vmatmul.mubr.bf16.gmra.mrb[0].mxu0 %v956
      %v1155 = vpop.f32.mrb[0].mxu0
      %v1156 = vadd.f32 %v880, %v1155
      %v1157 = vpop.f32.mrb[0].mxu0
      %v1158 = vpop.f32.mrb[0].mxu0
      %v1159 = vadd.f32 %v883, %v1158
      %v1160 = vpop.f32.mrb[0].mxu0
      %1161 = vmatprep.mubr.bf16.mxu0 0
      %1162 = vmatmul.mubr.bf16.gmra.mrb[0].mxu0 %v958
      %v1163 = vpop.f32.mrb[0].mxu0
      %v1164 = vadd.f32 %v888, %v1163
      %v1165 = vpop.f32.mrb[0].mxu0
      %v1166 = vpop.f32.mrb[0].mxu0
      %v1167 = vadd.f32 %v891, %v1166
      %v1168 = vpop.f32.mrb[0].mxu0
      %1169 = vmatprep.mubr.bf16.mxu0 0
      %1170 = vmatmul.mubr.bf16.gmra.mrb[0].mxu0 %v960
      %v1171 = vpop.f32.mrb[0].mxu0
      %v1172 = vadd.f32 %v896, %v1171
      %v1173 = vpop.f32.mrb[0].mxu0
      %v1174 = vpop.f32.mrb[0].mxu0
      %v1175 = vadd.f32 %v899, %v1174
      %v1176 = vpop.f32.mrb[0].mxu0
      %1177 = vmatprep.mubr.bf16.mxu0 0
      %1178 = vmatmul.mubr.bf16.gmra.mrb[0].mxu0 %v962
      %v1179 = vpop.f32.mrb[0].mxu0
      %v1180 = vadd.f32 %v904, %v1179
      %v1181 = vpop.f32.mrb[0].mxu0
      %v1182 = vpop.f32.mrb[0].mxu0
      %v1183 = vadd.f32 %v907, %v1182
      %v1184 = vpop.f32.mrb[0].mxu0
      %1185 = vmatprep.mubr.bf16.mxu0 0
      %1186 = vmatmul.mubr.bf16.gmra.mrb[0].mxu0 %v964
      %v1187 = vpop.f32.mrb[0].mxu0
      %v1188 = vadd.f32 %v912, %v1187
      %v1189 = vpop.f32.mrb[0].mxu0
      %v1190 = vpop.f32.mrb[0].mxu0
      %v1191 = vadd.f32 %v915, %v1190
      %v1192 = vpop.f32.mrb[0].mxu0
      %1193 = vdwg.mxu0
      %s1194 = scalar_lea.vmem %s220, 8
      %v1195 = vld [vmem:[%s1194] sm:$0xf]
      %v1197 = vunpack.c.l.b16 %v292
      %v1198 = vpack.c.b16 %v346, %v1197
      %vm1199 = vcmask 1046528
      %v1200 = vrot.slane %v1198, 1
      %v1201 = vrot.slane %v395, 1
      %v1202 = vsel %vm1199, %v1200, %v1201
      %v1203 = vrot.slane %v396, 1
      %v1204 = vsel %vm1199, %v1201, %v1203
      %v1205 = vrot.slane %v397, 1
      %v1206 = vsel %vm1199, %v1203, %v1205
      %v1207 = vrot.slane %v398, 1
      %v1208 = vsel %vm1199, %v1205, %v1207
      %v1209 = vrot.slane %v399, 1
      %v1210 = vsel %vm1199, %v1207, %v1209
      %v1211 = vrot.slane %v400, 1
      %v1212 = vsel %vm1199, %v1209, %v1211
      %v1213 = vrot.slane %v401, 1
      %v1214 = vsel %vm1199, %v1211, %v1213
      %v1215 = vrot.slane %v402, 1
      %v1216 = vsel %vm1199, %v1213, %v1215
      %v1217 = vrot.slane %v403, 1
      %v1218 = vsel %vm1199, %v1215, %v1217
      %v1219 = vrot.slane %v404, 1
      %v1220 = vsel %vm1199, %v1217, %v1219
      %v1221 = vrot.slane %v405, 1
      %v1222 = vsel %vm1199, %v1219, %v1221
      %v1223 = vrot.slane %v406, 1
      %v1224 = vsel %vm1199, %v1221, %v1223
      %v1225 = vrot.slane %v407, 1
      %v1226 = vsel %vm1199, %v1223, %v1225
      %v1227 = vrot.slane %v408, 1
      %v1228 = vsel %vm1199, %v1225, %v1227
      %v1229 = vrot.slane %v409, 1
      %v1230 = vsel %vm1199, %v1227, %v1229
      %v1231 = vrot.slane %v410, 1
      %v1232 = vsel %vm1199, %v1229, %v1231
      %v1233 = vrot.slane %v411, 1
      %v1234 = vsel %vm1199, %v1231, %v1233
      %v1235 = vrot.slane %v412, 1
      %v1236 = vsel %vm1199, %v1233, %v1235
      %v1237 = vrot.slane %v413, 1
      %v1238 = vsel %vm1199, %v1235, %v1237
      %v1239 = vrot.slane %v414, 1
      %v1240 = vsel %vm1199, %v1237, %v1239
      %v1241 = vrot.slane %v415, 1
      %v1242 = vsel %vm1199, %v1239, %v1241
      %v1243 = vrot.slane %v416, 1
      %v1244 = vsel %vm1199, %v1241, %v1243
      %v1245 = vrot.slane %v417, 1
      %v1246 = vsel %vm1199, %v1243, %v1245
      %v1247 = vrot.slane %v418, 1
      %v1248 = vsel %vm1199, %v1245, %v1247
      %v1250 = vsel %vm616, %v1202, 0
      %v1253 = vsel %vm616, %v1204, 0
      %v1256 = vsel %vm616, %v1206, 0
      %v1259 = vsel %vm616, %v1208, 0
      %v1262 = vsel %vm616, %v1210, 0
      %v1265 = vsel %vm616, %v1212, 0
      %v1268 = vsel %vm616, %v1214, 0
      %v1271 = vsel %vm616, %v1216, 0
      %v1274 = vsel %vm616, %v1218, 0
      %v1277 = vsel %vm616, %v1220, 0
      %v1280 = vsel %vm616, %v1222, 0
      %v1283 = vsel %vm616, %v1224, 0
      %v1286 = vsel %vm616, %v1226, 0
      %v1289 = vsel %vm616, %v1228, 0
      %v1292 = vsel %vm616, %v1230, 0
      %v1295 = vsel %vm616, %v1232, 0
      %v1298 = vsel %vm616, %v1234, 0
      %v1301 = vsel %vm616, %v1236, 0
      %v1304 = vsel %vm616, %v1238, 0
      %v1307 = vsel %vm616, %v1240, 0
      %v1310 = vsel %vm616, %v1242, 0
      %v1313 = vsel %vm616, %v1244, 0
      %v1316 = vsel %vm616, %v1246, 0
      %v1319 = vsel %vm616, %v1248, 0
      %v1322 = vsel %vm689, %v1195, 0
      %1324 = vmatprep.subr.bf16.mxu0 0
      %1325 = vmatpush1.bf16.msra.mxu0 %v1322
      %1326 = vmatprep.subr.bf16.mxu0 0
      %1327 = vmatpush1.bf16.msra.mxu0 0
      %1328 = vmatprep.subr.bf16.mxu0 0
      %1329 = vmatpush1.bf16.msra.mxu0 0
      %1330 = vmatprep.subr.bf16.mxu0 0
      %1331 = vmatpush1.bf16.msra.mxu0 0
      %1332 = vmatprep.subr.bf16.mxu0 0
      %1333 = vmatpush1.bf16.msra.mxu0 0
      %1334 = vmatprep.subr.bf16.mxu0 0
      %1335 = vmatpush1.bf16.msra.mxu0 0
      %1336 = vmatprep.subr.bf16.mxu0 0
      %1337 = vmatpush1.bf16.msra.mxu0 0
      %1338 = vmatprep.subr.bf16.mxu0 0
      %1339 = vmatpush1.bf16.msra.mxu0 0
      %1340 = vmatprep.subr.bf16.mxu0 0
      %1341 = vmatpush1.bf16.msra.mxu0 0
      %1342 = vmatprep.subr.bf16.mxu0 0
      %1343 = vmatpush1.bf16.msra.mxu0 0
      %1344 = vmatprep.subr.bf16.mxu0 0
      %1345 = vmatpush1.bf16.msra.mxu0 0
      %1346 = vmatprep.subr.bf16.mxu0 0
      %1347 = vmatpush1.bf16.msra.mxu0 0
      %1348 = vmatprep.subr.bf16.mxu0 0
      %1349 = vmatpush1.bf16.msra.mxu0 0
      %1350 = vmatprep.subr.bf16.mxu0 0
      %1351 = vmatpush1.bf16.msra.mxu0 0
      %1352 = vmatprep.subr.bf16.mxu0 0
      %1353 = vmatpush1.bf16.msra.mxu0 0
      %1354 = vmatprep.subr.bf16.mxu0 0
      %1355 = vmatpush1.bf16.msra.mxu0 0
      %1356 = vmatprep.mubr.bf16.mxu0 0
      %1357 = vmatmul.mubr.bf16.gmra.mrb[0].mxu0 %v1250
      %v1358 = vpop.f32.mrb[0].mxu0
      %v1359 = vadd.f32 0.0, %v1358
      %v1360 = vpop.f32.mrb[0].mxu0
      %v1361 = vpop.f32.mrb[0].mxu0
      %v1362 = vadd.f32 0.0, %v1361
      %v1363 = vpop.f32.mrb[0].mxu0
      %1364 = vmatprep.mubr.bf16.mxu0 0
      %1365 = vmatmul.mubr.bf16.gmra.mrb[0].mxu0 %v1253
      %v1366 = vpop.f32.mrb[0].mxu0
      %v1367 = vadd.f32 0.0, %v1366
      %v1368 = vpop.f32.mrb[0].mxu0
      %v1369 = vpop.f32.mrb[0].mxu0
      %v1370 = vadd.f32 0.0, %v1369
      %v1371 = vpop.f32.mrb[0].mxu0
      %1372 = vmatprep.mubr.bf16.mxu0 0
      %1373 = vmatmul.mubr.bf16.gmra.mrb[0].mxu0 %v1256
      %v1374 = vpop.f32.mrb[0].mxu0
      %v1375 = vadd.f32 0.0, %v1374
      %v1376 = vpop.f32.mrb[0].mxu0
      %v1377 = vpop.f32.mrb[0].mxu0
      %v1378 = vadd.f32 0.0, %v1377
      %v1379 = vpop.f32.mrb[0].mxu0
      %1380 = vmatprep.mubr.bf16.mxu0 0
      %1381 = vmatmul.mubr.bf16.gmra.mrb[0].mxu0 %v1259
      %v1382 = vpop.f32.mrb[0].mxu0
      %v1383 = vadd.f32 0.0, %v1382
      %v1384 = vpop.f32.mrb[0].mxu0
      %v1385 = vpop.f32.mrb[0].mxu0
      %v1386 = vadd.f32 0.0, %v1385
      %v1387 = vpop.f32.mrb[0].mxu0
      %1388 = vmatprep.mubr.bf16.mxu0 0
      %1389 = vmatmul.mubr.bf16.gmra.mrb[0].mxu0 %v1262
      %v1390 = vpop.f32.mrb[0].mxu0
      %v1391 = vadd.f32 0.0, %v1390
      %v1392 = vpop.f32.mrb[0].mxu0
      %v1393 = vpop.f32.mrb[0].mxu0
      %v1394 = vadd.f32 0.0, %v1393
      %v1395 = vpop.f32.mrb[0].mxu0
      %1396 = vmatprep.mubr.bf16.mxu0 0
      %1397 = vmatmul.mubr.bf16.gmra.mrb[0].mxu0 %v1265
      %v1398 = vpop.f32.mrb[0].mxu0
      %v1399 = vadd.f32 0.0, %v1398
      %v1400 = vpop.f32.mrb[0].mxu0
      %v1401 = vpop.f32.mrb[0].mxu0
      %v1402 = vadd.f32 0.0, %v1401
      %v1403 = vpop.f32.mrb[0].mxu0
      %1404 = vmatprep.mubr.bf16.mxu0 0
      %1405 = vmatmul.mubr.bf16.gmra.mrb[0].mxu0 %v1268
      %v1406 = vpop.f32.mrb[0].mxu0
      %v1407 = vadd.f32 0.0, %v1406
      %v1408 = vpop.f32.mrb[0].mxu0
      %v1409 = vpop.f32.mrb[0].mxu0
      %v1410 = vadd.f32 0.0, %v1409
      %v1411 = vpop.f32.mrb[0].mxu0
      %1412 = vmatprep.mubr.bf16.mxu0 0
      %1413 = vmatmul.mubr.bf16.gmra.mrb[0].mxu0 %v1271
      %v1414 = vpop.f32.mrb[0].mxu0
      %v1415 = vadd.f32 0.0, %v1414
      %v1416 = vpop.f32.mrb[0].mxu0
      %v1417 = vpop.f32.mrb[0].mxu0
      %v1418 = vadd.f32 0.0, %v1417
      %v1419 = vpop.f32.mrb[0].mxu0
      %1420 = vmatprep.mubr.bf16.mxu0 0
      %1421 = vmatmul.mubr.bf16.gmra.mrb[0].mxu0 %v1274
      %v1422 = vpop.f32.mrb[0].mxu0
      %v1423 = vadd.f32 0.0, %v1422
      %v1424 = vpop.f32.mrb[0].mxu0
      %v1425 = vpop.f32.mrb[0].mxu0
      %v1426 = vadd.f32 0.0, %v1425
      %v1427 = vpop.f32.mrb[0].mxu0
      %1428 = vmatprep.mubr.bf16.mxu0 0
      %1429 = vmatmul.mubr.bf16.gmra.mrb[0].mxu0 %v1277
      %v1430 = vpop.f32.mrb[0].mxu0
      %v1431 = vadd.f32 0.0, %v1430
      %v1432 = vpop.f32.mrb[0].mxu0
      %v1433 = vpop.f32.mrb[0].mxu0
      %v1434 = vadd.f32 0.0, %v1433
      %v1435 = vpop.f32.mrb[0].mxu0
      %1436 = vmatprep.mubr.bf16.mxu0 0
      %1437 = vmatmul.mubr.bf16.gmra.mrb[0].mxu0 %v1280
      %v1438 = vpop.f32.mrb[0].mxu0
      %v1439 = vadd.f32 0.0, %v1438
      %v1440 = vpop.f32.mrb[0].mxu0
      %v1441 = vpop.f32.mrb[0].mxu0
      %v1442 = vadd.f32 0.0, %v1441
      %v1443 = vpop.f32.mrb[0].mxu0
      %1444 = vmatprep.mubr.bf16.mxu0 0
      %1445 = vmatmul.mubr.bf16.gmra.mrb[0].mxu0 %v1283
      %v1446 = vpop.f32.mrb[0].mxu0
      %v1447 = vadd.f32 0.0, %v1446
      %v1448 = vpop.f32.mrb[0].mxu0
      %v1449 = vpop.f32.mrb[0].mxu0
      %v1450 = vadd.f32 0.0, %v1449
      %v1451 = vpop.f32.mrb[0].mxu0
      %1452 = vmatprep.mubr.bf16.mxu0 0
      %1453 = vmatmul.mubr.bf16.gmra.mrb[0].mxu0 %v1286
      %v1454 = vpop.f32.mrb[0].mxu0
      %v1455 = vadd.f32 0.0, %v1454
      %v1456 = vpop.f32.mrb[0].mxu0
      %v1457 = vpop.f32.mrb[0].mxu0
      %v1458 = vadd.f32 0.0, %v1457
      %v1459 = vpop.f32.mrb[0].mxu0
      %1460 = vmatprep.mubr.bf16.mxu0 0
      %1461 = vmatmul.mubr.bf16.gmra.mrb[0].mxu0 %v1289
      %v1462 = vpop.f32.mrb[0].mxu0
      %v1463 = vadd.f32 0.0, %v1462
      %v1464 = vpop.f32.mrb[0].mxu0
      %v1465 = vpop.f32.mrb[0].mxu0
      %v1466 = vadd.f32 0.0, %v1465
      %v1467 = vpop.f32.mrb[0].mxu0
      %1468 = vmatprep.mubr.bf16.mxu0 0
      %1469 = vmatmul.mubr.bf16.gmra.mrb[0].mxu0 %v1292
      %v1470 = vpop.f32.mrb[0].mxu0
      %v1471 = vadd.f32 0.0, %v1470
      %v1472 = vpop.f32.mrb[0].mxu0
      %v1473 = vpop.f32.mrb[0].mxu0
      %v1474 = vadd.f32 0.0, %v1473
      %v1475 = vpop.f32.mrb[0].mxu0
      %1476 = vmatprep.mubr.bf16.mxu0 0
      %1477 = vmatmul.mubr.bf16.gmra.mrb[0].mxu0 %v1295
      %v1478 = vpop.f32.mrb[0].mxu0
      %v1479 = vadd.f32 0.0, %v1478
      %v1480 = vpop.f32.mrb[0].mxu0
      %v1481 = vpop.f32.mrb[0].mxu0
      %v1482 = vadd.f32 0.0, %v1481
      %v1483 = vpop.f32.mrb[0].mxu0
      %1484 = vmatprep.mubr.bf16.mxu0 0
      %1485 = vmatmul.mubr.bf16.gmra.mrb[0].mxu0 %v1298
      %v1486 = vpop.f32.mrb[0].mxu0
      %v1487 = vadd.f32 0.0, %v1486
      %v1488 = vpop.f32.mrb[0].mxu0
      %v1489 = vpop.f32.mrb[0].mxu0
      %v1490 = vadd.f32 0.0, %v1489
      %v1491 = vpop.f32.mrb[0].mxu0
      %1492 = vmatprep.mubr.bf16.mxu0 0
      %1493 = vmatmul.mubr.bf16.gmra.mrb[0].mxu0 %v1301
      %v1494 = vpop.f32.mrb[0].mxu0
      %v1495 = vadd.f32 0.0, %v1494
      %v1496 = vpop.f32.mrb[0].mxu0
      %v1497 = vpop.f32.mrb[0].mxu0
      %v1498 = vadd.f32 0.0, %v1497
      %v1499 = vpop.f32.mrb[0].mxu0
      %1500 = vmatprep.mubr.bf16.mxu0 0
      %1501 = vmatmul.mubr.bf16.gmra.mrb[0].mxu0 %v1304
      %v1502 = vpop.f32.mrb[0].mxu0
      %v1503 = vadd.f32 0.0, %v1502
      %v1504 = vpop.f32.mrb[0].mxu0
      %v1505 = vpop.f32.mrb[0].mxu0
      %v1506 = vadd.f32 0.0, %v1505
      %v1507 = vpop.f32.mrb[0].mxu0
      %1508 = vmatprep.mubr.bf16.mxu0 0
      %1509 = vmatmul.mubr.bf16.gmra.mrb[0].mxu0 %v1307
      %v1510 = vpop.f32.mrb[0].mxu0
      %v1511 = vadd.f32 0.0, %v1510
      %v1512 = vpop.f32.mrb[0].mxu0
      %v1513 = vpop.f32.mrb[0].mxu0
      %v1514 = vadd.f32 0.0, %v1513
      %v1515 = vpop.f32.mrb[0].mxu0
      %1516 = vmatprep.mubr.bf16.mxu0 0
      %1517 = vmatmul.mubr.bf16.gmra.mrb[0].mxu0 %v1310
      %v1518 = vpop.f32.mrb[0].mxu0
      %v1519 = vadd.f32 0.0, %v1518
      %v1520 = vpop.f32.mrb[0].mxu0
      %v1521 = vpop.f32.mrb[0].mxu0
      %v1522 = vadd.f32 0.0, %v1521
      %v1523 = vpop.f32.mrb[0].mxu0
      %1524 = vmatprep.mubr.bf16.mxu0 0
      %1525 = vmatmul.mubr.bf16.gmra.mrb[0].mxu0 %v1313
      %v1526 = vpop.f32.mrb[0].mxu0
      %v1527 = vadd.f32 0.0, %v1526
      %v1528 = vpop.f32.mrb[0].mxu0
      %v1529 = vpop.f32.mrb[0].mxu0
      %v1530 = vadd.f32 0.0, %v1529
      %v1531 = vpop.f32.mrb[0].mxu0
      %1532 = vmatprep.mubr.bf16.mxu0 0
      %1533 = vmatmul.mubr.bf16.gmra.mrb[0].mxu0 %v1316
      %v1534 = vpop.f32.mrb[0].mxu0
      %v1535 = vadd.f32 0.0, %v1534
      %v1536 = vpop.f32.mrb[0].mxu0
      %v1537 = vpop.f32.mrb[0].mxu0
      %v1538 = vadd.f32 0.0, %v1537
      %v1539 = vpop.f32.mrb[0].mxu0
      %1540 = vmatprep.mubr.bf16.mxu0 0
      %1541 = vmatmul.mubr.bf16.gmra.mrb[0].mxu0 %v1319
      %v1542 = vpop.f32.mrb[0].mxu0
      %v1543 = vadd.f32 0.0, %v1542
      %v1544 = vpop.f32.mrb[0].mxu0
      %v1545 = vpop.f32.mrb[0].mxu0
      %v1546 = vadd.f32 0.0, %v1545
      %v1547 = vpop.f32.mrb[0].mxu0
      %1548 = vdwg.mxu0
      %v1549 = vadd.f32 %v1004, %v1359
      %v1550 = vadd.f32 %v1007, %v1362
      %v1551 = vadd.f32 %v1012, %v1367
      %v1552 = vadd.f32 %v1015, %v1370
      %v1553 = vadd.f32 %v1020, %v1375
      %v1554 = vadd.f32 %v1023, %v1378
      %v1555 = vadd.f32 %v1028, %v1383
      %v1556 = vadd.f32 %v1031, %v1386
      %v1557 = vadd.f32 %v1036, %v1391
      %v1558 = vadd.f32 %v1039, %v1394
      %v1559 = vadd.f32 %v1044, %v1399
      %v1560 = vadd.f32 %v1047, %v1402
      %v1561 = vadd.f32 %v1052, %v1407
      %v1562 = vadd.f32 %v1055, %v1410
      %v1563 = vadd.f32 %v1060, %v1415
      %v1564 = vadd.f32 %v1063, %v1418
      %v1565 = vadd.f32 %v1068, %v1423
      %v1566 = vadd.f32 %v1071, %v1426
      %v1567 = vadd.f32 %v1076, %v1431
      %v1568 = vadd.f32 %v1079, %v1434
      %v1569 = vadd.f32 %v1084, %v1439
      %v1570 = vadd.f32 %v1087, %v1442
      %v1571 = vadd.f32 %v1092, %v1447
      %v1572 = vadd.f32 %v1095, %v1450
      %v1573 = vadd.f32 %v1100, %v1455
      %v1574 = vadd.f32 %v1103, %v1458
      %v1575 = vadd.f32 %v1108, %v1463
      %v1576 = vadd.f32 %v1111, %v1466
      %v1577 = vadd.f32 %v1116, %v1471
      %v1578 = vadd.f32 %v1119, %v1474
      %v1579 = vadd.f32 %v1124, %v1479
      %v1580 = vadd.f32 %v1127, %v1482
      %v1581 = vadd.f32 %v1132, %v1487
      %v1582 = vadd.f32 %v1135, %v1490
      %v1583 = vadd.f32 %v1140, %v1495
      %v1584 = vadd.f32 %v1143, %v1498
      %v1585 = vadd.f32 %v1148, %v1503
      %v1586 = vadd.f32 %v1151, %v1506
      %v1587 = vadd.f32 %v1156, %v1511
      %v1588 = vadd.f32 %v1159, %v1514
      %v1589 = vadd.f32 %v1164, %v1519
      %v1590 = vadd.f32 %v1167, %v1522
      %v1591 = vadd.f32 %v1172, %v1527
      %v1592 = vadd.f32 %v1175, %v1530
      %v1593 = vadd.f32 %v1180, %v1535
      %v1594 = vadd.f32 %v1183, %v1538
      %v1595 = vadd.f32 %v1188, %v1543
      %v1596 = vadd.f32 %v1191, %v1546
      %s1597 = scalar_lea.vmem %s220, 12
      %v1598 = vld [vmem:[%s1597] sm:$0xf]
      %v1601 = vunpack.c.l.b16 %v286
      %v1602 = vunpack.c.l.b16 %v287
      %v1603 = vpack.c.b16 %v349, %v348
      %v1604 = vpack.c.b16 %v351, %v350
      %v1605 = vpack.c.b16 %v353, %v352
      %v1606 = vpack.c.b16 %v355, %v354
      %v1607 = vpack.c.b16 %v357, %v356
      %v1608 = vpack.c.b16 %v359, %v358
      %v1609 = vpack.c.b16 %v361, %v360
      %v1610 = vpack.c.b16 %v363, %v362
      %v1611 = vpack.c.b16 %v365, %v364
      %v1612 = vpack.c.b16 %v367, %v366
      %v1613 = vpack.c.b16 %v369, %v368
      %v1614 = vpack.c.b16 %v371, %v370
      %v1615 = vpack.c.b16 %v373, %v372
      %v1616 = vpack.c.b16 %v375, %v374
      %v1617 = vpack.c.b16 %v377, %v376
      %v1618 = vpack.c.b16 %v379, %v378
      %v1619 = vpack.c.b16 %v381, %v380
      %v1620 = vpack.c.b16 %v383, %v382
      %v1621 = vpack.c.b16 %v385, %v384
      %v1622 = vpack.c.b16 %v387, %v386
      %v1623 = vpack.c.b16 %v389, %v388
      %v1624 = vpack.c.b16 %v391, %v390
      %v1625 = vpack.c.b16 %v393, %v392
      %v1626 = vpack.c.b16 %v1602, %v1601
      %v1628 = vsel %vm616, %v1603, 0
      %v1631 = vsel %vm616, %v1604, 0
      %v1634 = vsel %vm616, %v1605, 0
      %v1637 = vsel %vm616, %v1606, 0
      %v1640 = vsel %vm616, %v1607, 0
      %v1643 = vsel %vm616, %v1608, 0
      %v1646 = vsel %vm616, %v1609, 0
      %v1649 = vsel %vm616, %v1610, 0
      %v1652 = vsel %vm616, %v1611, 0
      %v1655 = vsel %vm616, %v1612, 0
      %v1658 = vsel %vm616, %v1613, 0
      %v1661 = vsel %vm616, %v1614, 0
      %v1664 = vsel %vm616, %v1615, 0
      %v1667 = vsel %vm616, %v1616, 0
      %v1670 = vsel %vm616, %v1617, 0
      %v1673 = vsel %vm616, %v1618, 0
      %v1676 = vsel %vm616, %v1619, 0
      %v1679 = vsel %vm616, %v1620, 0
      %v1682 = vsel %vm616, %v1621, 0
      %v1685 = vsel %vm616, %v1622, 0
      %v1688 = vsel %vm616, %v1623, 0
      %v1691 = vsel %vm616, %v1624, 0
      %v1694 = vsel %vm616, %v1625, 0
      %v1697 = vsel %vm616, %v1626, 0
      %v1700 = vsel %vm689, %v1598, 0
      %1702 = vmatprep.subr.bf16.mxu0 0
      %1703 = vmatpush1.bf16.msra.mxu0 %v1700
      %1704 = vmatprep.subr.bf16.mxu0 0
      %1705 = vmatpush1.bf16.msra.mxu0 0
      %1706 = vmatprep.subr.bf16.mxu0 0
      %1707 = vmatpush1.bf16.msra.mxu0 0
      %1708 = vmatprep.subr.bf16.mxu0 0
      %1709 = vmatpush1.bf16.msra.mxu0 0
      %1710 = vmatprep.subr.bf16.mxu0 0
      %1711 = vmatpush1.bf16.msra.mxu0 0
      %1712 = vmatprep.subr.bf16.mxu0 0
      %1713 = vmatpush1.bf16.msra.mxu0 0
      %1714 = vmatprep.subr.bf16.mxu0 0
      %1715 = vmatpush1.bf16.msra.mxu0 0
      %1716 = vmatprep.subr.bf16.mxu0 0
      %1717 = vmatpush1.bf16.msra.mxu0 0
      %1718 = vmatprep.subr.bf16.mxu0 0
      %1719 = vmatpush1.bf16.msra.mxu0 0
      %1720 = vmatprep.subr.bf16.mxu0 0
      %1721 = vmatpush1.bf16.msra.mxu0 0
      %1722 = vmatprep.subr.bf16.mxu0 0
      %1723 = vmatpush1.bf16.msra.mxu0 0
      %1724 = vmatprep.subr.bf16.mxu0 0
      %1725 = vmatpush1.bf16.msra.mxu0 0
      %1726 = vmatprep.subr.bf16.mxu0 0
      %1727 = vmatpush1.bf16.msra.mxu0 0
      %1728 = vmatprep.subr.bf16.mxu0 0
      %1729 = vmatpush1.bf16.msra.mxu0 0
      %1730 = vmatprep.subr.bf16.mxu0 0
      %1731 = vmatpush1.bf16.msra.mxu0 0
      %1732 = vmatprep.subr.bf16.mxu0 0
      %1733 = vmatpush1.bf16.msra.mxu0 0
      %1734 = vmatprep.mubr.bf16.mxu0 0
      %1735 = vmatmul.mubr.bf16.gmra.mrb[0].mxu0 %v1628
      %v1736 = vpop.f32.mrb[0].mxu0
      %v1737 = vadd.f32 0.0, %v1736
      %v1738 = vpop.f32.mrb[0].mxu0
      %v1739 = vpop.f32.mrb[0].mxu0
      %v1740 = vadd.f32 0.0, %v1739
      %v1741 = vpop.f32.mrb[0].mxu0
      %1742 = vmatprep.mubr.bf16.mxu0 0
      %1743 = vmatmul.mubr.bf16.gmra.mrb[0].mxu0 %v1631
      %v1744 = vpop.f32.mrb[0].mxu0
      %v1745 = vadd.f32 0.0, %v1744
      %v1746 = vpop.f32.mrb[0].mxu0
      %v1747 = vpop.f32.mrb[0].mxu0
      %v1748 = vadd.f32 0.0, %v1747
      %v1749 = vpop.f32.mrb[0].mxu0
      %1750 = vmatprep.mubr.bf16.mxu0 0
      %1751 = vmatmul.mubr.bf16.gmra.mrb[0].mxu0 %v1634
      %v1752 = vpop.f32.mrb[0].mxu0
      %v1753 = vadd.f32 0.0, %v1752
      %v1754 = vpop.f32.mrb[0].mxu0
      %v1755 = vpop.f32.mrb[0].mxu0
      %v1756 = vadd.f32 0.0, %v1755
      %v1757 = vpop.f32.mrb[0].mxu0
      %1758 = vmatprep.mubr.bf16.mxu0 0
      %1759 = vmatmul.mubr.bf16.gmra.mrb[0].mxu0 %v1637
      %v1760 = vpop.f32.mrb[0].mxu0
      %v1761 = vadd.f32 0.0, %v1760
      %v1762 = vpop.f32.mrb[0].mxu0
      %v1763 = vpop.f32.mrb[0].mxu0
      %v1764 = vadd.f32 0.0, %v1763
      %v1765 = vpop.f32.mrb[0].mxu0
      %1766 = vmatprep.mubr.bf16.mxu0 0
      %1767 = vmatmul.mubr.bf16.gmra.mrb[0].mxu0 %v1640
      %v1768 = vpop.f32.mrb[0].mxu0
      %v1769 = vadd.f32 0.0, %v1768
      %v1770 = vpop.f32.mrb[0].mxu0
      %v1771 = vpop.f32.mrb[0].mxu0
      %v1772 = vadd.f32 0.0, %v1771
      %v1773 = vpop.f32.mrb[0].mxu0
      %1774 = vmatprep.mubr.bf16.mxu0 0
      %1775 = vmatmul.mubr.bf16.gmra.mrb[0].mxu0 %v1643
      %v1776 = vpop.f32.mrb[0].mxu0
      %v1777 = vadd.f32 0.0, %v1776
      %v1778 = vpop.f32.mrb[0].mxu0
      %v1779 = vpop.f32.mrb[0].mxu0
      %v1780 = vadd.f32 0.0, %v1779
      %v1781 = vpop.f32.mrb[0].mxu0
      %1782 = vmatprep.mubr.bf16.mxu0 0
      %1783 = vmatmul.mubr.bf16.gmra.mrb[0].mxu0 %v1646
      %v1784 = vpop.f32.mrb[0].mxu0
      %v1785 = vadd.f32 0.0, %v1784
      %v1786 = vpop.f32.mrb[0].mxu0
      %v1787 = vpop.f32.mrb[0].mxu0
      %v1788 = vadd.f32 0.0, %v1787
      %v1789 = vpop.f32.mrb[0].mxu0
      %1790 = vmatprep.mubr.bf16.mxu0 0
      %1791 = vmatmul.mubr.bf16.gmra.mrb[0].mxu0 %v1649
      %v1792 = vpop.f32.mrb[0].mxu0
      %v1793 = vadd.f32 0.0, %v1792
      %v1794 = vpop.f32.mrb[0].mxu0
      %v1795 = vpop.f32.mrb[0].mxu0
      %v1796 = vadd.f32 0.0, %v1795
      %v1797 = vpop.f32.mrb[0].mxu0
      %1798 = vmatprep.mubr.bf16.mxu0 0
      %1799 = vmatmul.mubr.bf16.gmra.mrb[0].mxu0 %v1652
      %v1800 = vpop.f32.mrb[0].mxu0
      %v1801 = vadd.f32 0.0, %v1800
      %v1802 = vpop.f32.mrb[0].mxu0
      %v1803 = vpop.f32.mrb[0].mxu0
      %v1804 = vadd.f32 0.0, %v1803
      %v1805 = vpop.f32.mrb[0].mxu0
      %1806 = vmatprep.mubr.bf16.mxu0 0
      %1807 = vmatmul.mubr.bf16.gmra.mrb[0].mxu0 %v1655
      %v1808 = vpop.f32.mrb[0].mxu0
      %v1809 = vadd.f32 0.0, %v1808
      %v1810 = vpop.f32.mrb[0].mxu0
      %v1811 = vpop.f32.mrb[0].mxu0
      %v1812 = vadd.f32 0.0, %v1811
      %v1813 = vpop.f32.mrb[0].mxu0
      %1814 = vmatprep.mubr.bf16.mxu0 0
      %1815 = vmatmul.mubr.bf16.gmra.mrb[0].mxu0 %v1658
      %v1816 = vpop.f32.mrb[0].mxu0
      %v1817 = vadd.f32 0.0, %v1816
      %v1818 = vpop.f32.mrb[0].mxu0
      %v1819 = vpop.f32.mrb[0].mxu0
      %v1820 = vadd.f32 0.0, %v1819
      %v1821 = vpop.f32.mrb[0].mxu0
      %1822 = vmatprep.mubr.bf16.mxu0 0
      %1823 = vmatmul.mubr.bf16.gmra.mrb[0].mxu0 %v1661
      %v1824 = vpop.f32.mrb[0].mxu0
      %v1825 = vadd.f32 0.0, %v1824
      %v1826 = vpop.f32.mrb[0].mxu0
      %v1827 = vpop.f32.mrb[0].mxu0
      %v1828 = vadd.f32 0.0, %v1827
      %v1829 = vpop.f32.mrb[0].mxu0
      %1830 = vmatprep.mubr.bf16.mxu0 0
      %1831 = vmatmul.mubr.bf16.gmra.mrb[0].mxu0 %v1664
      %v1832 = vpop.f32.mrb[0].mxu0
      %v1833 = vadd.f32 0.0, %v1832
      %v1834 = vpop.f32.mrb[0].mxu0
      %v1835 = vpop.f32.mrb[0].mxu0
      %v1836 = vadd.f32 0.0, %v1835
      %v1837 = vpop.f32.mrb[0].mxu0
      %1838 = vmatprep.mubr.bf16.mxu0 0
      %1839 = vmatmul.mubr.bf16.gmra.mrb[0].mxu0 %v1667
      %v1840 = vpop.f32.mrb[0].mxu0
      %v1841 = vadd.f32 0.0, %v1840
      %v1842 = vpop.f32.mrb[0].mxu0
      %v1843 = vpop.f32.mrb[0].mxu0
      %v1844 = vadd.f32 0.0, %v1843
      %v1845 = vpop.f32.mrb[0].mxu0
      %1846 = vmatprep.mubr.bf16.mxu0 0
      %1847 = vmatmul.mubr.bf16.gmra.mrb[0].mxu0 %v1670
      %v1848 = vpop.f32.mrb[0].mxu0
      %v1849 = vadd.f32 0.0, %v1848
      %v1850 = vpop.f32.mrb[0].mxu0
      %v1851 = vpop.f32.mrb[0].mxu0
      %v1852 = vadd.f32 0.0, %v1851
      %v1853 = vpop.f32.mrb[0].mxu0
      %1854 = vmatprep.mubr.bf16.mxu0 0
      %1855 = vmatmul.mubr.bf16.gmra.mrb[0].mxu0 %v1673
      %v1856 = vpop.f32.mrb[0].mxu0
      %v1857 = vadd.f32 0.0, %v1856
      %v1858 = vpop.f32.mrb[0].mxu0
      %v1859 = vpop.f32.mrb[0].mxu0
      %v1860 = vadd.f32 0.0, %v1859
      %v1861 = vpop.f32.mrb[0].mxu0
      %1862 = vmatprep.mubr.bf16.mxu0 0
      %1863 = vmatmul.mubr.bf16.gmra.mrb[0].mxu0 %v1676
      %v1864 = vpop.f32.mrb[0].mxu0
      %v1865 = vadd.f32 0.0, %v1864
      %v1866 = vpop.f32.mrb[0].mxu0
      %v1867 = vpop.f32.mrb[0].mxu0
      %v1868 = vadd.f32 0.0, %v1867
      %v1869 = vpop.f32.mrb[0].mxu0
      %1870 = vmatprep.mubr.bf16.mxu0 0
      %1871 = vmatmul.mubr.bf16.gmra.mrb[0].mxu0 %v1679
      %v1872 = vpop.f32.mrb[0].mxu0
      %v1873 = vadd.f32 0.0, %v1872
      %v1874 = vpop.f32.mrb[0].mxu0
      %v1875 = vpop.f32.mrb[0].mxu0
      %v1876 = vadd.f32 0.0, %v1875
      %v1877 = vpop.f32.mrb[0].mxu0
      %1878 = vmatprep.mubr.bf16.mxu0 0
      %1879 = vmatmul.mubr.bf16.gmra.mrb[0].mxu0 %v1682
      %v1880 = vpop.f32.mrb[0].mxu0
      %v1881 = vadd.f32 0.0, %v1880
      %v1882 = vpop.f32.mrb[0].mxu0
      %v1883 = vpop.f32.mrb[0].mxu0
      %v1884 = vadd.f32 0.0, %v1883
      %v1885 = vpop.f32.mrb[0].mxu0
      %1886 = vmatprep.mubr.bf16.mxu0 0
      %1887 = vmatmul.mubr.bf16.gmra.mrb[0].mxu0 %v1685
      %v1888 = vpop.f32.mrb[0].mxu0
      %v1889 = vadd.f32 0.0, %v1888
      %v1890 = vpop.f32.mrb[0].mxu0
      %v1891 = vpop.f32.mrb[0].mxu0
      %v1892 = vadd.f32 0.0, %v1891
      %v1893 = vpop.f32.mrb[0].mxu0
      %1894 = vmatprep.mubr.bf16.mxu0 0
      %1895 = vmatmul.mubr.bf16.gmra.mrb[0].mxu0 %v1688
      %v1896 = vpop.f32.mrb[0].mxu0
      %v1897 = vadd.f32 0.0, %v1896
      %v1898 = vpop.f32.mrb[0].mxu0
      %v1899 = vpop.f32.mrb[0].mxu0
      %v1900 = vadd.f32 0.0, %v1899
      %v1901 = vpop.f32.mrb[0].mxu0
      %1902 = vmatprep.mubr.bf16.mxu0 0
      %1903 = vmatmul.mubr.bf16.gmra.mrb[0].mxu0 %v1691
      %v1904 = vpop.f32.mrb[0].mxu0
      %v1905 = vadd.f32 0.0, %v1904
      %v1906 = vpop.f32.mrb[0].mxu0
      %v1907 = vpop.f32.mrb[0].mxu0
      %v1908 = vadd.f32 0.0, %v1907
      %v1909 = vpop.f32.mrb[0].mxu0
      %1910 = vmatprep.mubr.bf16.mxu0 0
      %1911 = vmatmul.mubr.bf16.gmra.mrb[0].mxu0 %v1694
      %v1912 = vpop.f32.mrb[0].mxu0
      %v1913 = vadd.f32 0.0, %v1912
      %v1914 = vpop.f32.mrb[0].mxu0
      %v1915 = vpop.f32.mrb[0].mxu0
      %v1916 = vadd.f32 0.0, %v1915
      %v1917 = vpop.f32.mrb[0].mxu0
      %1918 = vmatprep.mubr.bf16.mxu0 0
      %1919 = vmatmul.mubr.bf16.gmra.mrb[0].mxu0 %v1697
      %v1920 = vpop.f32.mrb[0].mxu0
      %v1921 = vadd.f32 0.0, %v1920
      %v1922 = vpop.f32.mrb[0].mxu0
      %v1923 = vpop.f32.mrb[0].mxu0
      %v1924 = vadd.f32 0.0, %v1923
      %v1925 = vpop.f32.mrb[0].mxu0
      %1926 = vdwg.mxu0
      %v1927 = vadd.f32 %v1549, %v1737
      %v1928 = vadd.f32 %v1550, %v1740
      %v1929 = vadd.f32 %v1551, %v1745
      %v1930 = vadd.f32 %v1552, %v1748
      %v1931 = vadd.f32 %v1553, %v1753
      %v1932 = vadd.f32 %v1554, %v1756
      %v1933 = vadd.f32 %v1555, %v1761
      %v1934 = vadd.f32 %v1556, %v1764
      %v1935 = vadd.f32 %v1557, %v1769
      %v1936 = vadd.f32 %v1558, %v1772
      %v1937 = vadd.f32 %v1559, %v1777
      %v1938 = vadd.f32 %v1560, %v1780
      %v1939 = vadd.f32 %v1561, %v1785
      %v1940 = vadd.f32 %v1562, %v1788
      %v1941 = vadd.f32 %v1563, %v1793
      %v1942 = vadd.f32 %v1564, %v1796
      %v1943 = vadd.f32 %v1565, %v1801
      %v1944 = vadd.f32 %v1566, %v1804
      %v1945 = vadd.f32 %v1567, %v1809
      %v1946 = vadd.f32 %v1568, %v1812
      %v1947 = vadd.f32 %v1569, %v1817
      %v1948 = vadd.f32 %v1570, %v1820
      %v1949 = vadd.f32 %v1571, %v1825
      %v1950 = vadd.f32 %v1572, %v1828
      %v1951 = vadd.f32 %v1573, %v1833
      %v1952 = vadd.f32 %v1574, %v1836
      %v1953 = vadd.f32 %v1575, %v1841
      %v1954 = vadd.f32 %v1576, %v1844
      %v1955 = vadd.f32 %v1577, %v1849
      %v1956 = vadd.f32 %v1578, %v1852
      %v1957 = vadd.f32 %v1579, %v1857
      %v1958 = vadd.f32 %v1580, %v1860
      %v1959 = vadd.f32 %v1581, %v1865
      %v1960 = vadd.f32 %v1582, %v1868
      %v1961 = vadd.f32 %v1583, %v1873
      %v1962 = vadd.f32 %v1584, %v1876
      %v1963 = vadd.f32 %v1585, %v1881
      %v1964 = vadd.f32 %v1586, %v1884
      %v1965 = vadd.f32 %v1587, %v1889
      %v1966 = vadd.f32 %v1588, %v1892
      %v1967 = vadd.f32 %v1589, %v1897
      %v1968 = vadd.f32 %v1590, %v1900
      %v1969 = vadd.f32 %v1591, %v1905
      %v1970 = vadd.f32 %v1592, %v1908
      %v1971 = vadd.f32 %v1593, %v1913
      %v1972 = vadd.f32 %v1594, %v1916
      %v1973 = vadd.f32 %v1595, %v1921
      %v1974 = vadd.f32 %v1596, %v1924
      %s1975 = scalar_lea.vmem %s220, 16
      %v1976 = vld [vmem:[%s1975] sm:$0xf]
      %v1978 = vunpack.c.l.b16 %v288
      %v1979 = vpack.c.b16 %v1978, %v1978
      %v1980 = vshrl.u32 %v1603, 16
      %v1982 = vshll.u32 %v1603, 16
      %v1984 = vrot.slane %v1982, 1
      %v1985 = vor.u32 %v1980, %v1984
      %v1986 = vshll.u32 %v1604, 16
      %v1988 = vrot.slane %v1986, 1
      %v1989 = vsel %vm419, %v1985, %v1988
      %v1990 = vshrl.u32 %v1604, 16
      %v1992 = vor.u32 %v1990, %v1988
      %v1993 = vshll.u32 %v1605, 16
      %v1995 = vrot.slane %v1993, 1
      %v1996 = vsel %vm419, %v1992, %v1995
      %v1997 = vshrl.u32 %v1605, 16
      %v1999 = vor.u32 %v1997, %v1995
      %v2000 = vshll.u32 %v1606, 16
      %v2002 = vrot.slane %v2000, 1
      %v2003 = vsel %vm419, %v1999, %v2002
      %v2004 = vshrl.u32 %v1606, 16
      %v2006 = vor.u32 %v2004, %v2002
      %v2007 = vshll.u32 %v1607, 16
      %v2009 = vrot.slane %v2007, 1
      %v2010 = vsel %vm419, %v2006, %v2009
      %v2011 = vshrl.u32 %v1607, 16
      %v2013 = vor.u32 %v2011, %v2009
      %v2014 = vshll.u32 %v1608, 16
      %v2016 = vrot.slane %v2014, 1
      %v2017 = vsel %vm419, %v2013, %v2016
      %v2018 = vshrl.u32 %v1608, 16
      %v2020 = vor.u32 %v2018, %v2016
      %v2021 = vshll.u32 %v1609, 16
      %v2023 = vrot.slane %v2021, 1
      %v2024 = vsel %vm419, %v2020, %v2023
      %v2025 = vshrl.u32 %v1609, 16
      %v2027 = vor.u32 %v2025, %v2023
      %v2028 = vshll.u32 %v1610, 16
      %v2030 = vrot.slane %v2028, 1
      %v2031 = vsel %vm419, %v2027, %v2030
      %v2032 = vshrl.u32 %v1610, 16
      %v2034 = vor.u32 %v2032, %v2030
      %v2035 = vshll.u32 %v1611, 16
      %v2037 = vrot.slane %v2035, 1
      %v2038 = vsel %vm419, %v2034, %v2037
      %v2039 = vshrl.u32 %v1611, 16
      %v2041 = vor.u32 %v2039, %v2037
      %v2042 = vshll.u32 %v1612, 16
      %v2044 = vrot.slane %v2042, 1
      %v2045 = vsel %vm419, %v2041, %v2044
      %v2046 = vshrl.u32 %v1612, 16
      %v2048 = vor.u32 %v2046, %v2044
      %v2049 = vshll.u32 %v1613, 16
      %v2051 = vrot.slane %v2049, 1
      %v2052 = vsel %vm419, %v2048, %v2051
      %v2053 = vshrl.u32 %v1613, 16
      %v2055 = vor.u32 %v2053, %v2051
      %v2056 = vshll.u32 %v1614, 16
      %v2058 = vrot.slane %v2056, 1
      %v2059 = vsel %vm419, %v2055, %v2058
      %v2060 = vshrl.u32 %v1614, 16
      %v2062 = vor.u32 %v2060, %v2058
      %v2063 = vshll.u32 %v1615, 16
      %v2065 = vrot.slane %v2063, 1
      %v2066 = vsel %vm419, %v2062, %v2065
      %v2067 = vshrl.u32 %v1615, 16
      %v2069 = vor.u32 %v2067, %v2065
      %v2070 = vshll.u32 %v1616, 16
      %v2072 = vrot.slane %v2070, 1
      %v2073 = vsel %vm419, %v2069, %v2072
      %v2074 = vshrl.u32 %v1616, 16
      %v2076 = vor.u32 %v2074, %v2072
      %v2077 = vshll.u32 %v1617, 16
      %v2079 = vrot.slane %v2077, 1
      %v2080 = vsel %vm419, %v2076, %v2079
      %v2081 = vshrl.u32 %v1617, 16
      %v2083 = vor.u32 %v2081, %v2079
      %v2084 = vshll.u32 %v1618, 16
      %v2086 = vrot.slane %v2084, 1
      %v2087 = vsel %vm419, %v2083, %v2086
      %v2088 = vshrl.u32 %v1618, 16
      %v2090 = vor.u32 %v2088, %v2086
      %v2091 = vshll.u32 %v1619, 16
      %v2093 = vrot.slane %v2091, 1
      %v2094 = vsel %vm419, %v2090, %v2093
      %v2095 = vshrl.u32 %v1619, 16
      %v2097 = vor.u32 %v2095, %v2093
      %v2098 = vshll.u32 %v1620, 16
      %v2100 = vrot.slane %v2098, 1
      %v2101 = vsel %vm419, %v2097, %v2100
      %v2102 = vshrl.u32 %v1620, 16
      %v2104 = vor.u32 %v2102, %v2100
      %v2105 = vshll.u32 %v1621, 16
      %v2107 = vrot.slane %v2105, 1
      %v2108 = vsel %vm419, %v2104, %v2107
      %v2109 = vshrl.u32 %v1621, 16
      %v2111 = vor.u32 %v2109, %v2107
      %v2112 = vshll.u32 %v1622, 16
      %v2114 = vrot.slane %v2112, 1
      %v2115 = vsel %vm419, %v2111, %v2114
      %v2116 = vshrl.u32 %v1622, 16
      %v2118 = vor.u32 %v2116, %v2114
      %v2119 = vshll.u32 %v1623, 16
      %v2121 = vrot.slane %v2119, 1
      %v2122 = vsel %vm419, %v2118, %v2121
      %v2123 = vshrl.u32 %v1623, 16
      %v2125 = vor.u32 %v2123, %v2121
      %v2126 = vshll.u32 %v1624, 16
      %v2128 = vrot.slane %v2126, 1
      %v2129 = vsel %vm419, %v2125, %v2128
      %v2130 = vshrl.u32 %v1624, 16
      %v2132 = vor.u32 %v2130, %v2128
      %v2133 = vshll.u32 %v1625, 16
      %v2135 = vrot.slane %v2133, 1
      %v2136 = vsel %vm419, %v2132, %v2135
      %v2137 = vshrl.u32 %v1625, 16
      %v2139 = vor.u32 %v2137, %v2135
      %v2140 = vshll.u32 %v1626, 16
      %v2142 = vrot.slane %v2140, 1
      %v2143 = vsel %vm419, %v2139, %v2142
      %v2144 = vshrl.u32 %v1626, 16
      %v2146 = vor.u32 %v2144, %v2142
      %v2148 = vshll.u32 %v1979, 16
      %v2150 = vrot.slane %v2148, 1
      %v2151 = vsel %vm419, %v2146, %v2150
      %v2153 = vsel %vm616, %v1989, 0
      %v2156 = vsel %vm616, %v1996, 0
      %v2159 = vsel %vm616, %v2003, 0
      %v2162 = vsel %vm616, %v2010, 0
      %v2165 = vsel %vm616, %v2017, 0
      %v2168 = vsel %vm616, %v2024, 0
      %v2171 = vsel %vm616, %v2031, 0
      %v2174 = vsel %vm616, %v2038, 0
      %v2177 = vsel %vm616, %v2045, 0
      %v2180 = vsel %vm616, %v2052, 0
      %v2183 = vsel %vm616, %v2059, 0
      %v2186 = vsel %vm616, %v2066, 0
      %v2189 = vsel %vm616, %v2073, 0
      %v2192 = vsel %vm616, %v2080, 0
      %v2195 = vsel %vm616, %v2087, 0
      %v2198 = vsel %vm616, %v2094, 0
      %v2201 = vsel %vm616, %v2101, 0
      %v2204 = vsel %vm616, %v2108, 0
      %v2207 = vsel %vm616, %v2115, 0
      %v2210 = vsel %vm616, %v2122, 0
      %v2213 = vsel %vm616, %v2129, 0
      %v2216 = vsel %vm616, %v2136, 0
      %v2219 = vsel %vm616, %v2143, 0
      %v2222 = vsel %vm616, %v2151, 0
      %v2225 = vsel %vm689, %v1976, 0
      %2227 = vmatprep.subr.bf16.mxu0 0
      %2228 = vmatpush1.bf16.msra.mxu0 %v2225
      %2229 = vmatprep.subr.bf16.mxu0 0
      %2230 = vmatpush1.bf16.msra.mxu0 0
      %2231 = vmatprep.subr.bf16.mxu0 0
      %2232 = vmatpush1.bf16.msra.mxu0 0
      %2233 = vmatprep.subr.bf16.mxu0 0
      %2234 = vmatpush1.bf16.msra.mxu0 0
      %2235 = vmatprep.subr.bf16.mxu0 0
      %2236 = vmatpush1.bf16.msra.mxu0 0
      %2237 = vmatprep.subr.bf16.mxu0 0
      %2238 = vmatpush1.bf16.msra.mxu0 0
      %2239 = vmatprep.subr.bf16.mxu0 0
      %2240 = vmatpush1.bf16.msra.mxu0 0
      %2241 = vmatprep.subr.bf16.mxu0 0
      %2242 = vmatpush1.bf16.msra.mxu0 0
      %2243 = vmatprep.subr.bf16.mxu0 0
      %2244 = vmatpush1.bf16.msra.mxu0 0
      %2245 = vmatprep.subr.bf16.mxu0 0
      %2246 = vmatpush1.bf16.msra.mxu0 0
      %2247 = vmatprep.subr.bf16.mxu0 0
      %2248 = vmatpush1.bf16.msra.mxu0 0
      %2249 = vmatprep.subr.bf16.mxu0 0
      %2250 = vmatpush1.bf16.msra.mxu0 0
      %2251 = vmatprep.subr.bf16.mxu0 0
      %2252 = vmatpush1.bf16.msra.mxu0 0
      %2253 = vmatprep.subr.bf16.mxu0 0
      %2254 = vmatpush1.bf16.msra.mxu0 0
      %2255 = vmatprep.subr.bf16.mxu0 0
      %2256 = vmatpush1.bf16.msra.mxu0 0
      %2257 = vmatprep.subr.bf16.mxu0 0
      %2258 = vmatpush1.bf16.msra.mxu0 0
      %2259 = vmatprep.mubr.bf16.mxu0 0
      %2260 = vmatmul.mubr.bf16.gmra.mrb[0].mxu0 %v2153
      %v2261 = vpop.f32.mrb[0].mxu0
      %v2262 = vadd.f32 0.0, %v2261
      %v2263 = vpop.f32.mrb[0].mxu0
      %v2264 = vpop.f32.mrb[0].mxu0
      %v2265 = vadd.f32 0.0, %v2264
      %v2266 = vpop.f32.mrb[0].mxu0
      %2267 = vmatprep.mubr.bf16.mxu0 0
      %2268 = vmatmul.mubr.bf16.gmra.mrb[0].mxu0 %v2156
      %v2269 = vpop.f32.mrb[0].mxu0
      %v2270 = vadd.f32 0.0, %v2269
      %v2271 = vpop.f32.mrb[0].mxu0
      %v2272 = vpop.f32.mrb[0].mxu0
      %v2273 = vadd.f32 0.0, %v2272
      %v2274 = vpop.f32.mrb[0].mxu0
      %2275 = vmatprep.mubr.bf16.mxu0 0
      %2276 = vmatmul.mubr.bf16.gmra.mrb[0].mxu0 %v2159
      %v2277 = vpop.f32.mrb[0].mxu0
      %v2278 = vadd.f32 0.0, %v2277
      %v2279 = vpop.f32.mrb[0].mxu0
      %v2280 = vpop.f32.mrb[0].mxu0
      %v2281 = vadd.f32 0.0, %v2280
      %v2282 = vpop.f32.mrb[0].mxu0
      %2283 = vmatprep.mubr.bf16.mxu0 0
      %2284 = vmatmul.mubr.bf16.gmra.mrb[0].mxu0 %v2162
      %v2285 = vpop.f32.mrb[0].mxu0
      %v2286 = vadd.f32 0.0, %v2285
      %v2287 = vpop.f32.mrb[0].mxu0
      %v2288 = vpop.f32.mrb[0].mxu0
      %v2289 = vadd.f32 0.0, %v2288
      %v2290 = vpop.f32.mrb[0].mxu0
      %2291 = vmatprep.mubr.bf16.mxu0 0
      %2292 = vmatmul.mubr.bf16.gmra.mrb[0].mxu0 %v2165
      %v2293 = vpop.f32.mrb[0].mxu0
      %v2294 = vadd.f32 0.0, %v2293
      %v2295 = vpop.f32.mrb[0].mxu0
      %v2296 = vpop.f32.mrb[0].mxu0
      %v2297 = vadd.f32 0.0, %v2296
      %v2298 = vpop.f32.mrb[0].mxu0
      %2299 = vmatprep.mubr.bf16.mxu0 0
      %2300 = vmatmul.mubr.bf16.gmra.mrb[0].mxu0 %v2168
      %v2301 = vpop.f32.mrb[0].mxu0
      %v2302 = vadd.f32 0.0, %v2301
      %v2303 = vpop.f32.mrb[0].mxu0
      %v2304 = vpop.f32.mrb[0].mxu0
      %v2305 = vadd.f32 0.0, %v2304
      %v2306 = vpop.f32.mrb[0].mxu0
      %2307 = vmatprep.mubr.bf16.mxu0 0
      %2308 = vmatmul.mubr.bf16.gmra.mrb[0].mxu0 %v2171
      %v2309 = vpop.f32.mrb[0].mxu0
      %v2310 = vadd.f32 0.0, %v2309
      %v2311 = vpop.f32.mrb[0].mxu0
      %v2312 = vpop.f32.mrb[0].mxu0
      %v2313 = vadd.f32 0.0, %v2312
      %v2314 = vpop.f32.mrb[0].mxu0
      %2315 = vmatprep.mubr.bf16.mxu0 0
      %2316 = vmatmul.mubr.bf16.gmra.mrb[0].mxu0 %v2174
      %v2317 = vpop.f32.mrb[0].mxu0
      %v2318 = vadd.f32 0.0, %v2317
      %v2319 = vpop.f32.mrb[0].mxu0
      %v2320 = vpop.f32.mrb[0].mxu0
      %v2321 = vadd.f32 0.0, %v2320
      %v2322 = vpop.f32.mrb[0].mxu0
      %2323 = vmatprep.mubr.bf16.mxu0 0
      %2324 = vmatmul.mubr.bf16.gmra.mrb[0].mxu0 %v2177
      %v2325 = vpop.f32.mrb[0].mxu0
      %v2326 = vadd.f32 0.0, %v2325
      %v2327 = vpop.f32.mrb[0].mxu0
      %v2328 = vpop.f32.mrb[0].mxu0
      %v2329 = vadd.f32 0.0, %v2328
      %v2330 = vpop.f32.mrb[0].mxu0
      %2331 = vmatprep.mubr.bf16.mxu0 0
      %2332 = vmatmul.mubr.bf16.gmra.mrb[0].mxu0 %v2180
      %v2333 = vpop.f32.mrb[0].mxu0
      %v2334 = vadd.f32 0.0, %v2333
      %v2335 = vpop.f32.mrb[0].mxu0
      %v2336 = vpop.f32.mrb[0].mxu0
      %v2337 = vadd.f32 0.0, %v2336
      %v2338 = vpop.f32.mrb[0].mxu0
      %2339 = vmatprep.mubr.bf16.mxu0 0
      %2340 = vmatmul.mubr.bf16.gmra.mrb[0].mxu0 %v2183
      %v2341 = vpop.f32.mrb[0].mxu0
      %v2342 = vadd.f32 0.0, %v2341
      %v2343 = vpop.f32.mrb[0].mxu0
      %v2344 = vpop.f32.mrb[0].mxu0
      %v2345 = vadd.f32 0.0, %v2344
      %v2346 = vpop.f32.mrb[0].mxu0
      %2347 = vmatprep.mubr.bf16.mxu0 0
      %2348 = vmatmul.mubr.bf16.gmra.mrb[0].mxu0 %v2186
      %v2349 = vpop.f32.mrb[0].mxu0
      %v2350 = vadd.f32 0.0, %v2349
      %v2351 = vpop.f32.mrb[0].mxu0
      %v2352 = vpop.f32.mrb[0].mxu0
      %v2353 = vadd.f32 0.0, %v2352
      %v2354 = vpop.f32.mrb[0].mxu0
      %2355 = vmatprep.mubr.bf16.mxu0 0
      %2356 = vmatmul.mubr.bf16.gmra.mrb[0].mxu0 %v2189
      %v2357 = vpop.f32.mrb[0].mxu0
      %v2358 = vadd.f32 0.0, %v2357
      %v2359 = vpop.f32.mrb[0].mxu0
      %v2360 = vpop.f32.mrb[0].mxu0
      %v2361 = vadd.f32 0.0, %v2360
      %v2362 = vpop.f32.mrb[0].mxu0
      %2363 = vmatprep.mubr.bf16.mxu0 0
      %2364 = vmatmul.mubr.bf16.gmra.mrb[0].mxu0 %v2192
      %v2365 = vpop.f32.mrb[0].mxu0
      %v2366 = vadd.f32 0.0, %v2365
      %v2367 = vpop.f32.mrb[0].mxu0
      %v2368 = vpop.f32.mrb[0].mxu0
      %v2369 = vadd.f32 0.0, %v2368
      %v2370 = vpop.f32.mrb[0].mxu0
      %2371 = vmatprep.mubr.bf16.mxu0 0
      %2372 = vmatmul.mubr.bf16.gmra.mrb[0].mxu0 %v2195
      %v2373 = vpop.f32.mrb[0].mxu0
      %v2374 = vadd.f32 0.0, %v2373
      %v2375 = vpop.f32.mrb[0].mxu0
      %v2376 = vpop.f32.mrb[0].mxu0
      %v2377 = vadd.f32 0.0, %v2376
      %v2378 = vpop.f32.mrb[0].mxu0
      %2379 = vmatprep.mubr.bf16.mxu0 0
      %2380 = vmatmul.mubr.bf16.gmra.mrb[0].mxu0 %v2198
      %v2381 = vpop.f32.mrb[0].mxu0
      %v2382 = vadd.f32 0.0, %v2381
      %v2383 = vpop.f32.mrb[0].mxu0
      %v2384 = vpop.f32.mrb[0].mxu0
      %v2385 = vadd.f32 0.0, %v2384
      %v2386 = vpop.f32.mrb[0].mxu0
      %2387 = vmatprep.mubr.bf16.mxu0 0
      %2388 = vmatmul.mubr.bf16.gmra.mrb[0].mxu0 %v2201
      %v2389 = vpop.f32.mrb[0].mxu0
      %v2390 = vadd.f32 0.0, %v2389
      %v2391 = vpop.f32.mrb[0].mxu0
      %v2392 = vpop.f32.mrb[0].mxu0
      %v2393 = vadd.f32 0.0, %v2392
      %v2394 = vpop.f32.mrb[0].mxu0
      %2395 = vmatprep.mubr.bf16.mxu0 0
      %2396 = vmatmul.mubr.bf16.gmra.mrb[0].mxu0 %v2204
      %v2397 = vpop.f32.mrb[0].mxu0
      %v2398 = vadd.f32 0.0, %v2397
      %v2399 = vpop.f32.mrb[0].mxu0
      %v2400 = vpop.f32.mrb[0].mxu0
      %v2401 = vadd.f32 0.0, %v2400
      %v2402 = vpop.f32.mrb[0].mxu0
      %2403 = vmatprep.mubr.bf16.mxu0 0
      %2404 = vmatmul.mubr.bf16.gmra.mrb[0].mxu0 %v2207
      %v2405 = vpop.f32.mrb[0].mxu0
      %v2406 = vadd.f32 0.0, %v2405
      %v2407 = vpop.f32.mrb[0].mxu0
      %v2408 = vpop.f32.mrb[0].mxu0
      %v2409 = vadd.f32 0.0, %v2408
      %v2410 = vpop.f32.mrb[0].mxu0
      %2411 = vmatprep.mubr.bf16.mxu0 0
      %2412 = vmatmul.mubr.bf16.gmra.mrb[0].mxu0 %v2210
      %v2413 = vpop.f32.mrb[0].mxu0
      %v2414 = vadd.f32 0.0, %v2413
      %v2415 = vpop.f32.mrb[0].mxu0
      %v2416 = vpop.f32.mrb[0].mxu0
      %v2417 = vadd.f32 0.0, %v2416
      %v2418 = vpop.f32.mrb[0].mxu0
      %2419 = vmatprep.mubr.bf16.mxu0 0
      %2420 = vmatmul.mubr.bf16.gmra.mrb[0].mxu0 %v2213
      %v2421 = vpop.f32.mrb[0].mxu0
      %v2422 = vadd.f32 0.0, %v2421
      %v2423 = vpop.f32.mrb[0].mxu0
      %v2424 = vpop.f32.mrb[0].mxu0
      %v2425 = vadd.f32 0.0, %v2424
      %v2426 = vpop.f32.mrb[0].mxu0
      %2427 = vmatprep.mubr.bf16.mxu0 0
      %2428 = vmatmul.mubr.bf16.gmra.mrb[0].mxu0 %v2216
      %v2429 = vpop.f32.mrb[0].mxu0
      %v2430 = vadd.f32 0.0, %v2429
      %v2431 = vpop.f32.mrb[0].mxu0
      %v2432 = vpop.f32.mrb[0].mxu0
      %v2433 = vadd.f32 0.0, %v2432
      %v2434 = vpop.f32.mrb[0].mxu0
      %2435 = vmatprep.mubr.bf16.mxu0 0
      %2436 = vmatmul.mubr.bf16.gmra.mrb[0].mxu0 %v2219
      %v2437 = vpop.f32.mrb[0].mxu0
      %v2438 = vadd.f32 0.0, %v2437
      %v2439 = vpop.f32.mrb[0].mxu0
      %v2440 = vpop.f32.mrb[0].mxu0
      %v2441 = vadd.f32 0.0, %v2440
      %v2442 = vpop.f32.mrb[0].mxu0
      %2443 = vmatprep.mubr.bf16.mxu0 0
      %2444 = vmatmul.mubr.bf16.gmra.mrb[0].mxu0 %v2222
      %v2445 = vpop.f32.mrb[0].mxu0
      %v2446 = vadd.f32 0.0, %v2445
      %v2447 = vpop.f32.mrb[0].mxu0
      %v2448 = vpop.f32.mrb[0].mxu0
      %v2449 = vadd.f32 0.0, %v2448
      %v2450 = vpop.f32.mrb[0].mxu0
      %2451 = vdwg.mxu0
      %v2452 = vadd.f32 %v1927, %v2262
      %v2453 = vadd.f32 %v1928, %v2265
      %v2454 = vadd.f32 %v1929, %v2270
      %v2455 = vadd.f32 %v1930, %v2273
      %v2456 = vadd.f32 %v1931, %v2278
      %v2457 = vadd.f32 %v1932, %v2281
      %v2458 = vadd.f32 %v1933, %v2286
      %v2459 = vadd.f32 %v1934, %v2289
      %v2460 = vadd.f32 %v1935, %v2294
      %v2461 = vadd.f32 %v1936, %v2297
      %v2462 = vadd.f32 %v1937, %v2302
      %v2463 = vadd.f32 %v1938, %v2305
      %v2464 = vadd.f32 %v1939, %v2310
      %v2465 = vadd.f32 %v1940, %v2313
      %v2466 = vadd.f32 %v1941, %v2318
      %v2467 = vadd.f32 %v1942, %v2321
      %v2468 = vadd.f32 %v1943, %v2326
      %v2469 = vadd.f32 %v1944, %v2329
      %v2470 = vadd.f32 %v1945, %v2334
      %v2471 = vadd.f32 %v1946, %v2337
      %v2472 = vadd.f32 %v1947, %v2342
      %v2473 = vadd.f32 %v1948, %v2345
      %v2474 = vadd.f32 %v1949, %v2350
      %v2475 = vadd.f32 %v1950, %v2353
      %v2476 = vadd.f32 %v1951, %v2358
      %v2477 = vadd.f32 %v1952, %v2361
      %v2478 = vadd.f32 %v1953, %v2366
      %v2479 = vadd.f32 %v1954, %v2369
      %v2480 = vadd.f32 %v1955, %v2374
      %v2481 = vadd.f32 %v1956, %v2377
      %v2482 = vadd.f32 %v1957, %v2382
      %v2483 = vadd.f32 %v1958, %v2385
      %v2484 = vadd.f32 %v1959, %v2390
      %v2485 = vadd.f32 %v1960, %v2393
      %v2486 = vadd.f32 %v1961, %v2398
      %v2487 = vadd.f32 %v1962, %v2401
      %v2488 = vadd.f32 %v1963, %v2406
      %v2489 = vadd.f32 %v1964, %v2409
      %v2490 = vadd.f32 %v1965, %v2414
      %v2491 = vadd.f32 %v1966, %v2417
      %v2492 = vadd.f32 %v1967, %v2422
      %v2493 = vadd.f32 %v1968, %v2425
      %v2494 = vadd.f32 %v1969, %v2430
      %v2495 = vadd.f32 %v1970, %v2433
      %v2496 = vadd.f32 %v1971, %v2438
      %v2497 = vadd.f32 %v1972, %v2441
      %v2498 = vadd.f32 %v1973, %v2446
      %v2499 = vadd.f32 %v1974, %v2449
      %s2500 = scalar_lea.vmem %s220, 20
      %v2501 = vld [vmem:[%s2500] sm:$0xf]
      %v2502 = vrot.slane %v1603, 1
      %v2503 = vrot.slane %v1604, 1
      %v2504 = vsel %vm1199, %v2502, %v2503
      %v2505 = vrot.slane %v1605, 1
      %v2506 = vsel %vm1199, %v2503, %v2505
      %v2507 = vrot.slane %v1606, 1
      %v2508 = vsel %vm1199, %v2505, %v2507
      %v2509 = vrot.slane %v1607, 1
      %v2510 = vsel %vm1199, %v2507, %v2509
      %v2511 = vrot.slane %v1608, 1
      %v2512 = vsel %vm1199, %v2509, %v2511
      %v2513 = vrot.slane %v1609, 1
      %v2514 = vsel %vm1199, %v2511, %v2513
      %v2515 = vrot.slane %v1610, 1
      %v2516 = vsel %vm1199, %v2513, %v2515
      %v2517 = vrot.slane %v1611, 1
      %v2518 = vsel %vm1199, %v2515, %v2517
      %v2519 = vrot.slane %v1612, 1
      %v2520 = vsel %vm1199, %v2517, %v2519
      %v2521 = vrot.slane %v1613, 1
      %v2522 = vsel %vm1199, %v2519, %v2521
      %v2523 = vrot.slane %v1614, 1
      %v2524 = vsel %vm1199, %v2521, %v2523
      %v2525 = vrot.slane %v1615, 1
      %v2526 = vsel %vm1199, %v2523, %v2525
      %v2527 = vrot.slane %v1616, 1
      %v2528 = vsel %vm1199, %v2525, %v2527
      %v2529 = vrot.slane %v1617, 1
      %v2530 = vsel %vm1199, %v2527, %v2529
      %v2531 = vrot.slane %v1618, 1
      %v2532 = vsel %vm1199, %v2529, %v2531
      %v2533 = vrot.slane %v1619, 1
      %v2534 = vsel %vm1199, %v2531, %v2533
      %v2535 = vrot.slane %v1620, 1
      %v2536 = vsel %vm1199, %v2533, %v2535
      %v2537 = vrot.slane %v1621, 1
      %v2538 = vsel %vm1199, %v2535, %v2537
      %v2539 = vrot.slane %v1622, 1
      %v2540 = vsel %vm1199, %v2537, %v2539
      %v2541 = vrot.slane %v1623, 1
      %v2542 = vsel %vm1199, %v2539, %v2541
      %v2543 = vrot.slane %v1624, 1
      %v2544 = vsel %vm1199, %v2541, %v2543
      %v2545 = vrot.slane %v1625, 1
      %v2546 = vsel %vm1199, %v2543, %v2545
      %v2547 = vrot.slane %v1626, 1
      %v2548 = vsel %vm1199, %v2545, %v2547
      %v2549 = vrot.slane %v1979, 1
      %v2550 = vsel %vm1199, %v2547, %v2549
      %v2552 = vsel %vm616, %v2504, 0
      %v2555 = vsel %vm616, %v2506, 0
      %v2558 = vsel %vm616, %v2508, 0
      %v2561 = vsel %vm616, %v2510, 0
      %v2564 = vsel %vm616, %v2512, 0
      %v2567 = vsel %vm616, %v2514, 0
      %v2570 = vsel %vm616, %v2516, 0
      %v2573 = vsel %vm616, %v2518, 0
      %v2576 = vsel %vm616, %v2520, 0
      %v2579 = vsel %vm616, %v2522, 0
      %v2582 = vsel %vm616, %v2524, 0
      %v2585 = vsel %vm616, %v2526, 0
      %v2588 = vsel %vm616, %v2528, 0
      %v2591 = vsel %vm616, %v2530, 0
      %v2594 = vsel %vm616, %v2532, 0
      %v2597 = vsel %vm616, %v2534, 0
      %v2600 = vsel %vm616, %v2536, 0
      %v2603 = vsel %vm616, %v2538, 0
      %v2606 = vsel %vm616, %v2540, 0
      %v2609 = vsel %vm616, %v2542, 0
      %v2612 = vsel %vm616, %v2544, 0
      %v2615 = vsel %vm616, %v2546, 0
      %v2618 = vsel %vm616, %v2548, 0
      %v2621 = vsel %vm616, %v2550, 0
      %v2624 = vsel %vm689, %v2501, 0
      %2626 = vmatprep.subr.bf16.mxu0 0
      %2627 = vmatpush1.bf16.msra.mxu0 %v2624
      %2628 = vmatprep.subr.bf16.mxu0 0
      %2629 = vmatpush1.bf16.msra.mxu0 0
      %2630 = vmatprep.subr.bf16.mxu0 0
      %2631 = vmatpush1.bf16.msra.mxu0 0
      %2632 = vmatprep.subr.bf16.mxu0 0
      %2633 = vmatpush1.bf16.msra.mxu0 0
      %2634 = vmatprep.subr.bf16.mxu0 0
      %2635 = vmatpush1.bf16.msra.mxu0 0
      %2636 = vmatprep.subr.bf16.mxu0 0
      %2637 = vmatpush1.bf16.msra.mxu0 0
      %2638 = vmatprep.subr.bf16.mxu0 0
      %2639 = vmatpush1.bf16.msra.mxu0 0
      %2640 = vmatprep.subr.bf16.mxu0 0
      %2641 = vmatpush1.bf16.msra.mxu0 0
      %2642 = vmatprep.subr.bf16.mxu0 0
      %2643 = vmatpush1.bf16.msra.mxu0 0
      %2644 = vmatprep.subr.bf16.mxu0 0
      %2645 = vmatpush1.bf16.msra.mxu0 0
      %2646 = vmatprep.subr.bf16.mxu0 0
      %2647 = vmatpush1.bf16.msra.mxu0 0
      %2648 = vmatprep.subr.bf16.mxu0 0
      %2649 = vmatpush1.bf16.msra.mxu0 0
      %2650 = vmatprep.subr.bf16.mxu0 0
      %2651 = vmatpush1.bf16.msra.mxu0 0
      %2652 = vmatprep.subr.bf16.mxu0 0
      %2653 = vmatpush1.bf16.msra.mxu0 0
      %2654 = vmatprep.subr.bf16.mxu0 0
      %2655 = vmatpush1.bf16.msra.mxu0 0
      %2656 = vmatprep.subr.bf16.mxu0 0
      %2657 = vmatpush1.bf16.msra.mxu0 0
      %2658 = vmatprep.mubr.bf16.mxu0 0
      %2659 = vmatmul.mubr.bf16.gmra.mrb[0].mxu0 %v2552
      %v2660 = vpop.f32.mrb[0].mxu0
      %v2661 = vadd.f32 0.0, %v2660
      %v2662 = vpop.f32.mrb[0].mxu0
      %v2663 = vpop.f32.mrb[0].mxu0
      %v2664 = vadd.f32 0.0, %v2663
      %v2665 = vpop.f32.mrb[0].mxu0
      %2666 = vmatprep.mubr.bf16.mxu0 0
      %2667 = vmatmul.mubr.bf16.gmra.mrb[0].mxu0 %v2555
      %v2668 = vpop.f32.mrb[0].mxu0
      %v2669 = vadd.f32 0.0, %v2668
      %v2670 = vpop.f32.mrb[0].mxu0
      %v2671 = vpop.f32.mrb[0].mxu0
      %v2672 = vadd.f32 0.0, %v2671
      %v2673 = vpop.f32.mrb[0].mxu0
      %2674 = vmatprep.mubr.bf16.mxu0 0
      %2675 = vmatmul.mubr.bf16.gmra.mrb[0].mxu0 %v2558
      %v2676 = vpop.f32.mrb[0].mxu0
      %v2677 = vadd.f32 0.0, %v2676
      %v2678 = vpop.f32.mrb[0].mxu0
      %v2679 = vpop.f32.mrb[0].mxu0
      %v2680 = vadd.f32 0.0, %v2679
      %v2681 = vpop.f32.mrb[0].mxu0
      %2682 = vmatprep.mubr.bf16.mxu0 0
      %2683 = vmatmul.mubr.bf16.gmra.mrb[0].mxu0 %v2561
      %v2684 = vpop.f32.mrb[0].mxu0
      %v2685 = vadd.f32 0.0, %v2684
      %v2686 = vpop.f32.mrb[0].mxu0
      %v2687 = vpop.f32.mrb[0].mxu0
      %v2688 = vadd.f32 0.0, %v2687
      %v2689 = vpop.f32.mrb[0].mxu0
      %2690 = vmatprep.mubr.bf16.mxu0 0
      %2691 = vmatmul.mubr.bf16.gmra.mrb[0].mxu0 %v2564
      %v2692 = vpop.f32.mrb[0].mxu0
      %v2693 = vadd.f32 0.0, %v2692
      %v2694 = vpop.f32.mrb[0].mxu0
      %v2695 = vpop.f32.mrb[0].mxu0
      %v2696 = vadd.f32 0.0, %v2695
      %v2697 = vpop.f32.mrb[0].mxu0
      %2698 = vmatprep.mubr.bf16.mxu0 0
      %2699 = vmatmul.mubr.bf16.gmra.mrb[0].mxu0 %v2567
      %v2700 = vpop.f32.mrb[0].mxu0
      %v2701 = vadd.f32 0.0, %v2700
      %v2702 = vpop.f32.mrb[0].mxu0
      %v2703 = vpop.f32.mrb[0].mxu0
      %v2704 = vadd.f32 0.0, %v2703
      %v2705 = vpop.f32.mrb[0].mxu0
      %2706 = vmatprep.mubr.bf16.mxu0 0
      %2707 = vmatmul.mubr.bf16.gmra.mrb[0].mxu0 %v2570
      %v2708 = vpop.f32.mrb[0].mxu0
      %v2709 = vadd.f32 0.0, %v2708
      %v2710 = vpop.f32.mrb[0].mxu0
      %v2711 = vpop.f32.mrb[0].mxu0
      %v2712 = vadd.f32 0.0, %v2711
      %v2713 = vpop.f32.mrb[0].mxu0
      %2714 = vmatprep.mubr.bf16.mxu0 0
      %2715 = vmatmul.mubr.bf16.gmra.mrb[0].mxu0 %v2573
      %v2716 = vpop.f32.mrb[0].mxu0
      %v2717 = vadd.f32 0.0, %v2716
      %v2718 = vpop.f32.mrb[0].mxu0
      %v2719 = vpop.f32.mrb[0].mxu0
      %v2720 = vadd.f32 0.0, %v2719
      %v2721 = vpop.f32.mrb[0].mxu0
      %2722 = vmatprep.mubr.bf16.mxu0 0
      %2723 = vmatmul.mubr.bf16.gmra.mrb[0].mxu0 %v2576
      %v2724 = vpop.f32.mrb[0].mxu0
      %v2725 = vadd.f32 0.0, %v2724
      %v2726 = vpop.f32.mrb[0].mxu0
      %v2727 = vpop.f32.mrb[0].mxu0
      %v2728 = vadd.f32 0.0, %v2727
      %v2729 = vpop.f32.mrb[0].mxu0
      %2730 = vmatprep.mubr.bf16.mxu0 0
      %2731 = vmatmul.mubr.bf16.gmra.mrb[0].mxu0 %v2579
      %v2732 = vpop.f32.mrb[0].mxu0
      %v2733 = vadd.f32 0.0, %v2732
      %v2734 = vpop.f32.mrb[0].mxu0
      %v2735 = vpop.f32.mrb[0].mxu0
      %v2736 = vadd.f32 0.0, %v2735
      %v2737 = vpop.f32.mrb[0].mxu0
      %2738 = vmatprep.mubr.bf16.mxu0 0
      %2739 = vmatmul.mubr.bf16.gmra.mrb[0].mxu0 %v2582
      %v2740 = vpop.f32.mrb[0].mxu0
      %v2741 = vadd.f32 0.0, %v2740
      %v2742 = vpop.f32.mrb[0].mxu0
      %v2743 = vpop.f32.mrb[0].mxu0
      %v2744 = vadd.f32 0.0, %v2743
      %v2745 = vpop.f32.mrb[0].mxu0
      %2746 = vmatprep.mubr.bf16.mxu0 0
      %2747 = vmatmul.mubr.bf16.gmra.mrb[0].mxu0 %v2585
      %v2748 = vpop.f32.mrb[0].mxu0
      %v2749 = vadd.f32 0.0, %v2748
      %v2750 = vpop.f32.mrb[0].mxu0
      %v2751 = vpop.f32.mrb[0].mxu0
      %v2752 = vadd.f32 0.0, %v2751
      %v2753 = vpop.f32.mrb[0].mxu0
      %2754 = vmatprep.mubr.bf16.mxu0 0
      %2755 = vmatmul.mubr.bf16.gmra.mrb[0].mxu0 %v2588
      %v2756 = vpop.f32.mrb[0].mxu0
      %v2757 = vadd.f32 0.0, %v2756
      %v2758 = vpop.f32.mrb[0].mxu0
      %v2759 = vpop.f32.mrb[0].mxu0
      %v2760 = vadd.f32 0.0, %v2759
      %v2761 = vpop.f32.mrb[0].mxu0
      %2762 = vmatprep.mubr.bf16.mxu0 0
      %2763 = vmatmul.mubr.bf16.gmra.mrb[0].mxu0 %v2591
      %v2764 = vpop.f32.mrb[0].mxu0
      %v2765 = vadd.f32 0.0, %v2764
      %v2766 = vpop.f32.mrb[0].mxu0
      %v2767 = vpop.f32.mrb[0].mxu0
      %v2768 = vadd.f32 0.0, %v2767
      %v2769 = vpop.f32.mrb[0].mxu0
      %2770 = vmatprep.mubr.bf16.mxu0 0
      %2771 = vmatmul.mubr.bf16.gmra.mrb[0].mxu0 %v2594
      %v2772 = vpop.f32.mrb[0].mxu0
      %v2773 = vadd.f32 0.0, %v2772
      %v2774 = vpop.f32.mrb[0].mxu0
      %v2775 = vpop.f32.mrb[0].mxu0
      %v2776 = vadd.f32 0.0, %v2775
      %v2777 = vpop.f32.mrb[0].mxu0
      %2778 = vmatprep.mubr.bf16.mxu0 0
      %2779 = vmatmul.mubr.bf16.gmra.mrb[0].mxu0 %v2597
      %v2780 = vpop.f32.mrb[0].mxu0
      %v2781 = vadd.f32 0.0, %v2780
      %v2782 = vpop.f32.mrb[0].mxu0
      %v2783 = vpop.f32.mrb[0].mxu0
      %v2784 = vadd.f32 0.0, %v2783
      %v2785 = vpop.f32.mrb[0].mxu0
      %2786 = vmatprep.mubr.bf16.mxu0 0
      %2787 = vmatmul.mubr.bf16.gmra.mrb[0].mxu0 %v2600
      %v2788 = vpop.f32.mrb[0].mxu0
      %v2789 = vadd.f32 0.0, %v2788
      %v2790 = vpop.f32.mrb[0].mxu0
      %v2791 = vpop.f32.mrb[0].mxu0
      %v2792 = vadd.f32 0.0, %v2791
      %v2793 = vpop.f32.mrb[0].mxu0
      %2794 = vmatprep.mubr.bf16.mxu0 0
      %2795 = vmatmul.mubr.bf16.gmra.mrb[0].mxu0 %v2603
      %v2796 = vpop.f32.mrb[0].mxu0
      %v2797 = vadd.f32 0.0, %v2796
      %v2798 = vpop.f32.mrb[0].mxu0
      %v2799 = vpop.f32.mrb[0].mxu0
      %v2800 = vadd.f32 0.0, %v2799
      %v2801 = vpop.f32.mrb[0].mxu0
      %2802 = vmatprep.mubr.bf16.mxu0 0
      %2803 = vmatmul.mubr.bf16.gmra.mrb[0].mxu0 %v2606
      %v2804 = vpop.f32.mrb[0].mxu0
      %v2805 = vadd.f32 0.0, %v2804
      %v2806 = vpop.f32.mrb[0].mxu0
      %v2807 = vpop.f32.mrb[0].mxu0
      %v2808 = vadd.f32 0.0, %v2807
      %v2809 = vpop.f32.mrb[0].mxu0
      %2810 = vmatprep.mubr.bf16.mxu0 0
      %2811 = vmatmul.mubr.bf16.gmra.mrb[0].mxu0 %v2609
      %v2812 = vpop.f32.mrb[0].mxu0
      %v2813 = vadd.f32 0.0, %v2812
      %v2814 = vpop.f32.mrb[0].mxu0
      %v2815 = vpop.f32.mrb[0].mxu0
      %v2816 = vadd.f32 0.0, %v2815
      %v2817 = vpop.f32.mrb[0].mxu0
      %2818 = vmatprep.mubr.bf16.mxu0 0
      %2819 = vmatmul.mubr.bf16.gmra.mrb[0].mxu0 %v2612
      %v2820 = vpop.f32.mrb[0].mxu0
      %v2821 = vadd.f32 0.0, %v2820
      %v2822 = vpop.f32.mrb[0].mxu0
      %v2823 = vpop.f32.mrb[0].mxu0
      %v2824 = vadd.f32 0.0, %v2823
      %v2825 = vpop.f32.mrb[0].mxu0
      %2826 = vmatprep.mubr.bf16.mxu0 0
      %2827 = vmatmul.mubr.bf16.gmra.mrb[0].mxu0 %v2615
      %v2828 = vpop.f32.mrb[0].mxu0
      %v2829 = vadd.f32 0.0, %v2828
      %v2830 = vpop.f32.mrb[0].mxu0
      %v2831 = vpop.f32.mrb[0].mxu0
      %v2832 = vadd.f32 0.0, %v2831
      %v2833 = vpop.f32.mrb[0].mxu0
      %2834 = vmatprep.mubr.bf16.mxu0 0
      %2835 = vmatmul.mubr.bf16.gmra.mrb[0].mxu0 %v2618
      %v2836 = vpop.f32.mrb[0].mxu0
      %v2837 = vadd.f32 0.0, %v2836
      %v2838 = vpop.f32.mrb[0].mxu0
      %v2839 = vpop.f32.mrb[0].mxu0
      %v2840 = vadd.f32 0.0, %v2839
      %v2841 = vpop.f32.mrb[0].mxu0
      %2842 = vmatprep.mubr.bf16.mxu0 0
      %2843 = vmatmul.mubr.bf16.gmra.mrb[0].mxu0 %v2621
      %v2844 = vpop.f32.mrb[0].mxu0
      %v2845 = vadd.f32 0.0, %v2844
      %v2846 = vpop.f32.mrb[0].mxu0
      %v2847 = vpop.f32.mrb[0].mxu0
      %v2848 = vadd.f32 0.0, %v2847
      %v2849 = vpop.f32.mrb[0].mxu0
      %2850 = vdwg.mxu0
      %v2851 = vadd.f32 %v2452, %v2661
      %v2852 = vadd.f32 %v2453, %v2664
      %v2853 = vadd.f32 %v2454, %v2669
      %v2854 = vadd.f32 %v2455, %v2672
      %v2855 = vadd.f32 %v2456, %v2677
      %v2856 = vadd.f32 %v2457, %v2680
      %v2857 = vadd.f32 %v2458, %v2685
      %v2858 = vadd.f32 %v2459, %v2688
      %v2859 = vadd.f32 %v2460, %v2693
      %v2860 = vadd.f32 %v2461, %v2696
      %v2861 = vadd.f32 %v2462, %v2701
      %v2862 = vadd.f32 %v2463, %v2704
      %v2863 = vadd.f32 %v2464, %v2709
      %v2864 = vadd.f32 %v2465, %v2712
      %v2865 = vadd.f32 %v2466, %v2717
      %v2866 = vadd.f32 %v2467, %v2720
      %v2867 = vadd.f32 %v2468, %v2725
      %v2868 = vadd.f32 %v2469, %v2728
      %v2869 = vadd.f32 %v2470, %v2733
      %v2870 = vadd.f32 %v2471, %v2736
      %v2871 = vadd.f32 %v2472, %v2741
      %v2872 = vadd.f32 %v2473, %v2744
      %v2873 = vadd.f32 %v2474, %v2749
      %v2874 = vadd.f32 %v2475, %v2752
      %v2875 = vadd.f32 %v2476, %v2757
      %v2876 = vadd.f32 %v2477, %v2760
      %v2877 = vadd.f32 %v2478, %v2765
      %v2878 = vadd.f32 %v2479, %v2768
      %v2879 = vadd.f32 %v2480, %v2773
      %v2880 = vadd.f32 %v2481, %v2776
      %v2881 = vadd.f32 %v2482, %v2781
      %v2882 = vadd.f32 %v2483, %v2784
      %v2883 = vadd.f32 %v2484, %v2789
      %v2884 = vadd.f32 %v2485, %v2792
      %v2885 = vadd.f32 %v2486, %v2797
      %v2886 = vadd.f32 %v2487, %v2800
      %v2887 = vadd.f32 %v2488, %v2805
      %v2888 = vadd.f32 %v2489, %v2808
      %v2889 = vadd.f32 %v2490, %v2813
      %v2890 = vadd.f32 %v2491, %v2816
      %v2891 = vadd.f32 %v2492, %v2821
      %v2892 = vadd.f32 %v2493, %v2824
      %v2893 = vadd.f32 %v2494, %v2829
      %v2894 = vadd.f32 %v2495, %v2832
      %v2895 = vadd.f32 %v2496, %v2837
      %v2896 = vadd.f32 %v2497, %v2840
      %v2897 = vadd.f32 %v2498, %v2845
      %v2898 = vadd.f32 %v2499, %v2848
      %s2899 = scalar_lea.vmem %s220, 24
      %v2900 = vld [vmem:[%s2899] sm:$0xf]
      %v2903 = vunpack.c.l.b16 %v289
      %v2904 = vunpack.c.l.b16 %v290
      %v2905 = vpack.c.b16 %v1601, %v393
      %v2906 = vpack.c.b16 %v1978, %v1602
      %v2907 = vpack.c.b16 %v2904, %v2903
      %v2909 = vsel %vm616, %v2905, 0
      %v2912 = vsel %vm616, %v2906, 0
      %v2915 = vsel %vm616, %v2907, 0
      %v2918 = vsel %vm689, %v2900, 0
      %2920 = vmatprep.subr.bf16.mxu0 0
      %2921 = vmatpush1.bf16.msra.mxu0 %v2918
      %2922 = vmatprep.subr.bf16.mxu0 0
      %2923 = vmatpush1.bf16.msra.mxu0 0
      %2924 = vmatprep.subr.bf16.mxu0 0
      %2925 = vmatpush1.bf16.msra.mxu0 0
      %2926 = vmatprep.subr.bf16.mxu0 0
      %2927 = vmatpush1.bf16.msra.mxu0 0
      %2928 = vmatprep.subr.bf16.mxu0 0
      %2929 = vmatpush1.bf16.msra.mxu0 0
      %2930 = vmatprep.subr.bf16.mxu0 0
      %2931 = vmatpush1.bf16.msra.mxu0 0
      %2932 = vmatprep.subr.bf16.mxu0 0
      %2933 = vmatpush1.bf16.msra.mxu0 0
      %2934 = vmatprep.subr.bf16.mxu0 0
      %2935 = vmatpush1.bf16.msra.mxu0 0
      %2936 = vmatprep.subr.bf16.mxu0 0
      %2937 = vmatpush1.bf16.msra.mxu0 0
      %2938 = vmatprep.subr.bf16.mxu0 0
      %2939 = vmatpush1.bf16.msra.mxu0 0
      %2940 = vmatprep.subr.bf16.mxu0 0
      %2941 = vmatpush1.bf16.msra.mxu0 0
      %2942 = vmatprep.subr.bf16.mxu0 0
      %2943 = vmatpush1.bf16.msra.mxu0 0
      %2944 = vmatprep.subr.bf16.mxu0 0
      %2945 = vmatpush1.bf16.msra.mxu0 0
      %2946 = vmatprep.subr.bf16.mxu0 0
      %2947 = vmatpush1.bf16.msra.mxu0 0
      %2948 = vmatprep.subr.bf16.mxu0 0
      %2949 = vmatpush1.bf16.msra.mxu0 0
      %2950 = vmatprep.subr.bf16.mxu0 0
      %2951 = vmatpush1.bf16.msra.mxu0 0
      %2952 = vmatprep.mubr.bf16.mxu0 0
      %2953 = vmatmul.mubr.bf16.gmra.mrb[0].mxu0 %v924
      %v2954 = vpop.f32.mrb[0].mxu0
      %v2955 = vadd.f32 0.0, %v2954
      %v2956 = vpop.f32.mrb[0].mxu0
      %v2957 = vpop.f32.mrb[0].mxu0
      %v2958 = vadd.f32 0.0, %v2957
      %v2959 = vpop.f32.mrb[0].mxu0
      %2960 = vmatprep.mubr.bf16.mxu0 0
      %2961 = vmatmul.mubr.bf16.gmra.mrb[0].mxu0 %v926
      %v2962 = vpop.f32.mrb[0].mxu0
      %v2963 = vadd.f32 0.0, %v2962
      %v2964 = vpop.f32.mrb[0].mxu0
      %v2965 = vpop.f32.mrb[0].mxu0
      %v2966 = vadd.f32 0.0, %v2965
      %v2967 = vpop.f32.mrb[0].mxu0
      %2968 = vmatprep.mubr.bf16.mxu0 0
      %2969 = vmatmul.mubr.bf16.gmra.mrb[0].mxu0 %v928
      %v2970 = vpop.f32.mrb[0].mxu0
      %v2971 = vadd.f32 0.0, %v2970
      %v2972 = vpop.f32.mrb[0].mxu0
      %v2973 = vpop.f32.mrb[0].mxu0
      %v2974 = vadd.f32 0.0, %v2973
      %v2975 = vpop.f32.mrb[0].mxu0
      %2976 = vmatprep.mubr.bf16.mxu0 0
      %2977 = vmatmul.mubr.bf16.gmra.mrb[0].mxu0 %v930
      %v2978 = vpop.f32.mrb[0].mxu0
      %v2979 = vadd.f32 0.0, %v2978
      %v2980 = vpop.f32.mrb[0].mxu0
      %v2981 = vpop.f32.mrb[0].mxu0
      %v2982 = vadd.f32 0.0, %v2981
      %v2983 = vpop.f32.mrb[0].mxu0
      %2984 = vmatprep.mubr.bf16.mxu0 0
      %2985 = vmatmul.mubr.bf16.gmra.mrb[0].mxu0 %v932
      %v2986 = vpop.f32.mrb[0].mxu0
      %v2987 = vadd.f32 0.0, %v2986
      %v2988 = vpop.f32.mrb[0].mxu0
      %v2989 = vpop.f32.mrb[0].mxu0
      %v2990 = vadd.f32 0.0, %v2989
      %v2991 = vpop.f32.mrb[0].mxu0
      %2992 = vmatprep.mubr.bf16.mxu0 0
      %2993 = vmatmul.mubr.bf16.gmra.mrb[0].mxu0 %v934
      %v2994 = vpop.f32.mrb[0].mxu0
      %v2995 = vadd.f32 0.0, %v2994
      %v2996 = vpop.f32.mrb[0].mxu0
      %v2997 = vpop.f32.mrb[0].mxu0
      %v2998 = vadd.f32 0.0, %v2997
      %v2999 = vpop.f32.mrb[0].mxu0
      %3000 = vmatprep.mubr.bf16.mxu0 0
      %3001 = vmatmul.mubr.bf16.gmra.mrb[0].mxu0 %v936
      %v3002 = vpop.f32.mrb[0].mxu0
      %v3003 = vadd.f32 0.0, %v3002
      %v3004 = vpop.f32.mrb[0].mxu0
      %v3005 = vpop.f32.mrb[0].mxu0
      %v3006 = vadd.f32 0.0, %v3005
      %v3007 = vpop.f32.mrb[0].mxu0
      %3008 = vmatprep.mubr.bf16.mxu0 0
      %3009 = vmatmul.mubr.bf16.gmra.mrb[0].mxu0 %v938
      %v3010 = vpop.f32.mrb[0].mxu0
      %v3011 = vadd.f32 0.0, %v3010
      %v3012 = vpop.f32.mrb[0].mxu0
      %v3013 = vpop.f32.mrb[0].mxu0
      %v3014 = vadd.f32 0.0, %v3013
      %v3015 = vpop.f32.mrb[0].mxu0
      %3016 = vmatprep.mubr.bf16.mxu0 0
      %3017 = vmatmul.mubr.bf16.gmra.mrb[0].mxu0 %v940
      %v3018 = vpop.f32.mrb[0].mxu0
      %v3019 = vadd.f32 0.0, %v3018
      %v3020 = vpop.f32.mrb[0].mxu0
      %v3021 = vpop.f32.mrb[0].mxu0
      %v3022 = vadd.f32 0.0, %v3021
      %v3023 = vpop.f32.mrb[0].mxu0
      %3024 = vmatprep.mubr.bf16.mxu0 0
      %3025 = vmatmul.mubr.bf16.gmra.mrb[0].mxu0 %v942
      %v3026 = vpop.f32.mrb[0].mxu0
      %v3027 = vadd.f32 0.0, %v3026
      %v3028 = vpop.f32.mrb[0].mxu0
      %v3029 = vpop.f32.mrb[0].mxu0
      %v3030 = vadd.f32 0.0, %v3029
      %v3031 = vpop.f32.mrb[0].mxu0
      %3032 = vmatprep.mubr.bf16.mxu0 0
      %3033 = vmatmul.mubr.bf16.gmra.mrb[0].mxu0 %v944
      %v3034 = vpop.f32.mrb[0].mxu0
      %v3035 = vadd.f32 0.0, %v3034
      %v3036 = vpop.f32.mrb[0].mxu0
      %v3037 = vpop.f32.mrb[0].mxu0
      %v3038 = vadd.f32 0.0, %v3037
      %v3039 = vpop.f32.mrb[0].mxu0
      %3040 = vmatprep.mubr.bf16.mxu0 0
      %3041 = vmatmul.mubr.bf16.gmra.mrb[0].mxu0 %v946
      %v3042 = vpop.f32.mrb[0].mxu0
      %v3043 = vadd.f32 0.0, %v3042
      %v3044 = vpop.f32.mrb[0].mxu0
      %v3045 = vpop.f32.mrb[0].mxu0
      %v3046 = vadd.f32 0.0, %v3045
      %v3047 = vpop.f32.mrb[0].mxu0
      %3048 = vmatprep.mubr.bf16.mxu0 0
      %3049 = vmatmul.mubr.bf16.gmra.mrb[0].mxu0 %v948
      %v3050 = vpop.f32.mrb[0].mxu0
      %v3051 = vadd.f32 0.0, %v3050
      %v3052 = vpop.f32.mrb[0].mxu0
      %v3053 = vpop.f32.mrb[0].mxu0
      %v3054 = vadd.f32 0.0, %v3053
      %v3055 = vpop.f32.mrb[0].mxu0
      %3056 = vmatprep.mubr.bf16.mxu0 0
      %3057 = vmatmul.mubr.bf16.gmra.mrb[0].mxu0 %v950
      %v3058 = vpop.f32.mrb[0].mxu0
      %v3059 = vadd.f32 0.0, %v3058
      %v3060 = vpop.f32.mrb[0].mxu0
      %v3061 = vpop.f32.mrb[0].mxu0
      %v3062 = vadd.f32 0.0, %v3061
      %v3063 = vpop.f32.mrb[0].mxu0
      %3064 = vmatprep.mubr.bf16.mxu0 0
      %3065 = vmatmul.mubr.bf16.gmra.mrb[0].mxu0 %v952
      %v3066 = vpop.f32.mrb[0].mxu0
      %v3067 = vadd.f32 0.0, %v3066
      %v3068 = vpop.f32.mrb[0].mxu0
      %v3069 = vpop.f32.mrb[0].mxu0
      %v3070 = vadd.f32 0.0, %v3069
      %v3071 = vpop.f32.mrb[0].mxu0
      %3072 = vmatprep.mubr.bf16.mxu0 0
      %3073 = vmatmul.mubr.bf16.gmra.mrb[0].mxu0 %v954
      %v3074 = vpop.f32.mrb[0].mxu0
      %v3075 = vadd.f32 0.0, %v3074
      %v3076 = vpop.f32.mrb[0].mxu0
      %v3077 = vpop.f32.mrb[0].mxu0
      %v3078 = vadd.f32 0.0, %v3077
      %v3079 = vpop.f32.mrb[0].mxu0
      %3080 = vmatprep.mubr.bf16.mxu0 0
      %3081 = vmatmul.mubr.bf16.gmra.mrb[0].mxu0 %v956
      %v3082 = vpop.f32.mrb[0].mxu0
      %v3083 = vadd.f32 0.0, %v3082
      %v3084 = vpop.f32.mrb[0].mxu0
      %v3085 = vpop.f32.mrb[0].mxu0
      %v3086 = vadd.f32 0.0, %v3085
      %v3087 = vpop.f32.mrb[0].mxu0
      %3088 = vmatprep.mubr.bf16.mxu0 0
      %3089 = vmatmul.mubr.bf16.gmra.mrb[0].mxu0 %v958
      %v3090 = vpop.f32.mrb[0].mxu0
      %v3091 = vadd.f32 0.0, %v3090
      %v3092 = vpop.f32.mrb[0].mxu0
      %v3093 = vpop.f32.mrb[0].mxu0
      %v3094 = vadd.f32 0.0, %v3093
      %v3095 = vpop.f32.mrb[0].mxu0
      %3096 = vmatprep.mubr.bf16.mxu0 0
      %3097 = vmatmul.mubr.bf16.gmra.mrb[0].mxu0 %v960
      %v3098 = vpop.f32.mrb[0].mxu0
      %v3099 = vadd.f32 0.0, %v3098
      %v3100 = vpop.f32.mrb[0].mxu0
      %v3101 = vpop.f32.mrb[0].mxu0
      %v3102 = vadd.f32 0.0, %v3101
      %v3103 = vpop.f32.mrb[0].mxu0
      %3104 = vmatprep.mubr.bf16.mxu0 0
      %3105 = vmatmul.mubr.bf16.gmra.mrb[0].mxu0 %v962
      %v3106 = vpop.f32.mrb[0].mxu0
      %v3107 = vadd.f32 0.0, %v3106
      %v3108 = vpop.f32.mrb[0].mxu0
      %v3109 = vpop.f32.mrb[0].mxu0
      %v3110 = vadd.f32 0.0, %v3109
      %v3111 = vpop.f32.mrb[0].mxu0
      %3112 = vmatprep.mubr.bf16.mxu0 0
      %3113 = vmatmul.mubr.bf16.gmra.mrb[0].mxu0 %v964
      %v3114 = vpop.f32.mrb[0].mxu0
      %v3115 = vadd.f32 0.0, %v3114
      %v3116 = vpop.f32.mrb[0].mxu0
      %v3117 = vpop.f32.mrb[0].mxu0
      %v3118 = vadd.f32 0.0, %v3117
      %v3119 = vpop.f32.mrb[0].mxu0
      %3120 = vmatprep.mubr.bf16.mxu0 0
      %3121 = vmatmul.mubr.bf16.gmra.mrb[0].mxu0 %v2909
      %v3122 = vpop.f32.mrb[0].mxu0
      %v3123 = vadd.f32 0.0, %v3122
      %v3124 = vpop.f32.mrb[0].mxu0
      %v3125 = vpop.f32.mrb[0].mxu0
      %v3126 = vadd.f32 0.0, %v3125
      %v3127 = vpop.f32.mrb[0].mxu0
      %3128 = vmatprep.mubr.bf16.mxu0 0
      %3129 = vmatmul.mubr.bf16.gmra.mrb[0].mxu0 %v2912
      %v3130 = vpop.f32.mrb[0].mxu0
      %v3131 = vadd.f32 0.0, %v3130
      %v3132 = vpop.f32.mrb[0].mxu0
      %v3133 = vpop.f32.mrb[0].mxu0
      %v3134 = vadd.f32 0.0, %v3133
      %v3135 = vpop.f32.mrb[0].mxu0
      %3136 = vmatprep.mubr.bf16.mxu0 0
      %3137 = vmatmul.mubr.bf16.gmra.mrb[0].mxu0 %v2915
      %v3138 = vpop.f32.mrb[0].mxu0
      %v3139 = vadd.f32 0.0, %v3138
      %v3140 = vpop.f32.mrb[0].mxu0
      %v3141 = vpop.f32.mrb[0].mxu0
      %v3142 = vadd.f32 0.0, %v3141
      %v3143 = vpop.f32.mrb[0].mxu0
      %3144 = vdwg.mxu0
      %v3145 = vadd.f32 %v2851, %v2955
      %v3146 = vadd.f32 %v2852, %v2958
      %v3147 = vadd.f32 %v2853, %v2963
      %v3148 = vadd.f32 %v2854, %v2966
      %v3149 = vadd.f32 %v2855, %v2971
      %v3150 = vadd.f32 %v2856, %v2974
      %v3151 = vadd.f32 %v2857, %v2979
      %v3152 = vadd.f32 %v2858, %v2982
      %v3153 = vadd.f32 %v2859, %v2987
      %v3154 = vadd.f32 %v2860, %v2990
      %v3155 = vadd.f32 %v2861, %v2995
      %v3156 = vadd.f32 %v2862, %v2998
      %v3157 = vadd.f32 %v2863, %v3003
      %v3158 = vadd.f32 %v2864, %v3006
      %v3159 = vadd.f32 %v2865, %v3011
      %v3160 = vadd.f32 %v2866, %v3014
      %v3161 = vadd.f32 %v2867, %v3019
      %v3162 = vadd.f32 %v2868, %v3022
      %v3163 = vadd.f32 %v2869, %v3027
      %v3164 = vadd.f32 %v2870, %v3030
      %v3165 = vadd.f32 %v2871, %v3035
      %v3166 = vadd.f32 %v2872, %v3038
      %v3167 = vadd.f32 %v2873, %v3043
      %v3168 = vadd.f32 %v2874, %v3046
      %v3169 = vadd.f32 %v2875, %v3051
      %v3170 = vadd.f32 %v2876, %v3054
      %v3171 = vadd.f32 %v2877, %v3059
      %v3172 = vadd.f32 %v2878, %v3062
      %v3173 = vadd.f32 %v2879, %v3067
      %v3174 = vadd.f32 %v2880, %v3070
      %v3175 = vadd.f32 %v2881, %v3075
      %v3176 = vadd.f32 %v2882, %v3078
      %v3177 = vadd.f32 %v2883, %v3083
      %v3178 = vadd.f32 %v2884, %v3086
      %v3179 = vadd.f32 %v2885, %v3091
      %v3180 = vadd.f32 %v2886, %v3094
      %v3181 = vadd.f32 %v2887, %v3099
      %v3182 = vadd.f32 %v2888, %v3102
      %v3183 = vadd.f32 %v2889, %v3107
      %v3184 = vadd.f32 %v2890, %v3110
      %v3185 = vadd.f32 %v2891, %v3115
      %v3186 = vadd.f32 %v2892, %v3118
      %v3187 = vadd.f32 %v2893, %v3123
      %v3188 = vadd.f32 %v2894, %v3126
      %v3189 = vadd.f32 %v2895, %v3131
      %v3190 = vadd.f32 %v2896, %v3134
      %v3191 = vadd.f32 %v2897, %v3139
      %v3192 = vadd.f32 %v2898, %v3142
      %s3193 = scalar_lea.vmem %s220, 28
      %v3194 = vld [vmem:[%s3193] sm:$0xf]
      %v3196 = vunpack.c.l.b16 %v291
      %v3197 = vpack.c.b16 %v3196, %v3196
      %v3198 = vshll.u32 %v2905, 16
      %v3200 = vrot.slane %v3198, 1
      %v3201 = vsel %vm419, %v610, %v3200
      %v3202 = vshrl.u32 %v2905, 16
      %v3204 = vor.u32 %v3202, %v3200
      %v3205 = vshll.u32 %v2906, 16
      %v3207 = vrot.slane %v3205, 1
      %v3208 = vsel %vm419, %v3204, %v3207
      %v3209 = vshrl.u32 %v2906, 16
      %v3211 = vor.u32 %v3209, %v3207
      %v3212 = vshll.u32 %v2907, 16
      %v3214 = vrot.slane %v3212, 1
      %v3215 = vsel %vm419, %v3211, %v3214
      %v3216 = vshrl.u32 %v2907, 16
      %v3218 = vor.u32 %v3216, %v3214
      %v3220 = vshll.u32 %v3197, 16
      %v3222 = vrot.slane %v3220, 1
      %v3223 = vsel %vm419, %v3218, %v3222
      %v3225 = vsel %vm616, %v3201, 0
      %v3228 = vsel %vm616, %v3208, 0
      %v3231 = vsel %vm616, %v3215, 0
      %v3234 = vsel %vm616, %v3223, 0
      %v3237 = vsel %vm689, %v3194, 0
      %3239 = vmatprep.subr.bf16.mxu0 0
      %3240 = vmatpush1.bf16.msra.mxu0 %v3237
      %3241 = vmatprep.subr.bf16.mxu0 0
      %3242 = vmatpush1.bf16.msra.mxu0 0
      %3243 = vmatprep.subr.bf16.mxu0 0
      %3244 = vmatpush1.bf16.msra.mxu0 0
      %3245 = vmatprep.subr.bf16.mxu0 0
      %3246 = vmatpush1.bf16.msra.mxu0 0
      %3247 = vmatprep.subr.bf16.mxu0 0
      %3248 = vmatpush1.bf16.msra.mxu0 0
      %3249 = vmatprep.subr.bf16.mxu0 0
      %3250 = vmatpush1.bf16.msra.mxu0 0
      %3251 = vmatprep.subr.bf16.mxu0 0
      %3252 = vmatpush1.bf16.msra.mxu0 0
      %3253 = vmatprep.subr.bf16.mxu0 0
      %3254 = vmatpush1.bf16.msra.mxu0 0
      %3255 = vmatprep.subr.bf16.mxu0 0
      %3256 = vmatpush1.bf16.msra.mxu0 0
      %3257 = vmatprep.subr.bf16.mxu0 0
      %3258 = vmatpush1.bf16.msra.mxu0 0
      %3259 = vmatprep.subr.bf16.mxu0 0
      %3260 = vmatpush1.bf16.msra.mxu0 0
      %3261 = vmatprep.subr.bf16.mxu0 0
      %3262 = vmatpush1.bf16.msra.mxu0 0
      %3263 = vmatprep.subr.bf16.mxu0 0
      %3264 = vmatpush1.bf16.msra.mxu0 0
      %3265 = vmatprep.subr.bf16.mxu0 0
      %3266 = vmatpush1.bf16.msra.mxu0 0
      %3267 = vmatprep.subr.bf16.mxu0 0
      %3268 = vmatpush1.bf16.msra.mxu0 0
      %3269 = vmatprep.subr.bf16.mxu0 0
      %3270 = vmatpush1.bf16.msra.mxu0 0
      %3271 = vmatprep.mubr.bf16.mxu0 0
      %3272 = vmatmul.mubr.bf16.gmra.mrb[0].mxu0 %v627
      %v3273 = vpop.f32.mrb[0].mxu0
      %v3274 = vadd.f32 0.0, %v3273
      %v3275 = vpop.f32.mrb[0].mxu0
      %v3276 = vpop.f32.mrb[0].mxu0
      %v3277 = vadd.f32 0.0, %v3276
      %v3278 = vpop.f32.mrb[0].mxu0
      %3279 = vmatprep.mubr.bf16.mxu0 0
      %3280 = vmatmul.mubr.bf16.gmra.mrb[0].mxu0 %v630
      %v3281 = vpop.f32.mrb[0].mxu0
      %v3282 = vadd.f32 0.0, %v3281
      %v3283 = vpop.f32.mrb[0].mxu0
      %v3284 = vpop.f32.mrb[0].mxu0
      %v3285 = vadd.f32 0.0, %v3284
      %v3286 = vpop.f32.mrb[0].mxu0
      %3287 = vmatprep.mubr.bf16.mxu0 0
      %3288 = vmatmul.mubr.bf16.gmra.mrb[0].mxu0 %v633
      %v3289 = vpop.f32.mrb[0].mxu0
      %v3290 = vadd.f32 0.0, %v3289
      %v3291 = vpop.f32.mrb[0].mxu0
      %v3292 = vpop.f32.mrb[0].mxu0
      %v3293 = vadd.f32 0.0, %v3292
      %v3294 = vpop.f32.mrb[0].mxu0
      %3295 = vmatprep.mubr.bf16.mxu0 0
      %3296 = vmatmul.mubr.bf16.gmra.mrb[0].mxu0 %v636
      %v3297 = vpop.f32.mrb[0].mxu0
      %v3298 = vadd.f32 0.0, %v3297
      %v3299 = vpop.f32.mrb[0].mxu0
      %v3300 = vpop.f32.mrb[0].mxu0
      %v3301 = vadd.f32 0.0, %v3300
      %v3302 = vpop.f32.mrb[0].mxu0
      %3303 = vmatprep.mubr.bf16.mxu0 0
      %3304 = vmatmul.mubr.bf16.gmra.mrb[0].mxu0 %v639
      %v3305 = vpop.f32.mrb[0].mxu0
      %v3306 = vadd.f32 0.0, %v3305
      %v3307 = vpop.f32.mrb[0].mxu0
      %v3308 = vpop.f32.mrb[0].mxu0
      %v3309 = vadd.f32 0.0, %v3308
      %v3310 = vpop.f32.mrb[0].mxu0
      %3311 = vmatprep.mubr.bf16.mxu0 0
      %3312 = vmatmul.mubr.bf16.gmra.mrb[0].mxu0 %v642
      %v3313 = vpop.f32.mrb[0].mxu0
      %v3314 = vadd.f32 0.0, %v3313
      %v3315 = vpop.f32.mrb[0].mxu0
      %v3316 = vpop.f32.mrb[0].mxu0
      %v3317 = vadd.f32 0.0, %v3316
      %v3318 = vpop.f32.mrb[0].mxu0
      %3319 = vmatprep.mubr.bf16.mxu0 0
      %3320 = vmatmul.mubr.bf16.gmra.mrb[0].mxu0 %v645
      %v3321 = vpop.f32.mrb[0].mxu0
      %v3322 = vadd.f32 0.0, %v3321
      %v3323 = vpop.f32.mrb[0].mxu0
      %v3324 = vpop.f32.mrb[0].mxu0
      %v3325 = vadd.f32 0.0, %v3324
      %v3326 = vpop.f32.mrb[0].mxu0
      %3327 = vmatprep.mubr.bf16.mxu0 0
      %3328 = vmatmul.mubr.bf16.gmra.mrb[0].mxu0 %v648
      %v3329 = vpop.f32.mrb[0].mxu0
      %v3330 = vadd.f32 0.0, %v3329
      %v3331 = vpop.f32.mrb[0].mxu0
      %v3332 = vpop.f32.mrb[0].mxu0
      %v3333 = vadd.f32 0.0, %v3332
      %v3334 = vpop.f32.mrb[0].mxu0
      %3335 = vmatprep.mubr.bf16.mxu0 0
      %3336 = vmatmul.mubr.bf16.gmra.mrb[0].mxu0 %v651
      %v3337 = vpop.f32.mrb[0].mxu0
      %v3338 = vadd.f32 0.0, %v3337
      %v3339 = vpop.f32.mrb[0].mxu0
      %v3340 = vpop.f32.mrb[0].mxu0
      %v3341 = vadd.f32 0.0, %v3340
      %v3342 = vpop.f32.mrb[0].mxu0
      %3343 = vmatprep.mubr.bf16.mxu0 0
      %3344 = vmatmul.mubr.bf16.gmra.mrb[0].mxu0 %v654
      %v3345 = vpop.f32.mrb[0].mxu0
      %v3346 = vadd.f32 0.0, %v3345
      %v3347 = vpop.f32.mrb[0].mxu0
      %v3348 = vpop.f32.mrb[0].mxu0
      %v3349 = vadd.f32 0.0, %v3348
      %v3350 = vpop.f32.mrb[0].mxu0
      %3351 = vmatprep.mubr.bf16.mxu0 0
      %3352 = vmatmul.mubr.bf16.gmra.mrb[0].mxu0 %v657
      %v3353 = vpop.f32.mrb[0].mxu0
      %v3354 = vadd.f32 0.0, %v3353
      %v3355 = vpop.f32.mrb[0].mxu0
      %v3356 = vpop.f32.mrb[0].mxu0
      %v3357 = vadd.f32 0.0, %v3356
      %v3358 = vpop.f32.mrb[0].mxu0
      %3359 = vmatprep.mubr.bf16.mxu0 0
      %3360 = vmatmul.mubr.bf16.gmra.mrb[0].mxu0 %v660
      %v3361 = vpop.f32.mrb[0].mxu0
      %v3362 = vadd.f32 0.0, %v3361
      %v3363 = vpop.f32.mrb[0].mxu0
      %v3364 = vpop.f32.mrb[0].mxu0
      %v3365 = vadd.f32 0.0, %v3364
      %v3366 = vpop.f32.mrb[0].mxu0
      %3367 = vmatprep.mubr.bf16.mxu0 0
      %3368 = vmatmul.mubr.bf16.gmra.mrb[0].mxu0 %v663
      %v3369 = vpop.f32.mrb[0].mxu0
      %v3370 = vadd.f32 0.0, %v3369
      %v3371 = vpop.f32.mrb[0].mxu0
      %v3372 = vpop.f32.mrb[0].mxu0
      %v3373 = vadd.f32 0.0, %v3372
      %v3374 = vpop.f32.mrb[0].mxu0
      %3375 = vmatprep.mubr.bf16.mxu0 0
      %3376 = vmatmul.mubr.bf16.gmra.mrb[0].mxu0 %v666
      %v3377 = vpop.f32.mrb[0].mxu0
      %v3378 = vadd.f32 0.0, %v3377
      %v3379 = vpop.f32.mrb[0].mxu0
      %v3380 = vpop.f32.mrb[0].mxu0
      %v3381 = vadd.f32 0.0, %v3380
      %v3382 = vpop.f32.mrb[0].mxu0
      %3383 = vmatprep.mubr.bf16.mxu0 0
      %3384 = vmatmul.mubr.bf16.gmra.mrb[0].mxu0 %v669
      %v3385 = vpop.f32.mrb[0].mxu0
      %v3386 = vadd.f32 0.0, %v3385
      %v3387 = vpop.f32.mrb[0].mxu0
      %v3388 = vpop.f32.mrb[0].mxu0
      %v3389 = vadd.f32 0.0, %v3388
      %v3390 = vpop.f32.mrb[0].mxu0
      %3391 = vmatprep.mubr.bf16.mxu0 0
      %3392 = vmatmul.mubr.bf16.gmra.mrb[0].mxu0 %v672
      %v3393 = vpop.f32.mrb[0].mxu0
      %v3394 = vadd.f32 0.0, %v3393
      %v3395 = vpop.f32.mrb[0].mxu0
      %v3396 = vpop.f32.mrb[0].mxu0
      %v3397 = vadd.f32 0.0, %v3396
      %v3398 = vpop.f32.mrb[0].mxu0
      %3399 = vmatprep.mubr.bf16.mxu0 0
      %3400 = vmatmul.mubr.bf16.gmra.mrb[0].mxu0 %v675
      %v3401 = vpop.f32.mrb[0].mxu0
      %v3402 = vadd.f32 0.0, %v3401
      %v3403 = vpop.f32.mrb[0].mxu0
      %v3404 = vpop.f32.mrb[0].mxu0
      %v3405 = vadd.f32 0.0, %v3404
      %v3406 = vpop.f32.mrb[0].mxu0
      %3407 = vmatprep.mubr.bf16.mxu0 0
      %3408 = vmatmul.mubr.bf16.gmra.mrb[0].mxu0 %v678
      %v3409 = vpop.f32.mrb[0].mxu0
      %v3410 = vadd.f32 0.0, %v3409
      %v3411 = vpop.f32.mrb[0].mxu0
      %v3412 = vpop.f32.mrb[0].mxu0
      %v3413 = vadd.f32 0.0, %v3412
      %v3414 = vpop.f32.mrb[0].mxu0
      %3415 = vmatprep.mubr.bf16.mxu0 0
      %3416 = vmatmul.mubr.bf16.gmra.mrb[0].mxu0 %v681
      %v3417 = vpop.f32.mrb[0].mxu0
      %v3418 = vadd.f32 0.0, %v3417
      %v3419 = vpop.f32.mrb[0].mxu0
      %v3420 = vpop.f32.mrb[0].mxu0
      %v3421 = vadd.f32 0.0, %v3420
      %v3422 = vpop.f32.mrb[0].mxu0
      %3423 = vmatprep.mubr.bf16.mxu0 0
      %3424 = vmatmul.mubr.bf16.gmra.mrb[0].mxu0 %v684
      %v3425 = vpop.f32.mrb[0].mxu0
      %v3426 = vadd.f32 0.0, %v3425
      %v3427 = vpop.f32.mrb[0].mxu0
      %v3428 = vpop.f32.mrb[0].mxu0
      %v3429 = vadd.f32 0.0, %v3428
      %v3430 = vpop.f32.mrb[0].mxu0
      %3431 = vmatprep.mubr.bf16.mxu0 0
      %3432 = vmatmul.mubr.bf16.gmra.mrb[0].mxu0 %v3225
      %v3433 = vpop.f32.mrb[0].mxu0
      %v3434 = vadd.f32 0.0, %v3433
      %v3435 = vpop.f32.mrb[0].mxu0
      %v3436 = vpop.f32.mrb[0].mxu0
      %v3437 = vadd.f32 0.0, %v3436
      %v3438 = vpop.f32.mrb[0].mxu0
      %3439 = vmatprep.mubr.bf16.mxu0 0
      %3440 = vmatmul.mubr.bf16.gmra.mrb[0].mxu0 %v3228
      %v3441 = vpop.f32.mrb[0].mxu0
      %v3442 = vadd.f32 0.0, %v3441
      %v3443 = vpop.f32.mrb[0].mxu0
      %v3444 = vpop.f32.mrb[0].mxu0
      %v3445 = vadd.f32 0.0, %v3444
      %v3446 = vpop.f32.mrb[0].mxu0
      %3447 = vmatprep.mubr.bf16.mxu0 0
      %3448 = vmatmul.mubr.bf16.gmra.mrb[0].mxu0 %v3231
      %v3449 = vpop.f32.mrb[0].mxu0
      %v3450 = vadd.f32 0.0, %v3449
      %v3451 = vpop.f32.mrb[0].mxu0
      %v3452 = vpop.f32.mrb[0].mxu0
      %v3453 = vadd.f32 0.0, %v3452
      %v3454 = vpop.f32.mrb[0].mxu0
      %3455 = vmatprep.mubr.bf16.mxu0 0
      %3456 = vmatmul.mubr.bf16.gmra.mrb[0].mxu0 %v3234
      %v3457 = vpop.f32.mrb[0].mxu0
      %v3458 = vadd.f32 0.0, %v3457
      %v3459 = vpop.f32.mrb[0].mxu0
      %v3460 = vpop.f32.mrb[0].mxu0
      %v3461 = vadd.f32 0.0, %v3460
      %v3462 = vpop.f32.mrb[0].mxu0
      %3463 = vdwg.mxu0
      %v3464 = vadd.f32 %v3145, %v3274
      %v3465 = vadd.f32 %v3146, %v3277
      %v3466 = vadd.f32 %v3147, %v3282
      %v3467 = vadd.f32 %v3148, %v3285
      %v3468 = vadd.f32 %v3149, %v3290
      %v3469 = vadd.f32 %v3150, %v3293
      %v3470 = vadd.f32 %v3151, %v3298
      %v3471 = vadd.f32 %v3152, %v3301
      %v3472 = vadd.f32 %v3153, %v3306
      %v3473 = vadd.f32 %v3154, %v3309
      %v3474 = vadd.f32 %v3155, %v3314
      %v3475 = vadd.f32 %v3156, %v3317
      %v3476 = vadd.f32 %v3157, %v3322
      %v3477 = vadd.f32 %v3158, %v3325
      %v3478 = vadd.f32 %v3159, %v3330
      %v3479 = vadd.f32 %v3160, %v3333
      %v3480 = vadd.f32 %v3161, %v3338
      %v3481 = vadd.f32 %v3162, %v3341
      %v3482 = vadd.f32 %v3163, %v3346
      %v3483 = vadd.f32 %v3164, %v3349
      %v3484 = vadd.f32 %v3165, %v3354
      %v3485 = vadd.f32 %v3166, %v3357
      %v3486 = vadd.f32 %v3167, %v3362
      %v3487 = vadd.f32 %v3168, %v3365
      %v3488 = vadd.f32 %v3169, %v3370
      %v3489 = vadd.f32 %v3170, %v3373
      %v3490 = vadd.f32 %v3171, %v3378
      %v3491 = vadd.f32 %v3172, %v3381
      %v3492 = vadd.f32 %v3173, %v3386
      %v3493 = vadd.f32 %v3174, %v3389
      %v3494 = vadd.f32 %v3175, %v3394
      %v3495 = vadd.f32 %v3176, %v3397
      %v3496 = vadd.f32 %v3177, %v3402
      %v3497 = vadd.f32 %v3178, %v3405
      %v3498 = vadd.f32 %v3179, %v3410
      %v3499 = vadd.f32 %v3180, %v3413
      %v3500 = vadd.f32 %v3181, %v3418
      %v3501 = vadd.f32 %v3182, %v3421
      %v3502 = vadd.f32 %v3183, %v3426
      %v3503 = vadd.f32 %v3184, %v3429
      %v3504 = vadd.f32 %v3185, %v3434
      %v3505 = vadd.f32 %v3186, %v3437
      %v3506 = vadd.f32 %v3187, %v3442
      %v3507 = vadd.f32 %v3188, %v3445
      %v3508 = vadd.f32 %v3189, %v3450
      %v3509 = vadd.f32 %v3190, %v3453
      %v3510 = vadd.f32 %v3191, %v3458
      %v3511 = vadd.f32 %v3192, %v3461
      %s3512 = scalar_lea.vmem %s220, 32
      %v3513 = vld [vmem:[%s3512] sm:$0xf]
      %v3514 = vrot.slane %v2905, 1
      %v3515 = vsel %vm1199, %v1245, %v3514
      %v3516 = vrot.slane %v2906, 1
      %v3517 = vsel %vm1199, %v3514, %v3516
      %v3518 = vrot.slane %v2907, 1
      %v3519 = vsel %vm1199, %v3516, %v3518
      %v3520 = vrot.slane %v3197, 1
      %v3521 = vsel %vm1199, %v3518, %v3520
      %v3523 = vsel %vm616, %v3515, 0
      %v3526 = vsel %vm616, %v3517, 0
      %v3529 = vsel %vm616, %v3519, 0
      %v3532 = vsel %vm616, %v3521, 0
      %v3535 = vsel %vm689, %v3513, 0
      %3537 = vmatprep.subr.bf16.mxu0 0
      %3538 = vmatpush1.bf16.msra.mxu0 %v3535
      %3539 = vmatprep.subr.bf16.mxu0 0
      %3540 = vmatpush1.bf16.msra.mxu0 0
      %3541 = vmatprep.subr.bf16.mxu0 0
      %3542 = vmatpush1.bf16.msra.mxu0 0
      %3543 = vmatprep.subr.bf16.mxu0 0
      %3544 = vmatpush1.bf16.msra.mxu0 0
      %3545 = vmatprep.subr.bf16.mxu0 0
      %3546 = vmatpush1.bf16.msra.mxu0 0
      %3547 = vmatprep.subr.bf16.mxu0 0
      %3548 = vmatpush1.bf16.msra.mxu0 0
      %3549 = vmatprep.subr.bf16.mxu0 0
      %3550 = vmatpush1.bf16.msra.mxu0 0
      %3551 = vmatprep.subr.bf16.mxu0 0
      %3552 = vmatpush1.bf16.msra.mxu0 0
      %3553 = vmatprep.subr.bf16.mxu0 0
      %3554 = vmatpush1.bf16.msra.mxu0 0
      %3555 = vmatprep.subr.bf16.mxu0 0
      %3556 = vmatpush1.bf16.msra.mxu0 0
      %3557 = vmatprep.subr.bf16.mxu0 0
      %3558 = vmatpush1.bf16.msra.mxu0 0
      %3559 = vmatprep.subr.bf16.mxu0 0
      %3560 = vmatpush1.bf16.msra.mxu0 0
      %3561 = vmatprep.subr.bf16.mxu0 0
      %3562 = vmatpush1.bf16.msra.mxu0 0
      %3563 = vmatprep.subr.bf16.mxu0 0
      %3564 = vmatpush1.bf16.msra.mxu0 0
      %3565 = vmatprep.subr.bf16.mxu0 0
      %3566 = vmatpush1.bf16.msra.mxu0 0
      %3567 = vmatprep.subr.bf16.mxu0 0
      %3568 = vmatpush1.bf16.msra.mxu0 0
      %3569 = vmatprep.mubr.bf16.mxu0 0
      %3570 = vmatmul.mubr.bf16.gmra.mrb[0].mxu0 %v1259
      %v3571 = vpop.f32.mrb[0].mxu0
      %v3572 = vadd.f32 0.0, %v3571
      %v3573 = vpop.f32.mrb[0].mxu0
      %v3574 = vpop.f32.mrb[0].mxu0
      %v3575 = vadd.f32 0.0, %v3574
      %v3576 = vpop.f32.mrb[0].mxu0
      %3577 = vmatprep.mubr.bf16.mxu0 0
      %3578 = vmatmul.mubr.bf16.gmra.mrb[0].mxu0 %v1262
      %v3579 = vpop.f32.mrb[0].mxu0
      %v3580 = vadd.f32 0.0, %v3579
      %v3581 = vpop.f32.mrb[0].mxu0
      %v3582 = vpop.f32.mrb[0].mxu0
      %v3583 = vadd.f32 0.0, %v3582
      %v3584 = vpop.f32.mrb[0].mxu0
      %3585 = vmatprep.mubr.bf16.mxu0 0
      %3586 = vmatmul.mubr.bf16.gmra.mrb[0].mxu0 %v1265
      %v3587 = vpop.f32.mrb[0].mxu0
      %v3588 = vadd.f32 0.0, %v3587
      %v3589 = vpop.f32.mrb[0].mxu0
      %v3590 = vpop.f32.mrb[0].mxu0
      %v3591 = vadd.f32 0.0, %v3590
      %v3592 = vpop.f32.mrb[0].mxu0
      %3593 = vmatprep.mubr.bf16.mxu0 0
      %3594 = vmatmul.mubr.bf16.gmra.mrb[0].mxu0 %v1268
      %v3595 = vpop.f32.mrb[0].mxu0
      %v3596 = vadd.f32 0.0, %v3595
      %v3597 = vpop.f32.mrb[0].mxu0
      %v3598 = vpop.f32.mrb[0].mxu0
      %v3599 = vadd.f32 0.0, %v3598
      %v3600 = vpop.f32.mrb[0].mxu0
      %3601 = vmatprep.mubr.bf16.mxu0 0
      %3602 = vmatmul.mubr.bf16.gmra.mrb[0].mxu0 %v1271
      %v3603 = vpop.f32.mrb[0].mxu0
      %v3604 = vadd.f32 0.0, %v3603
      %v3605 = vpop.f32.mrb[0].mxu0
      %v3606 = vpop.f32.mrb[0].mxu0
      %v3607 = vadd.f32 0.0, %v3606
      %v3608 = vpop.f32.mrb[0].mxu0
      %3609 = vmatprep.mubr.bf16.mxu0 0
      %3610 = vmatmul.mubr.bf16.gmra.mrb[0].mxu0 %v1274
      %v3611 = vpop.f32.mrb[0].mxu0
      %v3612 = vadd.f32 0.0, %v3611
      %v3613 = vpop.f32.mrb[0].mxu0
      %v3614 = vpop.f32.mrb[0].mxu0
      %v3615 = vadd.f32 0.0, %v3614
      %v3616 = vpop.f32.mrb[0].mxu0
      %3617 = vmatprep.mubr.bf16.mxu0 0
      %3618 = vmatmul.mubr.bf16.gmra.mrb[0].mxu0 %v1277
      %v3619 = vpop.f32.mrb[0].mxu0
      %v3620 = vadd.f32 0.0, %v3619
      %v3621 = vpop.f32.mrb[0].mxu0
      %v3622 = vpop.f32.mrb[0].mxu0
      %v3623 = vadd.f32 0.0, %v3622
      %v3624 = vpop.f32.mrb[0].mxu0
      %3625 = vmatprep.mubr.bf16.mxu0 0
      %3626 = vmatmul.mubr.bf16.gmra.mrb[0].mxu0 %v1280
      %v3627 = vpop.f32.mrb[0].mxu0
      %v3628 = vadd.f32 0.0, %v3627
      %v3629 = vpop.f32.mrb[0].mxu0
      %v3630 = vpop.f32.mrb[0].mxu0
      %v3631 = vadd.f32 0.0, %v3630
      %v3632 = vpop.f32.mrb[0].mxu0
      %3633 = vmatprep.mubr.bf16.mxu0 0
      %3634 = vmatmul.mubr.bf16.gmra.mrb[0].mxu0 %v1283
      %v3635 = vpop.f32.mrb[0].mxu0
      %v3636 = vadd.f32 0.0, %v3635
      %v3637 = vpop.f32.mrb[0].mxu0
      %v3638 = vpop.f32.mrb[0].mxu0
      %v3639 = vadd.f32 0.0, %v3638
      %v3640 = vpop.f32.mrb[0].mxu0
      %3641 = vmatprep.mubr.bf16.mxu0 0
      %3642 = vmatmul.mubr.bf16.gmra.mrb[0].mxu0 %v1286
      %v3643 = vpop.f32.mrb[0].mxu0
      %v3644 = vadd.f32 0.0, %v3643
      %v3645 = vpop.f32.mrb[0].mxu0
      %v3646 = vpop.f32.mrb[0].mxu0
      %v3647 = vadd.f32 0.0, %v3646
      %v3648 = vpop.f32.mrb[0].mxu0
      %3649 = vmatprep.mubr.bf16.mxu0 0
      %3650 = vmatmul.mubr.bf16.gmra.mrb[0].mxu0 %v1289
      %v3651 = vpop.f32.mrb[0].mxu0
      %v3652 = vadd.f32 0.0, %v3651
      %v3653 = vpop.f32.mrb[0].mxu0
      %v3654 = vpop.f32.mrb[0].mxu0
      %v3655 = vadd.f32 0.0, %v3654
      %v3656 = vpop.f32.mrb[0].mxu0
      %3657 = vmatprep.mubr.bf16.mxu0 0
      %3658 = vmatmul.mubr.bf16.gmra.mrb[0].mxu0 %v1292
      %v3659 = vpop.f32.mrb[0].mxu0
      %v3660 = vadd.f32 0.0, %v3659
      %v3661 = vpop.f32.mrb[0].mxu0
      %v3662 = vpop.f32.mrb[0].mxu0
      %v3663 = vadd.f32 0.0, %v3662
      %v3664 = vpop.f32.mrb[0].mxu0
      %3665 = vmatprep.mubr.bf16.mxu0 0
      %3666 = vmatmul.mubr.bf16.gmra.mrb[0].mxu0 %v1295
      %v3667 = vpop.f32.mrb[0].mxu0
      %v3668 = vadd.f32 0.0, %v3667
      %v3669 = vpop.f32.mrb[0].mxu0
      %v3670 = vpop.f32.mrb[0].mxu0
      %v3671 = vadd.f32 0.0, %v3670
      %v3672 = vpop.f32.mrb[0].mxu0
      %3673 = vmatprep.mubr.bf16.mxu0 0
      %3674 = vmatmul.mubr.bf16.gmra.mrb[0].mxu0 %v1298
      %v3675 = vpop.f32.mrb[0].mxu0
      %v3676 = vadd.f32 0.0, %v3675
      %v3677 = vpop.f32.mrb[0].mxu0
      %v3678 = vpop.f32.mrb[0].mxu0
      %v3679 = vadd.f32 0.0, %v3678
      %v3680 = vpop.f32.mrb[0].mxu0
      %3681 = vmatprep.mubr.bf16.mxu0 0
      %3682 = vmatmul.mubr.bf16.gmra.mrb[0].mxu0 %v1301
      %v3683 = vpop.f32.mrb[0].mxu0
      %v3684 = vadd.f32 0.0, %v3683
      %v3685 = vpop.f32.mrb[0].mxu0
      %v3686 = vpop.f32.mrb[0].mxu0
      %v3687 = vadd.f32 0.0, %v3686
      %v3688 = vpop.f32.mrb[0].mxu0
      %3689 = vmatprep.mubr.bf16.mxu0 0
      %3690 = vmatmul.mubr.bf16.gmra.mrb[0].mxu0 %v1304
      %v3691 = vpop.f32.mrb[0].mxu0
      %v3692 = vadd.f32 0.0, %v3691
      %v3693 = vpop.f32.mrb[0].mxu0
      %v3694 = vpop.f32.mrb[0].mxu0
      %v3695 = vadd.f32 0.0, %v3694
      %v3696 = vpop.f32.mrb[0].mxu0
      %3697 = vmatprep.mubr.bf16.mxu0 0
      %3698 = vmatmul.mubr.bf16.gmra.mrb[0].mxu0 %v1307
      %v3699 = vpop.f32.mrb[0].mxu0
      %v3700 = vadd.f32 0.0, %v3699
      %v3701 = vpop.f32.mrb[0].mxu0
      %v3702 = vpop.f32.mrb[0].mxu0
      %v3703 = vadd.f32 0.0, %v3702
      %v3704 = vpop.f32.mrb[0].mxu0
      %3705 = vmatprep.mubr.bf16.mxu0 0
      %3706 = vmatmul.mubr.bf16.gmra.mrb[0].mxu0 %v1310
      %v3707 = vpop.f32.mrb[0].mxu0
      %v3708 = vadd.f32 0.0, %v3707
      %v3709 = vpop.f32.mrb[0].mxu0
      %v3710 = vpop.f32.mrb[0].mxu0
      %v3711 = vadd.f32 0.0, %v3710
      %v3712 = vpop.f32.mrb[0].mxu0
      %3713 = vmatprep.mubr.bf16.mxu0 0
      %3714 = vmatmul.mubr.bf16.gmra.mrb[0].mxu0 %v1313
      %v3715 = vpop.f32.mrb[0].mxu0
      %v3716 = vadd.f32 0.0, %v3715
      %v3717 = vpop.f32.mrb[0].mxu0
      %v3718 = vpop.f32.mrb[0].mxu0
      %v3719 = vadd.f32 0.0, %v3718
      %v3720 = vpop.f32.mrb[0].mxu0
      %3721 = vmatprep.mubr.bf16.mxu0 0
      %3722 = vmatmul.mubr.bf16.gmra.mrb[0].mxu0 %v1316
      %v3723 = vpop.f32.mrb[0].mxu0
      %v3724 = vadd.f32 0.0, %v3723
      %v3725 = vpop.f32.mrb[0].mxu0
      %v3726 = vpop.f32.mrb[0].mxu0
      %v3727 = vadd.f32 0.0, %v3726
      %v3728 = vpop.f32.mrb[0].mxu0
      %3729 = vmatprep.mubr.bf16.mxu0 0
      %3730 = vmatmul.mubr.bf16.gmra.mrb[0].mxu0 %v3523
      %v3731 = vpop.f32.mrb[0].mxu0
      %v3732 = vadd.f32 0.0, %v3731
      %v3733 = vpop.f32.mrb[0].mxu0
      %v3734 = vpop.f32.mrb[0].mxu0
      %v3735 = vadd.f32 0.0, %v3734
      %v3736 = vpop.f32.mrb[0].mxu0
      %3737 = vmatprep.mubr.bf16.mxu0 0
      %3738 = vmatmul.mubr.bf16.gmra.mrb[0].mxu0 %v3526
      %v3739 = vpop.f32.mrb[0].mxu0
      %v3740 = vadd.f32 0.0, %v3739
      %v3741 = vpop.f32.mrb[0].mxu0
      %v3742 = vpop.f32.mrb[0].mxu0
      %v3743 = vadd.f32 0.0, %v3742
      %v3744 = vpop.f32.mrb[0].mxu0
      %3745 = vmatprep.mubr.bf16.mxu0 0
      %3746 = vmatmul.mubr.bf16.gmra.mrb[0].mxu0 %v3529
      %v3747 = vpop.f32.mrb[0].mxu0
      %v3748 = vadd.f32 0.0, %v3747
      %v3749 = vpop.f32.mrb[0].mxu0
      %v3750 = vpop.f32.mrb[0].mxu0
      %v3751 = vadd.f32 0.0, %v3750
      %v3752 = vpop.f32.mrb[0].mxu0
      %3753 = vmatprep.mubr.bf16.mxu0 0
      %3754 = vmatmul.mubr.bf16.gmra.mrb[0].mxu0 %v3532
      %v3755 = vpop.f32.mrb[0].mxu0
      %v3756 = vadd.f32 0.0, %v3755
      %v3757 = vpop.f32.mrb[0].mxu0
      %v3758 = vpop.f32.mrb[0].mxu0
      %v3759 = vadd.f32 0.0, %v3758
      %v3760 = vpop.f32.mrb[0].mxu0
      %3761 = vdwg.mxu0
      %v3762 = vadd.f32 %v3464, %v3572
      %v3763 = vadd.f32 %v3465, %v3575
      %v3764 = vadd.f32 %v3466, %v3580
      %v3765 = vadd.f32 %v3467, %v3583
      %v3766 = vadd.f32 %v3468, %v3588
      %v3767 = vadd.f32 %v3469, %v3591
      %v3768 = vadd.f32 %v3470, %v3596
      %v3769 = vadd.f32 %v3471, %v3599
      %v3770 = vadd.f32 %v3472, %v3604
      %v3771 = vadd.f32 %v3473, %v3607
      %v3772 = vadd.f32 %v3474, %v3612
      %v3773 = vadd.f32 %v3475, %v3615
      %v3774 = vadd.f32 %v3476, %v3620
      %v3775 = vadd.f32 %v3477, %v3623
      %v3776 = vadd.f32 %v3478, %v3628
      %v3777 = vadd.f32 %v3479, %v3631
      %v3778 = vadd.f32 %v3480, %v3636
      %v3779 = vadd.f32 %v3481, %v3639
      %v3780 = vadd.f32 %v3482, %v3644
      %v3781 = vadd.f32 %v3483, %v3647
      %v3782 = vadd.f32 %v3484, %v3652
      %v3783 = vadd.f32 %v3485, %v3655
      %v3784 = vadd.f32 %v3486, %v3660
      %v3785 = vadd.f32 %v3487, %v3663
      %v3786 = vadd.f32 %v3488, %v3668
      %v3787 = vadd.f32 %v3489, %v3671
      %v3788 = vadd.f32 %v3490, %v3676
      %v3789 = vadd.f32 %v3491, %v3679
      %v3790 = vadd.f32 %v3492, %v3684
      %v3791 = vadd.f32 %v3493, %v3687
      %v3792 = vadd.f32 %v3494, %v3692
      %v3793 = vadd.f32 %v3495, %v3695
      %v3794 = vadd.f32 %v3496, %v3700
      %v3795 = vadd.f32 %v3497, %v3703
      %v3796 = vadd.f32 %v3498, %v3708
      %v3797 = vadd.f32 %v3499, %v3711
      %v3798 = vadd.f32 %v3500, %v3716
      %v3799 = vadd.f32 %v3501, %v3719
      %v3800 = vadd.f32 %v3502, %v3724
      %v3801 = vadd.f32 %v3503, %v3727
      %v3802 = vadd.f32 %v3504, %v3732
      %v3803 = vadd.f32 %v3505, %v3735
      %v3804 = vadd.f32 %v3506, %v3740
      %v3805 = vadd.f32 %v3507, %v3743
      %v3806 = vadd.f32 %v3508, %v3748
      %v3807 = vadd.f32 %v3509, %v3751
      %v3808 = vadd.f32 %v3510, %v3756
      %v3809 = vadd.f32 %v3511, %v3759
      %v3810 = vlaneseq
      %v3811 = vshrl.u32 %v3810, 7
      %v3812 = vadd.s32 %v3811, 8
      %v3813 = vadd.s32 %v3811, 16
      %vm3814 = vcmp.lt.s32.totalorder %v3811, 16
      %vm3815 = vcmp.lt.s32.totalorder %v3812, 16
      %vm3816 = vcmp.lt.s32.totalorder %v3813, 16
      %v3817 = vsel %vm3814, 1, 0
      %v3818 = vsel %vm3815, 1, 0
      %v3819 = vsel %vm3816, 1, 0
      %v3820 = vcvt.s32.f32 %v3817
      %v3821 = vcvt.s32.f32 %v3818
      %v3822 = vcvt.s32.f32 %v3819
      %v3823 = vmul.f32 %v3762, %v3820
      %v3824 = vmul.f32 %v3763, %v3821
      %v3825 = vmul.f32 %v3764, %v3822
      %v3826 = vmul.f32 %v3765, %v3820
      %v3827 = vmul.f32 %v3766, %v3821
      %v3828 = vmul.f32 %v3767, %v3822
      %v3829 = vmul.f32 %v3768, %v3820
      %v3830 = vmul.f32 %v3769, %v3821
      %v3831 = vmul.f32 %v3770, %v3822
      %v3832 = vmul.f32 %v3771, %v3820
      %v3833 = vmul.f32 %v3772, %v3821
      %v3834 = vmul.f32 %v3773, %v3822
      %v3835 = vmul.f32 %v3774, %v3820
      %v3836 = vmul.f32 %v3775, %v3821
      %v3837 = vmul.f32 %v3776, %v3822
      %v3838 = vmul.f32 %v3777, %v3820
      %v3839 = vmul.f32 %v3778, %v3821
      %v3840 = vmul.f32 %v3779, %v3822
      %v3841 = vmul.f32 %v3780, %v3820
      %v3842 = vmul.f32 %v3781, %v3821
      %v3843 = vmul.f32 %v3782, %v3822
      %v3844 = vmul.f32 %v3783, %v3820
      %v3845 = vmul.f32 %v3784, %v3821
      %v3846 = vmul.f32 %v3785, %v3822
      %v3847 = vmul.f32 %v3786, %v3820
      %v3848 = vmul.f32 %v3787, %v3821
      %v3849 = vmul.f32 %v3788, %v3822
      %v3850 = vmul.f32 %v3789, %v3820
      %v3851 = vmul.f32 %v3790, %v3821
      %v3852 = vmul.f32 %v3791, %v3822
      %v3853 = vmul.f32 %v3792, %v3820
      %v3854 = vmul.f32 %v3793, %v3821
      %v3855 = vmul.f32 %v3794, %v3822
      %v3856 = vmul.f32 %v3795, %v3820
      %v3857 = vmul.f32 %v3796, %v3821
      %v3858 = vmul.f32 %v3797, %v3822
      %v3859 = vmul.f32 %v3798, %v3820
      %v3860 = vmul.f32 %v3799, %v3821
      %v3861 = vmul.f32 %v3800, %v3822
      %v3862 = vmul.f32 %v3801, %v3820
      %v3863 = vmul.f32 %v3802, %v3821
      %v3864 = vmul.f32 %v3803, %v3822
      %v3865 = vmul.f32 %v3804, %v3820
      %v3866 = vmul.f32 %v3805, %v3821
      %v3867 = vmul.f32 %v3806, %v3822
      %v3868 = vmul.f32 %v3807, %v3820
      %v3869 = vmul.f32 %v3808, %v3821
      %v3870 = vmul.f32 %v3809, %v3822
      %v3871 = vsel %vm616, %v3823, 0.0
      %v3872 = vsel %vm616, %v3824, 0.0
      %v3873 = vadd.f32 %v3871, %v3872
      %v3874 = vsel %vm616, %v3825, 0.0
      %v3875 = vadd.f32 %v3873, %v3874
      %v3876 = vsel %vm616, %v3826, 0.0
      %v3877 = vadd.f32 %v3875, %v3876
      %v3878 = vsel %vm616, %v3827, 0.0
      %v3879 = vadd.f32 %v3877, %v3878
      %v3880 = vsel %vm616, %v3828, 0.0
      %v3881 = vadd.f32 %v3879, %v3880
      %v3882 = vsel %vm616, %v3829, 0.0
      %v3883 = vadd.f32 %v3881, %v3882
      %v3884 = vsel %vm616, %v3830, 0.0
      %v3885 = vadd.f32 %v3883, %v3884
      %v3886 = vsel %vm616, %v3831, 0.0
      %v3887 = vadd.f32 %v3885, %v3886
      %v3888 = vsel %vm616, %v3832, 0.0
      %v3889 = vadd.f32 %v3887, %v3888
      %v3890 = vsel %vm616, %v3833, 0.0
      %v3891 = vadd.f32 %v3889, %v3890
      %v3892 = vsel %vm616, %v3834, 0.0
      %v3893 = vadd.f32 %v3891, %v3892
      %v3894 = vsel %vm616, %v3835, 0.0
      %v3895 = vadd.f32 %v3893, %v3894
      %v3896 = vsel %vm616, %v3836, 0.0
      %v3897 = vadd.f32 %v3895, %v3896
      %v3898 = vsel %vm616, %v3837, 0.0
      %v3899 = vadd.f32 %v3897, %v3898
      %v3900 = vsel %vm616, %v3838, 0.0
      %v3901 = vadd.f32 %v3899, %v3900
      %v3902 = vsel %vm616, %v3839, 0.0
      %v3903 = vadd.f32 %v3901, %v3902
      %v3904 = vsel %vm616, %v3840, 0.0
      %v3905 = vadd.f32 %v3903, %v3904
      %v3906 = vsel %vm616, %v3841, 0.0
      %v3907 = vadd.f32 %v3905, %v3906
      %v3908 = vsel %vm616, %v3842, 0.0
      %v3909 = vadd.f32 %v3907, %v3908
      %v3910 = vsel %vm616, %v3843, 0.0
      %v3911 = vadd.f32 %v3909, %v3910
      %v3912 = vsel %vm616, %v3844, 0.0
      %v3913 = vadd.f32 %v3911, %v3912
      %v3914 = vsel %vm616, %v3845, 0.0
      %v3915 = vadd.f32 %v3913, %v3914
      %v3916 = vsel %vm616, %v3846, 0.0
      %v3917 = vadd.f32 %v3915, %v3916
      %v3918 = vsel %vm616, %v3847, 0.0
      %v3919 = vadd.f32 %v3917, %v3918
      %v3920 = vsel %vm616, %v3848, 0.0
      %v3921 = vadd.f32 %v3919, %v3920
      %v3922 = vsel %vm616, %v3849, 0.0
      %v3923 = vadd.f32 %v3921, %v3922
      %v3924 = vsel %vm616, %v3850, 0.0
      %v3925 = vadd.f32 %v3923, %v3924
      %v3926 = vsel %vm616, %v3851, 0.0
      %v3927 = vadd.f32 %v3925, %v3926
      %v3928 = vsel %vm616, %v3852, 0.0
      %v3929 = vadd.f32 %v3927, %v3928
      %v3930 = vsel %vm616, %v3853, 0.0
      %v3931 = vadd.f32 %v3929, %v3930
      %v3932 = vsel %vm616, %v3854, 0.0
      %v3933 = vadd.f32 %v3931, %v3932
      %v3934 = vsel %vm616, %v3855, 0.0
      %v3935 = vadd.f32 %v3933, %v3934
      %v3936 = vsel %vm616, %v3856, 0.0
      %v3937 = vadd.f32 %v3935, %v3936
      %v3938 = vsel %vm616, %v3857, 0.0
      %v3939 = vadd.f32 %v3937, %v3938
      %v3940 = vsel %vm616, %v3858, 0.0
      %v3941 = vadd.f32 %v3939, %v3940
      %v3942 = vsel %vm616, %v3859, 0.0
      %v3943 = vadd.f32 %v3941, %v3942
      %v3944 = vsel %vm616, %v3860, 0.0
      %v3945 = vadd.f32 %v3943, %v3944
      %v3946 = vsel %vm616, %v3861, 0.0
      %v3947 = vadd.f32 %v3945, %v3946
      %v3948 = vsel %vm616, %v3862, 0.0
      %v3949 = vadd.f32 %v3947, %v3948
      %v3950 = vsel %vm616, %v3863, 0.0
      %v3951 = vadd.f32 %v3949, %v3950
      %v3952 = vsel %vm616, %v3864, 0.0
      %v3953 = vadd.f32 %v3951, %v3952
      %v3954 = vsel %vm616, %v3865, 0.0
      %v3955 = vadd.f32 %v3953, %v3954
      %v3956 = vsel %vm616, %v3866, 0.0
      %v3957 = vadd.f32 %v3955, %v3956
      %v3958 = vsel %vm616, %v3867, 0.0
      %v3959 = vadd.f32 %v3957, %v3958
      %v3960 = vsel %vm616, %v3868, 0.0
      %v3961 = vadd.f32 %v3959, %v3960
      %v3962 = vsel %vm616, %v3869, 0.0
      %v3963 = vadd.f32 %v3961, %v3962
      %v3964 = vsel %vm616, %v3870, 0.0
      %v3965 = vadd.f32 %v3963, %v3964
      %v3966 = vrot.slane %v3965, 4
      %v3967 = vadd.f32 %v3965, %v3966
      %v3968 = vrot.slane %v3967, 2
      %v3969 = vadd.f32 %v3967, %v3968
      %v3970 = vrot.slane %v3969, 1
      %v3971 = vadd.f32 %v3969, %v3970
      %v3972 = vmul.f32 %v3971, 0.00390625
      %v3973 = vsub.f32 %v3762, %v3972
      %v3974 = vsub.f32 %v3763, %v3972
      %v3975 = vsub.f32 %v3764, %v3972
      %v3976 = vsub.f32 %v3765, %v3972
      %v3977 = vsub.f32 %v3766, %v3972
      %v3978 = vsub.f32 %v3767, %v3972
      %v3979 = vsub.f32 %v3768, %v3972
      %v3980 = vsub.f32 %v3769, %v3972
      %v3981 = vsub.f32 %v3770, %v3972
      %v3982 = vsub.f32 %v3771, %v3972
      %v3983 = vsub.f32 %v3772, %v3972
      %v3984 = vsub.f32 %v3773, %v3972
      %v3985 = vsub.f32 %v3774, %v3972
      %v3986 = vsub.f32 %v3775, %v3972
      %v3987 = vsub.f32 %v3776, %v3972
      %v3988 = vsub.f32 %v3777, %v3972
      %v3989 = vsub.f32 %v3778, %v3972
      %v3990 = vsub.f32 %v3779, %v3972
      %v3991 = vsub.f32 %v3780, %v3972
      %v3992 = vsub.f32 %v3781, %v3972
      %v3993 = vsub.f32 %v3782, %v3972
      %v3994 = vsub.f32 %v3783, %v3972
      %v3995 = vsub.f32 %v3784, %v3972
      %v3996 = vsub.f32 %v3785, %v3972
      %v3997 = vsub.f32 %v3786, %v3972
      %v3998 = vsub.f32 %v3787, %v3972
      %v3999 = vsub.f32 %v3788, %v3972
      %v4000 = vsub.f32 %v3789, %v3972
      %v4001 = vsub.f32 %v3790, %v3972
      %v4002 = vsub.f32 %v3791, %v3972
      %v4003 = vsub.f32 %v3792, %v3972
      %v4004 = vsub.f32 %v3793, %v3972
      %v4005 = vsub.f32 %v3794, %v3972
      %v4006 = vsub.f32 %v3795, %v3972
      %v4007 = vsub.f32 %v3796, %v3972
      %v4008 = vsub.f32 %v3797, %v3972
      %v4009 = vsub.f32 %v3798, %v3972
      %v4010 = vsub.f32 %v3799, %v3972
      %v4011 = vsub.f32 %v3800, %v3972
      %v4012 = vsub.f32 %v3801, %v3972
      %v4013 = vsub.f32 %v3802, %v3972
      %v4014 = vsub.f32 %v3803, %v3972
      %v4015 = vsub.f32 %v3804, %v3972
      %v4016 = vsub.f32 %v3805, %v3972
      %v4017 = vsub.f32 %v3806, %v3972
      %v4018 = vsub.f32 %v3807, %v3972
      %v4019 = vsub.f32 %v3808, %v3972
      %v4020 = vsub.f32 %v3809, %v3972
      %v4021 = vmul.f32 %v3973, %v3973
      %v4022 = vmul.f32 %v3974, %v3974
      %v4023 = vmul.f32 %v3975, %v3975
      %v4024 = vmul.f32 %v3976, %v3976
      %v4025 = vmul.f32 %v3977, %v3977
      %v4026 = vmul.f32 %v3978, %v3978
      %v4027 = vmul.f32 %v3979, %v3979
      %v4028 = vmul.f32 %v3980, %v3980
      %v4029 = vmul.f32 %v3981, %v3981
      %v4030 = vmul.f32 %v3982, %v3982
      %v4031 = vmul.f32 %v3983, %v3983
      %v4032 = vmul.f32 %v3984, %v3984
      %v4033 = vmul.f32 %v3985, %v3985
      %v4034 = vmul.f32 %v3986, %v3986
      %v4035 = vmul.f32 %v3987, %v3987
      %v4036 = vmul.f32 %v3988, %v3988
      %v4037 = vmul.f32 %v3989, %v3989
      %v4038 = vmul.f32 %v3990, %v3990
      %v4039 = vmul.f32 %v3991, %v3991
      %v4040 = vmul.f32 %v3992, %v3992
      %v4041 = vmul.f32 %v3993, %v3993
      %v4042 = vmul.f32 %v3994, %v3994
      %v4043 = vmul.f32 %v3995, %v3995
      %v4044 = vmul.f32 %v3996, %v3996
      %v4045 = vmul.f32 %v3997, %v3997
      %v4046 = vmul.f32 %v3998, %v3998
      %v4047 = vmul.f32 %v3999, %v3999
      %v4048 = vmul.f32 %v4000, %v4000
      %v4049 = vmul.f32 %v4001, %v4001
      %v4050 = vmul.f32 %v4002, %v4002
      %v4051 = vmul.f32 %v4003, %v4003
      %v4052 = vmul.f32 %v4004, %v4004
      %v4053 = vmul.f32 %v4005, %v4005
      %v4054 = vmul.f32 %v4006, %v4006
      %v4055 = vmul.f32 %v4007, %v4007
      %v4056 = vmul.f32 %v4008, %v4008
      %v4057 = vmul.f32 %v4009, %v4009
      %v4058 = vmul.f32 %v4010, %v4010
      %v4059 = vmul.f32 %v4011, %v4011
      %v4060 = vmul.f32 %v4012, %v4012
      %v4061 = vmul.f32 %v4013, %v4013
      %v4062 = vmul.f32 %v4014, %v4014
      %v4063 = vmul.f32 %v4015, %v4015
      %v4064 = vmul.f32 %v4016, %v4016
      %v4065 = vmul.f32 %v4017, %v4017
      %v4066 = vmul.f32 %v4018, %v4018
      %v4067 = vmul.f32 %v4019, %v4019
      %v4068 = vmul.f32 %v4020, %v4020
      %v4069 = vmul.f32 %v4021, %v3820
      %v4070 = vmul.f32 %v4022, %v3821
      %v4071 = vmul.f32 %v4023, %v3822
      %v4072 = vmul.f32 %v4024, %v3820
      %v4073 = vmul.f32 %v4025, %v3821
      %v4074 = vmul.f32 %v4026, %v3822
      %v4075 = vmul.f32 %v4027, %v3820
      %v4076 = vmul.f32 %v4028, %v3821
      %v4077 = vmul.f32 %v4029, %v3822
      %v4078 = vmul.f32 %v4030, %v3820
      %v4079 = vmul.f32 %v4031, %v3821
      %v4080 = vmul.f32 %v4032, %v3822
      %v4081 = vmul.f32 %v4033, %v3820
      %v4082 = vmul.f32 %v4034, %v3821
      %v4083 = vmul.f32 %v4035, %v3822
      %v4084 = vmul.f32 %v4036, %v3820
      %v4085 = vmul.f32 %v4037, %v3821
      %v4086 = vmul.f32 %v4038, %v3822
      %v4087 = vmul.f32 %v4039, %v3820
      %v4088 = vmul.f32 %v4040, %v3821
      %v4089 = vmul.f32 %v4041, %v3822
      %v4090 = vmul.f32 %v4042, %v3820
      %v4091 = vmul.f32 %v4043, %v3821
      %v4092 = vmul.f32 %v4044, %v3822
      %v4093 = vmul.f32 %v4045, %v3820
      %v4094 = vmul.f32 %v4046, %v3821
      %v4095 = vmul.f32 %v4047, %v3822
      %v4096 = vmul.f32 %v4048, %v3820
      %v4097 = vmul.f32 %v4049, %v3821
      %v4098 = vmul.f32 %v4050, %v3822
      %v4099 = vmul.f32 %v4051, %v3820
      %v4100 = vmul.f32 %v4052, %v3821
      %v4101 = vmul.f32 %v4053, %v3822
      %v4102 = vmul.f32 %v4054, %v3820
      %v4103 = vmul.f32 %v4055, %v3821
      %v4104 = vmul.f32 %v4056, %v3822
      %v4105 = vmul.f32 %v4057, %v3820
      %v4106 = vmul.f32 %v4058, %v3821
      %v4107 = vmul.f32 %v4059, %v3822
      %v4108 = vmul.f32 %v4060, %v3820
      %v4109 = vmul.f32 %v4061, %v3821
      %v4110 = vmul.f32 %v4062, %v3822
      %v4111 = vmul.f32 %v4063, %v3820
      %v4112 = vmul.f32 %v4064, %v3821
      %v4113 = vmul.f32 %v4065, %v3822
      %v4114 = vmul.f32 %v4066, %v3820
      %v4115 = vmul.f32 %v4067, %v3821
      %v4116 = vmul.f32 %v4068, %v3822
      %v4117 = vsel %vm616, %v4069, 0.0
      %v4118 = vsel %vm616, %v4070, 0.0
      %v4119 = vadd.f32 %v4117, %v4118
      %v4120 = vsel %vm616, %v4071, 0.0
      %v4121 = vadd.f32 %v4119, %v4120
      %v4122 = vsel %vm616, %v4072, 0.0
      %v4123 = vadd.f32 %v4121, %v4122
      %v4124 = vsel %vm616, %v4073, 0.0
      %v4125 = vadd.f32 %v4123, %v4124
      %v4126 = vsel %vm616, %v4074, 0.0
      %v4127 = vadd.f32 %v4125, %v4126
      %v4128 = vsel %vm616, %v4075, 0.0
      %v4129 = vadd.f32 %v4127, %v4128
      %v4130 = vsel %vm616, %v4076, 0.0
      %v4131 = vadd.f32 %v4129, %v4130
      %v4132 = vsel %vm616, %v4077, 0.0
      %v4133 = vadd.f32 %v4131, %v4132
      %v4134 = vsel %vm616, %v4078, 0.0
      %v4135 = vadd.f32 %v4133, %v4134
      %v4136 = vsel %vm616, %v4079, 0.0
      %v4137 = vadd.f32 %v4135, %v4136
      %v4138 = vsel %vm616, %v4080, 0.0
      %v4139 = vadd.f32 %v4137, %v4138
      %v4140 = vsel %vm616, %v4081, 0.0
      %v4141 = vadd.f32 %v4139, %v4140
      %v4142 = vsel %vm616, %v4082, 0.0
      %v4143 = vadd.f32 %v4141, %v4142
      %v4144 = vsel %vm616, %v4083, 0.0
      %v4145 = vadd.f32 %v4143, %v4144
      %v4146 = vsel %vm616, %v4084, 0.0
      %v4147 = vadd.f32 %v4145, %v4146
      %v4148 = vsel %vm616, %v4085, 0.0
      %v4149 = vadd.f32 %v4147, %v4148
      %v4150 = vsel %vm616, %v4086, 0.0
      %v4151 = vadd.f32 %v4149, %v4150
      %v4152 = vsel %vm616, %v4087, 0.0
      %v4153 = vadd.f32 %v4151, %v4152
      %v4154 = vsel %vm616, %v4088, 0.0
      %v4155 = vadd.f32 %v4153, %v4154
      %v4156 = vsel %vm616, %v4089, 0.0
      %v4157 = vadd.f32 %v4155, %v4156
      %v4158 = vsel %vm616, %v4090, 0.0
      %v4159 = vadd.f32 %v4157, %v4158
      %v4160 = vsel %vm616, %v4091, 0.0
      %v4161 = vadd.f32 %v4159, %v4160
      %v4162 = vsel %vm616, %v4092, 0.0
      %v4163 = vadd.f32 %v4161, %v4162
      %v4164 = vsel %vm616, %v4093, 0.0
      %v4165 = vadd.f32 %v4163, %v4164
      %v4166 = vsel %vm616, %v4094, 0.0
      %v4167 = vadd.f32 %v4165, %v4166
      %v4168 = vsel %vm616, %v4095, 0.0
      %v4169 = vadd.f32 %v4167, %v4168
      %v4170 = vsel %vm616, %v4096, 0.0
      %v4171 = vadd.f32 %v4169, %v4170
      %v4172 = vsel %vm616, %v4097, 0.0
      %v4173 = vadd.f32 %v4171, %v4172
      %v4174 = vsel %vm616, %v4098, 0.0
      %v4175 = vadd.f32 %v4173, %v4174
      %v4176 = vsel %vm616, %v4099, 0.0
      %v4177 = vadd.f32 %v4175, %v4176
      %v4178 = vsel %vm616, %v4100, 0.0
      %v4179 = vadd.f32 %v4177, %v4178
      %v4180 = vsel %vm616, %v4101, 0.0
      %v4181 = vadd.f32 %v4179, %v4180
      %v4182 = vsel %vm616, %v4102, 0.0
      %v4183 = vadd.f32 %v4181, %v4182
      %v4184 = vsel %vm616, %v4103, 0.0
      %v4185 = vadd.f32 %v4183, %v4184
      %v4186 = vsel %vm616, %v4104, 0.0
      %v4187 = vadd.f32 %v4185, %v4186
      %v4188 = vsel %vm616, %v4105, 0.0
      %v4189 = vadd.f32 %v4187, %v4188
      %v4190 = vsel %vm616, %v4106, 0.0
      %v4191 = vadd.f32 %v4189, %v4190
      %v4192 = vsel %vm616, %v4107, 0.0
      %v4193 = vadd.f32 %v4191, %v4192
      %v4194 = vsel %vm616, %v4108, 0.0
      %v4195 = vadd.f32 %v4193, %v4194
      %v4196 = vsel %vm616, %v4109, 0.0
      %v4197 = vadd.f32 %v4195, %v4196
      %v4198 = vsel %vm616, %v4110, 0.0
      %v4199 = vadd.f32 %v4197, %v4198
      %v4200 = vsel %vm616, %v4111, 0.0
      %v4201 = vadd.f32 %v4199, %v4200
      %v4202 = vsel %vm616, %v4112, 0.0
      %v4203 = vadd.f32 %v4201, %v4202
      %v4204 = vsel %vm616, %v4113, 0.0
      %v4205 = vadd.f32 %v4203, %v4204
      %v4206 = vsel %vm616, %v4114, 0.0
      %v4207 = vadd.f32 %v4205, %v4206
      %v4208 = vsel %vm616, %v4115, 0.0
      %v4209 = vadd.f32 %v4207, %v4208
      %v4210 = vsel %vm616, %v4116, 0.0
      %v4211 = vadd.f32 %v4209, %v4210
      %v4212 = vrot.slane %v4211, 4
      %v4213 = vadd.f32 %v4211, %v4212
      %v4214 = vrot.slane %v4213, 2
      %v4215 = vadd.f32 %v4213, %v4214
      %v4216 = vrot.slane %v4215, 1
      %v4217 = vadd.f32 %v4215, %v4216
      %v4218 = vmul.f32 %v4217, 0.00390625
      %v4219 = vld [vmem:[%s227] sm:$0x1]
      %v4220 = vld [vmem:[%s227 + $0x1] sm:$0x1]
      %v4221 = vadd.f32 %v4218, 1e-08
      %v4222 = vrsqrt.pop %v4221
      %v4223 = vmul.f32 %v4219, %v4222
      %v4224 = vlaneseq
      %v4225 = vshrl.u32 %v4224, 7
      %v4226 = vsub.s32 0, %v4225
      %v4227 = vrot.slane %v4223, %v4226
      %v4228 = vmul.f32 %v3973, %v4227
      %v4229 = vmul.f32 %v3974, %v4227
      %v4230 = vmul.f32 %v3975, %v4227
      %v4231 = vmul.f32 %v3976, %v4227
      %v4232 = vmul.f32 %v3977, %v4227
      %v4233 = vmul.f32 %v3978, %v4227
      %v4234 = vmul.f32 %v3979, %v4227
      %v4235 = vmul.f32 %v3980, %v4227
      %v4236 = vmul.f32 %v3981, %v4227
      %v4237 = vmul.f32 %v3982, %v4227
      %v4238 = vmul.f32 %v3983, %v4227
      %v4239 = vmul.f32 %v3984, %v4227
      %v4240 = vmul.f32 %v3985, %v4227
      %v4241 = vmul.f32 %v3986, %v4227
      %v4242 = vmul.f32 %v3987, %v4227
      %v4243 = vmul.f32 %v3988, %v4227
      %v4244 = vmul.f32 %v3989, %v4227
      %v4245 = vmul.f32 %v3990, %v4227
      %v4246 = vmul.f32 %v3991, %v4227
      %v4247 = vmul.f32 %v3992, %v4227
      %v4248 = vmul.f32 %v3993, %v4227
      %v4249 = vmul.f32 %v3994, %v4227
      %v4250 = vmul.f32 %v3995, %v4227
      %v4251 = vmul.f32 %v3996, %v4227
      %v4252 = vmul.f32 %v3997, %v4227
      %v4253 = vmul.f32 %v3998, %v4227
      %v4254 = vmul.f32 %v3999, %v4227
      %v4255 = vmul.f32 %v4000, %v4227
      %v4256 = vmul.f32 %v4001, %v4227
      %v4257 = vmul.f32 %v4002, %v4227
      %v4258 = vmul.f32 %v4003, %v4227
      %v4259 = vmul.f32 %v4004, %v4227
      %v4260 = vmul.f32 %v4005, %v4227
      %v4261 = vmul.f32 %v4006, %v4227
      %v4262 = vmul.f32 %v4007, %v4227
      %v4263 = vmul.f32 %v4008, %v4227
      %v4264 = vmul.f32 %v4009, %v4227
      %v4265 = vmul.f32 %v4010, %v4227
      %v4266 = vmul.f32 %v4011, %v4227
      %v4267 = vmul.f32 %v4012, %v4227
      %v4268 = vmul.f32 %v4013, %v4227
      %v4269 = vmul.f32 %v4014, %v4227
      %v4270 = vmul.f32 %v4015, %v4227
      %v4271 = vmul.f32 %v4016, %v4227
      %v4272 = vmul.f32 %v4017, %v4227
      %v4273 = vmul.f32 %v4018, %v4227
      %v4274 = vmul.f32 %v4019, %v4227
      %v4275 = vmul.f32 %v4020, %v4227
      %v4276 = vlaneseq
      %v4277 = vshrl.u32 %v4276, 7
      %v4278 = vsub.s32 0, %v4277
      %v4279 = vrot.slane %v4220, %v4278
      %v4280 = vadd.f32 %v4228, %v4279
      %v4281 = vadd.f32 %v4229, %v4279
      %v4282 = vadd.f32 %v4230, %v4279
      %v4283 = vadd.f32 %v4231, %v4279
      %v4284 = vadd.f32 %v4232, %v4279
      %v4285 = vadd.f32 %v4233, %v4279
      %v4286 = vadd.f32 %v4234, %v4279
      %v4287 = vadd.f32 %v4235, %v4279
      %v4288 = vadd.f32 %v4236, %v4279
      %v4289 = vadd.f32 %v4237, %v4279
      %v4290 = vadd.f32 %v4238, %v4279
      %v4291 = vadd.f32 %v4239, %v4279
      %v4292 = vadd.f32 %v4240, %v4279
      %v4293 = vadd.f32 %v4241, %v4279
      %v4294 = vadd.f32 %v4242, %v4279
      %v4295 = vadd.f32 %v4243, %v4279
      %v4296 = vadd.f32 %v4244, %v4279
      %v4297 = vadd.f32 %v4245, %v4279
      %v4298 = vadd.f32 %v4246, %v4279
      %v4299 = vadd.f32 %v4247, %v4279
      %v4300 = vadd.f32 %v4248, %v4279
      %v4301 = vadd.f32 %v4249, %v4279
      %v4302 = vadd.f32 %v4250, %v4279
      %v4303 = vadd.f32 %v4251, %v4279
      %v4304 = vadd.f32 %v4252, %v4279
      %v4305 = vadd.f32 %v4253, %v4279
      %v4306 = vadd.f32 %v4254, %v4279
      %v4307 = vadd.f32 %v4255, %v4279
      %v4308 = vadd.f32 %v4256, %v4279
      %v4309 = vadd.f32 %v4257, %v4279
      %v4310 = vadd.f32 %v4258, %v4279
      %v4311 = vadd.f32 %v4259, %v4279
      %v4312 = vadd.f32 %v4260, %v4279
      %v4313 = vadd.f32 %v4261, %v4279
      %v4314 = vadd.f32 %v4262, %v4279
      %v4315 = vadd.f32 %v4263, %v4279
      %v4316 = vadd.f32 %v4264, %v4279
      %v4317 = vadd.f32 %v4265, %v4279
      %v4318 = vadd.f32 %v4266, %v4279
      %v4319 = vadd.f32 %v4267, %v4279
      %v4320 = vadd.f32 %v4268, %v4279
      %v4321 = vadd.f32 %v4269, %v4279
      %v4322 = vadd.f32 %v4270, %v4279
      %v4323 = vadd.f32 %v4271, %v4279
      %v4324 = vadd.f32 %v4272, %v4279
      %v4325 = vadd.f32 %v4273, %v4279
      %v4326 = vadd.f32 %v4274, %v4279
      %v4327 = vadd.f32 %v4275, %v4279
      %v4328 = vmax.f32 %v4280, 0.0
      %v4329 = vmax.f32 %v4281, 0.0
      %v4330 = vmax.f32 %v4282, 0.0
      %v4331 = vmax.f32 %v4283, 0.0
      %v4332 = vmax.f32 %v4284, 0.0
      %v4333 = vmax.f32 %v4285, 0.0
      %v4334 = vmax.f32 %v4286, 0.0
      %v4335 = vmax.f32 %v4287, 0.0
      %v4336 = vmax.f32 %v4288, 0.0
      %v4337 = vmax.f32 %v4289, 0.0
      %v4338 = vmax.f32 %v4290, 0.0
      %v4339 = vmax.f32 %v4291, 0.0
      %v4340 = vmax.f32 %v4292, 0.0
      %v4341 = vmax.f32 %v4293, 0.0
      %v4342 = vmax.f32 %v4294, 0.0
      %v4343 = vmax.f32 %v4295, 0.0
      %v4344 = vmax.f32 %v4296, 0.0
      %v4345 = vmax.f32 %v4297, 0.0
      %v4346 = vmax.f32 %v4298, 0.0
      %v4347 = vmax.f32 %v4299, 0.0
      %v4348 = vmax.f32 %v4300, 0.0
      %v4349 = vmax.f32 %v4301, 0.0
      %v4350 = vmax.f32 %v4302, 0.0
      %v4351 = vmax.f32 %v4303, 0.0
      %v4352 = vmax.f32 %v4304, 0.0
      %v4353 = vmax.f32 %v4305, 0.0
      %v4354 = vmax.f32 %v4306, 0.0
      %v4355 = vmax.f32 %v4307, 0.0
      %v4356 = vmax.f32 %v4308, 0.0
      %v4357 = vmax.f32 %v4309, 0.0
      %v4358 = vmax.f32 %v4310, 0.0
      %v4359 = vmax.f32 %v4311, 0.0
      %v4360 = vmax.f32 %v4312, 0.0
      %v4361 = vmax.f32 %v4313, 0.0
      %v4362 = vmax.f32 %v4314, 0.0
      %v4363 = vmax.f32 %v4315, 0.0
      %v4364 = vmax.f32 %v4316, 0.0
      %v4365 = vmax.f32 %v4317, 0.0
      %v4366 = vmax.f32 %v4318, 0.0
      %v4367 = vmax.f32 %v4319, 0.0
      %v4368 = vmax.f32 %v4320, 0.0
      %v4369 = vmax.f32 %v4321, 0.0
      %v4370 = vmax.f32 %v4322, 0.0
      %v4371 = vmax.f32 %v4323, 0.0
      %v4372 = vmax.f32 %v4324, 0.0
      %v4373 = vmax.f32 %v4325, 0.0
      %v4374 = vmax.f32 %v4326, 0.0
      %v4375 = vmax.f32 %v4327, 0.0
      %v4376 = vpack.c.bf16 %v4329, %v4328
      %v4377 = vpack.c.bf16 %v4331, %v4330
      %v4378 = vpack.c.bf16 %v4333, %v4332
      %v4379 = vpack.c.bf16 %v4335, %v4334
      %v4380 = vpack.c.bf16 %v4337, %v4336
      %v4381 = vpack.c.bf16 %v4339, %v4338
      %v4382 = vpack.c.bf16 %v4341, %v4340
      %v4383 = vpack.c.bf16 %v4343, %v4342
      %v4384 = vpack.c.bf16 %v4345, %v4344
      %v4385 = vpack.c.bf16 %v4347, %v4346
      %v4386 = vpack.c.bf16 %v4349, %v4348
      %v4387 = vpack.c.bf16 %v4351, %v4350
      %v4388 = vpack.c.bf16 %v4353, %v4352
      %v4389 = vpack.c.bf16 %v4355, %v4354
      %v4390 = vpack.c.bf16 %v4357, %v4356
      %v4391 = vpack.c.bf16 %v4359, %v4358
      %v4392 = vpack.c.bf16 %v4361, %v4360
      %v4393 = vpack.c.bf16 %v4363, %v4362
      %v4394 = vpack.c.bf16 %v4365, %v4364
      %v4395 = vpack.c.bf16 %v4367, %v4366
      %v4396 = vpack.c.bf16 %v4369, %v4368
      %v4397 = vpack.c.bf16 %v4371, %v4370
      %v4398 = vpack.c.bf16 %v4373, %v4372
      %v4399 = vpack.c.bf16 %v4375, %v4374
      %v4424 = vunpack.c.l.b16 %v4376
      %v4425 = vunpack.c.h.b16 %v4376
      %v4426 = vunpack.c.l.b16 %v4377
      %v4427 = vunpack.c.h.b16 %v4377
      %v4428 = vunpack.c.l.b16 %v4378
      %v4429 = vunpack.c.h.b16 %v4378
      %v4430 = vunpack.c.l.b16 %v4379
      %v4431 = vunpack.c.h.b16 %v4379
      %v4432 = vunpack.c.l.b16 %v4380
      %v4433 = vunpack.c.h.b16 %v4380
      %v4434 = vunpack.c.l.b16 %v4381
      %v4435 = vunpack.c.h.b16 %v4381
      %v4436 = vunpack.c.l.b16 %v4382
      %v4437 = vunpack.c.h.b16 %v4382
      %v4438 = vunpack.c.l.b16 %v4383
      %v4439 = vunpack.c.h.b16 %v4383
      %v4440 = vunpack.c.l.b16 %v4384
      %v4441 = vunpack.c.h.b16 %v4384
      %v4442 = vunpack.c.l.b16 %v4385
      %v4443 = vunpack.c.h.b16 %v4385
      %v4444 = vunpack.c.l.b16 %v4386
      %v4445 = vunpack.c.h.b16 %v4386
      %v4446 = vunpack.c.l.b16 %v4387
      %v4447 = vunpack.c.h.b16 %v4387
      %v4448 = vunpack.c.l.b16 %v4388
      %v4449 = vunpack.c.h.b16 %v4388
      %v4450 = vunpack.c.l.b16 %v4389
      %v4451 = vunpack.c.h.b16 %v4389
      %v4452 = vunpack.c.l.b16 %v4390
      %v4453 = vunpack.c.h.b16 %v4390
      %v4454 = vunpack.c.l.b16 %v4391
      %v4455 = vunpack.c.h.b16 %v4391
      %v4456 = vunpack.c.l.b16 %v4392
      %v4457 = vunpack.c.h.b16 %v4392
      %v4458 = vunpack.c.l.b16 %v4393
      %v4459 = vunpack.c.h.b16 %v4393
      %v4460 = vunpack.c.l.b16 %v4394
      %v4461 = vunpack.c.h.b16 %v4394
      %v4462 = vunpack.c.l.b16 %v4395
      %v4463 = vunpack.c.h.b16 %v4395
      %v4464 = vunpack.c.l.b16 %v4396
      %v4465 = vunpack.c.h.b16 %v4396
      %v4466 = vunpack.c.l.b16 %v4397
      %v4467 = vunpack.c.h.b16 %v4397
      %v4468 = vunpack.c.l.b16 %v4398
      %v4469 = vunpack.c.h.b16 %v4398
      %v4470 = vunpack.c.l.b16 %v4399
      %v4471 = vunpack.c.h.b16 %v4399
      %v4472 = vpack.c.b16 %v4424, %v4424
      %v4473 = vpack.c.b16 %v4425, %v4425
      %v4474 = vpack.c.b16 %v4426, %v4426
      %v4475 = vpack.c.b16 %v4427, %v4427
      %v4476 = vpack.c.b16 %v4428, %v4428
      %v4477 = vpack.c.b16 %v4429, %v4429
      %v4478 = vpack.c.b16 %v4430, %v4430
      %v4479 = vpack.c.b16 %v4431, %v4431
      %v4480 = vpack.c.b16 %v4432, %v4432
      %v4481 = vpack.c.b16 %v4433, %v4433
      %v4482 = vpack.c.b16 %v4434, %v4434
      %v4483 = vpack.c.b16 %v4435, %v4435
      %v4484 = vpack.c.b16 %v4436, %v4436
      %v4485 = vpack.c.b16 %v4437, %v4437
      %v4486 = vpack.c.b16 %v4438, %v4438
      %v4487 = vpack.c.b16 %v4439, %v4439
      %v4488 = vpack.c.b16 %v4440, %v4440
      %v4489 = vpack.c.b16 %v4441, %v4441
      %v4490 = vpack.c.b16 %v4442, %v4442
      %v4491 = vpack.c.b16 %v4443, %v4443
      %v4492 = vpack.c.b16 %v4444, %v4444
      %v4493 = vpack.c.b16 %v4445, %v4445
      %v4494 = vpack.c.b16 %v4446, %v4446
      %v4495 = vpack.c.b16 %v4447, %v4447
      %v4496 = vpack.c.b16 %v4448, %v4448
      %v4497 = vpack.c.b16 %v4449, %v4449
      %v4498 = vpack.c.b16 %v4450, %v4450
      %v4499 = vpack.c.b16 %v4451, %v4451
      %v4500 = vpack.c.b16 %v4452, %v4452
      %v4501 = vpack.c.b16 %v4453, %v4453
      %v4502 = vpack.c.b16 %v4454, %v4454
      %v4503 = vpack.c.b16 %v4455, %v4455
      %v4504 = vpack.c.b16 %v4456, %v4456
      %v4505 = vpack.c.b16 %v4457, %v4457
      %v4506 = vpack.c.b16 %v4458, %v4458
      %v4507 = vpack.c.b16 %v4459, %v4459
      %v4508 = vpack.c.b16 %v4460, %v4460
      %v4509 = vpack.c.b16 %v4461, %v4461
      %v4510 = vpack.c.b16 %v4462, %v4462
      %v4511 = vpack.c.b16 %v4463, %v4463
      %v4512 = vpack.c.b16 %v4464, %v4464
      %v4513 = vpack.c.b16 %v4465, %v4465
      %v4514 = vpack.c.b16 %v4466, %v4466
      %v4515 = vpack.c.b16 %v4467, %v4467
      %v4516 = vpack.c.b16 %v4468, %v4468
      %v4517 = vpack.c.b16 %v4469, %v4469
      %v4518 = vpack.c.b16 %v4470, %v4470
      %v4519 = vpack.c.b16 %v4471, %v4471
      %vm4568 = vcmask 60416
      %4569 = vst.msk [vmem:[%s235] sm:$0xf] %vm4568, %v4472
      %4570 = vst.msk [vmem:[%s235 + $0x4] sm:$0xf] %vm4568, %v4473
      %4571 = vst.msk [vmem:[%s235 + $0x8] sm:$0xf] %vm4568, %v4474
      %4572 = vst.msk [vmem:[%s235 + $0xc] sm:$0xf] %vm4568, %v4475
      %4573 = vst.msk [vmem:[%s235 + $0x10] sm:$0xf] %vm4568, %v4476
      %4574 = vst.msk [vmem:[%s235 + $0x14] sm:$0xf] %vm4568, %v4477
      %4575 = vst.msk [vmem:[%s235 + $0x18] sm:$0xf] %vm4568, %v4478
      %4576 = vst.msk [vmem:[%s235 + $0x1c] sm:$0xf] %vm4568, %v4479
      %4577 = vst.msk [vmem:[%s235 + $0x20] sm:$0xf] %vm4568, %v4480
      %4578 = vst.msk [vmem:[%s235 + $0x24] sm:$0xf] %vm4568, %v4481
      %4579 = vst.msk [vmem:[%s235 + $0x28] sm:$0xf] %vm4568, %v4482
      %4580 = vst.msk [vmem:[%s235 + $0x2c] sm:$0xf] %vm4568, %v4483
      %4581 = vst.msk [vmem:[%s235 + $0x30] sm:$0xf] %vm4568, %v4484
      %4582 = vst.msk [vmem:[%s235 + $0x34] sm:$0xf] %vm4568, %v4485
      %4583 = vst.msk [vmem:[%s235 + $0x38] sm:$0xf] %vm4568, %v4486
      %4584 = vst.msk [vmem:[%s235 + $0x3c] sm:$0xf] %vm4568, %v4487
      %4585 = vst.msk [vmem:[%s235 + $0x40] sm:$0xf] %vm4568, %v4488
      %4586 = vst.msk [vmem:[%s235 + $0x44] sm:$0xf] %vm4568, %v4489
      %4587 = vst.msk [vmem:[%s235 + $0x48] sm:$0xf] %vm4568, %v4490
      %4588 = vst.msk [vmem:[%s235 + $0x4c] sm:$0xf] %vm4568, %v4491
      %4589 = vst.msk [vmem:[%s235 + $0x50] sm:$0xf] %vm4568, %v4492
      %4590 = vst.msk [vmem:[%s235 + $0x54] sm:$0xf] %vm4568, %v4493
      %4591 = vst.msk [vmem:[%s235 + $0x58] sm:$0xf] %vm4568, %v4494
      %4592 = vst.msk [vmem:[%s235 + $0x5c] sm:$0xf] %vm4568, %v4495
      %4593 = vst.msk [vmem:[%s235 + $0x60] sm:$0xf] %vm4568, %v4496
      %4594 = vst.msk [vmem:[%s235 + $0x64] sm:$0xf] %vm4568, %v4497
      %4595 = vst.msk [vmem:[%s235 + $0x68] sm:$0xf] %vm4568, %v4498
      %4596 = vst.msk [vmem:[%s235 + $0x6c] sm:$0xf] %vm4568, %v4499
      %4597 = vst.msk [vmem:[%s235 + $0x70] sm:$0xf] %vm4568, %v4500
      %4598 = vst.msk [vmem:[%s235 + $0x74] sm:$0xf] %vm4568, %v4501
      %4599 = vst.msk [vmem:[%s235 + $0x78] sm:$0xf] %vm4568, %v4502
      %4600 = vst.msk [vmem:[%s235 + $0x7c] sm:$0xf] %vm4568, %v4503
      %4601 = vst.msk [vmem:[%s235 + $0x80] sm:$0xf] %vm4568, %v4504
      %4602 = vst.msk [vmem:[%s235 + $0x84] sm:$0xf] %vm4568, %v4505
      %4603 = vst.msk [vmem:[%s235 + $0x88] sm:$0xf] %vm4568, %v4506
      %4604 = vst.msk [vmem:[%s235 + $0x8c] sm:$0xf] %vm4568, %v4507
      %4605 = vst.msk [vmem:[%s235 + $0x90] sm:$0xf] %vm4568, %v4508
      %4606 = vst.msk [vmem:[%s235 + $0x94] sm:$0xf] %vm4568, %v4509
      %4607 = vst.msk [vmem:[%s235 + $0x98] sm:$0xf] %vm4568, %v4510
      %4608 = vst.msk [vmem:[%s235 + $0x9c] sm:$0xf] %vm4568, %v4511
      %4609 = vst.msk [vmem:[%s235 + $0xa0] sm:$0xf] %vm4568, %v4512
      %4610 = vst.msk [vmem:[%s235 + $0xa4] sm:$0xf] %vm4568, %v4513
      %4611 = vst.msk [vmem:[%s235 + $0xa8] sm:$0xf] %vm4568, %v4514
      %4612 = vst.msk [vmem:[%s235 + $0xac] sm:$0xf] %vm4568, %v4515
      %4613 = vst.msk [vmem:[%s235 + $0xb0] sm:$0xf] %vm4568, %v4516
      %4614 = vst.msk [vmem:[%s235 + $0xb4] sm:$0xf] %vm4568, %v4517
      %4615 = vst.msk [vmem:[%s235 + $0xb8] sm:$0xf] %vm4568, %v4518
      %4616 = vst.msk [vmem:[%s235 + $0xbc] sm:$0xf] %vm4568, %v4519
      %p4617 = scmp.lt.s32.totalorder %s18, 1
      %s4618 = scalar_select %p4617, %s18, 1
      %p4619 = scmp.lt.s32.totalorder %s19, 0
      %s4620 = scalar_select %p4619, %s19, 0
      %s4621 = smul.addr %s4618, 48
      %s4622 = sadd.s32 %s4620, %s4621
      %s4623 = smul.addr %s4622, 4
      %s4624 = scalar_lea.vmem %s3, %s4623
      // Predicated region
      $region33: #{resnet_block_adain.2} parent=31 // pred_check
        %p4625 = pneg %p126
      $region34: #{resnet_block_adain.2} parent=31 // pred_check_branch
        %4627 = sbr.rel (%p4625) target = $region36
      $region35: #{resnet_block_adain.2} parent=31 // pred_region
        _
      $region36: #{resnet_block_adain.2} parent=31 // pred_fallthru
        _
    $region32: #{resnet_block_adain.2} parent=5 // pred_fallthru
      _
    %p4628 = scmp.le.s32.totalorder 2, %s9
    // Predicated region
    $region37: #{resnet_block_adain.2} parent=5 // pred_check
      %p4629 = pneg %p4628
    $region38: #{resnet_block_adain.2} parent=5 // pred_check_branch
      %4631 = sbr.rel (%p4629) target = $region40
    $region39: #{resnet_block_adain.2} parent=5 // pred_region
      %s4632 = ssub.s32 %s9, 2
      // Predicated region
      $region41: #{resnet_block_adain.2} parent=39 // pred_check
        %p4633 = pneg %p132
      $region42: #{resnet_block_adain.2} parent=39 // pred_check_branch
        %4635 = sbr.rel (%p4633) target = $region44
      $region43: #{resnet_block_adain.2} parent=39 // pred_region
        %p4636 = scmp.lt.s32.totalorder %s20, 1
        %s4637 = scalar_select %p4636, %s20, 1
        %p4638 = scmp.lt.s32.totalorder %s21, 0
        %s4639 = scalar_select %p4638, %s21, 0
        %s4640 = smul.addr %s4637, 48
        %s4641 = sadd.s32 %s4639, %s4640
        %s4642 = smul.addr %s4641, 4
        %s4643 = scalar_lea.vmem %s3, %s4642
      $region44: #{resnet_block_adain.2} parent=39 // pred_fallthru
        _
    $region40: #{resnet_block_adain.2} parent=5 // pred_fallthru
      _
  $region6: #{resnet_block_adain.2} parent=0 // loop_footer
    %s13 = sadd.s32 1, %s9
  $region7: #{resnet_block_adain.2} parent=0 // loop_footer_branch
    %8 = sbr.rel target = $region3
  $region8: #{resnet_block_adain.2} parent=0 // loop_exit
    _

// kernel: resnet_block_adain.3
$region0: #{resnet_block_adain.3}
  #allocation0 [shape = 'u32[]', space=smem, size = 0x4, offset = 0x4, fixed_abs, tag = 'smem constant byte address 0x4 - core index']
  #allocation1 [shape = 'u32[144,128]{1,0:T(1,128)}', space=vmem, size = 0x12000, scoped, tag = 'internal scratch']
  %s0 = inlined_call_operand.vmem [shape: bf16[2,440,8], index: 0, kind: input, shape index: {}]
  %s1 = inlined_call_operand.vmem [shape: bf16[9,8,8], index: 1, kind: input, shape index: {}]
  %s2 = inlined_call_operand.vmem [shape: f32[2,2,8], index: 2, kind: input, shape index: {}]
  %s3 = inlined_call_operand.vmem [shape: f32[2,384,8], index: 3, kind: input, shape index: {}]
  %s4 = inlined_call_operand.vmem [shape: f32[2,384,8], index: 4, kind: output, shape index: {}]
  %s5 = sld [smem:[#allocation0]]
  $region49: #{resnet_block_adain.3} parent=0
    _
  %s7 = ssub.s32 1, %s5
  %s8 = scalar_select 0, %s7, %s5
  loop: start=0, step=1, limit=4
  $region2: #{resnet_block_adain.3} parent=0 // loop_pre_header
    _
  $region3: #{resnet_block_adain.3} parent=0 // loop_header
    %s10 = sphi 0, %s14
    %p11 = scmp.ge.s32.totalorder %s10, 4
    %s17 = sphi 0, %s29
    %s18 = sphi 0, %s25
    %s19 = sphi 0, %s17
    %s20 = sphi 0, %s18
    %s21 = sphi 0, %s19
    %s22 = sphi 0, %s20
    %s32 = sphi 0, %s34
    %s35 = sphi 0, %s32
    %s36 = sphi 0, %s35
    %s52 = sphi 0, %s36
    %s58 = sphi 0, %s60
    %s61 = sphi 0, %s58
    %s62 = sphi 0, %s61
    %s78 = sphi 0, %s62
    %s86 = sphi 0, %s88
    %s89 = sphi 0, %s86
    %s90 = sphi 0, %s89
    %s106 = sphi 0, %s90
    %s114 = sphi 0, %s116
    %s117 = sphi 0, %s114
    %s118 = sphi 0, %s117
    %s134 = sphi 0, %s118
    %s142 = sphi 0, %s144
    %s145 = sphi 0, %s142
    %s146 = sphi 0, %s145
    %s162 = sphi 0, %s146
  $region4: #{resnet_block_adain.3} parent=0 // loop_header_branch
    %13 = sbr.rel (%p11) target = $region8
  $region5: #{resnet_block_adain.3} parent=0 // loop_body
    %s15 = ssub.s32 %s10, 1
    %s16 = ssub.s32 %s10, 2
    %s23 = sadd.s32 1, %s18
    %p24 = scmp.ge.s32.totalorder %s23, 1
    %s25 = scalar_select %p24, 0, %s23
    %s26 = sadd.s32 1, %s17
    %s27 = scalar_select %p24, %s26, %s17
    %p28 = scmp.ge.s32.totalorder %s27, 2
    %s29 = scalar_select %p28, 0, %s27
    %s30 = ssub.s32 %s17, %s29
    %p31 = scmp.eq.s32.totalorder %s30, 0
    %s33 = sadd.s32 %s32, 1
    %s34 = scalar_select %p31, %s32, %s33
    %p37 = pneg %p31
    %p38 = scmp.eq.s32.totalorder %s10, 1
    %p39 = por %p37, %p38
    %p40 = scmp.ne.s32.totalorder %s32, %s35
    %p41 = scmp.eq.s32.totalorder %s10, 0
    %p42 = por %p40, %p41
    %p43 = scmp.ne.s32.totalorder %s32, %s35
    %p44 = scmp.eq.s32.totalorder %s15, 1
    %p45 = por %p43, %p44
    %p46 = scmp.ne.s32.totalorder %s35, %s36
    %p47 = scmp.eq.s32.totalorder %s15, 0
    %p48 = por %p46, %p47
    %p49 = scmp.ne.s32.totalorder %s35, %s36
    %p50 = scmp.eq.s32.totalorder %s16, 1
    %p51 = por %p49, %p50
    %p53 = scmp.ne.s32.totalorder %s36, %s52
    %p54 = scmp.eq.s32.totalorder %s16, 0
    %p55 = por %p53, %p54
    %s56 = ssub.s32 %s18, %s25
    %p57 = scmp.eq.s32.totalorder %s56, 0
    %s59 = sadd.s32 %s58, 1
    %s60 = scalar_select %p57, %s58, %s59
    %p63 = pneg %p57
    %p64 = scmp.eq.s32.totalorder %s10, 1
    %p65 = por %p63, %p64
    %p66 = scmp.ne.s32.totalorder %s58, %s61
    %p67 = scmp.eq.s32.totalorder %s10, 0
    %p68 = por %p66, %p67
    %p69 = scmp.ne.s32.totalorder %s58, %s61
    %p70 = scmp.eq.s32.totalorder %s15, 1
    %p71 = por %p69, %p70
    %p72 = scmp.ne.s32.totalorder %s61, %s62
    %p73 = scmp.eq.s32.totalorder %s15, 0
    %p74 = por %p72, %p73
    %p75 = scmp.ne.s32.totalorder %s61, %s62
    %p76 = scmp.eq.s32.totalorder %s16, 1
    %p77 = por %p75, %p76
    %p79 = scmp.ne.s32.totalorder %s62, %s78
    %p80 = scmp.eq.s32.totalorder %s16, 0
    %p81 = por %p79, %p80
    %s82 = ssub.s32 %s17, %s29
    %s83 = ssub.s32 %s18, %s25
    %s84 = sor.u32 %s82, %s83
    %p85 = scmp.eq.s32.totalorder %s84, 0
    %s87 = sadd.s32 %s86, 1
    %s88 = scalar_select %p85, %s86, %s87
    %p91 = pneg %p85
    %p92 = scmp.eq.s32.totalorder %s10, 1
    %p93 = por %p91, %p92
    %p94 = scmp.ne.s32.totalorder %s86, %s89
    %p95 = scmp.eq.s32.totalorder %s10, 0
    %p96 = por %p94, %p95
    %p97 = scmp.ne.s32.totalorder %s86, %s89
    %p98 = scmp.eq.s32.totalorder %s15, 1
    %p99 = por %p97, %p98
    %p100 = scmp.ne.s32.totalorder %s89, %s90
    %p101 = scmp.eq.s32.totalorder %s15, 0
    %p102 = por %p100, %p101
    %p103 = scmp.ne.s32.totalorder %s89, %s90
    %p104 = scmp.eq.s32.totalorder %s16, 1
    %p105 = por %p103, %p104
    %p107 = scmp.ne.s32.totalorder %s90, %s106
    %p108 = scmp.eq.s32.totalorder %s16, 0
    %p109 = por %p107, %p108
    %s110 = ssub.s32 %s17, %s29
    %s111 = ssub.s32 %s18, %s25
    %s112 = sor.u32 %s110, %s111
    %p113 = scmp.eq.s32.totalorder %s112, 0
    %s115 = sadd.s32 %s114, 1
    %s116 = scalar_select %p113, %s114, %s115
    %p119 = pneg %p113
    %p120 = scmp.eq.s32.totalorder %s10, 1
    %p121 = por %p119, %p120
    %p122 = scmp.ne.s32.totalorder %s114, %s117
    %p123 = scmp.eq.s32.totalorder %s10, 0
    %p124 = por %p122, %p123
    %p125 = scmp.ne.s32.totalorder %s114, %s117
    %p126 = scmp.eq.s32.totalorder %s15, 1
    %p127 = por %p125, %p126
    %p128 = scmp.ne.s32.totalorder %s117, %s118
    %p129 = scmp.eq.s32.totalorder %s15, 0
    %p130 = por %p128, %p129
    %p131 = scmp.ne.s32.totalorder %s117, %s118
    %p132 = scmp.eq.s32.totalorder %s16, 1
    %p133 = por %p131, %p132
    %p135 = scmp.ne.s32.totalorder %s118, %s134
    %p136 = scmp.eq.s32.totalorder %s16, 0
    %p137 = por %p135, %p136
    %s138 = ssub.s32 %s17, %s29
    %s139 = ssub.s32 %s18, %s25
    %s140 = sor.u32 %s138, %s139
    %p141 = scmp.eq.s32.totalorder %s140, 0
    %s143 = sadd.s32 %s142, 1
    %s144 = scalar_select %p141, %s142, %s143
    %p147 = pneg %p141
    %p148 = scmp.eq.s32.totalorder %s10, 1
    %p149 = por %p147, %p148
    %p150 = scmp.ne.s32.totalorder %s142, %s145
    %p151 = scmp.eq.s32.totalorder %s10, 0
    %p152 = por %p150, %p151
    %p153 = scmp.ne.s32.totalorder %s142, %s145
    %p154 = scmp.eq.s32.totalorder %s15, 1
    %p155 = por %p153, %p154
    %p156 = scmp.ne.s32.totalorder %s145, %s146
    %p157 = scmp.eq.s32.totalorder %s15, 0
    %p158 = por %p156, %p157
    %p159 = scmp.ne.s32.totalorder %s145, %s146
    %p160 = scmp.eq.s32.totalorder %s16, 1
    %p161 = por %p159, %p160
    %p163 = scmp.ne.s32.totalorder %s146, %s162
    %p164 = scmp.eq.s32.totalorder %s16, 0
    %p165 = por %p163, %p164
    %p166 = scmp.le.s32.totalorder 1, %s10
    %p167 = scmp.lt.s32.totalorder %s10, 3
    %p168 = pnand %p166, %p167
    %p169 = pneg %p168
    // Predicated region
    $region9: #{resnet_block_adain.3} parent=5 // pred_check
      _
    $region10: #{resnet_block_adain.3} parent=5 // pred_check_branch
      %171 = sbr.rel (%p168) target = $region12
    $region11: #{resnet_block_adain.3} parent=5 // pred_region
      %s172 = ssub.s32 %s10, 1
      // Predicated region
      $region13: #{resnet_block_adain.3} parent=11 // pred_check
        %p173 = pneg %p74
      $region14: #{resnet_block_adain.3} parent=11 // pred_check_branch
        %175 = sbr.rel (%p173) target = $region16
      $region15: #{resnet_block_adain.3} parent=11 // pred_region
        %p176 = scmp.lt.s32.totalorder %s20, 0
        %s177 = scalar_select %p176, %s20, 0
        %s178 = smul.addr %s177, 4
        %s179 = scalar_lea.vmem %s1, %s178
      $region16: #{resnet_block_adain.3} parent=11 // pred_fallthru
        _
    $region12: #{resnet_block_adain.3} parent=5 // pred_fallthru
      _
    %p180 = scmp.lt.s32.totalorder %s10, 2
    // Predicated region
    $region17: #{resnet_block_adain.3} parent=5 // pred_check
      %p181 = pneg %p180
    $region18: #{resnet_block_adain.3} parent=5 // pred_check_branch
      %183 = sbr.rel (%p181) target = $region20
    $region19: #{resnet_block_adain.3} parent=5 // pred_region
      // Predicated region
      $region21: #{resnet_block_adain.3} parent=19 // pred_check
        %p184 = pneg %p42
      $region22: #{resnet_block_adain.3} parent=19 // pred_check_branch
        %186 = sbr.rel (%p184) target = $region24
      $region23: #{resnet_block_adain.3} parent=19 // pred_region
        %p187 = scmp.lt.s32.totalorder %s17, 1
        %s188 = scalar_select %p187, %s17, 1
        %s189 = smul.addr %s188, 55
        %s190 = smul.addr %s189, 4
        %s191 = scalar_lea.vmem %s0, %s190
      $region24: #{resnet_block_adain.3} parent=19 // pred_fallthru
        _
      // Predicated region
      $region25: #{resnet_block_adain.3} parent=19 // pred_check
        %p192 = pneg %p96
      $region26: #{resnet_block_adain.3} parent=19 // pred_check_branch
        %194 = sbr.rel (%p192) target = $region28
      $region27: #{resnet_block_adain.3} parent=19 // pred_region
        %p195 = scmp.lt.s32.totalorder %s17, 1
        %s196 = scalar_select %p195, %s17, 1
        %p197 = scmp.lt.s32.totalorder %s18, 0
        %s198 = scalar_select %p197, %s18, 0
        %s199 = sadd.s32 %s198, %s196
        %s200 = smul.addr %s199, 2
        %s201 = scalar_lea.vmem %s2, %s200
      $region28: #{resnet_block_adain.3} parent=19 // pred_fallthru
        _
      // Predicated region
      $region29: #{resnet_block_adain.3} parent=19 // pred_check
        %p202 = pneg %p124
      $region30: #{resnet_block_adain.3} parent=19 // pred_check_branch
        %204 = sbr.rel (%p202) target = $region32
      $region31: #{resnet_block_adain.3} parent=19 // pred_region
        %p205 = scmp.lt.s32.totalorder %s17, 1
        %s206 = scalar_select %p205, %s17, 1
        %p207 = scmp.lt.s32.totalorder %s18, 0
        %s208 = scalar_select %p207, %s18, 0
        %s209 = smul.addr %s206, 48
        %s210 = sadd.s32 %s208, %s209
        %s211 = smul.addr %s210, 8
        %s212 = scalar_lea.vmem %s3, %s211
      $region32: #{resnet_block_adain.3} parent=19 // pred_fallthru
        _
    $region20: #{resnet_block_adain.3} parent=5 // pred_fallthru
      _
    %p213 = scmp.le.s32.totalorder 1, %s10
    %p214 = scmp.lt.s32.totalorder %s10, 3
    %p215 = pnand %p213, %p214
    %p216 = pneg %p215
    // Predicated region
    $region33: #{resnet_block_adain.3} parent=5 // pred_check
      _
    $region34: #{resnet_block_adain.3} parent=5 // pred_check_branch
      %218 = sbr.rel (%p215) target = $region36
    $region35: #{resnet_block_adain.3} parent=5 // pred_region
      %s219 = ssub.s32 %s10, 1
      %p220 = scmp.lt.s32.totalorder %s19, 1
      %s221 = scalar_select %p220, %s19, 1
      %s222 = smul.addr %s221, 55
      %s223 = smul.addr %s222, 4
      %s224 = scalar_lea.vmem %s0, %s223
      %p225 = pneg %p48
      %p226 = pneg %p45
      %p227 = scmp.lt.s32.totalorder %s20, 0
      %s228 = scalar_select %p227, %s20, 0
      %s229 = smul.addr %s228, 4
      %s230 = scalar_lea.vmem %s1, %s229
      %p231 = pneg %p74
      %p232 = pneg %p71
      %p233 = scmp.lt.s32.totalorder %s19, 1
      %s234 = scalar_select %p233, %s19, 1
      %p235 = scmp.lt.s32.totalorder %s20, 0
      %s236 = scalar_select %p235, %s20, 0
      %s237 = sadd.s32 %s236, %s234
      %s238 = smul.addr %s237, 2
      %s239 = scalar_lea.vmem %s2, %s238
      %p240 = pneg %p102
      %p241 = pneg %p99
      %p242 = scmp.lt.s32.totalorder %s19, 1
      %s243 = scalar_select %p242, %s19, 1
      %p244 = scmp.lt.s32.totalorder %s20, 0
      %s245 = scalar_select %p244, %s20, 0
      %s246 = smul.addr %s243, 48
      %s247 = sadd.s32 %s245, %s246
      %s248 = smul.addr %s247, 8
      %s249 = scalar_lea.vmem %s3, %s248
      %p250 = pneg %p130
      %p251 = pneg %p127
      %p252 = pneg %p158
      %p253 = pneg %p155
      %p254 = scmp.lt.s32.totalorder %s19, 1
      %s255 = scalar_select %p254, %s19, 1
      %p256 = scmp.lt.s32.totalorder %s20, 0
      %s257 = scalar_select %p256, %s20, 0
      %s258 = smul.addr %s255, 48
      %s259 = sadd.s32 %s257, %s258
      %s260 = smul.addr %s259, 8
      %s261 = scalar_lea.vmem %s4, %s260
      %p262 = scmp.lt.s32.totalorder %s19, 1
      %s263 = scalar_select %p262, %s19, 1
      %s264 = smul.addr %s263, 55
      %s265 = smul.addr %s264, 4
      %s266 = scalar_lea.vmem %s0, %s265
      %p267 = scmp.lt.s32.totalorder %s20, 0
      %s268 = scalar_select %p267, %s20, 0
      %s269 = smul.addr %s268, 4
      %s270 = scalar_lea.vmem %s1, %s269
      %p271 = scmp.lt.s32.totalorder %s19, 1
      %s272 = scalar_select %p271, %s19, 1
      %p273 = scmp.lt.s32.totalorder %s20, 0
      %s274 = scalar_select %p273, %s20, 0
      %s275 = sadd.s32 %s274, %s272
      %s276 = smul.addr %s275, 2
      %s277 = scalar_lea.vmem %s2, %s276
      %p278 = scmp.lt.s32.totalorder %s19, 1
      %s279 = scalar_select %p278, %s19, 1
      %p280 = scmp.lt.s32.totalorder %s20, 0
      %s281 = scalar_select %p280, %s20, 0
      %s282 = smul.addr %s279, 48
      %s283 = sadd.s32 %s281, %s282
      %s284 = smul.addr %s283, 8
      %s285 = scalar_lea.vmem %s3, %s284
      %p286 = scmp.lt.s32.totalorder %s19, 1
      %s287 = scalar_select %p286, %s19, 1
      %p288 = scmp.lt.s32.totalorder %s20, 0
      %s289 = scalar_select %p288, %s20, 0
      %s290 = smul.addr %s287, 48
      %s291 = sadd.s32 %s289, %s290
      %s292 = smul.addr %s291, 8
      %s293 = scalar_lea.vmem %s4, %s292
      %v295 = vld [vmem:[%s266] sm:$0xf]
      %v296 = vld [vmem:[%s266 + $0x4] sm:$0xf]
      %v297 = vld [vmem:[%s266 + $0x8] sm:$0xf]
      %v298 = vld [vmem:[%s266 + $0xc] sm:$0xf]
      %v299 = vld [vmem:[%s266 + $0x10] sm:$0xf]
      %v300 = vld [vmem:[%s266 + $0x14] sm:$0xf]
      %v301 = vld [vmem:[%s266 + $0x18] sm:$0xf]
      %v302 = vld [vmem:[%s266 + $0x1c] sm:$0xf]
      %v303 = vld [vmem:[%s266 + $0x20] sm:$0xf]
      %v304 = vld [vmem:[%s266 + $0x24] sm:$0xf]
      %v305 = vld [vmem:[%s266 + $0x28] sm:$0xf]
      %v306 = vld [vmem:[%s266 + $0x2c] sm:$0xf]
      %v307 = vld [vmem:[%s266 + $0x30] sm:$0xf]
      %v308 = vld [vmem:[%s266 + $0x34] sm:$0xf]
      %v309 = vld [vmem:[%s266 + $0x38] sm:$0xf]
      %v310 = vld [vmem:[%s266 + $0x3c] sm:$0xf]
      %v311 = vld [vmem:[%s266 + $0x40] sm:$0xf]
      %v312 = vld [vmem:[%s266 + $0x44] sm:$0xf]
      %v313 = vld [vmem:[%s266 + $0x48] sm:$0xf]
      %v314 = vld [vmem:[%s266 + $0x4c] sm:$0xf]
      %v315 = vld [vmem:[%s266 + $0x50] sm:$0xf]
      %v316 = vld [vmem:[%s266 + $0x54] sm:$0xf]
      %v317 = vld [vmem:[%s266 + $0x58] sm:$0xf]
      %v318 = vld [vmem:[%s266 + $0x5c] sm:$0xf]
      %v319 = vld [vmem:[%s266 + $0x60] sm:$0xf]
      %v320 = vld [vmem:[%s266 + $0x64] sm:$0xf]
      %v321 = vld [vmem:[%s266 + $0x68] sm:$0xf]
      %v322 = vld [vmem:[%s266 + $0x6c] sm:$0xf]
      %v323 = vld [vmem:[%s266 + $0x70] sm:$0xf]
      %v324 = vld [vmem:[%s266 + $0x74] sm:$0xf]
      %v325 = vld [vmem:[%s266 + $0x78] sm:$0xf]
      %v326 = vld [vmem:[%s266 + $0x7c] sm:$0xf]
      %v327 = vld [vmem:[%s266 + $0x80] sm:$0xf]
      %v328 = vld [vmem:[%s266 + $0x84] sm:$0xf]
      %v329 = vld [vmem:[%s266 + $0x88] sm:$0xf]
      %v330 = vld [vmem:[%s266 + $0x8c] sm:$0xf]
      %v331 = vld [vmem:[%s266 + $0x90] sm:$0xf]
      %v332 = vld [vmem:[%s266 + $0x94] sm:$0xf]
      %v333 = vld [vmem:[%s266 + $0x98] sm:$0xf]
      %v334 = vld [vmem:[%s266 + $0x9c] sm:$0xf]
      %v335 = vld [vmem:[%s266 + $0xa0] sm:$0xf]
      %v336 = vld [vmem:[%s266 + $0xa4] sm:$0xf]
      %v337 = vld [vmem:[%s266 + $0xa8] sm:$0xf]
      %v338 = vld [vmem:[%s266 + $0xac] sm:$0xf]
      %v339 = vld [vmem:[%s266 + $0xb0] sm:$0xf]
      %v340 = vld [vmem:[%s266 + $0xb4] sm:$0xf]
      %v341 = vld [vmem:[%s266 + $0xb8] sm:$0xf]
      %v342 = vld [vmem:[%s266 + $0xbc] sm:$0xf]
      %v343 = vld [vmem:[%s266 + $0xc0] sm:$0xf]
      %v344 = vld [vmem:[%s266 + $0xc4] sm:$0xf]
      %v345 = vld [vmem:[%s266 + $0xc8] sm:$0xf]
      %v346 = vld [vmem:[%s266 + $0xcc] sm:$0xf]
      %v347 = vld [vmem:[%s266 + $0xd0] sm:$0xf]
      %v348 = vld [vmem:[%s266 + $0xd4] sm:$0xf]
      %v349 = vld [vmem:[%s266 + $0xd8] sm:$0x1]
      %v350 = vld [vmem:[%s266] sm:$0xe]
      %v351 = vld [vmem:[%s270] sm:$0xf]
      %s352 = scalar_lea.vmem %s270, 4
      %v353 = vld [vmem:[%s352] sm:$0xf]
      %v403 = vunpack.c.l.b16 %v295
      %v404 = vunpack.c.l.b16 %v296
      %v405 = vunpack.c.l.b16 %v297
      %v406 = vunpack.c.l.b16 %v298
      %v407 = vunpack.c.l.b16 %v299
      %v408 = vunpack.c.l.b16 %v300
      %v409 = vunpack.c.l.b16 %v301
      %v410 = vunpack.c.l.b16 %v302
      %v411 = vunpack.c.l.b16 %v303
      %v412 = vunpack.c.l.b16 %v304
      %v413 = vunpack.c.l.b16 %v305
      %v414 = vunpack.c.l.b16 %v306
      %v415 = vunpack.c.l.b16 %v307
      %v416 = vunpack.c.l.b16 %v308
      %v417 = vunpack.c.l.b16 %v309
      %v418 = vunpack.c.l.b16 %v310
      %v419 = vunpack.c.l.b16 %v311
      %v420 = vunpack.c.l.b16 %v312
      %v421 = vunpack.c.l.b16 %v313
      %v422 = vunpack.c.l.b16 %v314
      %v423 = vunpack.c.l.b16 %v315
      %v424 = vunpack.c.l.b16 %v316
      %v425 = vunpack.c.l.b16 %v317
      %v426 = vunpack.c.l.b16 %v318
      %v427 = vunpack.c.l.b16 %v319
      %v428 = vunpack.c.l.b16 %v320
      %v429 = vunpack.c.l.b16 %v321
      %v430 = vunpack.c.l.b16 %v322
      %v431 = vunpack.c.l.b16 %v323
      %v432 = vunpack.c.l.b16 %v324
      %v433 = vunpack.c.l.b16 %v325
      %v434 = vunpack.c.l.b16 %v326
      %v435 = vunpack.c.l.b16 %v327
      %v436 = vunpack.c.l.b16 %v328
      %v437 = vunpack.c.l.b16 %v329
      %v438 = vunpack.c.l.b16 %v330
      %v439 = vunpack.c.l.b16 %v331
      %v440 = vunpack.c.l.b16 %v332
      %v441 = vunpack.c.l.b16 %v333
      %v442 = vunpack.c.l.b16 %v334
      %v443 = vunpack.c.l.b16 %v335
      %v444 = vunpack.c.l.b16 %v336
      %v445 = vunpack.c.l.b16 %v337
      %v446 = vunpack.c.l.b16 %v338
      %v447 = vunpack.c.l.b16 %v339
      %v448 = vunpack.c.l.b16 %v340
      %v449 = vunpack.c.l.b16 %v341
      %v450 = vunpack.c.l.b16 %v342
      %v451 = vunpack.c.l.b16 %v343
      %v452 = vpack.c.b16 %v404, %v403
      %v453 = vpack.c.b16 %v406, %v405
      %v454 = vpack.c.b16 %v408, %v407
      %v455 = vpack.c.b16 %v410, %v409
      %v456 = vpack.c.b16 %v412, %v411
      %v457 = vpack.c.b16 %v414, %v413
      %v458 = vpack.c.b16 %v416, %v415
      %v459 = vpack.c.b16 %v418, %v417
      %v460 = vpack.c.b16 %v420, %v419
      %v461 = vpack.c.b16 %v422, %v421
      %v462 = vpack.c.b16 %v424, %v423
      %v463 = vpack.c.b16 %v426, %v425
      %v464 = vpack.c.b16 %v428, %v427
      %v465 = vpack.c.b16 %v430, %v429
      %v466 = vpack.c.b16 %v432, %v431
      %v467 = vpack.c.b16 %v434, %v433
      %v468 = vpack.c.b16 %v436, %v435
      %v469 = vpack.c.b16 %v438, %v437
      %v470 = vpack.c.b16 %v440, %v439
      %v471 = vpack.c.b16 %v442, %v441
      %v472 = vpack.c.b16 %v444, %v443
      %v473 = vpack.c.b16 %v446, %v445
      %v474 = vpack.c.b16 %v448, %v447
      %v475 = vpack.c.b16 %v450, %v449
      %v476 = vpack.c.b16 %v451, %v451
      %vm477 = vsmask.f32 7424
      %v479 = vshrl.u32 %v452, 16
      %v481 = vshll.u32 %v452, 16
      %v483 = vrot.slane %v481, 1
      %v484 = vor.u32 %v479, %v483
      %v486 = vshll.u32 %v453, 16
      %v488 = vrot.slane %v486, 1
      %v489 = vsel %vm477, %v484, %v488
      %v490 = vshrl.u32 %v453, 16
      %v492 = vor.u32 %v490, %v488
      %v494 = vshll.u32 %v454, 16
      %v496 = vrot.slane %v494, 1
      %v497 = vsel %vm477, %v492, %v496
      %v498 = vshrl.u32 %v454, 16
      %v500 = vor.u32 %v498, %v496
      %v502 = vshll.u32 %v455, 16
      %v504 = vrot.slane %v502, 1
      %v505 = vsel %vm477, %v500, %v504
      %v506 = vshrl.u32 %v455, 16
      %v508 = vor.u32 %v506, %v504
      %v510 = vshll.u32 %v456, 16
      %v512 = vrot.slane %v510, 1
      %v513 = vsel %vm477, %v508, %v512
      %v514 = vshrl.u32 %v456, 16
      %v516 = vor.u32 %v514, %v512
      %v518 = vshll.u32 %v457, 16
      %v520 = vrot.slane %v518, 1
      %v521 = vsel %vm477, %v516, %v520
      %v522 = vshrl.u32 %v457, 16
      %v524 = vor.u32 %v522, %v520
      %v526 = vshll.u32 %v458, 16
      %v528 = vrot.slane %v526, 1
      %v529 = vsel %vm477, %v524, %v528
      %v530 = vshrl.u32 %v458, 16
      %v532 = vor.u32 %v530, %v528
      %v534 = vshll.u32 %v459, 16
      %v536 = vrot.slane %v534, 1
      %v537 = vsel %vm477, %v532, %v536
      %v538 = vshrl.u32 %v459, 16
      %v540 = vor.u32 %v538, %v536
      %v542 = vshll.u32 %v460, 16
      %v544 = vrot.slane %v542, 1
      %v545 = vsel %vm477, %v540, %v544
      %v546 = vshrl.u32 %v460, 16
      %v548 = vor.u32 %v546, %v544
      %v550 = vshll.u32 %v461, 16
      %v552 = vrot.slane %v550, 1
      %v553 = vsel %vm477, %v548, %v552
      %v554 = vshrl.u32 %v461, 16
      %v556 = vor.u32 %v554, %v552
      %v558 = vshll.u32 %v462, 16
      %v560 = vrot.slane %v558, 1
      %v561 = vsel %vm477, %v556, %v560
      %v562 = vshrl.u32 %v462, 16
      %v564 = vor.u32 %v562, %v560
      %v566 = vshll.u32 %v463, 16
      %v568 = vrot.slane %v566, 1
      %v569 = vsel %vm477, %v564, %v568
      %v570 = vshrl.u32 %v463, 16
      %v572 = vor.u32 %v570, %v568
      %v574 = vshll.u32 %v464, 16
      %v576 = vrot.slane %v574, 1
      %v577 = vsel %vm477, %v572, %v576
      %v578 = vshrl.u32 %v464, 16
      %v580 = vor.u32 %v578, %v576
      %v582 = vshll.u32 %v465, 16
      %v584 = vrot.slane %v582, 1
      %v585 = vsel %vm477, %v580, %v584
      %v586 = vshrl.u32 %v465, 16
      %v588 = vor.u32 %v586, %v584
      %v590 = vshll.u32 %v466, 16
      %v592 = vrot.slane %v590, 1
      %v593 = vsel %vm477, %v588, %v592
      %v594 = vshrl.u32 %v466, 16
      %v596 = vor.u32 %v594, %v592
      %v598 = vshll.u32 %v467, 16
      %v600 = vrot.slane %v598, 1
      %v601 = vsel %vm477, %v596, %v600
      %v602 = vshrl.u32 %v467, 16
      %v604 = vor.u32 %v602, %v600
      %v606 = vshll.u32 %v468, 16
      %v608 = vrot.slane %v606, 1
      %v609 = vsel %vm477, %v604, %v608
      %v610 = vshrl.u32 %v468, 16
      %v612 = vor.u32 %v610, %v608
      %v614 = vshll.u32 %v469, 16
      %v616 = vrot.slane %v614, 1
      %v617 = vsel %vm477, %v612, %v616
      %v618 = vshrl.u32 %v469, 16
      %v620 = vor.u32 %v618, %v616
      %v622 = vshll.u32 %v470, 16
      %v624 = vrot.slane %v622, 1
      %v625 = vsel %vm477, %v620, %v624
      %v626 = vshrl.u32 %v470, 16
      %v628 = vor.u32 %v626, %v624
      %v630 = vshll.u32 %v471, 16
      %v632 = vrot.slane %v630, 1
      %v633 = vsel %vm477, %v628, %v632
      %v634 = vshrl.u32 %v471, 16
      %v636 = vor.u32 %v634, %v632
      %v638 = vshll.u32 %v472, 16
      %v640 = vrot.slane %v638, 1
      %v641 = vsel %vm477, %v636, %v640
      %v642 = vshrl.u32 %v472, 16
      %v644 = vor.u32 %v642, %v640
      %v646 = vshll.u32 %v473, 16
      %v648 = vrot.slane %v646, 1
      %v649 = vsel %vm477, %v644, %v648
      %v650 = vshrl.u32 %v473, 16
      %v652 = vor.u32 %v650, %v648
      %v654 = vshll.u32 %v474, 16
      %v656 = vrot.slane %v654, 1
      %v657 = vsel %vm477, %v652, %v656
      %v658 = vshrl.u32 %v474, 16
      %v660 = vor.u32 %v658, %v656
      %v662 = vshll.u32 %v475, 16
      %v664 = vrot.slane %v662, 1
      %v665 = vsel %vm477, %v660, %v664
      %v666 = vshrl.u32 %v475, 16
      %v668 = vor.u32 %v666, %v664
      %v670 = vshll.u32 %v476, 16
      %v672 = vrot.slane %v670, 1
      %v673 = vsel %vm477, %v668, %v672
      %vm674 = vcmask 64512
      %v676 = vsel %vm674, %v489, 0
      %v679 = vsel %vm674, %v497, 0
      %v682 = vsel %vm674, %v505, 0
      %v685 = vsel %vm674, %v513, 0
      %v688 = vsel %vm674, %v521, 0
      %v691 = vsel %vm674, %v529, 0
      %v694 = vsel %vm674, %v537, 0
      %v697 = vsel %vm674, %v545, 0
      %v700 = vsel %vm674, %v553, 0
      %v703 = vsel %vm674, %v561, 0
      %v706 = vsel %vm674, %v569, 0
      %v709 = vsel %vm674, %v577, 0
      %v712 = vsel %vm674, %v585, 0
      %v715 = vsel %vm674, %v593, 0
      %v718 = vsel %vm674, %v601, 0
      %v721 = vsel %vm674, %v609, 0
      %v724 = vsel %vm674, %v617, 0
      %v727 = vsel %vm674, %v625, 0
      %v730 = vsel %vm674, %v633, 0
      %v733 = vsel %vm674, %v641, 0
      %v736 = vsel %vm674, %v649, 0
      %v739 = vsel %vm674, %v657, 0
      %v742 = vsel %vm674, %v665, 0
      %v745 = vsel %vm674, %v673, 0
      %vm747 = vcmask 1043456
      %v749 = vsel %vm747, %v353, 0
      %751 = vmatprep.subr.bf16.mxu0 0
      %752 = vmatpush1.bf16.msra.mxu0 %v749
      %753 = vmatprep.subr.bf16.mxu0 0
      %754 = vmatpush1.bf16.msra.mxu0 0
      %755 = vmatprep.subr.bf16.mxu0 0
      %756 = vmatpush1.bf16.msra.mxu0 0
      %757 = vmatprep.subr.bf16.mxu0 0
      %758 = vmatpush1.bf16.msra.mxu0 0
      %759 = vmatprep.subr.bf16.mxu0 0
      %760 = vmatpush1.bf16.msra.mxu0 0
      %761 = vmatprep.subr.bf16.mxu0 0
      %762 = vmatpush1.bf16.msra.mxu0 0
      %763 = vmatprep.subr.bf16.mxu0 0
      %764 = vmatpush1.bf16.msra.mxu0 0
      %765 = vmatprep.subr.bf16.mxu0 0
      %766 = vmatpush1.bf16.msra.mxu0 0
      %767 = vmatprep.subr.bf16.mxu0 0
      %768 = vmatpush1.bf16.msra.mxu0 0
      %769 = vmatprep.subr.bf16.mxu0 0
      %770 = vmatpush1.bf16.msra.mxu0 0
      %771 = vmatprep.subr.bf16.mxu0 0
      %772 = vmatpush1.bf16.msra.mxu0 0
      %773 = vmatprep.subr.bf16.mxu0 0
      %774 = vmatpush1.bf16.msra.mxu0 0
      %775 = vmatprep.subr.bf16.mxu0 0
      %776 = vmatpush1.bf16.msra.mxu0 0
      %777 = vmatprep.subr.bf16.mxu0 0
      %778 = vmatpush1.bf16.msra.mxu0 0
      %779 = vmatprep.subr.bf16.mxu0 0
      %780 = vmatpush1.bf16.msra.mxu0 0
      %781 = vmatprep.subr.bf16.mxu0 0
      %782 = vmatpush1.bf16.msra.mxu0 0
      %783 = vmatprep.mubr.bf16.mxu0 0
      %784 = vmatmul.mubr.bf16.gmra.mrb[0].mxu0 %v676
      %v785 = vpop.f32.mrb[0].mxu0
      %v786 = vadd.f32 0.0, %v785
      %v787 = vpop.f32.mrb[0].mxu0
      %v788 = vpop.f32.mrb[0].mxu0
      %v789 = vadd.f32 0.0, %v788
      %v790 = vpop.f32.mrb[0].mxu0
      %791 = vmatprep.mubr.bf16.mxu0 0
      %792 = vmatmul.mubr.bf16.gmra.mrb[0].mxu0 %v679
      %v793 = vpop.f32.mrb[0].mxu0
      %v794 = vadd.f32 0.0, %v793
      %v795 = vpop.f32.mrb[0].mxu0
      %v796 = vpop.f32.mrb[0].mxu0
      %v797 = vadd.f32 0.0, %v796
      %v798 = vpop.f32.mrb[0].mxu0
      %799 = vmatprep.mubr.bf16.mxu0 0
      %800 = vmatmul.mubr.bf16.gmra.mrb[0].mxu0 %v682
      %v801 = vpop.f32.mrb[0].mxu0
      %v802 = vadd.f32 0.0, %v801
      %v803 = vpop.f32.mrb[0].mxu0
      %v804 = vpop.f32.mrb[0].mxu0
      %v805 = vadd.f32 0.0, %v804
      %v806 = vpop.f32.mrb[0].mxu0
      %807 = vmatprep.mubr.bf16.mxu0 0
      %808 = vmatmul.mubr.bf16.gmra.mrb[0].mxu0 %v685
      %v809 = vpop.f32.mrb[0].mxu0
      %v810 = vadd.f32 0.0, %v809
      %v811 = vpop.f32.mrb[0].mxu0
      %v812 = vpop.f32.mrb[0].mxu0
      %v813 = vadd.f32 0.0, %v812
      %v814 = vpop.f32.mrb[0].mxu0
      %815 = vmatprep.mubr.bf16.mxu0 0
      %816 = vmatmul.mubr.bf16.gmra.mrb[0].mxu0 %v688
      %v817 = vpop.f32.mrb[0].mxu0
      %v818 = vadd.f32 0.0, %v817
      %v819 = vpop.f32.mrb[0].mxu0
      %v820 = vpop.f32.mrb[0].mxu0
      %v821 = vadd.f32 0.0, %v820
      %v822 = vpop.f32.mrb[0].mxu0
      %823 = vmatprep.mubr.bf16.mxu0 0
      %824 = vmatmul.mubr.bf16.gmra.mrb[0].mxu0 %v691
      %v825 = vpop.f32.mrb[0].mxu0
      %v826 = vadd.f32 0.0, %v825
      %v827 = vpop.f32.mrb[0].mxu0
      %v828 = vpop.f32.mrb[0].mxu0
      %v829 = vadd.f32 0.0, %v828
      %v830 = vpop.f32.mrb[0].mxu0
      %831 = vmatprep.mubr.bf16.mxu0 0
      %832 = vmatmul.mubr.bf16.gmra.mrb[0].mxu0 %v694
      %v833 = vpop.f32.mrb[0].mxu0
      %v834 = vadd.f32 0.0, %v833
      %v835 = vpop.f32.mrb[0].mxu0
      %v836 = vpop.f32.mrb[0].mxu0
      %v837 = vadd.f32 0.0, %v836
      %v838 = vpop.f32.mrb[0].mxu0
      %839 = vmatprep.mubr.bf16.mxu0 0
      %840 = vmatmul.mubr.bf16.gmra.mrb[0].mxu0 %v697
      %v841 = vpop.f32.mrb[0].mxu0
      %v842 = vadd.f32 0.0, %v841
      %v843 = vpop.f32.mrb[0].mxu0
      %v844 = vpop.f32.mrb[0].mxu0
      %v845 = vadd.f32 0.0, %v844
      %v846 = vpop.f32.mrb[0].mxu0
      %847 = vmatprep.mubr.bf16.mxu0 0
      %848 = vmatmul.mubr.bf16.gmra.mrb[0].mxu0 %v700
      %v849 = vpop.f32.mrb[0].mxu0
      %v850 = vadd.f32 0.0, %v849
      %v851 = vpop.f32.mrb[0].mxu0
      %v852 = vpop.f32.mrb[0].mxu0
      %v853 = vadd.f32 0.0, %v852
      %v854 = vpop.f32.mrb[0].mxu0
      %855 = vmatprep.mubr.bf16.mxu0 0
      %856 = vmatmul.mubr.bf16.gmra.mrb[0].mxu0 %v703
      %v857 = vpop.f32.mrb[0].mxu0
      %v858 = vadd.f32 0.0, %v857
      %v859 = vpop.f32.mrb[0].mxu0
      %v860 = vpop.f32.mrb[0].mxu0
      %v861 = vadd.f32 0.0, %v860
      %v862 = vpop.f32.mrb[0].mxu0
      %863 = vmatprep.mubr.bf16.mxu0 0
      %864 = vmatmul.mubr.bf16.gmra.mrb[0].mxu0 %v706
      %v865 = vpop.f32.mrb[0].mxu0
      %v866 = vadd.f32 0.0, %v865
      %v867 = vpop.f32.mrb[0].mxu0
      %v868 = vpop.f32.mrb[0].mxu0
      %v869 = vadd.f32 0.0, %v868
      %v870 = vpop.f32.mrb[0].mxu0
      %871 = vmatprep.mubr.bf16.mxu0 0
      %872 = vmatmul.mubr.bf16.gmra.mrb[0].mxu0 %v709
      %v873 = vpop.f32.mrb[0].mxu0
      %v874 = vadd.f32 0.0, %v873
      %v875 = vpop.f32.mrb[0].mxu0
      %v876 = vpop.f32.mrb[0].mxu0
      %v877 = vadd.f32 0.0, %v876
      %v878 = vpop.f32.mrb[0].mxu0
      %879 = vmatprep.mubr.bf16.mxu0 0
      %880 = vmatmul.mubr.bf16.gmra.mrb[0].mxu0 %v712
      %v881 = vpop.f32.mrb[0].mxu0
      %v882 = vadd.f32 0.0, %v881
      %v883 = vpop.f32.mrb[0].mxu0
      %v884 = vpop.f32.mrb[0].mxu0
      %v885 = vadd.f32 0.0, %v884
      %v886 = vpop.f32.mrb[0].mxu0
      %887 = vmatprep.mubr.bf16.mxu0 0
      %888 = vmatmul.mubr.bf16.gmra.mrb[0].mxu0 %v715
      %v889 = vpop.f32.mrb[0].mxu0
      %v890 = vadd.f32 0.0, %v889
      %v891 = vpop.f32.mrb[0].mxu0
      %v892 = vpop.f32.mrb[0].mxu0
      %v893 = vadd.f32 0.0, %v892
      %v894 = vpop.f32.mrb[0].mxu0
      %895 = vmatprep.mubr.bf16.mxu0 0
      %896 = vmatmul.mubr.bf16.gmra.mrb[0].mxu0 %v718
      %v897 = vpop.f32.mrb[0].mxu0
      %v898 = vadd.f32 0.0, %v897
      %v899 = vpop.f32.mrb[0].mxu0
      %v900 = vpop.f32.mrb[0].mxu0
      %v901 = vadd.f32 0.0, %v900
      %v902 = vpop.f32.mrb[0].mxu0
      %903 = vmatprep.mubr.bf16.mxu0 0
      %904 = vmatmul.mubr.bf16.gmra.mrb[0].mxu0 %v721
      %v905 = vpop.f32.mrb[0].mxu0
      %v906 = vadd.f32 0.0, %v905
      %v907 = vpop.f32.mrb[0].mxu0
      %v908 = vpop.f32.mrb[0].mxu0
      %v909 = vadd.f32 0.0, %v908
      %v910 = vpop.f32.mrb[0].mxu0
      %911 = vmatprep.mubr.bf16.mxu0 0
      %912 = vmatmul.mubr.bf16.gmra.mrb[0].mxu0 %v724
      %v913 = vpop.f32.mrb[0].mxu0
      %v914 = vadd.f32 0.0, %v913
      %v915 = vpop.f32.mrb[0].mxu0
      %v916 = vpop.f32.mrb[0].mxu0
      %v917 = vadd.f32 0.0, %v916
      %v918 = vpop.f32.mrb[0].mxu0
      %919 = vmatprep.mubr.bf16.mxu0 0
      %920 = vmatmul.mubr.bf16.gmra.mrb[0].mxu0 %v727
      %v921 = vpop.f32.mrb[0].mxu0
      %v922 = vadd.f32 0.0, %v921
      %v923 = vpop.f32.mrb[0].mxu0
      %v924 = vpop.f32.mrb[0].mxu0
      %v925 = vadd.f32 0.0, %v924
      %v926 = vpop.f32.mrb[0].mxu0
      %927 = vmatprep.mubr.bf16.mxu0 0
      %928 = vmatmul.mubr.bf16.gmra.mrb[0].mxu0 %v730
      %v929 = vpop.f32.mrb[0].mxu0
      %v930 = vadd.f32 0.0, %v929
      %v931 = vpop.f32.mrb[0].mxu0
      %v932 = vpop.f32.mrb[0].mxu0
      %v933 = vadd.f32 0.0, %v932
      %v934 = vpop.f32.mrb[0].mxu0
      %935 = vmatprep.mubr.bf16.mxu0 0
      %936 = vmatmul.mubr.bf16.gmra.mrb[0].mxu0 %v733
      %v937 = vpop.f32.mrb[0].mxu0
      %v938 = vadd.f32 0.0, %v937
      %v939 = vpop.f32.mrb[0].mxu0
      %v940 = vpop.f32.mrb[0].mxu0
      %v941 = vadd.f32 0.0, %v940
      %v942 = vpop.f32.mrb[0].mxu0
      %943 = vmatprep.mubr.bf16.mxu0 0
      %944 = vmatmul.mubr.bf16.gmra.mrb[0].mxu0 %v736
      %v945 = vpop.f32.mrb[0].mxu0
      %v946 = vadd.f32 0.0, %v945
      %v947 = vpop.f32.mrb[0].mxu0
      %v948 = vpop.f32.mrb[0].mxu0
      %v949 = vadd.f32 0.0, %v948
      %v950 = vpop.f32.mrb[0].mxu0
      %951 = vmatprep.mubr.bf16.mxu0 0
      %952 = vmatmul.mubr.bf16.gmra.mrb[0].mxu0 %v739
      %v953 = vpop.f32.mrb[0].mxu0
      %v954 = vadd.f32 0.0, %v953
      %v955 = vpop.f32.mrb[0].mxu0
      %v956 = vpop.f32.mrb[0].mxu0
      %v957 = vadd.f32 0.0, %v956
      %v958 = vpop.f32.mrb[0].mxu0
      %959 = vmatprep.mubr.bf16.mxu0 0
      %960 = vmatmul.mubr.bf16.gmra.mrb[0].mxu0 %v742
      %v961 = vpop.f32.mrb[0].mxu0
      %v962 = vadd.f32 0.0, %v961
      %v963 = vpop.f32.mrb[0].mxu0
      %v964 = vpop.f32.mrb[0].mxu0
      %v965 = vadd.f32 0.0, %v964
      %v966 = vpop.f32.mrb[0].mxu0
      %967 = vmatprep.mubr.bf16.mxu0 0
      %968 = vmatmul.mubr.bf16.gmra.mrb[0].mxu0 %v745
      %v969 = vpop.f32.mrb[0].mxu0
      %v970 = vadd.f32 0.0, %v969
      %v971 = vpop.f32.mrb[0].mxu0
      %v972 = vpop.f32.mrb[0].mxu0
      %v973 = vadd.f32 0.0, %v972
      %v974 = vpop.f32.mrb[0].mxu0
      %975 = vdwg.mxu0
      %v976 = vsel %vm674, %v452, 0
      %v978 = vsel %vm674, %v453, 0
      %v980 = vsel %vm674, %v454, 0
      %v982 = vsel %vm674, %v455, 0
      %v984 = vsel %vm674, %v456, 0
      %v986 = vsel %vm674, %v457, 0
      %v988 = vsel %vm674, %v458, 0
      %v990 = vsel %vm674, %v459, 0
      %v992 = vsel %vm674, %v460, 0
      %v994 = vsel %vm674, %v461, 0
      %v996 = vsel %vm674, %v462, 0
      %v998 = vsel %vm674, %v463, 0
      %v1000 = vsel %vm674, %v464, 0
      %v1002 = vsel %vm674, %v465, 0
      %v1004 = vsel %vm674, %v466, 0
      %v1006 = vsel %vm674, %v467, 0
      %v1008 = vsel %vm674, %v468, 0
      %v1010 = vsel %vm674, %v469, 0
      %v1012 = vsel %vm674, %v470, 0
      %v1014 = vsel %vm674, %v471, 0
      %v1016 = vsel %vm674, %v472, 0
      %v1018 = vsel %vm674, %v473, 0
      %v1020 = vsel %vm674, %v474, 0
      %v1022 = vsel %vm674, %v475, 0
      %v1025 = vsel %vm747, %v351, 0
      %1027 = vmatprep.subr.bf16.mxu0 0
      %1028 = vmatpush1.bf16.msra.mxu0 %v1025
      %1029 = vmatprep.subr.bf16.mxu0 0
      %1030 = vmatpush1.bf16.msra.mxu0 0
      %1031 = vmatprep.subr.bf16.mxu0 0
      %1032 = vmatpush1.bf16.msra.mxu0 0
      %1033 = vmatprep.subr.bf16.mxu0 0
      %1034 = vmatpush1.bf16.msra.mxu0 0
      %1035 = vmatprep.subr.bf16.mxu0 0
      %1036 = vmatpush1.bf16.msra.mxu0 0
      %1037 = vmatprep.subr.bf16.mxu0 0
      %1038 = vmatpush1.bf16.msra.mxu0 0
      %1039 = vmatprep.subr.bf16.mxu0 0
      %1040 = vmatpush1.bf16.msra.mxu0 0
      %1041 = vmatprep.subr.bf16.mxu0 0
      %1042 = vmatpush1.bf16.msra.mxu0 0
      %1043 = vmatprep.subr.bf16.mxu0 0
      %1044 = vmatpush1.bf16.msra.mxu0 0
      %1045 = vmatprep.subr.bf16.mxu0 0
      %1046 = vmatpush1.bf16.msra.mxu0 0
      %1047 = vmatprep.subr.bf16.mxu0 0
      %1048 = vmatpush1.bf16.msra.mxu0 0
      %1049 = vmatprep.subr.bf16.mxu0 0
      %1050 = vmatpush1.bf16.msra.mxu0 0
      %1051 = vmatprep.subr.bf16.mxu0 0
      %1052 = vmatpush1.bf16.msra.mxu0 0
      %1053 = vmatprep.subr.bf16.mxu0 0
      %1054 = vmatpush1.bf16.msra.mxu0 0
      %1055 = vmatprep.subr.bf16.mxu0 0
      %1056 = vmatpush1.bf16.msra.mxu0 0
      %1057 = vmatprep.subr.bf16.mxu0 0
      %1058 = vmatpush1.bf16.msra.mxu0 0
      %1059 = vmatprep.mubr.bf16.mxu0 0
      %1060 = vmatmul.mubr.bf16.gmra.mrb[0].mxu0 %v976
      %v1061 = vpop.f32.mrb[0].mxu0
      %v1062 = vadd.f32 %v786, %v1061
      %v1063 = vpop.f32.mrb[0].mxu0
      %v1064 = vpop.f32.mrb[0].mxu0
      %v1065 = vadd.f32 %v789, %v1064
      %v1066 = vpop.f32.mrb[0].mxu0
      %1067 = vmatprep.mubr.bf16.mxu0 0
      %1068 = vmatmul.mubr.bf16.gmra.mrb[0].mxu0 %v978
      %v1069 = vpop.f32.mrb[0].mxu0
      %v1070 = vadd.f32 %v794, %v1069
      %v1071 = vpop.f32.mrb[0].mxu0
      %v1072 = vpop.f32.mrb[0].mxu0
      %v1073 = vadd.f32 %v797, %v1072
      %v1074 = vpop.f32.mrb[0].mxu0
      %1075 = vmatprep.mubr.bf16.mxu0 0
      %1076 = vmatmul.mubr.bf16.gmra.mrb[0].mxu0 %v980
      %v1077 = vpop.f32.mrb[0].mxu0
      %v1078 = vadd.f32 %v802, %v1077
      %v1079 = vpop.f32.mrb[0].mxu0
      %v1080 = vpop.f32.mrb[0].mxu0
      %v1081 = vadd.f32 %v805, %v1080
      %v1082 = vpop.f32.mrb[0].mxu0
      %1083 = vmatprep.mubr.bf16.mxu0 0
      %1084 = vmatmul.mubr.bf16.gmra.mrb[0].mxu0 %v982
      %v1085 = vpop.f32.mrb[0].mxu0
      %v1086 = vadd.f32 %v810, %v1085
      %v1087 = vpop.f32.mrb[0].mxu0
      %v1088 = vpop.f32.mrb[0].mxu0
      %v1089 = vadd.f32 %v813, %v1088
      %v1090 = vpop.f32.mrb[0].mxu0
      %1091 = vmatprep.mubr.bf16.mxu0 0
      %1092 = vmatmul.mubr.bf16.gmra.mrb[0].mxu0 %v984
      %v1093 = vpop.f32.mrb[0].mxu0
      %v1094 = vadd.f32 %v818, %v1093
      %v1095 = vpop.f32.mrb[0].mxu0
      %v1096 = vpop.f32.mrb[0].mxu0
      %v1097 = vadd.f32 %v821, %v1096
      %v1098 = vpop.f32.mrb[0].mxu0
      %1099 = vmatprep.mubr.bf16.mxu0 0
      %1100 = vmatmul.mubr.bf16.gmra.mrb[0].mxu0 %v986
      %v1101 = vpop.f32.mrb[0].mxu0
      %v1102 = vadd.f32 %v826, %v1101
      %v1103 = vpop.f32.mrb[0].mxu0
      %v1104 = vpop.f32.mrb[0].mxu0
      %v1105 = vadd.f32 %v829, %v1104
      %v1106 = vpop.f32.mrb[0].mxu0
      %1107 = vmatprep.mubr.bf16.mxu0 0
      %1108 = vmatmul.mubr.bf16.gmra.mrb[0].mxu0 %v988
      %v1109 = vpop.f32.mrb[0].mxu0
      %v1110 = vadd.f32 %v834, %v1109
      %v1111 = vpop.f32.mrb[0].mxu0
      %v1112 = vpop.f32.mrb[0].mxu0
      %v1113 = vadd.f32 %v837, %v1112
      %v1114 = vpop.f32.mrb[0].mxu0
      %1115 = vmatprep.mubr.bf16.mxu0 0
      %1116 = vmatmul.mubr.bf16.gmra.mrb[0].mxu0 %v990
      %v1117 = vpop.f32.mrb[0].mxu0
      %v1118 = vadd.f32 %v842, %v1117
      %v1119 = vpop.f32.mrb[0].mxu0
      %v1120 = vpop.f32.mrb[0].mxu0
      %v1121 = vadd.f32 %v845, %v1120
      %v1122 = vpop.f32.mrb[0].mxu0
      %1123 = vmatprep.mubr.bf16.mxu0 0
      %1124 = vmatmul.mubr.bf16.gmra.mrb[0].mxu0 %v992
      %v1125 = vpop.f32.mrb[0].mxu0
      %v1126 = vadd.f32 %v850, %v1125
      %v1127 = vpop.f32.mrb[0].mxu0
      %v1128 = vpop.f32.mrb[0].mxu0
      %v1129 = vadd.f32 %v853, %v1128
      %v1130 = vpop.f32.mrb[0].mxu0
      %1131 = vmatprep.mubr.bf16.mxu0 0
      %1132 = vmatmul.mubr.bf16.gmra.mrb[0].mxu0 %v994
      %v1133 = vpop.f32.mrb[0].mxu0
      %v1134 = vadd.f32 %v858, %v1133
      %v1135 = vpop.f32.mrb[0].mxu0
      %v1136 = vpop.f32.mrb[0].mxu0
      %v1137 = vadd.f32 %v861, %v1136
      %v1138 = vpop.f32.mrb[0].mxu0
      %1139 = vmatprep.mubr.bf16.mxu0 0
      %1140 = vmatmul.mubr.bf16.gmra.mrb[0].mxu0 %v996
      %v1141 = vpop.f32.mrb[0].mxu0
      %v1142 = vadd.f32 %v866, %v1141
      %v1143 = vpop.f32.mrb[0].mxu0
      %v1144 = vpop.f32.mrb[0].mxu0
      %v1145 = vadd.f32 %v869, %v1144
      %v1146 = vpop.f32.mrb[0].mxu0
      %1147 = vmatprep.mubr.bf16.mxu0 0
      %1148 = vmatmul.mubr.bf16.gmra.mrb[0].mxu0 %v998
      %v1149 = vpop.f32.mrb[0].mxu0
      %v1150 = vadd.f32 %v874, %v1149
      %v1151 = vpop.f32.mrb[0].mxu0
      %v1152 = vpop.f32.mrb[0].mxu0
      %v1153 = vadd.f32 %v877, %v1152
      %v1154 = vpop.f32.mrb[0].mxu0
      %1155 = vmatprep.mubr.bf16.mxu0 0
      %1156 = vmatmul.mubr.bf16.gmra.mrb[0].mxu0 %v1000
      %v1157 = vpop.f32.mrb[0].mxu0
      %v1158 = vadd.f32 %v882, %v1157
      %v1159 = vpop.f32.mrb[0].mxu0
      %v1160 = vpop.f32.mrb[0].mxu0
      %v1161 = vadd.f32 %v885, %v1160
      %v1162 = vpop.f32.mrb[0].mxu0
      %1163 = vmatprep.mubr.bf16.mxu0 0
      %1164 = vmatmul.mubr.bf16.gmra.mrb[0].mxu0 %v1002
      %v1165 = vpop.f32.mrb[0].mxu0
      %v1166 = vadd.f32 %v890, %v1165
      %v1167 = vpop.f32.mrb[0].mxu0
      %v1168 = vpop.f32.mrb[0].mxu0
      %v1169 = vadd.f32 %v893, %v1168
      %v1170 = vpop.f32.mrb[0].mxu0
      %1171 = vmatprep.mubr.bf16.mxu0 0
      %1172 = vmatmul.mubr.bf16.gmra.mrb[0].mxu0 %v1004
      %v1173 = vpop.f32.mrb[0].mxu0
      %v1174 = vadd.f32 %v898, %v1173
      %v1175 = vpop.f32.mrb[0].mxu0
      %v1176 = vpop.f32.mrb[0].mxu0
      %v1177 = vadd.f32 %v901, %v1176
      %v1178 = vpop.f32.mrb[0].mxu0
      %1179 = vmatprep.mubr.bf16.mxu0 0
      %1180 = vmatmul.mubr.bf16.gmra.mrb[0].mxu0 %v1006
      %v1181 = vpop.f32.mrb[0].mxu0
      %v1182 = vadd.f32 %v906, %v1181
      %v1183 = vpop.f32.mrb[0].mxu0
      %v1184 = vpop.f32.mrb[0].mxu0
      %v1185 = vadd.f32 %v909, %v1184
      %v1186 = vpop.f32.mrb[0].mxu0
      %1187 = vmatprep.mubr.bf16.mxu0 0
      %1188 = vmatmul.mubr.bf16.gmra.mrb[0].mxu0 %v1008
      %v1189 = vpop.f32.mrb[0].mxu0
      %v1190 = vadd.f32 %v914, %v1189
      %v1191 = vpop.f32.mrb[0].mxu0
      %v1192 = vpop.f32.mrb[0].mxu0
      %v1193 = vadd.f32 %v917, %v1192
      %v1194 = vpop.f32.mrb[0].mxu0
      %1195 = vmatprep.mubr.bf16.mxu0 0
      %1196 = vmatmul.mubr.bf16.gmra.mrb[0].mxu0 %v1010
      %v1197 = vpop.f32.mrb[0].mxu0
      %v1198 = vadd.f32 %v922, %v1197
      %v1199 = vpop.f32.mrb[0].mxu0
      %v1200 = vpop.f32.mrb[0].mxu0
      %v1201 = vadd.f32 %v925, %v1200
      %v1202 = vpop.f32.mrb[0].mxu0
      %1203 = vmatprep.mubr.bf16.mxu0 0
      %1204 = vmatmul.mubr.bf16.gmra.mrb[0].mxu0 %v1012
      %v1205 = vpop.f32.mrb[0].mxu0
      %v1206 = vadd.f32 %v930, %v1205
      %v1207 = vpop.f32.mrb[0].mxu0
      %v1208 = vpop.f32.mrb[0].mxu0
      %v1209 = vadd.f32 %v933, %v1208
      %v1210 = vpop.f32.mrb[0].mxu0
      %1211 = vmatprep.mubr.bf16.mxu0 0
      %1212 = vmatmul.mubr.bf16.gmra.mrb[0].mxu0 %v1014
      %v1213 = vpop.f32.mrb[0].mxu0
      %v1214 = vadd.f32 %v938, %v1213
      %v1215 = vpop.f32.mrb[0].mxu0
      %v1216 = vpop.f32.mrb[0].mxu0
      %v1217 = vadd.f32 %v941, %v1216
      %v1218 = vpop.f32.mrb[0].mxu0
      %1219 = vmatprep.mubr.bf16.mxu0 0
      %1220 = vmatmul.mubr.bf16.gmra.mrb[0].mxu0 %v1016
      %v1221 = vpop.f32.mrb[0].mxu0
      %v1222 = vadd.f32 %v946, %v1221
      %v1223 = vpop.f32.mrb[0].mxu0
      %v1224 = vpop.f32.mrb[0].mxu0
      %v1225 = vadd.f32 %v949, %v1224
      %v1226 = vpop.f32.mrb[0].mxu0
      %1227 = vmatprep.mubr.bf16.mxu0 0
      %1228 = vmatmul.mubr.bf16.gmra.mrb[0].mxu0 %v1018
      %v1229 = vpop.f32.mrb[0].mxu0
      %v1230 = vadd.f32 %v954, %v1229
      %v1231 = vpop.f32.mrb[0].mxu0
      %v1232 = vpop.f32.mrb[0].mxu0
      %v1233 = vadd.f32 %v957, %v1232
      %v1234 = vpop.f32.mrb[0].mxu0
      %1235 = vmatprep.mubr.bf16.mxu0 0
      %1236 = vmatmul.mubr.bf16.gmra.mrb[0].mxu0 %v1020
      %v1237 = vpop.f32.mrb[0].mxu0
      %v1238 = vadd.f32 %v962, %v1237
      %v1239 = vpop.f32.mrb[0].mxu0
      %v1240 = vpop.f32.mrb[0].mxu0
      %v1241 = vadd.f32 %v965, %v1240
      %v1242 = vpop.f32.mrb[0].mxu0
      %1243 = vmatprep.mubr.bf16.mxu0 0
      %1244 = vmatmul.mubr.bf16.gmra.mrb[0].mxu0 %v1022
      %v1245 = vpop.f32.mrb[0].mxu0
      %v1246 = vadd.f32 %v970, %v1245
      %v1247 = vpop.f32.mrb[0].mxu0
      %v1248 = vpop.f32.mrb[0].mxu0
      %v1249 = vadd.f32 %v973, %v1248
      %v1250 = vpop.f32.mrb[0].mxu0
      %1251 = vdwg.mxu0
      %s1252 = scalar_lea.vmem %s270, 8
      %v1253 = vld [vmem:[%s1252] sm:$0xf]
      %v1255 = vunpack.c.l.b16 %v350
      %v1256 = vpack.c.b16 %v404, %v1255
      %vm1257 = vcmask 1046528
      %v1258 = vrot.slane %v1256, 1
      %v1259 = vrot.slane %v453, 1
      %v1260 = vsel %vm1257, %v1258, %v1259
      %v1261 = vrot.slane %v454, 1
      %v1262 = vsel %vm1257, %v1259, %v1261
      %v1263 = vrot.slane %v455, 1
      %v1264 = vsel %vm1257, %v1261, %v1263
      %v1265 = vrot.slane %v456, 1
      %v1266 = vsel %vm1257, %v1263, %v1265
      %v1267 = vrot.slane %v457, 1
      %v1268 = vsel %vm1257, %v1265, %v1267
      %v1269 = vrot.slane %v458, 1
      %v1270 = vsel %vm1257, %v1267, %v1269
      %v1271 = vrot.slane %v459, 1
      %v1272 = vsel %vm1257, %v1269, %v1271
      %v1273 = vrot.slane %v460, 1
      %v1274 = vsel %vm1257, %v1271, %v1273
      %v1275 = vrot.slane %v461, 1
      %v1276 = vsel %vm1257, %v1273, %v1275
      %v1277 = vrot.slane %v462, 1
      %v1278 = vsel %vm1257, %v1275, %v1277
      %v1279 = vrot.slane %v463, 1
      %v1280 = vsel %vm1257, %v1277, %v1279
      %v1281 = vrot.slane %v464, 1
      %v1282 = vsel %vm1257, %v1279, %v1281
      %v1283 = vrot.slane %v465, 1
      %v1284 = vsel %vm1257, %v1281, %v1283
      %v1285 = vrot.slane %v466, 1
      %v1286 = vsel %vm1257, %v1283, %v1285
      %v1287 = vrot.slane %v467, 1
      %v1288 = vsel %vm1257, %v1285, %v1287
      %v1289 = vrot.slane %v468, 1
      %v1290 = vsel %vm1257, %v1287, %v1289
      %v1291 = vrot.slane %v469, 1
      %v1292 = vsel %vm1257, %v1289, %v1291
      %v1293 = vrot.slane %v470, 1
      %v1294 = vsel %vm1257, %v1291, %v1293
      %v1295 = vrot.slane %v471, 1
      %v1296 = vsel %vm1257, %v1293, %v1295
      %v1297 = vrot.slane %v472, 1
      %v1298 = vsel %vm1257, %v1295, %v1297
      %v1299 = vrot.slane %v473, 1
      %v1300 = vsel %vm1257, %v1297, %v1299
      %v1301 = vrot.slane %v474, 1
      %v1302 = vsel %vm1257, %v1299, %v1301
      %v1303 = vrot.slane %v475, 1
      %v1304 = vsel %vm1257, %v1301, %v1303
      %v1305 = vrot.slane %v476, 1
      %v1306 = vsel %vm1257, %v1303, %v1305
      %v1308 = vsel %vm674, %v1260, 0
      %v1311 = vsel %vm674, %v1262, 0
      %v1314 = vsel %vm674, %v1264, 0
      %v1317 = vsel %vm674, %v1266, 0
      %v1320 = vsel %vm674, %v1268, 0
      %v1323 = vsel %vm674, %v1270, 0
      %v1326 = vsel %vm674, %v1272, 0
      %v1329 = vsel %vm674, %v1274, 0
      %v1332 = vsel %vm674, %v1276, 0
      %v1335 = vsel %vm674, %v1278, 0
      %v1338 = vsel %vm674, %v1280, 0
      %v1341 = vsel %vm674, %v1282, 0
      %v1344 = vsel %vm674, %v1284, 0
      %v1347 = vsel %vm674, %v1286, 0
      %v1350 = vsel %vm674, %v1288, 0
      %v1353 = vsel %vm674, %v1290, 0
      %v1356 = vsel %vm674, %v1292, 0
      %v1359 = vsel %vm674, %v1294, 0
      %v1362 = vsel %vm674, %v1296, 0
      %v1365 = vsel %vm674, %v1298, 0
      %v1368 = vsel %vm674, %v1300, 0
      %v1371 = vsel %vm674, %v1302, 0
      %v1374 = vsel %vm674, %v1304, 0
      %v1377 = vsel %vm674, %v1306, 0
      %v1380 = vsel %vm747, %v1253, 0
      %1382 = vmatprep.subr.bf16.mxu0 0
      %1383 = vmatpush1.bf16.msra.mxu0 %v1380
      %1384 = vmatprep.subr.bf16.mxu0 0
      %1385 = vmatpush1.bf16.msra.mxu0 0
      %1386 = vmatprep.subr.bf16.mxu0 0
      %1387 = vmatpush1.bf16.msra.mxu0 0
      %1388 = vmatprep.subr.bf16.mxu0 0
      %1389 = vmatpush1.bf16.msra.mxu0 0
      %1390 = vmatprep.subr.bf16.mxu0 0
      %1391 = vmatpush1.bf16.msra.mxu0 0
      %1392 = vmatprep.subr.bf16.mxu0 0
      %1393 = vmatpush1.bf16.msra.mxu0 0
      %1394 = vmatprep.subr.bf16.mxu0 0
      %1395 = vmatpush1.bf16.msra.mxu0 0
      %1396 = vmatprep.subr.bf16.mxu0 0
      %1397 = vmatpush1.bf16.msra.mxu0 0
      %1398 = vmatprep.subr.bf16.mxu0 0
      %1399 = vmatpush1.bf16.msra.mxu0 0
      %1400 = vmatprep.subr.bf16.mxu0 0
      %1401 = vmatpush1.bf16.msra.mxu0 0
      %1402 = vmatprep.subr.bf16.mxu0 0
      %1403 = vmatpush1.bf16.msra.mxu0 0
      %1404 = vmatprep.subr.bf16.mxu0 0
      %1405 = vmatpush1.bf16.msra.mxu0 0
      %1406 = vmatprep.subr.bf16.mxu0 0
      %1407 = vmatpush1.bf16.msra.mxu0 0
      %1408 = vmatprep.subr.bf16.mxu0 0
      %1409 = vmatpush1.bf16.msra.mxu0 0
      %1410 = vmatprep.subr.bf16.mxu0 0
      %1411 = vmatpush1.bf16.msra.mxu0 0
      %1412 = vmatprep.subr.bf16.mxu0 0
      %1413 = vmatpush1.bf16.msra.mxu0 0
      %1414 = vmatprep.mubr.bf16.mxu0 0
      %1415 = vmatmul.mubr.bf16.gmra.mrb[0].mxu0 %v1308
      %v1416 = vpop.f32.mrb[0].mxu0
      %v1417 = vadd.f32 0.0, %v1416
      %v1418 = vpop.f32.mrb[0].mxu0
      %v1419 = vpop.f32.mrb[0].mxu0
      %v1420 = vadd.f32 0.0, %v1419
      %v1421 = vpop.f32.mrb[0].mxu0
      %1422 = vmatprep.mubr.bf16.mxu0 0
      %1423 = vmatmul.mubr.bf16.gmra.mrb[0].mxu0 %v1311
      %v1424 = vpop.f32.mrb[0].mxu0
      %v1425 = vadd.f32 0.0, %v1424
      %v1426 = vpop.f32.mrb[0].mxu0
      %v1427 = vpop.f32.mrb[0].mxu0
      %v1428 = vadd.f32 0.0, %v1427
      %v1429 = vpop.f32.mrb[0].mxu0
      %1430 = vmatprep.mubr.bf16.mxu0 0
      %1431 = vmatmul.mubr.bf16.gmra.mrb[0].mxu0 %v1314
      %v1432 = vpop.f32.mrb[0].mxu0
      %v1433 = vadd.f32 0.0, %v1432
      %v1434 = vpop.f32.mrb[0].mxu0
      %v1435 = vpop.f32.mrb[0].mxu0
      %v1436 = vadd.f32 0.0, %v1435
      %v1437 = vpop.f32.mrb[0].mxu0
      %1438 = vmatprep.mubr.bf16.mxu0 0
      %1439 = vmatmul.mubr.bf16.gmra.mrb[0].mxu0 %v1317
      %v1440 = vpop.f32.mrb[0].mxu0
      %v1441 = vadd.f32 0.0, %v1440
      %v1442 = vpop.f32.mrb[0].mxu0
      %v1443 = vpop.f32.mrb[0].mxu0
      %v1444 = vadd.f32 0.0, %v1443
      %v1445 = vpop.f32.mrb[0].mxu0
      %1446 = vmatprep.mubr.bf16.mxu0 0
      %1447 = vmatmul.mubr.bf16.gmra.mrb[0].mxu0 %v1320
      %v1448 = vpop.f32.mrb[0].mxu0
      %v1449 = vadd.f32 0.0, %v1448
      %v1450 = vpop.f32.mrb[0].mxu0
      %v1451 = vpop.f32.mrb[0].mxu0
      %v1452 = vadd.f32 0.0, %v1451
      %v1453 = vpop.f32.mrb[0].mxu0
      %1454 = vmatprep.mubr.bf16.mxu0 0
      %1455 = vmatmul.mubr.bf16.gmra.mrb[0].mxu0 %v1323
      %v1456 = vpop.f32.mrb[0].mxu0
      %v1457 = vadd.f32 0.0, %v1456
      %v1458 = vpop.f32.mrb[0].mxu0
      %v1459 = vpop.f32.mrb[0].mxu0
      %v1460 = vadd.f32 0.0, %v1459
      %v1461 = vpop.f32.mrb[0].mxu0
      %1462 = vmatprep.mubr.bf16.mxu0 0
      %1463 = vmatmul.mubr.bf16.gmra.mrb[0].mxu0 %v1326
      %v1464 = vpop.f32.mrb[0].mxu0
      %v1465 = vadd.f32 0.0, %v1464
      %v1466 = vpop.f32.mrb[0].mxu0
      %v1467 = vpop.f32.mrb[0].mxu0
      %v1468 = vadd.f32 0.0, %v1467
      %v1469 = vpop.f32.mrb[0].mxu0
      %1470 = vmatprep.mubr.bf16.mxu0 0
      %1471 = vmatmul.mubr.bf16.gmra.mrb[0].mxu0 %v1329
      %v1472 = vpop.f32.mrb[0].mxu0
      %v1473 = vadd.f32 0.0, %v1472
      %v1474 = vpop.f32.mrb[0].mxu0
      %v1475 = vpop.f32.mrb[0].mxu0
      %v1476 = vadd.f32 0.0, %v1475
      %v1477 = vpop.f32.mrb[0].mxu0
      %1478 = vmatprep.mubr.bf16.mxu0 0
      %1479 = vmatmul.mubr.bf16.gmra.mrb[0].mxu0 %v1332
      %v1480 = vpop.f32.mrb[0].mxu0
      %v1481 = vadd.f32 0.0, %v1480
      %v1482 = vpop.f32.mrb[0].mxu0
      %v1483 = vpop.f32.mrb[0].mxu0
      %v1484 = vadd.f32 0.0, %v1483
      %v1485 = vpop.f32.mrb[0].mxu0
      %1486 = vmatprep.mubr.bf16.mxu0 0
      %1487 = vmatmul.mubr.bf16.gmra.mrb[0].mxu0 %v1335
      %v1488 = vpop.f32.mrb[0].mxu0
      %v1489 = vadd.f32 0.0, %v1488
      %v1490 = vpop.f32.mrb[0].mxu0
      %v1491 = vpop.f32.mrb[0].mxu0
      %v1492 = vadd.f32 0.0, %v1491
      %v1493 = vpop.f32.mrb[0].mxu0
      %1494 = vmatprep.mubr.bf16.mxu0 0
      %1495 = vmatmul.mubr.bf16.gmra.mrb[0].mxu0 %v1338
      %v1496 = vpop.f32.mrb[0].mxu0
      %v1497 = vadd.f32 0.0, %v1496
      %v1498 = vpop.f32.mrb[0].mxu0
      %v1499 = vpop.f32.mrb[0].mxu0
      %v1500 = vadd.f32 0.0, %v1499
      %v1501 = vpop.f32.mrb[0].mxu0
      %1502 = vmatprep.mubr.bf16.mxu0 0
      %1503 = vmatmul.mubr.bf16.gmra.mrb[0].mxu0 %v1341
      %v1504 = vpop.f32.mrb[0].mxu0
      %v1505 = vadd.f32 0.0, %v1504
      %v1506 = vpop.f32.mrb[0].mxu0
      %v1507 = vpop.f32.mrb[0].mxu0
      %v1508 = vadd.f32 0.0, %v1507
      %v1509 = vpop.f32.mrb[0].mxu0
      %1510 = vmatprep.mubr.bf16.mxu0 0
      %1511 = vmatmul.mubr.bf16.gmra.mrb[0].mxu0 %v1344
      %v1512 = vpop.f32.mrb[0].mxu0
      %v1513 = vadd.f32 0.0, %v1512
      %v1514 = vpop.f32.mrb[0].mxu0
      %v1515 = vpop.f32.mrb[0].mxu0
      %v1516 = vadd.f32 0.0, %v1515
      %v1517 = vpop.f32.mrb[0].mxu0
      %1518 = vmatprep.mubr.bf16.mxu0 0
      %1519 = vmatmul.mubr.bf16.gmra.mrb[0].mxu0 %v1347
      %v1520 = vpop.f32.mrb[0].mxu0
      %v1521 = vadd.f32 0.0, %v1520
      %v1522 = vpop.f32.mrb[0].mxu0
      %v1523 = vpop.f32.mrb[0].mxu0
      %v1524 = vadd.f32 0.0, %v1523
      %v1525 = vpop.f32.mrb[0].mxu0
      %1526 = vmatprep.mubr.bf16.mxu0 0
      %1527 = vmatmul.mubr.bf16.gmra.mrb[0].mxu0 %v1350
      %v1528 = vpop.f32.mrb[0].mxu0
      %v1529 = vadd.f32 0.0, %v1528
      %v1530 = vpop.f32.mrb[0].mxu0
      %v1531 = vpop.f32.mrb[0].mxu0
      %v1532 = vadd.f32 0.0, %v1531
      %v1533 = vpop.f32.mrb[0].mxu0
      %1534 = vmatprep.mubr.bf16.mxu0 0
      %1535 = vmatmul.mubr.bf16.gmra.mrb[0].mxu0 %v1353
      %v1536 = vpop.f32.mrb[0].mxu0
      %v1537 = vadd.f32 0.0, %v1536
      %v1538 = vpop.f32.mrb[0].mxu0
      %v1539 = vpop.f32.mrb[0].mxu0
      %v1540 = vadd.f32 0.0, %v1539
      %v1541 = vpop.f32.mrb[0].mxu0
      %1542 = vmatprep.mubr.bf16.mxu0 0
      %1543 = vmatmul.mubr.bf16.gmra.mrb[0].mxu0 %v1356
      %v1544 = vpop.f32.mrb[0].mxu0
      %v1545 = vadd.f32 0.0, %v1544
      %v1546 = vpop.f32.mrb[0].mxu0
      %v1547 = vpop.f32.mrb[0].mxu0
      %v1548 = vadd.f32 0.0, %v1547
      %v1549 = vpop.f32.mrb[0].mxu0
      %1550 = vmatprep.mubr.bf16.mxu0 0
      %1551 = vmatmul.mubr.bf16.gmra.mrb[0].mxu0 %v1359
      %v1552 = vpop.f32.mrb[0].mxu0
      %v1553 = vadd.f32 0.0, %v1552
      %v1554 = vpop.f32.mrb[0].mxu0
      %v1555 = vpop.f32.mrb[0].mxu0
      %v1556 = vadd.f32 0.0, %v1555
      %v1557 = vpop.f32.mrb[0].mxu0
      %1558 = vmatprep.mubr.bf16.mxu0 0
      %1559 = vmatmul.mubr.bf16.gmra.mrb[0].mxu0 %v1362
      %v1560 = vpop.f32.mrb[0].mxu0
      %v1561 = vadd.f32 0.0, %v1560
      %v1562 = vpop.f32.mrb[0].mxu0
      %v1563 = vpop.f32.mrb[0].mxu0
      %v1564 = vadd.f32 0.0, %v1563
      %v1565 = vpop.f32.mrb[0].mxu0
      %1566 = vmatprep.mubr.bf16.mxu0 0
      %1567 = vmatmul.mubr.bf16.gmra.mrb[0].mxu0 %v1365
      %v1568 = vpop.f32.mrb[0].mxu0
      %v1569 = vadd.f32 0.0, %v1568
      %v1570 = vpop.f32.mrb[0].mxu0
      %v1571 = vpop.f32.mrb[0].mxu0
      %v1572 = vadd.f32 0.0, %v1571
      %v1573 = vpop.f32.mrb[0].mxu0
      %1574 = vmatprep.mubr.bf16.mxu0 0
      %1575 = vmatmul.mubr.bf16.gmra.mrb[0].mxu0 %v1368
      %v1576 = vpop.f32.mrb[0].mxu0
      %v1577 = vadd.f32 0.0, %v1576
      %v1578 = vpop.f32.mrb[0].mxu0
      %v1579 = vpop.f32.mrb[0].mxu0
      %v1580 = vadd.f32 0.0, %v1579
      %v1581 = vpop.f32.mrb[0].mxu0
      %1582 = vmatprep.mubr.bf16.mxu0 0
      %1583 = vmatmul.mubr.bf16.gmra.mrb[0].mxu0 %v1371
      %v1584 = vpop.f32.mrb[0].mxu0
      %v1585 = vadd.f32 0.0, %v1584
      %v1586 = vpop.f32.mrb[0].mxu0
      %v1587 = vpop.f32.mrb[0].mxu0
      %v1588 = vadd.f32 0.0, %v1587
      %v1589 = vpop.f32.mrb[0].mxu0
      %1590 = vmatprep.mubr.bf16.mxu0 0
      %1591 = vmatmul.mubr.bf16.gmra.mrb[0].mxu0 %v1374
      %v1592 = vpop.f32.mrb[0].mxu0
      %v1593 = vadd.f32 0.0, %v1592
      %v1594 = vpop.f32.mrb[0].mxu0
      %v1595 = vpop.f32.mrb[0].mxu0
      %v1596 = vadd.f32 0.0, %v1595
      %v1597 = vpop.f32.mrb[0].mxu0
      %1598 = vmatprep.mubr.bf16.mxu0 0
      %1599 = vmatmul.mubr.bf16.gmra.mrb[0].mxu0 %v1377
      %v1600 = vpop.f32.mrb[0].mxu0
      %v1601 = vadd.f32 0.0, %v1600
      %v1602 = vpop.f32.mrb[0].mxu0
      %v1603 = vpop.f32.mrb[0].mxu0
      %v1604 = vadd.f32 0.0, %v1603
      %v1605 = vpop.f32.mrb[0].mxu0
      %1606 = vdwg.mxu0
      %v1607 = vadd.f32 %v1062, %v1417
      %v1608 = vadd.f32 %v1065, %v1420
      %v1609 = vadd.f32 %v1070, %v1425
      %v1610 = vadd.f32 %v1073, %v1428
      %v1611 = vadd.f32 %v1078, %v1433
      %v1612 = vadd.f32 %v1081, %v1436
      %v1613 = vadd.f32 %v1086, %v1441
      %v1614 = vadd.f32 %v1089, %v1444
      %v1615 = vadd.f32 %v1094, %v1449
      %v1616 = vadd.f32 %v1097, %v1452
      %v1617 = vadd.f32 %v1102, %v1457
      %v1618 = vadd.f32 %v1105, %v1460
      %v1619 = vadd.f32 %v1110, %v1465
      %v1620 = vadd.f32 %v1113, %v1468
      %v1621 = vadd.f32 %v1118, %v1473
      %v1622 = vadd.f32 %v1121, %v1476
      %v1623 = vadd.f32 %v1126, %v1481
      %v1624 = vadd.f32 %v1129, %v1484
      %v1625 = vadd.f32 %v1134, %v1489
      %v1626 = vadd.f32 %v1137, %v1492
      %v1627 = vadd.f32 %v1142, %v1497
      %v1628 = vadd.f32 %v1145, %v1500
      %v1629 = vadd.f32 %v1150, %v1505
      %v1630 = vadd.f32 %v1153, %v1508
      %v1631 = vadd.f32 %v1158, %v1513
      %v1632 = vadd.f32 %v1161, %v1516
      %v1633 = vadd.f32 %v1166, %v1521
      %v1634 = vadd.f32 %v1169, %v1524
      %v1635 = vadd.f32 %v1174, %v1529
      %v1636 = vadd.f32 %v1177, %v1532
      %v1637 = vadd.f32 %v1182, %v1537
      %v1638 = vadd.f32 %v1185, %v1540
      %v1639 = vadd.f32 %v1190, %v1545
      %v1640 = vadd.f32 %v1193, %v1548
      %v1641 = vadd.f32 %v1198, %v1553
      %v1642 = vadd.f32 %v1201, %v1556
      %v1643 = vadd.f32 %v1206, %v1561
      %v1644 = vadd.f32 %v1209, %v1564
      %v1645 = vadd.f32 %v1214, %v1569
      %v1646 = vadd.f32 %v1217, %v1572
      %v1647 = vadd.f32 %v1222, %v1577
      %v1648 = vadd.f32 %v1225, %v1580
      %v1649 = vadd.f32 %v1230, %v1585
      %v1650 = vadd.f32 %v1233, %v1588
      %v1651 = vadd.f32 %v1238, %v1593
      %v1652 = vadd.f32 %v1241, %v1596
      %v1653 = vadd.f32 %v1246, %v1601
      %v1654 = vadd.f32 %v1249, %v1604
      %s1655 = scalar_lea.vmem %s270, 12
      %v1656 = vld [vmem:[%s1655] sm:$0xf]
      %v1659 = vunpack.c.l.b16 %v344
      %v1660 = vunpack.c.l.b16 %v345
      %v1661 = vpack.c.b16 %v407, %v406
      %v1662 = vpack.c.b16 %v409, %v408
      %v1663 = vpack.c.b16 %v411, %v410
      %v1664 = vpack.c.b16 %v413, %v412
      %v1665 = vpack.c.b16 %v415, %v414
      %v1666 = vpack.c.b16 %v417, %v416
      %v1667 = vpack.c.b16 %v419, %v418
      %v1668 = vpack.c.b16 %v421, %v420
      %v1669 = vpack.c.b16 %v423, %v422
      %v1670 = vpack.c.b16 %v425, %v424
      %v1671 = vpack.c.b16 %v427, %v426
      %v1672 = vpack.c.b16 %v429, %v428
      %v1673 = vpack.c.b16 %v431, %v430
      %v1674 = vpack.c.b16 %v433, %v432
      %v1675 = vpack.c.b16 %v435, %v434
      %v1676 = vpack.c.b16 %v437, %v436
      %v1677 = vpack.c.b16 %v439, %v438
      %v1678 = vpack.c.b16 %v441, %v440
      %v1679 = vpack.c.b16 %v443, %v442
      %v1680 = vpack.c.b16 %v445, %v444
      %v1681 = vpack.c.b16 %v447, %v446
      %v1682 = vpack.c.b16 %v449, %v448
      %v1683 = vpack.c.b16 %v451, %v450
      %v1684 = vpack.c.b16 %v1660, %v1659
      %v1686 = vsel %vm674, %v1661, 0
      %v1689 = vsel %vm674, %v1662, 0
      %v1692 = vsel %vm674, %v1663, 0
      %v1695 = vsel %vm674, %v1664, 0
      %v1698 = vsel %vm674, %v1665, 0
      %v1701 = vsel %vm674, %v1666, 0
      %v1704 = vsel %vm674, %v1667, 0
      %v1707 = vsel %vm674, %v1668, 0
      %v1710 = vsel %vm674, %v1669, 0
      %v1713 = vsel %vm674, %v1670, 0
      %v1716 = vsel %vm674, %v1671, 0
      %v1719 = vsel %vm674, %v1672, 0
      %v1722 = vsel %vm674, %v1673, 0
      %v1725 = vsel %vm674, %v1674, 0
      %v1728 = vsel %vm674, %v1675, 0
      %v1731 = vsel %vm674, %v1676, 0
      %v1734 = vsel %vm674, %v1677, 0
      %v1737 = vsel %vm674, %v1678, 0
      %v1740 = vsel %vm674, %v1679, 0
      %v1743 = vsel %vm674, %v1680, 0
      %v1746 = vsel %vm674, %v1681, 0
      %v1749 = vsel %vm674, %v1682, 0
      %v1752 = vsel %vm674, %v1683, 0
      %v1755 = vsel %vm674, %v1684, 0
      %v1758 = vsel %vm747, %v1656, 0
      %1760 = vmatprep.subr.bf16.mxu0 0
      %1761 = vmatpush1.bf16.msra.mxu0 %v1758
      %1762 = vmatprep.subr.bf16.mxu0 0
      %1763 = vmatpush1.bf16.msra.mxu0 0
      %1764 = vmatprep.subr.bf16.mxu0 0
      %1765 = vmatpush1.bf16.msra.mxu0 0
      %1766 = vmatprep.subr.bf16.mxu0 0
      %1767 = vmatpush1.bf16.msra.mxu0 0
      %1768 = vmatprep.subr.bf16.mxu0 0
      %1769 = vmatpush1.bf16.msra.mxu0 0
      %1770 = vmatprep.subr.bf16.mxu0 0
      %1771 = vmatpush1.bf16.msra.mxu0 0
      %1772 = vmatprep.subr.bf16.mxu0 0
      %1773 = vmatpush1.bf16.msra.mxu0 0
      %1774 = vmatprep.subr.bf16.mxu0 0
      %1775 = vmatpush1.bf16.msra.mxu0 0
      %1776 = vmatprep.subr.bf16.mxu0 0
      %1777 = vmatpush1.bf16.msra.mxu0 0
      %1778 = vmatprep.subr.bf16.mxu0 0
      %1779 = vmatpush1.bf16.msra.mxu0 0
      %1780 = vmatprep.subr.bf16.mxu0 0
      %1781 = vmatpush1.bf16.msra.mxu0 0
      %1782 = vmatprep.subr.bf16.mxu0 0
      %1783 = vmatpush1.bf16.msra.mxu0 0
      %1784 = vmatprep.subr.bf16.mxu0 0
      %1785 = vmatpush1.bf16.msra.mxu0 0
      %1786 = vmatprep.subr.bf16.mxu0 0
      %1787 = vmatpush1.bf16.msra.mxu0 0
      %1788 = vmatprep.subr.bf16.mxu0 0
      %1789 = vmatpush1.bf16.msra.mxu0 0
      %1790 = vmatprep.subr.bf16.mxu0 0
      %1791 = vmatpush1.bf16.msra.mxu0 0
      %1792 = vmatprep.mubr.bf16.mxu0 0
      %1793 = vmatmul.mubr.bf16.gmra.mrb[0].mxu0 %v1686
      %v1794 = vpop.f32.mrb[0].mxu0
      %v1795 = vadd.f32 0.0, %v1794
      %v1796 = vpop.f32.mrb[0].mxu0
      %v1797 = vpop.f32.mrb[0].mxu0
      %v1798 = vadd.f32 0.0, %v1797
      %v1799 = vpop.f32.mrb[0].mxu0
      %1800 = vmatprep.mubr.bf16.mxu0 0
      %1801 = vmatmul.mubr.bf16.gmra.mrb[0].mxu0 %v1689
      %v1802 = vpop.f32.mrb[0].mxu0
      %v1803 = vadd.f32 0.0, %v1802
      %v1804 = vpop.f32.mrb[0].mxu0
      %v1805 = vpop.f32.mrb[0].mxu0
      %v1806 = vadd.f32 0.0, %v1805
      %v1807 = vpop.f32.mrb[0].mxu0
      %1808 = vmatprep.mubr.bf16.mxu0 0
      %1809 = vmatmul.mubr.bf16.gmra.mrb[0].mxu0 %v1692
      %v1810 = vpop.f32.mrb[0].mxu0
      %v1811 = vadd.f32 0.0, %v1810
      %v1812 = vpop.f32.mrb[0].mxu0
      %v1813 = vpop.f32.mrb[0].mxu0
      %v1814 = vadd.f32 0.0, %v1813
      %v1815 = vpop.f32.mrb[0].mxu0
      %1816 = vmatprep.mubr.bf16.mxu0 0
      %1817 = vmatmul.mubr.bf16.gmra.mrb[0].mxu0 %v1695
      %v1818 = vpop.f32.mrb[0].mxu0
      %v1819 = vadd.f32 0.0, %v1818
      %v1820 = vpop.f32.mrb[0].mxu0
      %v1821 = vpop.f32.mrb[0].mxu0
      %v1822 = vadd.f32 0.0, %v1821
      %v1823 = vpop.f32.mrb[0].mxu0
      %1824 = vmatprep.mubr.bf16.mxu0 0
      %1825 = vmatmul.mubr.bf16.gmra.mrb[0].mxu0 %v1698
      %v1826 = vpop.f32.mrb[0].mxu0
      %v1827 = vadd.f32 0.0, %v1826
      %v1828 = vpop.f32.mrb[0].mxu0
      %v1829 = vpop.f32.mrb[0].mxu0
      %v1830 = vadd.f32 0.0, %v1829
      %v1831 = vpop.f32.mrb[0].mxu0
      %1832 = vmatprep.mubr.bf16.mxu0 0
      %1833 = vmatmul.mubr.bf16.gmra.mrb[0].mxu0 %v1701
      %v1834 = vpop.f32.mrb[0].mxu0
      %v1835 = vadd.f32 0.0, %v1834
      %v1836 = vpop.f32.mrb[0].mxu0
      %v1837 = vpop.f32.mrb[0].mxu0
      %v1838 = vadd.f32 0.0, %v1837
      %v1839 = vpop.f32.mrb[0].mxu0
      %1840 = vmatprep.mubr.bf16.mxu0 0
      %1841 = vmatmul.mubr.bf16.gmra.mrb[0].mxu0 %v1704
      %v1842 = vpop.f32.mrb[0].mxu0
      %v1843 = vadd.f32 0.0, %v1842
      %v1844 = vpop.f32.mrb[0].mxu0
      %v1845 = vpop.f32.mrb[0].mxu0
      %v1846 = vadd.f32 0.0, %v1845
      %v1847 = vpop.f32.mrb[0].mxu0
      %1848 = vmatprep.mubr.bf16.mxu0 0
      %1849 = vmatmul.mubr.bf16.gmra.mrb[0].mxu0 %v1707
      %v1850 = vpop.f32.mrb[0].mxu0
      %v1851 = vadd.f32 0.0, %v1850
      %v1852 = vpop.f32.mrb[0].mxu0
      %v1853 = vpop.f32.mrb[0].mxu0
      %v1854 = vadd.f32 0.0, %v1853
      %v1855 = vpop.f32.mrb[0].mxu0
      %1856 = vmatprep.mubr.bf16.mxu0 0
      %1857 = vmatmul.mubr.bf16.gmra.mrb[0].mxu0 %v1710
      %v1858 = vpop.f32.mrb[0].mxu0
      %v1859 = vadd.f32 0.0, %v1858
      %v1860 = vpop.f32.mrb[0].mxu0
      %v1861 = vpop.f32.mrb[0].mxu0
      %v1862 = vadd.f32 0.0, %v1861
      %v1863 = vpop.f32.mrb[0].mxu0
      %1864 = vmatprep.mubr.bf16.mxu0 0
      %1865 = vmatmul.mubr.bf16.gmra.mrb[0].mxu0 %v1713
      %v1866 = vpop.f32.mrb[0].mxu0
      %v1867 = vadd.f32 0.0, %v1866
      %v1868 = vpop.f32.mrb[0].mxu0
      %v1869 = vpop.f32.mrb[0].mxu0
      %v1870 = vadd.f32 0.0, %v1869
      %v1871 = vpop.f32.mrb[0].mxu0
      %1872 = vmatprep.mubr.bf16.mxu0 0
      %1873 = vmatmul.mubr.bf16.gmra.mrb[0].mxu0 %v1716
      %v1874 = vpop.f32.mrb[0].mxu0
      %v1875 = vadd.f32 0.0, %v1874
      %v1876 = vpop.f32.mrb[0].mxu0
      %v1877 = vpop.f32.mrb[0].mxu0
      %v1878 = vadd.f32 0.0, %v1877
      %v1879 = vpop.f32.mrb[0].mxu0
      %1880 = vmatprep.mubr.bf16.mxu0 0
      %1881 = vmatmul.mubr.bf16.gmra.mrb[0].mxu0 %v1719
      %v1882 = vpop.f32.mrb[0].mxu0
      %v1883 = vadd.f32 0.0, %v1882
      %v1884 = vpop.f32.mrb[0].mxu0
      %v1885 = vpop.f32.mrb[0].mxu0
      %v1886 = vadd.f32 0.0, %v1885
      %v1887 = vpop.f32.mrb[0].mxu0
      %1888 = vmatprep.mubr.bf16.mxu0 0
      %1889 = vmatmul.mubr.bf16.gmra.mrb[0].mxu0 %v1722
      %v1890 = vpop.f32.mrb[0].mxu0
      %v1891 = vadd.f32 0.0, %v1890
      %v1892 = vpop.f32.mrb[0].mxu0
      %v1893 = vpop.f32.mrb[0].mxu0
      %v1894 = vadd.f32 0.0, %v1893
      %v1895 = vpop.f32.mrb[0].mxu0
      %1896 = vmatprep.mubr.bf16.mxu0 0
      %1897 = vmatmul.mubr.bf16.gmra.mrb[0].mxu0 %v1725
      %v1898 = vpop.f32.mrb[0].mxu0
      %v1899 = vadd.f32 0.0, %v1898
      %v1900 = vpop.f32.mrb[0].mxu0
      %v1901 = vpop.f32.mrb[0].mxu0
      %v1902 = vadd.f32 0.0, %v1901
      %v1903 = vpop.f32.mrb[0].mxu0
      %1904 = vmatprep.mubr.bf16.mxu0 0
      %1905 = vmatmul.mubr.bf16.gmra.mrb[0].mxu0 %v1728
      %v1906 = vpop.f32.mrb[0].mxu0
      %v1907 = vadd.f32 0.0, %v1906
      %v1908 = vpop.f32.mrb[0].mxu0
      %v1909 = vpop.f32.mrb[0].mxu0
      %v1910 = vadd.f32 0.0, %v1909
      %v1911 = vpop.f32.mrb[0].mxu0
      %1912 = vmatprep.mubr.bf16.mxu0 0
      %1913 = vmatmul.mubr.bf16.gmra.mrb[0].mxu0 %v1731
      %v1914 = vpop.f32.mrb[0].mxu0
      %v1915 = vadd.f32 0.0, %v1914
      %v1916 = vpop.f32.mrb[0].mxu0
      %v1917 = vpop.f32.mrb[0].mxu0
      %v1918 = vadd.f32 0.0, %v1917
      %v1919 = vpop.f32.mrb[0].mxu0
      %1920 = vmatprep.mubr.bf16.mxu0 0
      %1921 = vmatmul.mubr.bf16.gmra.mrb[0].mxu0 %v1734
      %v1922 = vpop.f32.mrb[0].mxu0
      %v1923 = vadd.f32 0.0, %v1922
      %v1924 = vpop.f32.mrb[0].mxu0
      %v1925 = vpop.f32.mrb[0].mxu0
      %v1926 = vadd.f32 0.0, %v1925
      %v1927 = vpop.f32.mrb[0].mxu0
      %1928 = vmatprep.mubr.bf16.mxu0 0
      %1929 = vmatmul.mubr.bf16.gmra.mrb[0].mxu0 %v1737
      %v1930 = vpop.f32.mrb[0].mxu0
      %v1931 = vadd.f32 0.0, %v1930
      %v1932 = vpop.f32.mrb[0].mxu0
      %v1933 = vpop.f32.mrb[0].mxu0
      %v1934 = vadd.f32 0.0, %v1933
      %v1935 = vpop.f32.mrb[0].mxu0
      %1936 = vmatprep.mubr.bf16.mxu0 0
      %1937 = vmatmul.mubr.bf16.gmra.mrb[0].mxu0 %v1740
      %v1938 = vpop.f32.mrb[0].mxu0
      %v1939 = vadd.f32 0.0, %v1938
      %v1940 = vpop.f32.mrb[0].mxu0
      %v1941 = vpop.f32.mrb[0].mxu0
      %v1942 = vadd.f32 0.0, %v1941
      %v1943 = vpop.f32.mrb[0].mxu0
      %1944 = vmatprep.mubr.bf16.mxu0 0
      %1945 = vmatmul.mubr.bf16.gmra.mrb[0].mxu0 %v1743
      %v1946 = vpop.f32.mrb[0].mxu0
      %v1947 = vadd.f32 0.0, %v1946
      %v1948 = vpop.f32.mrb[0].mxu0
      %v1949 = vpop.f32.mrb[0].mxu0
      %v1950 = vadd.f32 0.0, %v1949
      %v1951 = vpop.f32.mrb[0].mxu0
      %1952 = vmatprep.mubr.bf16.mxu0 0
      %1953 = vmatmul.mubr.bf16.gmra.mrb[0].mxu0 %v1746
      %v1954 = vpop.f32.mrb[0].mxu0
      %v1955 = vadd.f32 0.0, %v1954
      %v1956 = vpop.f32.mrb[0].mxu0
      %v1957 = vpop.f32.mrb[0].mxu0
      %v1958 = vadd.f32 0.0, %v1957
      %v1959 = vpop.f32.mrb[0].mxu0
      %1960 = vmatprep.mubr.bf16.mxu0 0
      %1961 = vmatmul.mubr.bf16.gmra.mrb[0].mxu0 %v1749
      %v1962 = vpop.f32.mrb[0].mxu0
      %v1963 = vadd.f32 0.0, %v1962
      %v1964 = vpop.f32.mrb[0].mxu0
      %v1965 = vpop.f32.mrb[0].mxu0
      %v1966 = vadd.f32 0.0, %v1965
      %v1967 = vpop.f32.mrb[0].mxu0
      %1968 = vmatprep.mubr.bf16.mxu0 0
      %1969 = vmatmul.mubr.bf16.gmra.mrb[0].mxu0 %v1752
      %v1970 = vpop.f32.mrb[0].mxu0
      %v1971 = vadd.f32 0.0, %v1970
      %v1972 = vpop.f32.mrb[0].mxu0
      %v1973 = vpop.f32.mrb[0].mxu0
      %v1974 = vadd.f32 0.0, %v1973
      %v1975 = vpop.f32.mrb[0].mxu0
      %1976 = vmatprep.mubr.bf16.mxu0 0
      %1977 = vmatmul.mubr.bf16.gmra.mrb[0].mxu0 %v1755
      %v1978 = vpop.f32.mrb[0].mxu0
      %v1979 = vadd.f32 0.0, %v1978
      %v1980 = vpop.f32.mrb[0].mxu0
      %v1981 = vpop.f32.mrb[0].mxu0
      %v1982 = vadd.f32 0.0, %v1981
      %v1983 = vpop.f32.mrb[0].mxu0
      %1984 = vdwg.mxu0
      %v1985 = vadd.f32 %v1607, %v1795
      %v1986 = vadd.f32 %v1608, %v1798
      %v1987 = vadd.f32 %v1609, %v1803
      %v1988 = vadd.f32 %v1610, %v1806
      %v1989 = vadd.f32 %v1611, %v1811
      %v1990 = vadd.f32 %v1612, %v1814
      %v1991 = vadd.f32 %v1613, %v1819
      %v1992 = vadd.f32 %v1614, %v1822
      %v1993 = vadd.f32 %v1615, %v1827
      %v1994 = vadd.f32 %v1616, %v1830
      %v1995 = vadd.f32 %v1617, %v1835
      %v1996 = vadd.f32 %v1618, %v1838
      %v1997 = vadd.f32 %v1619, %v1843
      %v1998 = vadd.f32 %v1620, %v1846
      %v1999 = vadd.f32 %v1621, %v1851
      %v2000 = vadd.f32 %v1622, %v1854
      %v2001 = vadd.f32 %v1623, %v1859
      %v2002 = vadd.f32 %v1624, %v1862
      %v2003 = vadd.f32 %v1625, %v1867
      %v2004 = vadd.f32 %v1626, %v1870
      %v2005 = vadd.f32 %v1627, %v1875
      %v2006 = vadd.f32 %v1628, %v1878
      %v2007 = vadd.f32 %v1629, %v1883
      %v2008 = vadd.f32 %v1630, %v1886
      %v2009 = vadd.f32 %v1631, %v1891
      %v2010 = vadd.f32 %v1632, %v1894
      %v2011 = vadd.f32 %v1633, %v1899
      %v2012 = vadd.f32 %v1634, %v1902
      %v2013 = vadd.f32 %v1635, %v1907
      %v2014 = vadd.f32 %v1636, %v1910
      %v2015 = vadd.f32 %v1637, %v1915
      %v2016 = vadd.f32 %v1638, %v1918
      %v2017 = vadd.f32 %v1639, %v1923
      %v2018 = vadd.f32 %v1640, %v1926
      %v2019 = vadd.f32 %v1641, %v1931
      %v2020 = vadd.f32 %v1642, %v1934
      %v2021 = vadd.f32 %v1643, %v1939
      %v2022 = vadd.f32 %v1644, %v1942
      %v2023 = vadd.f32 %v1645, %v1947
      %v2024 = vadd.f32 %v1646, %v1950
      %v2025 = vadd.f32 %v1647, %v1955
      %v2026 = vadd.f32 %v1648, %v1958
      %v2027 = vadd.f32 %v1649, %v1963
      %v2028 = vadd.f32 %v1650, %v1966
      %v2029 = vadd.f32 %v1651, %v1971
      %v2030 = vadd.f32 %v1652, %v1974
      %v2031 = vadd.f32 %v1653, %v1979
      %v2032 = vadd.f32 %v1654, %v1982
      %s2033 = scalar_lea.vmem %s270, 16
      %v2034 = vld [vmem:[%s2033] sm:$0xf]
      %v2036 = vunpack.c.l.b16 %v346
      %v2037 = vpack.c.b16 %v2036, %v2036
      %v2038 = vshrl.u32 %v1661, 16
      %v2040 = vshll.u32 %v1661, 16
      %v2042 = vrot.slane %v2040, 1
      %v2043 = vor.u32 %v2038, %v2042
      %v2044 = vshll.u32 %v1662, 16
      %v2046 = vrot.slane %v2044, 1
      %v2047 = vsel %vm477, %v2043, %v2046
      %v2048 = vshrl.u32 %v1662, 16
      %v2050 = vor.u32 %v2048, %v2046
      %v2051 = vshll.u32 %v1663, 16
      %v2053 = vrot.slane %v2051, 1
      %v2054 = vsel %vm477, %v2050, %v2053
      %v2055 = vshrl.u32 %v1663, 16
      %v2057 = vor.u32 %v2055, %v2053
      %v2058 = vshll.u32 %v1664, 16
      %v2060 = vrot.slane %v2058, 1
      %v2061 = vsel %vm477, %v2057, %v2060
      %v2062 = vshrl.u32 %v1664, 16
      %v2064 = vor.u32 %v2062, %v2060
      %v2065 = vshll.u32 %v1665, 16
      %v2067 = vrot.slane %v2065, 1
      %v2068 = vsel %vm477, %v2064, %v2067
      %v2069 = vshrl.u32 %v1665, 16
      %v2071 = vor.u32 %v2069, %v2067
      %v2072 = vshll.u32 %v1666, 16
      %v2074 = vrot.slane %v2072, 1
      %v2075 = vsel %vm477, %v2071, %v2074
      %v2076 = vshrl.u32 %v1666, 16
      %v2078 = vor.u32 %v2076, %v2074
      %v2079 = vshll.u32 %v1667, 16
      %v2081 = vrot.slane %v2079, 1
      %v2082 = vsel %vm477, %v2078, %v2081
      %v2083 = vshrl.u32 %v1667, 16
      %v2085 = vor.u32 %v2083, %v2081
      %v2086 = vshll.u32 %v1668, 16
      %v2088 = vrot.slane %v2086, 1
      %v2089 = vsel %vm477, %v2085, %v2088
      %v2090 = vshrl.u32 %v1668, 16
      %v2092 = vor.u32 %v2090, %v2088
      %v2093 = vshll.u32 %v1669, 16
      %v2095 = vrot.slane %v2093, 1
      %v2096 = vsel %vm477, %v2092, %v2095
      %v2097 = vshrl.u32 %v1669, 16
      %v2099 = vor.u32 %v2097, %v2095
      %v2100 = vshll.u32 %v1670, 16
      %v2102 = vrot.slane %v2100, 1
      %v2103 = vsel %vm477, %v2099, %v2102
      %v2104 = vshrl.u32 %v1670, 16
      %v2106 = vor.u32 %v2104, %v2102
      %v2107 = vshll.u32 %v1671, 16
      %v2109 = vrot.slane %v2107, 1
      %v2110 = vsel %vm477, %v2106, %v2109
      %v2111 = vshrl.u32 %v1671, 16
      %v2113 = vor.u32 %v2111, %v2109
      %v2114 = vshll.u32 %v1672, 16
      %v2116 = vrot.slane %v2114, 1
      %v2117 = vsel %vm477, %v2113, %v2116
      %v2118 = vshrl.u32 %v1672, 16
      %v2120 = vor.u32 %v2118, %v2116
      %v2121 = vshll.u32 %v1673, 16
      %v2123 = vrot.slane %v2121, 1
      %v2124 = vsel %vm477, %v2120, %v2123
      %v2125 = vshrl.u32 %v1673, 16
      %v2127 = vor.u32 %v2125, %v2123
      %v2128 = vshll.u32 %v1674, 16
      %v2130 = vrot.slane %v2128, 1
      %v2131 = vsel %vm477, %v2127, %v2130
      %v2132 = vshrl.u32 %v1674, 16
      %v2134 = vor.u32 %v2132, %v2130
      %v2135 = vshll.u32 %v1675, 16
      %v2137 = vrot.slane %v2135, 1
      %v2138 = vsel %vm477, %v2134, %v2137
      %v2139 = vshrl.u32 %v1675, 16
      %v2141 = vor.u32 %v2139, %v2137
      %v2142 = vshll.u32 %v1676, 16
      %v2144 = vrot.slane %v2142, 1
      %v2145 = vsel %vm477, %v2141, %v2144
      %v2146 = vshrl.u32 %v1676, 16
      %v2148 = vor.u32 %v2146, %v2144
      %v2149 = vshll.u32 %v1677, 16
      %v2151 = vrot.slane %v2149, 1
      %v2152 = vsel %vm477, %v2148, %v2151
      %v2153 = vshrl.u32 %v1677, 16
      %v2155 = vor.u32 %v2153, %v2151
      %v2156 = vshll.u32 %v1678, 16
      %v2158 = vrot.slane %v2156, 1
      %v2159 = vsel %vm477, %v2155, %v2158
      %v2160 = vshrl.u32 %v1678, 16
      %v2162 = vor.u32 %v2160, %v2158
      %v2163 = vshll.u32 %v1679, 16
      %v2165 = vrot.slane %v2163, 1
      %v2166 = vsel %vm477, %v2162, %v2165
      %v2167 = vshrl.u32 %v1679, 16
      %v2169 = vor.u32 %v2167, %v2165
      %v2170 = vshll.u32 %v1680, 16
      %v2172 = vrot.slane %v2170, 1
      %v2173 = vsel %vm477, %v2169, %v2172
      %v2174 = vshrl.u32 %v1680, 16
      %v2176 = vor.u32 %v2174, %v2172
      %v2177 = vshll.u32 %v1681, 16
      %v2179 = vrot.slane %v2177, 1
      %v2180 = vsel %vm477, %v2176, %v2179
      %v2181 = vshrl.u32 %v1681, 16
      %v2183 = vor.u32 %v2181, %v2179
      %v2184 = vshll.u32 %v1682, 16
      %v2186 = vrot.slane %v2184, 1
      %v2187 = vsel %vm477, %v2183, %v2186
      %v2188 = vshrl.u32 %v1682, 16
      %v2190 = vor.u32 %v2188, %v2186
      %v2191 = vshll.u32 %v1683, 16
      %v2193 = vrot.slane %v2191, 1
      %v2194 = vsel %vm477, %v2190, %v2193
      %v2195 = vshrl.u32 %v1683, 16
      %v2197 = vor.u32 %v2195, %v2193
      %v2198 = vshll.u32 %v1684, 16
      %v2200 = vrot.slane %v2198, 1
      %v2201 = vsel %vm477, %v2197, %v2200
      %v2202 = vshrl.u32 %v1684, 16
      %v2204 = vor.u32 %v2202, %v2200
      %v2206 = vshll.u32 %v2037, 16
      %v2208 = vrot.slane %v2206, 1
      %v2209 = vsel %vm477, %v2204, %v2208
      %v2211 = vsel %vm674, %v2047, 0
      %v2214 = vsel %vm674, %v2054, 0
      %v2217 = vsel %vm674, %v2061, 0
      %v2220 = vsel %vm674, %v2068, 0
      %v2223 = vsel %vm674, %v2075, 0
      %v2226 = vsel %vm674, %v2082, 0
      %v2229 = vsel %vm674, %v2089, 0
      %v2232 = vsel %vm674, %v2096, 0
      %v2235 = vsel %vm674, %v2103, 0
      %v2238 = vsel %vm674, %v2110, 0
      %v2241 = vsel %vm674, %v2117, 0
      %v2244 = vsel %vm674, %v2124, 0
      %v2247 = vsel %vm674, %v2131, 0
      %v2250 = vsel %vm674, %v2138, 0
      %v2253 = vsel %vm674, %v2145, 0
      %v2256 = vsel %vm674, %v2152, 0
      %v2259 = vsel %vm674, %v2159, 0
      %v2262 = vsel %vm674, %v2166, 0
      %v2265 = vsel %vm674, %v2173, 0
      %v2268 = vsel %vm674, %v2180, 0
      %v2271 = vsel %vm674, %v2187, 0
      %v2274 = vsel %vm674, %v2194, 0
      %v2277 = vsel %vm674, %v2201, 0
      %v2280 = vsel %vm674, %v2209, 0
      %v2283 = vsel %vm747, %v2034, 0
      %2285 = vmatprep.subr.bf16.mxu0 0
      %2286 = vmatpush1.bf16.msra.mxu0 %v2283
      %2287 = vmatprep.subr.bf16.mxu0 0
      %2288 = vmatpush1.bf16.msra.mxu0 0
      %2289 = vmatprep.subr.bf16.mxu0 0
      %2290 = vmatpush1.bf16.msra.mxu0 0
      %2291 = vmatprep.subr.bf16.mxu0 0
      %2292 = vmatpush1.bf16.msra.mxu0 0
      %2293 = vmatprep.subr.bf16.mxu0 0
      %2294 = vmatpush1.bf16.msra.mxu0 0
      %2295 = vmatprep.subr.bf16.mxu0 0
      %2296 = vmatpush1.bf16.msra.mxu0 0
      %2297 = vmatprep.subr.bf16.mxu0 0
      %2298 = vmatpush1.bf16.msra.mxu0 0
      %2299 = vmatprep.subr.bf16.mxu0 0
      %2300 = vmatpush1.bf16.msra.mxu0 0
      %2301 = vmatprep.subr.bf16.mxu0 0
      %2302 = vmatpush1.bf16.msra.mxu0 0
      %2303 = vmatprep.subr.bf16.mxu0 0
      %2304 = vmatpush1.bf16.msra.mxu0 0
      %2305 = vmatprep.subr.bf16.mxu0 0
      %2306 = vmatpush1.bf16.msra.mxu0 0
      %2307 = vmatprep.subr.bf16.mxu0 0
      %2308 = vmatpush1.bf16.msra.mxu0 0
      %2309 = vmatprep.subr.bf16.mxu0 0
      %2310 = vmatpush1.bf16.msra.mxu0 0
      %2311 = vmatprep.subr.bf16.mxu0 0
      %2312 = vmatpush1.bf16.msra.mxu0 0
      %2313 = vmatprep.subr.bf16.mxu0 0
      %2314 = vmatpush1.bf16.msra.mxu0 0
      %2315 = vmatprep.subr.bf16.mxu0 0
      %2316 = vmatpush1.bf16.msra.mxu0 0
      %2317 = vmatprep.mubr.bf16.mxu0 0
      %2318 = vmatmul.mubr.bf16.gmra.mrb[0].mxu0 %v2211
      %v2319 = vpop.f32.mrb[0].mxu0
      %v2320 = vadd.f32 0.0, %v2319
      %v2321 = vpop.f32.mrb[0].mxu0
      %v2322 = vpop.f32.mrb[0].mxu0
      %v2323 = vadd.f32 0.0, %v2322
      %v2324 = vpop.f32.mrb[0].mxu0
      %2325 = vmatprep.mubr.bf16.mxu0 0
      %2326 = vmatmul.mubr.bf16.gmra.mrb[0].mxu0 %v2214
      %v2327 = vpop.f32.mrb[0].mxu0
      %v2328 = vadd.f32 0.0, %v2327
      %v2329 = vpop.f32.mrb[0].mxu0
      %v2330 = vpop.f32.mrb[0].mxu0
      %v2331 = vadd.f32 0.0, %v2330
      %v2332 = vpop.f32.mrb[0].mxu0
      %2333 = vmatprep.mubr.bf16.mxu0 0
      %2334 = vmatmul.mubr.bf16.gmra.mrb[0].mxu0 %v2217
      %v2335 = vpop.f32.mrb[0].mxu0
      %v2336 = vadd.f32 0.0, %v2335
      %v2337 = vpop.f32.mrb[0].mxu0
      %v2338 = vpop.f32.mrb[0].mxu0
      %v2339 = vadd.f32 0.0, %v2338
      %v2340 = vpop.f32.mrb[0].mxu0
      %2341 = vmatprep.mubr.bf16.mxu0 0
      %2342 = vmatmul.mubr.bf16.gmra.mrb[0].mxu0 %v2220
      %v2343 = vpop.f32.mrb[0].mxu0
      %v2344 = vadd.f32 0.0, %v2343
      %v2345 = vpop.f32.mrb[0].mxu0
      %v2346 = vpop.f32.mrb[0].mxu0
      %v2347 = vadd.f32 0.0, %v2346
      %v2348 = vpop.f32.mrb[0].mxu0
      %2349 = vmatprep.mubr.bf16.mxu0 0
      %2350 = vmatmul.mubr.bf16.gmra.mrb[0].mxu0 %v2223
      %v2351 = vpop.f32.mrb[0].mxu0
      %v2352 = vadd.f32 0.0, %v2351
      %v2353 = vpop.f32.mrb[0].mxu0
      %v2354 = vpop.f32.mrb[0].mxu0
      %v2355 = vadd.f32 0.0, %v2354
      %v2356 = vpop.f32.mrb[0].mxu0
      %2357 = vmatprep.mubr.bf16.mxu0 0
      %2358 = vmatmul.mubr.bf16.gmra.mrb[0].mxu0 %v2226
      %v2359 = vpop.f32.mrb[0].mxu0
      %v2360 = vadd.f32 0.0, %v2359
      %v2361 = vpop.f32.mrb[0].mxu0
      %v2362 = vpop.f32.mrb[0].mxu0
      %v2363 = vadd.f32 0.0, %v2362
      %v2364 = vpop.f32.mrb[0].mxu0
      %2365 = vmatprep.mubr.bf16.mxu0 0
      %2366 = vmatmul.mubr.bf16.gmra.mrb[0].mxu0 %v2229
      %v2367 = vpop.f32.mrb[0].mxu0
      %v2368 = vadd.f32 0.0, %v2367
      %v2369 = vpop.f32.mrb[0].mxu0
      %v2370 = vpop.f32.mrb[0].mxu0
      %v2371 = vadd.f32 0.0, %v2370
      %v2372 = vpop.f32.mrb[0].mxu0
      %2373 = vmatprep.mubr.bf16.mxu0 0
      %2374 = vmatmul.mubr.bf16.gmra.mrb[0].mxu0 %v2232
      %v2375 = vpop.f32.mrb[0].mxu0
      %v2376 = vadd.f32 0.0, %v2375
      %v2377 = vpop.f32.mrb[0].mxu0
      %v2378 = vpop.f32.mrb[0].mxu0
      %v2379 = vadd.f32 0.0, %v2378
      %v2380 = vpop.f32.mrb[0].mxu0
      %2381 = vmatprep.mubr.bf16.mxu0 0
      %2382 = vmatmul.mubr.bf16.gmra.mrb[0].mxu0 %v2235
      %v2383 = vpop.f32.mrb[0].mxu0
      %v2384 = vadd.f32 0.0, %v2383
      %v2385 = vpop.f32.mrb[0].mxu0
      %v2386 = vpop.f32.mrb[0].mxu0
      %v2387 = vadd.f32 0.0, %v2386
      %v2388 = vpop.f32.mrb[0].mxu0
      %2389 = vmatprep.mubr.bf16.mxu0 0
      %2390 = vmatmul.mubr.bf16.gmra.mrb[0].mxu0 %v2238
      %v2391 = vpop.f32.mrb[0].mxu0
      %v2392 = vadd.f32 0.0, %v2391
      %v2393 = vpop.f32.mrb[0].mxu0
      %v2394 = vpop.f32.mrb[0].mxu0
      %v2395 = vadd.f32 0.0, %v2394
      %v2396 = vpop.f32.mrb[0].mxu0
      %2397 = vmatprep.mubr.bf16.mxu0 0
      %2398 = vmatmul.mubr.bf16.gmra.mrb[0].mxu0 %v2241
      %v2399 = vpop.f32.mrb[0].mxu0
      %v2400 = vadd.f32 0.0, %v2399
      %v2401 = vpop.f32.mrb[0].mxu0
      %v2402 = vpop.f32.mrb[0].mxu0
      %v2403 = vadd.f32 0.0, %v2402
      %v2404 = vpop.f32.mrb[0].mxu0
      %2405 = vmatprep.mubr.bf16.mxu0 0
      %2406 = vmatmul.mubr.bf16.gmra.mrb[0].mxu0 %v2244
      %v2407 = vpop.f32.mrb[0].mxu0
      %v2408 = vadd.f32 0.0, %v2407
      %v2409 = vpop.f32.mrb[0].mxu0
      %v2410 = vpop.f32.mrb[0].mxu0
      %v2411 = vadd.f32 0.0, %v2410
      %v2412 = vpop.f32.mrb[0].mxu0
      %2413 = vmatprep.mubr.bf16.mxu0 0
      %2414 = vmatmul.mubr.bf16.gmra.mrb[0].mxu0 %v2247
      %v2415 = vpop.f32.mrb[0].mxu0
      %v2416 = vadd.f32 0.0, %v2415
      %v2417 = vpop.f32.mrb[0].mxu0
      %v2418 = vpop.f32.mrb[0].mxu0
      %v2419 = vadd.f32 0.0, %v2418
      %v2420 = vpop.f32.mrb[0].mxu0
      %2421 = vmatprep.mubr.bf16.mxu0 0
      %2422 = vmatmul.mubr.bf16.gmra.mrb[0].mxu0 %v2250
      %v2423 = vpop.f32.mrb[0].mxu0
      %v2424 = vadd.f32 0.0, %v2423
      %v2425 = vpop.f32.mrb[0].mxu0
      %v2426 = vpop.f32.mrb[0].mxu0
      %v2427 = vadd.f32 0.0, %v2426
      %v2428 = vpop.f32.mrb[0].mxu0
      %2429 = vmatprep.mubr.bf16.mxu0 0
      %2430 = vmatmul.mubr.bf16.gmra.mrb[0].mxu0 %v2253
      %v2431 = vpop.f32.mrb[0].mxu0
      %v2432 = vadd.f32 0.0, %v2431
      %v2433 = vpop.f32.mrb[0].mxu0
      %v2434 = vpop.f32.mrb[0].mxu0
      %v2435 = vadd.f32 0.0, %v2434
      %v2436 = vpop.f32.mrb[0].mxu0
      %2437 = vmatprep.mubr.bf16.mxu0 0
      %2438 = vmatmul.mubr.bf16.gmra.mrb[0].mxu0 %v2256
      %v2439 = vpop.f32.mrb[0].mxu0
      %v2440 = vadd.f32 0.0, %v2439
      %v2441 = vpop.f32.mrb[0].mxu0
      %v2442 = vpop.f32.mrb[0].mxu0
      %v2443 = vadd.f32 0.0, %v2442
      %v2444 = vpop.f32.mrb[0].mxu0
      %2445 = vmatprep.mubr.bf16.mxu0 0
      %2446 = vmatmul.mubr.bf16.gmra.mrb[0].mxu0 %v2259
      %v2447 = vpop.f32.mrb[0].mxu0
      %v2448 = vadd.f32 0.0, %v2447
      %v2449 = vpop.f32.mrb[0].mxu0
      %v2450 = vpop.f32.mrb[0].mxu0
      %v2451 = vadd.f32 0.0, %v2450
      %v2452 = vpop.f32.mrb[0].mxu0
      %2453 = vmatprep.mubr.bf16.mxu0 0
      %2454 = vmatmul.mubr.bf16.gmra.mrb[0].mxu0 %v2262
      %v2455 = vpop.f32.mrb[0].mxu0
      %v2456 = vadd.f32 0.0, %v2455
      %v2457 = vpop.f32.mrb[0].mxu0
      %v2458 = vpop.f32.mrb[0].mxu0
      %v2459 = vadd.f32 0.0, %v2458
      %v2460 = vpop.f32.mrb[0].mxu0
      %2461 = vmatprep.mubr.bf16.mxu0 0
      %2462 = vmatmul.mubr.bf16.gmra.mrb[0].mxu0 %v2265
      %v2463 = vpop.f32.mrb[0].mxu0
      %v2464 = vadd.f32 0.0, %v2463
      %v2465 = vpop.f32.mrb[0].mxu0
      %v2466 = vpop.f32.mrb[0].mxu0
      %v2467 = vadd.f32 0.0, %v2466
      %v2468 = vpop.f32.mrb[0].mxu0
      %2469 = vmatprep.mubr.bf16.mxu0 0
      %2470 = vmatmul.mubr.bf16.gmra.mrb[0].mxu0 %v2268
      %v2471 = vpop.f32.mrb[0].mxu0
      %v2472 = vadd.f32 0.0, %v2471
      %v2473 = vpop.f32.mrb[0].mxu0
      %v2474 = vpop.f32.mrb[0].mxu0
      %v2475 = vadd.f32 0.0, %v2474
      %v2476 = vpop.f32.mrb[0].mxu0
      %2477 = vmatprep.mubr.bf16.mxu0 0
      %2478 = vmatmul.mubr.bf16.gmra.mrb[0].mxu0 %v2271
      %v2479 = vpop.f32.mrb[0].mxu0
      %v2480 = vadd.f32 0.0, %v2479
      %v2481 = vpop.f32.mrb[0].mxu0
      %v2482 = vpop.f32.mrb[0].mxu0
      %v2483 = vadd.f32 0.0, %v2482
      %v2484 = vpop.f32.mrb[0].mxu0
      %2485 = vmatprep.mubr.bf16.mxu0 0
      %2486 = vmatmul.mubr.bf16.gmra.mrb[0].mxu0 %v2274
      %v2487 = vpop.f32.mrb[0].mxu0
      %v2488 = vadd.f32 0.0, %v2487
      %v2489 = vpop.f32.mrb[0].mxu0
      %v2490 = vpop.f32.mrb[0].mxu0
      %v2491 = vadd.f32 0.0, %v2490
      %v2492 = vpop.f32.mrb[0].mxu0
      %2493 = vmatprep.mubr.bf16.mxu0 0
      %2494 = vmatmul.mubr.bf16.gmra.mrb[0].mxu0 %v2277
      %v2495 = vpop.f32.mrb[0].mxu0
      %v2496 = vadd.f32 0.0, %v2495
      %v2497 = vpop.f32.mrb[0].mxu0
      %v2498 = vpop.f32.mrb[0].mxu0
      %v2499 = vadd.f32 0.0, %v2498
      %v2500 = vpop.f32.mrb[0].mxu0
      %2501 = vmatprep.mubr.bf16.mxu0 0
      %2502 = vmatmul.mubr.bf16.gmra.mrb[0].mxu0 %v2280
      %v2503 = vpop.f32.mrb[0].mxu0
      %v2504 = vadd.f32 0.0, %v2503
      %v2505 = vpop.f32.mrb[0].mxu0
      %v2506 = vpop.f32.mrb[0].mxu0
      %v2507 = vadd.f32 0.0, %v2506
      %v2508 = vpop.f32.mrb[0].mxu0
      %2509 = vdwg.mxu0
      %v2510 = vadd.f32 %v1985, %v2320
      %v2511 = vadd.f32 %v1986, %v2323
      %v2512 = vadd.f32 %v1987, %v2328
      %v2513 = vadd.f32 %v1988, %v2331
      %v2514 = vadd.f32 %v1989, %v2336
      %v2515 = vadd.f32 %v1990, %v2339
      %v2516 = vadd.f32 %v1991, %v2344
      %v2517 = vadd.f32 %v1992, %v2347
      %v2518 = vadd.f32 %v1993, %v2352
      %v2519 = vadd.f32 %v1994, %v2355
      %v2520 = vadd.f32 %v1995, %v2360
      %v2521 = vadd.f32 %v1996, %v2363
      %v2522 = vadd.f32 %v1997, %v2368
      %v2523 = vadd.f32 %v1998, %v2371
      %v2524 = vadd.f32 %v1999, %v2376
      %v2525 = vadd.f32 %v2000, %v2379
      %v2526 = vadd.f32 %v2001, %v2384
      %v2527 = vadd.f32 %v2002, %v2387
      %v2528 = vadd.f32 %v2003, %v2392
      %v2529 = vadd.f32 %v2004, %v2395
      %v2530 = vadd.f32 %v2005, %v2400
      %v2531 = vadd.f32 %v2006, %v2403
      %v2532 = vadd.f32 %v2007, %v2408
      %v2533 = vadd.f32 %v2008, %v2411
      %v2534 = vadd.f32 %v2009, %v2416
      %v2535 = vadd.f32 %v2010, %v2419
      %v2536 = vadd.f32 %v2011, %v2424
      %v2537 = vadd.f32 %v2012, %v2427
      %v2538 = vadd.f32 %v2013, %v2432
      %v2539 = vadd.f32 %v2014, %v2435
      %v2540 = vadd.f32 %v2015, %v2440
      %v2541 = vadd.f32 %v2016, %v2443
      %v2542 = vadd.f32 %v2017, %v2448
      %v2543 = vadd.f32 %v2018, %v2451
      %v2544 = vadd.f32 %v2019, %v2456
      %v2545 = vadd.f32 %v2020, %v2459
      %v2546 = vadd.f32 %v2021, %v2464
      %v2547 = vadd.f32 %v2022, %v2467
      %v2548 = vadd.f32 %v2023, %v2472
      %v2549 = vadd.f32 %v2024, %v2475
      %v2550 = vadd.f32 %v2025, %v2480
      %v2551 = vadd.f32 %v2026, %v2483
      %v2552 = vadd.f32 %v2027, %v2488
      %v2553 = vadd.f32 %v2028, %v2491
      %v2554 = vadd.f32 %v2029, %v2496
      %v2555 = vadd.f32 %v2030, %v2499
      %v2556 = vadd.f32 %v2031, %v2504
      %v2557 = vadd.f32 %v2032, %v2507
      %s2558 = scalar_lea.vmem %s270, 20
      %v2559 = vld [vmem:[%s2558] sm:$0xf]
      %v2560 = vrot.slane %v1661, 1
      %v2561 = vrot.slane %v1662, 1
      %v2562 = vsel %vm1257, %v2560, %v2561
      %v2563 = vrot.slane %v1663, 1
      %v2564 = vsel %vm1257, %v2561, %v2563
      %v2565 = vrot.slane %v1664, 1
      %v2566 = vsel %vm1257, %v2563, %v2565
      %v2567 = vrot.slane %v1665, 1
      %v2568 = vsel %vm1257, %v2565, %v2567
      %v2569 = vrot.slane %v1666, 1
      %v2570 = vsel %vm1257, %v2567, %v2569
      %v2571 = vrot.slane %v1667, 1
      %v2572 = vsel %vm1257, %v2569, %v2571
      %v2573 = vrot.slane %v1668, 1
      %v2574 = vsel %vm1257, %v2571, %v2573
      %v2575 = vrot.slane %v1669, 1
      %v2576 = vsel %vm1257, %v2573, %v2575
      %v2577 = vrot.slane %v1670, 1
      %v2578 = vsel %vm1257, %v2575, %v2577
      %v2579 = vrot.slane %v1671, 1
      %v2580 = vsel %vm1257, %v2577, %v2579
      %v2581 = vrot.slane %v1672, 1
      %v2582 = vsel %vm1257, %v2579, %v2581
      %v2583 = vrot.slane %v1673, 1
      %v2584 = vsel %vm1257, %v2581, %v2583
      %v2585 = vrot.slane %v1674, 1
      %v2586 = vsel %vm1257, %v2583, %v2585
      %v2587 = vrot.slane %v1675, 1
      %v2588 = vsel %vm1257, %v2585, %v2587
      %v2589 = vrot.slane %v1676, 1
      %v2590 = vsel %vm1257, %v2587, %v2589
      %v2591 = vrot.slane %v1677, 1
      %v2592 = vsel %vm1257, %v2589, %v2591
      %v2593 = vrot.slane %v1678, 1
      %v2594 = vsel %vm1257, %v2591, %v2593
      %v2595 = vrot.slane %v1679, 1
      %v2596 = vsel %vm1257, %v2593, %v2595
      %v2597 = vrot.slane %v1680, 1
      %v2598 = vsel %vm1257, %v2595, %v2597
      %v2599 = vrot.slane %v1681, 1
      %v2600 = vsel %vm1257, %v2597, %v2599
      %v2601 = vrot.slane %v1682, 1
      %v2602 = vsel %vm1257, %v2599, %v2601
      %v2603 = vrot.slane %v1683, 1
      %v2604 = vsel %vm1257, %v2601, %v2603
      %v2605 = vrot.slane %v1684, 1
      %v2606 = vsel %vm1257, %v2603, %v2605
      %v2607 = vrot.slane %v2037, 1
      %v2608 = vsel %vm1257, %v2605, %v2607
      %v2610 = vsel %vm674, %v2562, 0
      %v2613 = vsel %vm674, %v2564, 0
      %v2616 = vsel %vm674, %v2566, 0
      %v2619 = vsel %vm674, %v2568, 0
      %v2622 = vsel %vm674, %v2570, 0
      %v2625 = vsel %vm674, %v2572, 0
      %v2628 = vsel %vm674, %v2574, 0
      %v2631 = vsel %vm674, %v2576, 0
      %v2634 = vsel %vm674, %v2578, 0
      %v2637 = vsel %vm674, %v2580, 0
      %v2640 = vsel %vm674, %v2582, 0
      %v2643 = vsel %vm674, %v2584, 0
      %v2646 = vsel %vm674, %v2586, 0
      %v2649 = vsel %vm674, %v2588, 0
      %v2652 = vsel %vm674, %v2590, 0
      %v2655 = vsel %vm674, %v2592, 0
      %v2658 = vsel %vm674, %v2594, 0
      %v2661 = vsel %vm674, %v2596, 0
      %v2664 = vsel %vm674, %v2598, 0
      %v2667 = vsel %vm674, %v2600, 0
      %v2670 = vsel %vm674, %v2602, 0
      %v2673 = vsel %vm674, %v2604, 0
      %v2676 = vsel %vm674, %v2606, 0
      %v2679 = vsel %vm674, %v2608, 0
      %v2682 = vsel %vm747, %v2559, 0
      %2684 = vmatprep.subr.bf16.mxu0 0
      %2685 = vmatpush1.bf16.msra.mxu0 %v2682
      %2686 = vmatprep.subr.bf16.mxu0 0
      %2687 = vmatpush1.bf16.msra.mxu0 0
      %2688 = vmatprep.subr.bf16.mxu0 0
      %2689 = vmatpush1.bf16.msra.mxu0 0
      %2690 = vmatprep.subr.bf16.mxu0 0
      %2691 = vmatpush1.bf16.msra.mxu0 0
      %2692 = vmatprep.subr.bf16.mxu0 0
      %2693 = vmatpush1.bf16.msra.mxu0 0
      %2694 = vmatprep.subr.bf16.mxu0 0
      %2695 = vmatpush1.bf16.msra.mxu0 0
      %2696 = vmatprep.subr.bf16.mxu0 0
      %2697 = vmatpush1.bf16.msra.mxu0 0
      %2698 = vmatprep.subr.bf16.mxu0 0
      %2699 = vmatpush1.bf16.msra.mxu0 0
      %2700 = vmatprep.subr.bf16.mxu0 0
      %2701 = vmatpush1.bf16.msra.mxu0 0
      %2702 = vmatprep.subr.bf16.mxu0 0
      %2703 = vmatpush1.bf16.msra.mxu0 0
      %2704 = vmatprep.subr.bf16.mxu0 0
      %2705 = vmatpush1.bf16.msra.mxu0 0
      %2706 = vmatprep.subr.bf16.mxu0 0
      %2707 = vmatpush1.bf16.msra.mxu0 0
      %2708 = vmatprep.subr.bf16.mxu0 0
      %2709 = vmatpush1.bf16.msra.mxu0 0
      %2710 = vmatprep.subr.bf16.mxu0 0
      %2711 = vmatpush1.bf16.msra.mxu0 0
      %2712 = vmatprep.subr.bf16.mxu0 0
      %2713 = vmatpush1.bf16.msra.mxu0 0
      %2714 = vmatprep.subr.bf16.mxu0 0
      %2715 = vmatpush1.bf16.msra.mxu0 0
      %2716 = vmatprep.mubr.bf16.mxu0 0
      %2717 = vmatmul.mubr.bf16.gmra.mrb[0].mxu0 %v2610
      %v2718 = vpop.f32.mrb[0].mxu0
      %v2719 = vadd.f32 0.0, %v2718
      %v2720 = vpop.f32.mrb[0].mxu0
      %v2721 = vpop.f32.mrb[0].mxu0
      %v2722 = vadd.f32 0.0, %v2721
      %v2723 = vpop.f32.mrb[0].mxu0
      %2724 = vmatprep.mubr.bf16.mxu0 0
      %2725 = vmatmul.mubr.bf16.gmra.mrb[0].mxu0 %v2613
      %v2726 = vpop.f32.mrb[0].mxu0
      %v2727 = vadd.f32 0.0, %v2726
      %v2728 = vpop.f32.mrb[0].mxu0
      %v2729 = vpop.f32.mrb[0].mxu0
      %v2730 = vadd.f32 0.0, %v2729
      %v2731 = vpop.f32.mrb[0].mxu0
      %2732 = vmatprep.mubr.bf16.mxu0 0
      %2733 = vmatmul.mubr.bf16.gmra.mrb[0].mxu0 %v2616
      %v2734 = vpop.f32.mrb[0].mxu0
      %v2735 = vadd.f32 0.0, %v2734
      %v2736 = vpop.f32.mrb[0].mxu0
      %v2737 = vpop.f32.mrb[0].mxu0
      %v2738 = vadd.f32 0.0, %v2737
      %v2739 = vpop.f32.mrb[0].mxu0
      %2740 = vmatprep.mubr.bf16.mxu0 0
      %2741 = vmatmul.mubr.bf16.gmra.mrb[0].mxu0 %v2619
      %v2742 = vpop.f32.mrb[0].mxu0
      %v2743 = vadd.f32 0.0, %v2742
      %v2744 = vpop.f32.mrb[0].mxu0
      %v2745 = vpop.f32.mrb[0].mxu0
      %v2746 = vadd.f32 0.0, %v2745
      %v2747 = vpop.f32.mrb[0].mxu0
      %2748 = vmatprep.mubr.bf16.mxu0 0
      %2749 = vmatmul.mubr.bf16.gmra.mrb[0].mxu0 %v2622
      %v2750 = vpop.f32.mrb[0].mxu0
      %v2751 = vadd.f32 0.0, %v2750
      %v2752 = vpop.f32.mrb[0].mxu0
      %v2753 = vpop.f32.mrb[0].mxu0
      %v2754 = vadd.f32 0.0, %v2753
      %v2755 = vpop.f32.mrb[0].mxu0
      %2756 = vmatprep.mubr.bf16.mxu0 0
      %2757 = vmatmul.mubr.bf16.gmra.mrb[0].mxu0 %v2625
      %v2758 = vpop.f32.mrb[0].mxu0
      %v2759 = vadd.f32 0.0, %v2758
      %v2760 = vpop.f32.mrb[0].mxu0
      %v2761 = vpop.f32.mrb[0].mxu0
      %v2762 = vadd.f32 0.0, %v2761
      %v2763 = vpop.f32.mrb[0].mxu0
      %2764 = vmatprep.mubr.bf16.mxu0 0
      %2765 = vmatmul.mubr.bf16.gmra.mrb[0].mxu0 %v2628
      %v2766 = vpop.f32.mrb[0].mxu0
      %v2767 = vadd.f32 0.0, %v2766
      %v2768 = vpop.f32.mrb[0].mxu0
      %v2769 = vpop.f32.mrb[0].mxu0
      %v2770 = vadd.f32 0.0, %v2769
      %v2771 = vpop.f32.mrb[0].mxu0
      %2772 = vmatprep.mubr.bf16.mxu0 0
      %2773 = vmatmul.mubr.bf16.gmra.mrb[0].mxu0 %v2631
      %v2774 = vpop.f32.mrb[0].mxu0
      %v2775 = vadd.f32 0.0, %v2774
      %v2776 = vpop.f32.mrb[0].mxu0
      %v2777 = vpop.f32.mrb[0].mxu0
      %v2778 = vadd.f32 0.0, %v2777
      %v2779 = vpop.f32.mrb[0].mxu0
      %2780 = vmatprep.mubr.bf16.mxu0 0
      %2781 = vmatmul.mubr.bf16.gmra.mrb[0].mxu0 %v2634
      %v2782 = vpop.f32.mrb[0].mxu0
      %v2783 = vadd.f32 0.0, %v2782
      %v2784 = vpop.f32.mrb[0].mxu0
      %v2785 = vpop.f32.mrb[0].mxu0
      %v2786 = vadd.f32 0.0, %v2785
      %v2787 = vpop.f32.mrb[0].mxu0
      %2788 = vmatprep.mubr.bf16.mxu0 0
      %2789 = vmatmul.mubr.bf16.gmra.mrb[0].mxu0 %v2637
      %v2790 = vpop.f32.mrb[0].mxu0
      %v2791 = vadd.f32 0.0, %v2790
      %v2792 = vpop.f32.mrb[0].mxu0
      %v2793 = vpop.f32.mrb[0].mxu0
      %v2794 = vadd.f32 0.0, %v2793
      %v2795 = vpop.f32.mrb[0].mxu0
      %2796 = vmatprep.mubr.bf16.mxu0 0
      %2797 = vmatmul.mubr.bf16.gmra.mrb[0].mxu0 %v2640
      %v2798 = vpop.f32.mrb[0].mxu0
      %v2799 = vadd.f32 0.0, %v2798
      %v2800 = vpop.f32.mrb[0].mxu0
      %v2801 = vpop.f32.mrb[0].mxu0
      %v2802 = vadd.f32 0.0, %v2801
      %v2803 = vpop.f32.mrb[0].mxu0
      %2804 = vmatprep.mubr.bf16.mxu0 0
      %2805 = vmatmul.mubr.bf16.gmra.mrb[0].mxu0 %v2643
      %v2806 = vpop.f32.mrb[0].mxu0
      %v2807 = vadd.f32 0.0, %v2806
      %v2808 = vpop.f32.mrb[0].mxu0
      %v2809 = vpop.f32.mrb[0].mxu0
      %v2810 = vadd.f32 0.0, %v2809
      %v2811 = vpop.f32.mrb[0].mxu0
      %2812 = vmatprep.mubr.bf16.mxu0 0
      %2813 = vmatmul.mubr.bf16.gmra.mrb[0].mxu0 %v2646
      %v2814 = vpop.f32.mrb[0].mxu0
      %v2815 = vadd.f32 0.0, %v2814
      %v2816 = vpop.f32.mrb[0].mxu0
      %v2817 = vpop.f32.mrb[0].mxu0
      %v2818 = vadd.f32 0.0, %v2817
      %v2819 = vpop.f32.mrb[0].mxu0
      %2820 = vmatprep.mubr.bf16.mxu0 0
      %2821 = vmatmul.mubr.bf16.gmra.mrb[0].mxu0 %v2649
      %v2822 = vpop.f32.mrb[0].mxu0
      %v2823 = vadd.f32 0.0, %v2822
      %v2824 = vpop.f32.mrb[0].mxu0
      %v2825 = vpop.f32.mrb[0].mxu0
      %v2826 = vadd.f32 0.0, %v2825
      %v2827 = vpop.f32.mrb[0].mxu0
      %2828 = vmatprep.mubr.bf16.mxu0 0
      %2829 = vmatmul.mubr.bf16.gmra.mrb[0].mxu0 %v2652
      %v2830 = vpop.f32.mrb[0].mxu0
      %v2831 = vadd.f32 0.0, %v2830
      %v2832 = vpop.f32.mrb[0].mxu0
      %v2833 = vpop.f32.mrb[0].mxu0
      %v2834 = vadd.f32 0.0, %v2833
      %v2835 = vpop.f32.mrb[0].mxu0
      %2836 = vmatprep.mubr.bf16.mxu0 0
      %2837 = vmatmul.mubr.bf16.gmra.mrb[0].mxu0 %v2655
      %v2838 = vpop.f32.mrb[0].mxu0
      %v2839 = vadd.f32 0.0, %v2838
      %v2840 = vpop.f32.mrb[0].mxu0
      %v2841 = vpop.f32.mrb[0].mxu0
      %v2842 = vadd.f32 0.0, %v2841
      %v2843 = vpop.f32.mrb[0].mxu0
      %2844 = vmatprep.mubr.bf16.mxu0 0
      %2845 = vmatmul.mubr.bf16.gmra.mrb[0].mxu0 %v2658
      %v2846 = vpop.f32.mrb[0].mxu0
      %v2847 = vadd.f32 0.0, %v2846
      %v2848 = vpop.f32.mrb[0].mxu0
      %v2849 = vpop.f32.mrb[0].mxu0
      %v2850 = vadd.f32 0.0, %v2849
      %v2851 = vpop.f32.mrb[0].mxu0
      %2852 = vmatprep.mubr.bf16.mxu0 0
      %2853 = vmatmul.mubr.bf16.gmra.mrb[0].mxu0 %v2661
      %v2854 = vpop.f32.mrb[0].mxu0
      %v2855 = vadd.f32 0.0, %v2854
      %v2856 = vpop.f32.mrb[0].mxu0
      %v2857 = vpop.f32.mrb[0].mxu0
      %v2858 = vadd.f32 0.0, %v2857
      %v2859 = vpop.f32.mrb[0].mxu0
      %2860 = vmatprep.mubr.bf16.mxu0 0
      %2861 = vmatmul.mubr.bf16.gmra.mrb[0].mxu0 %v2664
      %v2862 = vpop.f32.mrb[0].mxu0
      %v2863 = vadd.f32 0.0, %v2862
      %v2864 = vpop.f32.mrb[0].mxu0
      %v2865 = vpop.f32.mrb[0].mxu0
      %v2866 = vadd.f32 0.0, %v2865
      %v2867 = vpop.f32.mrb[0].mxu0
      %2868 = vmatprep.mubr.bf16.mxu0 0
      %2869 = vmatmul.mubr.bf16.gmra.mrb[0].mxu0 %v2667
      %v2870 = vpop.f32.mrb[0].mxu0
      %v2871 = vadd.f32 0.0, %v2870
      %v2872 = vpop.f32.mrb[0].mxu0
      %v2873 = vpop.f32.mrb[0].mxu0
      %v2874 = vadd.f32 0.0, %v2873
      %v2875 = vpop.f32.mrb[0].mxu0
      %2876 = vmatprep.mubr.bf16.mxu0 0
      %2877 = vmatmul.mubr.bf16.gmra.mrb[0].mxu0 %v2670
      %v2878 = vpop.f32.mrb[0].mxu0
      %v2879 = vadd.f32 0.0, %v2878
      %v2880 = vpop.f32.mrb[0].mxu0
      %v2881 = vpop.f32.mrb[0].mxu0
      %v2882 = vadd.f32 0.0, %v2881
      %v2883 = vpop.f32.mrb[0].mxu0
      %2884 = vmatprep.mubr.bf16.mxu0 0
      %2885 = vmatmul.mubr.bf16.gmra.mrb[0].mxu0 %v2673
      %v2886 = vpop.f32.mrb[0].mxu0
      %v2887 = vadd.f32 0.0, %v2886
      %v2888 = vpop.f32.mrb[0].mxu0
      %v2889 = vpop.f32.mrb[0].mxu0
      %v2890 = vadd.f32 0.0, %v2889
      %v2891 = vpop.f32.mrb[0].mxu0
      %2892 = vmatprep.mubr.bf16.mxu0 0
      %2893 = vmatmul.mubr.bf16.gmra.mrb[0].mxu0 %v2676
      %v2894 = vpop.f32.mrb[0].mxu0
      %v2895 = vadd.f32 0.0, %v2894
      %v2896 = vpop.f32.mrb[0].mxu0
      %v2897 = vpop.f32.mrb[0].mxu0
      %v2898 = vadd.f32 0.0, %v2897
      %v2899 = vpop.f32.mrb[0].mxu0
      %2900 = vmatprep.mubr.bf16.mxu0 0
      %2901 = vmatmul.mubr.bf16.gmra.mrb[0].mxu0 %v2679
      %v2902 = vpop.f32.mrb[0].mxu0
      %v2903 = vadd.f32 0.0, %v2902
      %v2904 = vpop.f32.mrb[0].mxu0
      %v2905 = vpop.f32.mrb[0].mxu0
      %v2906 = vadd.f32 0.0, %v2905
      %v2907 = vpop.f32.mrb[0].mxu0
      %2908 = vdwg.mxu0
      %v2909 = vadd.f32 %v2510, %v2719
      %v2910 = vadd.f32 %v2511, %v2722
      %v2911 = vadd.f32 %v2512, %v2727
      %v2912 = vadd.f32 %v2513, %v2730
      %v2913 = vadd.f32 %v2514, %v2735
      %v2914 = vadd.f32 %v2515, %v2738
      %v2915 = vadd.f32 %v2516, %v2743
      %v2916 = vadd.f32 %v2517, %v2746
      %v2917 = vadd.f32 %v2518, %v2751
      %v2918 = vadd.f32 %v2519, %v2754
      %v2919 = vadd.f32 %v2520, %v2759
      %v2920 = vadd.f32 %v2521, %v2762
      %v2921 = vadd.f32 %v2522, %v2767
      %v2922 = vadd.f32 %v2523, %v2770
      %v2923 = vadd.f32 %v2524, %v2775
      %v2924 = vadd.f32 %v2525, %v2778
      %v2925 = vadd.f32 %v2526, %v2783
      %v2926 = vadd.f32 %v2527, %v2786
      %v2927 = vadd.f32 %v2528, %v2791
      %v2928 = vadd.f32 %v2529, %v2794
      %v2929 = vadd.f32 %v2530, %v2799
      %v2930 = vadd.f32 %v2531, %v2802
      %v2931 = vadd.f32 %v2532, %v2807
      %v2932 = vadd.f32 %v2533, %v2810
      %v2933 = vadd.f32 %v2534, %v2815
      %v2934 = vadd.f32 %v2535, %v2818
      %v2935 = vadd.f32 %v2536, %v2823
      %v2936 = vadd.f32 %v2537, %v2826
      %v2937 = vadd.f32 %v2538, %v2831
      %v2938 = vadd.f32 %v2539, %v2834
      %v2939 = vadd.f32 %v2540, %v2839
      %v2940 = vadd.f32 %v2541, %v2842
      %v2941 = vadd.f32 %v2542, %v2847
      %v2942 = vadd.f32 %v2543, %v2850
      %v2943 = vadd.f32 %v2544, %v2855
      %v2944 = vadd.f32 %v2545, %v2858
      %v2945 = vadd.f32 %v2546, %v2863
      %v2946 = vadd.f32 %v2547, %v2866
      %v2947 = vadd.f32 %v2548, %v2871
      %v2948 = vadd.f32 %v2549, %v2874
      %v2949 = vadd.f32 %v2550, %v2879
      %v2950 = vadd.f32 %v2551, %v2882
      %v2951 = vadd.f32 %v2552, %v2887
      %v2952 = vadd.f32 %v2553, %v2890
      %v2953 = vadd.f32 %v2554, %v2895
      %v2954 = vadd.f32 %v2555, %v2898
      %v2955 = vadd.f32 %v2556, %v2903
      %v2956 = vadd.f32 %v2557, %v2906
      %s2957 = scalar_lea.vmem %s270, 24
      %v2958 = vld [vmem:[%s2957] sm:$0xf]
      %v2961 = vunpack.c.l.b16 %v347
      %v2962 = vunpack.c.l.b16 %v348
      %v2963 = vpack.c.b16 %v1659, %v451
      %v2964 = vpack.c.b16 %v2036, %v1660
      %v2965 = vpack.c.b16 %v2962, %v2961
      %v2967 = vsel %vm674, %v2963, 0
      %v2970 = vsel %vm674, %v2964, 0
      %v2973 = vsel %vm674, %v2965, 0
      %v2976 = vsel %vm747, %v2958, 0
      %2978 = vmatprep.subr.bf16.mxu0 0
      %2979 = vmatpush1.bf16.msra.mxu0 %v2976
      %2980 = vmatprep.subr.bf16.mxu0 0
      %2981 = vmatpush1.bf16.msra.mxu0 0
      %2982 = vmatprep.subr.bf16.mxu0 0
      %2983 = vmatpush1.bf16.msra.mxu0 0
      %2984 = vmatprep.subr.bf16.mxu0 0
      %2985 = vmatpush1.bf16.msra.mxu0 0
      %2986 = vmatprep.subr.bf16.mxu0 0
      %2987 = vmatpush1.bf16.msra.mxu0 0
      %2988 = vmatprep.subr.bf16.mxu0 0
      %2989 = vmatpush1.bf16.msra.mxu0 0
      %2990 = vmatprep.subr.bf16.mxu0 0
      %2991 = vmatpush1.bf16.msra.mxu0 0
      %2992 = vmatprep.subr.bf16.mxu0 0
      %2993 = vmatpush1.bf16.msra.mxu0 0
      %2994 = vmatprep.subr.bf16.mxu0 0
      %2995 = vmatpush1.bf16.msra.mxu0 0
      %2996 = vmatprep.subr.bf16.mxu0 0
      %2997 = vmatpush1.bf16.msra.mxu0 0
      %2998 = vmatprep.subr.bf16.mxu0 0
      %2999 = vmatpush1.bf16.msra.mxu0 0
      %3000 = vmatprep.subr.bf16.mxu0 0
      %3001 = vmatpush1.bf16.msra.mxu0 0
      %3002 = vmatprep.subr.bf16.mxu0 0
      %3003 = vmatpush1.bf16.msra.mxu0 0
      %3004 = vmatprep.subr.bf16.mxu0 0
      %3005 = vmatpush1.bf16.msra.mxu0 0
      %3006 = vmatprep.subr.bf16.mxu0 0
      %3007 = vmatpush1.bf16.msra.mxu0 0
      %3008 = vmatprep.subr.bf16.mxu0 0
      %3009 = vmatpush1.bf16.msra.mxu0 0
      %3010 = vmatprep.mubr.bf16.mxu0 0
      %3011 = vmatmul.mubr.bf16.gmra.mrb[0].mxu0 %v982
      %v3012 = vpop.f32.mrb[0].mxu0
      %v3013 = vadd.f32 0.0, %v3012
      %v3014 = vpop.f32.mrb[0].mxu0
      %v3015 = vpop.f32.mrb[0].mxu0
      %v3016 = vadd.f32 0.0, %v3015
      %v3017 = vpop.f32.mrb[0].mxu0
      %3018 = vmatprep.mubr.bf16.mxu0 0
      %3019 = vmatmul.mubr.bf16.gmra.mrb[0].mxu0 %v984
      %v3020 = vpop.f32.mrb[0].mxu0
      %v3021 = vadd.f32 0.0, %v3020
      %v3022 = vpop.f32.mrb[0].mxu0
      %v3023 = vpop.f32.mrb[0].mxu0
      %v3024 = vadd.f32 0.0, %v3023
      %v3025 = vpop.f32.mrb[0].mxu0
      %3026 = vmatprep.mubr.bf16.mxu0 0
      %3027 = vmatmul.mubr.bf16.gmra.mrb[0].mxu0 %v986
      %v3028 = vpop.f32.mrb[0].mxu0
      %v3029 = vadd.f32 0.0, %v3028
      %v3030 = vpop.f32.mrb[0].mxu0
      %v3031 = vpop.f32.mrb[0].mxu0
      %v3032 = vadd.f32 0.0, %v3031
      %v3033 = vpop.f32.mrb[0].mxu0
      %3034 = vmatprep.mubr.bf16.mxu0 0
      %3035 = vmatmul.mubr.bf16.gmra.mrb[0].mxu0 %v988
      %v3036 = vpop.f32.mrb[0].mxu0
      %v3037 = vadd.f32 0.0, %v3036
      %v3038 = vpop.f32.mrb[0].mxu0
      %v3039 = vpop.f32.mrb[0].mxu0
      %v3040 = vadd.f32 0.0, %v3039
      %v3041 = vpop.f32.mrb[0].mxu0
      %3042 = vmatprep.mubr.bf16.mxu0 0
      %3043 = vmatmul.mubr.bf16.gmra.mrb[0].mxu0 %v990
      %v3044 = vpop.f32.mrb[0].mxu0
      %v3045 = vadd.f32 0.0, %v3044
      %v3046 = vpop.f32.mrb[0].mxu0
      %v3047 = vpop.f32.mrb[0].mxu0
      %v3048 = vadd.f32 0.0, %v3047
      %v3049 = vpop.f32.mrb[0].mxu0
      %3050 = vmatprep.mubr.bf16.mxu0 0
      %3051 = vmatmul.mubr.bf16.gmra.mrb[0].mxu0 %v992
      %v3052 = vpop.f32.mrb[0].mxu0
      %v3053 = vadd.f32 0.0, %v3052
      %v3054 = vpop.f32.mrb[0].mxu0
      %v3055 = vpop.f32.mrb[0].mxu0
      %v3056 = vadd.f32 0.0, %v3055
      %v3057 = vpop.f32.mrb[0].mxu0
      %3058 = vmatprep.mubr.bf16.mxu0 0
      %3059 = vmatmul.mubr.bf16.gmra.mrb[0].mxu0 %v994
      %v3060 = vpop.f32.mrb[0].mxu0
      %v3061 = vadd.f32 0.0, %v3060
      %v3062 = vpop.f32.mrb[0].mxu0
      %v3063 = vpop.f32.mrb[0].mxu0
      %v3064 = vadd.f32 0.0, %v3063
      %v3065 = vpop.f32.mrb[0].mxu0
      %3066 = vmatprep.mubr.bf16.mxu0 0
      %3067 = vmatmul.mubr.bf16.gmra.mrb[0].mxu0 %v996
      %v3068 = vpop.f32.mrb[0].mxu0
      %v3069 = vadd.f32 0.0, %v3068
      %v3070 = vpop.f32.mrb[0].mxu0
      %v3071 = vpop.f32.mrb[0].mxu0
      %v3072 = vadd.f32 0.0, %v3071
      %v3073 = vpop.f32.mrb[0].mxu0
      %3074 = vmatprep.mubr.bf16.mxu0 0
      %3075 = vmatmul.mubr.bf16.gmra.mrb[0].mxu0 %v998
      %v3076 = vpop.f32.mrb[0].mxu0
      %v3077 = vadd.f32 0.0, %v3076
      %v3078 = vpop.f32.mrb[0].mxu0
      %v3079 = vpop.f32.mrb[0].mxu0
      %v3080 = vadd.f32 0.0, %v3079
      %v3081 = vpop.f32.mrb[0].mxu0
      %3082 = vmatprep.mubr.bf16.mxu0 0
      %3083 = vmatmul.mubr.bf16.gmra.mrb[0].mxu0 %v1000
      %v3084 = vpop.f32.mrb[0].mxu0
      %v3085 = vadd.f32 0.0, %v3084
      %v3086 = vpop.f32.mrb[0].mxu0
      %v3087 = vpop.f32.mrb[0].mxu0
      %v3088 = vadd.f32 0.0, %v3087
      %v3089 = vpop.f32.mrb[0].mxu0
      %3090 = vmatprep.mubr.bf16.mxu0 0
      %3091 = vmatmul.mubr.bf16.gmra.mrb[0].mxu0 %v1002
      %v3092 = vpop.f32.mrb[0].mxu0
      %v3093 = vadd.f32 0.0, %v3092
      %v3094 = vpop.f32.mrb[0].mxu0
      %v3095 = vpop.f32.mrb[0].mxu0
      %v3096 = vadd.f32 0.0, %v3095
      %v3097 = vpop.f32.mrb[0].mxu0
      %3098 = vmatprep.mubr.bf16.mxu0 0
      %3099 = vmatmul.mubr.bf16.gmra.mrb[0].mxu0 %v1004
      %v3100 = vpop.f32.mrb[0].mxu0
      %v3101 = vadd.f32 0.0, %v3100
      %v3102 = vpop.f32.mrb[0].mxu0
      %v3103 = vpop.f32.mrb[0].mxu0
      %v3104 = vadd.f32 0.0, %v3103
      %v3105 = vpop.f32.mrb[0].mxu0
      %3106 = vmatprep.mubr.bf16.mxu0 0
      %3107 = vmatmul.mubr.bf16.gmra.mrb[0].mxu0 %v1006
      %v3108 = vpop.f32.mrb[0].mxu0
      %v3109 = vadd.f32 0.0, %v3108
      %v3110 = vpop.f32.mrb[0].mxu0
      %v3111 = vpop.f32.mrb[0].mxu0
      %v3112 = vadd.f32 0.0, %v3111
      %v3113 = vpop.f32.mrb[0].mxu0
      %3114 = vmatprep.mubr.bf16.mxu0 0
      %3115 = vmatmul.mubr.bf16.gmra.mrb[0].mxu0 %v1008
      %v3116 = vpop.f32.mrb[0].mxu0
      %v3117 = vadd.f32 0.0, %v3116
      %v3118 = vpop.f32.mrb[0].mxu0
      %v3119 = vpop.f32.mrb[0].mxu0
      %v3120 = vadd.f32 0.0, %v3119
      %v3121 = vpop.f32.mrb[0].mxu0
      %3122 = vmatprep.mubr.bf16.mxu0 0
      %3123 = vmatmul.mubr.bf16.gmra.mrb[0].mxu0 %v1010
      %v3124 = vpop.f32.mrb[0].mxu0
      %v3125 = vadd.f32 0.0, %v3124
      %v3126 = vpop.f32.mrb[0].mxu0
      %v3127 = vpop.f32.mrb[0].mxu0
      %v3128 = vadd.f32 0.0, %v3127
      %v3129 = vpop.f32.mrb[0].mxu0
      %3130 = vmatprep.mubr.bf16.mxu0 0
      %3131 = vmatmul.mubr.bf16.gmra.mrb[0].mxu0 %v1012
      %v3132 = vpop.f32.mrb[0].mxu0
      %v3133 = vadd.f32 0.0, %v3132
      %v3134 = vpop.f32.mrb[0].mxu0
      %v3135 = vpop.f32.mrb[0].mxu0
      %v3136 = vadd.f32 0.0, %v3135
      %v3137 = vpop.f32.mrb[0].mxu0
      %3138 = vmatprep.mubr.bf16.mxu0 0
      %3139 = vmatmul.mubr.bf16.gmra.mrb[0].mxu0 %v1014
      %v3140 = vpop.f32.mrb[0].mxu0
      %v3141 = vadd.f32 0.0, %v3140
      %v3142 = vpop.f32.mrb[0].mxu0
      %v3143 = vpop.f32.mrb[0].mxu0
      %v3144 = vadd.f32 0.0, %v3143
      %v3145 = vpop.f32.mrb[0].mxu0
      %3146 = vmatprep.mubr.bf16.mxu0 0
      %3147 = vmatmul.mubr.bf16.gmra.mrb[0].mxu0 %v1016
      %v3148 = vpop.f32.mrb[0].mxu0
      %v3149 = vadd.f32 0.0, %v3148
      %v3150 = vpop.f32.mrb[0].mxu0
      %v3151 = vpop.f32.mrb[0].mxu0
      %v3152 = vadd.f32 0.0, %v3151
      %v3153 = vpop.f32.mrb[0].mxu0
      %3154 = vmatprep.mubr.bf16.mxu0 0
      %3155 = vmatmul.mubr.bf16.gmra.mrb[0].mxu0 %v1018
      %v3156 = vpop.f32.mrb[0].mxu0
      %v3157 = vadd.f32 0.0, %v3156
      %v3158 = vpop.f32.mrb[0].mxu0
      %v3159 = vpop.f32.mrb[0].mxu0
      %v3160 = vadd.f32 0.0, %v3159
      %v3161 = vpop.f32.mrb[0].mxu0
      %3162 = vmatprep.mubr.bf16.mxu0 0
      %3163 = vmatmul.mubr.bf16.gmra.mrb[0].mxu0 %v1020
      %v3164 = vpop.f32.mrb[0].mxu0
      %v3165 = vadd.f32 0.0, %v3164
      %v3166 = vpop.f32.mrb[0].mxu0
      %v3167 = vpop.f32.mrb[0].mxu0
      %v3168 = vadd.f32 0.0, %v3167
      %v3169 = vpop.f32.mrb[0].mxu0
      %3170 = vmatprep.mubr.bf16.mxu0 0
      %3171 = vmatmul.mubr.bf16.gmra.mrb[0].mxu0 %v1022
      %v3172 = vpop.f32.mrb[0].mxu0
      %v3173 = vadd.f32 0.0, %v3172
      %v3174 = vpop.f32.mrb[0].mxu0
      %v3175 = vpop.f32.mrb[0].mxu0
      %v3176 = vadd.f32 0.0, %v3175
      %v3177 = vpop.f32.mrb[0].mxu0
      %3178 = vmatprep.mubr.bf16.mxu0 0
      %3179 = vmatmul.mubr.bf16.gmra.mrb[0].mxu0 %v2967
      %v3180 = vpop.f32.mrb[0].mxu0
      %v3181 = vadd.f32 0.0, %v3180
      %v3182 = vpop.f32.mrb[0].mxu0
      %v3183 = vpop.f32.mrb[0].mxu0
      %v3184 = vadd.f32 0.0, %v3183
      %v3185 = vpop.f32.mrb[0].mxu0
      %3186 = vmatprep.mubr.bf16.mxu0 0
      %3187 = vmatmul.mubr.bf16.gmra.mrb[0].mxu0 %v2970
      %v3188 = vpop.f32.mrb[0].mxu0
      %v3189 = vadd.f32 0.0, %v3188
      %v3190 = vpop.f32.mrb[0].mxu0
      %v3191 = vpop.f32.mrb[0].mxu0
      %v3192 = vadd.f32 0.0, %v3191
      %v3193 = vpop.f32.mrb[0].mxu0
      %3194 = vmatprep.mubr.bf16.mxu0 0
      %3195 = vmatmul.mubr.bf16.gmra.mrb[0].mxu0 %v2973
      %v3196 = vpop.f32.mrb[0].mxu0
      %v3197 = vadd.f32 0.0, %v3196
      %v3198 = vpop.f32.mrb[0].mxu0
      %v3199 = vpop.f32.mrb[0].mxu0
      %v3200 = vadd.f32 0.0, %v3199
      %v3201 = vpop.f32.mrb[0].mxu0
      %3202 = vdwg.mxu0
      %v3203 = vadd.f32 %v2909, %v3013
      %v3204 = vadd.f32 %v2910, %v3016
      %v3205 = vadd.f32 %v2911, %v3021
      %v3206 = vadd.f32 %v2912, %v3024
      %v3207 = vadd.f32 %v2913, %v3029
      %v3208 = vadd.f32 %v2914, %v3032
      %v3209 = vadd.f32 %v2915, %v3037
      %v3210 = vadd.f32 %v2916, %v3040
      %v3211 = vadd.f32 %v2917, %v3045
      %v3212 = vadd.f32 %v2918, %v3048
      %v3213 = vadd.f32 %v2919, %v3053
      %v3214 = vadd.f32 %v2920, %v3056
      %v3215 = vadd.f32 %v2921, %v3061
      %v3216 = vadd.f32 %v2922, %v3064
      %v3217 = vadd.f32 %v2923, %v3069
      %v3218 = vadd.f32 %v2924, %v3072
      %v3219 = vadd.f32 %v2925, %v3077
      %v3220 = vadd.f32 %v2926, %v3080
      %v3221 = vadd.f32 %v2927, %v3085
      %v3222 = vadd.f32 %v2928, %v3088
      %v3223 = vadd.f32 %v2929, %v3093
      %v3224 = vadd.f32 %v2930, %v3096
      %v3225 = vadd.f32 %v2931, %v3101
      %v3226 = vadd.f32 %v2932, %v3104
      %v3227 = vadd.f32 %v2933, %v3109
      %v3228 = vadd.f32 %v2934, %v3112
      %v3229 = vadd.f32 %v2935, %v3117
      %v3230 = vadd.f32 %v2936, %v3120
      %v3231 = vadd.f32 %v2937, %v3125
      %v3232 = vadd.f32 %v2938, %v3128
      %v3233 = vadd.f32 %v2939, %v3133
      %v3234 = vadd.f32 %v2940, %v3136
      %v3235 = vadd.f32 %v2941, %v3141
      %v3236 = vadd.f32 %v2942, %v3144
      %v3237 = vadd.f32 %v2943, %v3149
      %v3238 = vadd.f32 %v2944, %v3152
      %v3239 = vadd.f32 %v2945, %v3157
      %v3240 = vadd.f32 %v2946, %v3160
      %v3241 = vadd.f32 %v2947, %v3165
      %v3242 = vadd.f32 %v2948, %v3168
      %v3243 = vadd.f32 %v2949, %v3173
      %v3244 = vadd.f32 %v2950, %v3176
      %v3245 = vadd.f32 %v2951, %v3181
      %v3246 = vadd.f32 %v2952, %v3184
      %v3247 = vadd.f32 %v2953, %v3189
      %v3248 = vadd.f32 %v2954, %v3192
      %v3249 = vadd.f32 %v2955, %v3197
      %v3250 = vadd.f32 %v2956, %v3200
      %s3251 = scalar_lea.vmem %s270, 28
      %v3252 = vld [vmem:[%s3251] sm:$0xf]
      %v3254 = vunpack.c.l.b16 %v349
      %v3255 = vpack.c.b16 %v3254, %v3254
      %v3256 = vshll.u32 %v2963, 16
      %v3258 = vrot.slane %v3256, 1
      %v3259 = vsel %vm477, %v668, %v3258
      %v3260 = vshrl.u32 %v2963, 16
      %v3262 = vor.u32 %v3260, %v3258
      %v3263 = vshll.u32 %v2964, 16
      %v3265 = vrot.slane %v3263, 1
      %v3266 = vsel %vm477, %v3262, %v3265
      %v3267 = vshrl.u32 %v2964, 16
      %v3269 = vor.u32 %v3267, %v3265
      %v3270 = vshll.u32 %v2965, 16
      %v3272 = vrot.slane %v3270, 1
      %v3273 = vsel %vm477, %v3269, %v3272
      %v3274 = vshrl.u32 %v2965, 16
      %v3276 = vor.u32 %v3274, %v3272
      %v3278 = vshll.u32 %v3255, 16
      %v3280 = vrot.slane %v3278, 1
      %v3281 = vsel %vm477, %v3276, %v3280
      %v3283 = vsel %vm674, %v3259, 0
      %v3286 = vsel %vm674, %v3266, 0
      %v3289 = vsel %vm674, %v3273, 0
      %v3292 = vsel %vm674, %v3281, 0
      %v3295 = vsel %vm747, %v3252, 0
      %3297 = vmatprep.subr.bf16.mxu0 0
      %3298 = vmatpush1.bf16.msra.mxu0 %v3295
      %3299 = vmatprep.subr.bf16.mxu0 0
      %3300 = vmatpush1.bf16.msra.mxu0 0
      %3301 = vmatprep.subr.bf16.mxu0 0
      %3302 = vmatpush1.bf16.msra.mxu0 0
      %3303 = vmatprep.subr.bf16.mxu0 0
      %3304 = vmatpush1.bf16.msra.mxu0 0
      %3305 = vmatprep.subr.bf16.mxu0 0
      %3306 = vmatpush1.bf16.msra.mxu0 0
      %3307 = vmatprep.subr.bf16.mxu0 0
      %3308 = vmatpush1.bf16.msra.mxu0 0
      %3309 = vmatprep.subr.bf16.mxu0 0
      %3310 = vmatpush1.bf16.msra.mxu0 0
      %3311 = vmatprep.subr.bf16.mxu0 0
      %3312 = vmatpush1.bf16.msra.mxu0 0
      %3313 = vmatprep.subr.bf16.mxu0 0
      %3314 = vmatpush1.bf16.msra.mxu0 0
      %3315 = vmatprep.subr.bf16.mxu0 0
      %3316 = vmatpush1.bf16.msra.mxu0 0
      %3317 = vmatprep.subr.bf16.mxu0 0
      %3318 = vmatpush1.bf16.msra.mxu0 0
      %3319 = vmatprep.subr.bf16.mxu0 0
      %3320 = vmatpush1.bf16.msra.mxu0 0
      %3321 = vmatprep.subr.bf16.mxu0 0
      %3322 = vmatpush1.bf16.msra.mxu0 0
      %3323 = vmatprep.subr.bf16.mxu0 0
      %3324 = vmatpush1.bf16.msra.mxu0 0
      %3325 = vmatprep.subr.bf16.mxu0 0
      %3326 = vmatpush1.bf16.msra.mxu0 0
      %3327 = vmatprep.subr.bf16.mxu0 0
      %3328 = vmatpush1.bf16.msra.mxu0 0
      %3329 = vmatprep.mubr.bf16.mxu0 0
      %3330 = vmatmul.mubr.bf16.gmra.mrb[0].mxu0 %v685
      %v3331 = vpop.f32.mrb[0].mxu0
      %v3332 = vadd.f32 0.0, %v3331
      %v3333 = vpop.f32.mrb[0].mxu0
      %v3334 = vpop.f32.mrb[0].mxu0
      %v3335 = vadd.f32 0.0, %v3334
      %v3336 = vpop.f32.mrb[0].mxu0
      %3337 = vmatprep.mubr.bf16.mxu0 0
      %3338 = vmatmul.mubr.bf16.gmra.mrb[0].mxu0 %v688
      %v3339 = vpop.f32.mrb[0].mxu0
      %v3340 = vadd.f32 0.0, %v3339
      %v3341 = vpop.f32.mrb[0].mxu0
      %v3342 = vpop.f32.mrb[0].mxu0
      %v3343 = vadd.f32 0.0, %v3342
      %v3344 = vpop.f32.mrb[0].mxu0
      %3345 = vmatprep.mubr.bf16.mxu0 0
      %3346 = vmatmul.mubr.bf16.gmra.mrb[0].mxu0 %v691
      %v3347 = vpop.f32.mrb[0].mxu0
      %v3348 = vadd.f32 0.0, %v3347
      %v3349 = vpop.f32.mrb[0].mxu0
      %v3350 = vpop.f32.mrb[0].mxu0
      %v3351 = vadd.f32 0.0, %v3350
      %v3352 = vpop.f32.mrb[0].mxu0
      %3353 = vmatprep.mubr.bf16.mxu0 0
      %3354 = vmatmul.mubr.bf16.gmra.mrb[0].mxu0 %v694
      %v3355 = vpop.f32.mrb[0].mxu0
      %v3356 = vadd.f32 0.0, %v3355
      %v3357 = vpop.f32.mrb[0].mxu0
      %v3358 = vpop.f32.mrb[0].mxu0
      %v3359 = vadd.f32 0.0, %v3358
      %v3360 = vpop.f32.mrb[0].mxu0
      %3361 = vmatprep.mubr.bf16.mxu0 0
      %3362 = vmatmul.mubr.bf16.gmra.mrb[0].mxu0 %v697
      %v3363 = vpop.f32.mrb[0].mxu0
      %v3364 = vadd.f32 0.0, %v3363
      %v3365 = vpop.f32.mrb[0].mxu0
      %v3366 = vpop.f32.mrb[0].mxu0
      %v3367 = vadd.f32 0.0, %v3366
      %v3368 = vpop.f32.mrb[0].mxu0
      %3369 = vmatprep.mubr.bf16.mxu0 0
      %3370 = vmatmul.mubr.bf16.gmra.mrb[0].mxu0 %v700
      %v3371 = vpop.f32.mrb[0].mxu0
      %v3372 = vadd.f32 0.0, %v3371
      %v3373 = vpop.f32.mrb[0].mxu0
      %v3374 = vpop.f32.mrb[0].mxu0
      %v3375 = vadd.f32 0.0, %v3374
      %v3376 = vpop.f32.mrb[0].mxu0
      %3377 = vmatprep.mubr.bf16.mxu0 0
      %3378 = vmatmul.mubr.bf16.gmra.mrb[0].mxu0 %v703
      %v3379 = vpop.f32.mrb[0].mxu0
      %v3380 = vadd.f32 0.0, %v3379
      %v3381 = vpop.f32.mrb[0].mxu0
      %v3382 = vpop.f32.mrb[0].mxu0
      %v3383 = vadd.f32 0.0, %v3382
      %v3384 = vpop.f32.mrb[0].mxu0
      %3385 = vmatprep.mubr.bf16.mxu0 0
      %3386 = vmatmul.mubr.bf16.gmra.mrb[0].mxu0 %v706
      %v3387 = vpop.f32.mrb[0].mxu0
      %v3388 = vadd.f32 0.0, %v3387
      %v3389 = vpop.f32.mrb[0].mxu0
      %v3390 = vpop.f32.mrb[0].mxu0
      %v3391 = vadd.f32 0.0, %v3390
      %v3392 = vpop.f32.mrb[0].mxu0
      %3393 = vmatprep.mubr.bf16.mxu0 0
      %3394 = vmatmul.mubr.bf16.gmra.mrb[0].mxu0 %v709
      %v3395 = vpop.f32.mrb[0].mxu0
      %v3396 = vadd.f32 0.0, %v3395
      %v3397 = vpop.f32.mrb[0].mxu0
      %v3398 = vpop.f32.mrb[0].mxu0
      %v3399 = vadd.f32 0.0, %v3398
      %v3400 = vpop.f32.mrb[0].mxu0
      %3401 = vmatprep.mubr.bf16.mxu0 0
      %3402 = vmatmul.mubr.bf16.gmra.mrb[0].mxu0 %v712
      %v3403 = vpop.f32.mrb[0].mxu0
      %v3404 = vadd.f32 0.0, %v3403
      %v3405 = vpop.f32.mrb[0].mxu0
      %v3406 = vpop.f32.mrb[0].mxu0
      %v3407 = vadd.f32 0.0, %v3406
      %v3408 = vpop.f32.mrb[0].mxu0
      %3409 = vmatprep.mubr.bf16.mxu0 0
      %3410 = vmatmul.mubr.bf16.gmra.mrb[0].mxu0 %v715
      %v3411 = vpop.f32.mrb[0].mxu0
      %v3412 = vadd.f32 0.0, %v3411
      %v3413 = vpop.f32.mrb[0].mxu0
      %v3414 = vpop.f32.mrb[0].mxu0
      %v3415 = vadd.f32 0.0, %v3414
      %v3416 = vpop.f32.mrb[0].mxu0
      %3417 = vmatprep.mubr.bf16.mxu0 0
      %3418 = vmatmul.mubr.bf16.gmra.mrb[0].mxu0 %v718
      %v3419 = vpop.f32.mrb[0].mxu0
      %v3420 = vadd.f32 0.0, %v3419
      %v3421 = vpop.f32.mrb[0].mxu0
      %v3422 = vpop.f32.mrb[0].mxu0
      %v3423 = vadd.f32 0.0, %v3422
      %v3424 = vpop.f32.mrb[0].mxu0
      %3425 = vmatprep.mubr.bf16.mxu0 0
      %3426 = vmatmul.mubr.bf16.gmra.mrb[0].mxu0 %v721
      %v3427 = vpop.f32.mrb[0].mxu0
      %v3428 = vadd.f32 0.0, %v3427
      %v3429 = vpop.f32.mrb[0].mxu0
      %v3430 = vpop.f32.mrb[0].mxu0
      %v3431 = vadd.f32 0.0, %v3430
      %v3432 = vpop.f32.mrb[0].mxu0
      %3433 = vmatprep.mubr.bf16.mxu0 0
      %3434 = vmatmul.mubr.bf16.gmra.mrb[0].mxu0 %v724
      %v3435 = vpop.f32.mrb[0].mxu0
      %v3436 = vadd.f32 0.0, %v3435
      %v3437 = vpop.f32.mrb[0].mxu0
      %v3438 = vpop.f32.mrb[0].mxu0
      %v3439 = vadd.f32 0.0, %v3438
      %v3440 = vpop.f32.mrb[0].mxu0
      %3441 = vmatprep.mubr.bf16.mxu0 0
      %3442 = vmatmul.mubr.bf16.gmra.mrb[0].mxu0 %v727
      %v3443 = vpop.f32.mrb[0].mxu0
      %v3444 = vadd.f32 0.0, %v3443
      %v3445 = vpop.f32.mrb[0].mxu0
      %v3446 = vpop.f32.mrb[0].mxu0
      %v3447 = vadd.f32 0.0, %v3446
      %v3448 = vpop.f32.mrb[0].mxu0
      %3449 = vmatprep.mubr.bf16.mxu0 0
      %3450 = vmatmul.mubr.bf16.gmra.mrb[0].mxu0 %v730
      %v3451 = vpop.f32.mrb[0].mxu0
      %v3452 = vadd.f32 0.0, %v3451
      %v3453 = vpop.f32.mrb[0].mxu0
      %v3454 = vpop.f32.mrb[0].mxu0
      %v3455 = vadd.f32 0.0, %v3454
      %v3456 = vpop.f32.mrb[0].mxu0
      %3457 = vmatprep.mubr.bf16.mxu0 0
      %3458 = vmatmul.mubr.bf16.gmra.mrb[0].mxu0 %v733
      %v3459 = vpop.f32.mrb[0].mxu0
      %v3460 = vadd.f32 0.0, %v3459
      %v3461 = vpop.f32.mrb[0].mxu0
      %v3462 = vpop.f32.mrb[0].mxu0
      %v3463 = vadd.f32 0.0, %v3462
      %v3464 = vpop.f32.mrb[0].mxu0
      %3465 = vmatprep.mubr.bf16.mxu0 0
      %3466 = vmatmul.mubr.bf16.gmra.mrb[0].mxu0 %v736
      %v3467 = vpop.f32.mrb[0].mxu0
      %v3468 = vadd.f32 0.0, %v3467
      %v3469 = vpop.f32.mrb[0].mxu0
      %v3470 = vpop.f32.mrb[0].mxu0
      %v3471 = vadd.f32 0.0, %v3470
      %v3472 = vpop.f32.mrb[0].mxu0
      %3473 = vmatprep.mubr.bf16.mxu0 0
      %3474 = vmatmul.mubr.bf16.gmra.mrb[0].mxu0 %v739
      %v3475 = vpop.f32.mrb[0].mxu0
      %v3476 = vadd.f32 0.0, %v3475
      %v3477 = vpop.f32.mrb[0].mxu0
      %v3478 = vpop.f32.mrb[0].mxu0
      %v3479 = vadd.f32 0.0, %v3478
      %v3480 = vpop.f32.mrb[0].mxu0
      %3481 = vmatprep.mubr.bf16.mxu0 0
      %3482 = vmatmul.mubr.bf16.gmra.mrb[0].mxu0 %v742
      %v3483 = vpop.f32.mrb[0].mxu0
      %v3484 = vadd.f32 0.0, %v3483
      %v3485 = vpop.f32.mrb[0].mxu0
      %v3486 = vpop.f32.mrb[0].mxu0
      %v3487 = vadd.f32 0.0, %v3486
      %v3488 = vpop.f32.mrb[0].mxu0
      %3489 = vmatprep.mubr.bf16.mxu0 0
      %3490 = vmatmul.mubr.bf16.gmra.mrb[0].mxu0 %v3283
      %v3491 = vpop.f32.mrb[0].mxu0
      %v3492 = vadd.f32 0.0, %v3491
      %v3493 = vpop.f32.mrb[0].mxu0
      %v3494 = vpop.f32.mrb[0].mxu0
      %v3495 = vadd.f32 0.0, %v3494
      %v3496 = vpop.f32.mrb[0].mxu0
      %3497 = vmatprep.mubr.bf16.mxu0 0
      %3498 = vmatmul.mubr.bf16.gmra.mrb[0].mxu0 %v3286
      %v3499 = vpop.f32.mrb[0].mxu0
      %v3500 = vadd.f32 0.0, %v3499
      %v3501 = vpop.f32.mrb[0].mxu0
      %v3502 = vpop.f32.mrb[0].mxu0
      %v3503 = vadd.f32 0.0, %v3502
      %v3504 = vpop.f32.mrb[0].mxu0
      %3505 = vmatprep.mubr.bf16.mxu0 0
      %3506 = vmatmul.mubr.bf16.gmra.mrb[0].mxu0 %v3289
      %v3507 = vpop.f32.mrb[0].mxu0
      %v3508 = vadd.f32 0.0, %v3507
      %v3509 = vpop.f32.mrb[0].mxu0
      %v3510 = vpop.f32.mrb[0].mxu0
      %v3511 = vadd.f32 0.0, %v3510
      %v3512 = vpop.f32.mrb[0].mxu0
      %3513 = vmatprep.mubr.bf16.mxu0 0
      %3514 = vmatmul.mubr.bf16.gmra.mrb[0].mxu0 %v3292
      %v3515 = vpop.f32.mrb[0].mxu0
      %v3516 = vadd.f32 0.0, %v3515
      %v3517 = vpop.f32.mrb[0].mxu0
      %v3518 = vpop.f32.mrb[0].mxu0
      %v3519 = vadd.f32 0.0, %v3518
      %v3520 = vpop.f32.mrb[0].mxu0
      %3521 = vdwg.mxu0
      %v3522 = vadd.f32 %v3203, %v3332
      %v3523 = vadd.f32 %v3204, %v3335
      %v3524 = vadd.f32 %v3205, %v3340
      %v3525 = vadd.f32 %v3206, %v3343
      %v3526 = vadd.f32 %v3207, %v3348
      %v3527 = vadd.f32 %v3208, %v3351
      %v3528 = vadd.f32 %v3209, %v3356
      %v3529 = vadd.f32 %v3210, %v3359
      %v3530 = vadd.f32 %v3211, %v3364
      %v3531 = vadd.f32 %v3212, %v3367
      %v3532 = vadd.f32 %v3213, %v3372
      %v3533 = vadd.f32 %v3214, %v3375
      %v3534 = vadd.f32 %v3215, %v3380
      %v3535 = vadd.f32 %v3216, %v3383
      %v3536 = vadd.f32 %v3217, %v3388
      %v3537 = vadd.f32 %v3218, %v3391
      %v3538 = vadd.f32 %v3219, %v3396
      %v3539 = vadd.f32 %v3220, %v3399
      %v3540 = vadd.f32 %v3221, %v3404
      %v3541 = vadd.f32 %v3222, %v3407
      %v3542 = vadd.f32 %v3223, %v3412
      %v3543 = vadd.f32 %v3224, %v3415
      %v3544 = vadd.f32 %v3225, %v3420
      %v3545 = vadd.f32 %v3226, %v3423
      %v3546 = vadd.f32 %v3227, %v3428
      %v3547 = vadd.f32 %v3228, %v3431
      %v3548 = vadd.f32 %v3229, %v3436
      %v3549 = vadd.f32 %v3230, %v3439
      %v3550 = vadd.f32 %v3231, %v3444
      %v3551 = vadd.f32 %v3232, %v3447
      %v3552 = vadd.f32 %v3233, %v3452
      %v3553 = vadd.f32 %v3234, %v3455
      %v3554 = vadd.f32 %v3235, %v3460
      %v3555 = vadd.f32 %v3236, %v3463
      %v3556 = vadd.f32 %v3237, %v3468
      %v3557 = vadd.f32 %v3238, %v3471
      %v3558 = vadd.f32 %v3239, %v3476
      %v3559 = vadd.f32 %v3240, %v3479
      %v3560 = vadd.f32 %v3241, %v3484
      %v3561 = vadd.f32 %v3242, %v3487
      %v3562 = vadd.f32 %v3243, %v3492
      %v3563 = vadd.f32 %v3244, %v3495
      %v3564 = vadd.f32 %v3245, %v3500
      %v3565 = vadd.f32 %v3246, %v3503
      %v3566 = vadd.f32 %v3247, %v3508
      %v3567 = vadd.f32 %v3248, %v3511
      %v3568 = vadd.f32 %v3249, %v3516
      %v3569 = vadd.f32 %v3250, %v3519
      %s3570 = scalar_lea.vmem %s270, 32
      %v3571 = vld [vmem:[%s3570] sm:$0xf]
      %v3572 = vrot.slane %v2963, 1
      %v3573 = vsel %vm1257, %v1303, %v3572
      %v3574 = vrot.slane %v2964, 1
      %v3575 = vsel %vm1257, %v3572, %v3574
      %v3576 = vrot.slane %v2965, 1
      %v3577 = vsel %vm1257, %v3574, %v3576
      %v3578 = vrot.slane %v3255, 1
      %v3579 = vsel %vm1257, %v3576, %v3578
      %v3581 = vsel %vm674, %v3573, 0
      %v3584 = vsel %vm674, %v3575, 0
      %v3587 = vsel %vm674, %v3577, 0
      %v3590 = vsel %vm674, %v3579, 0
      %v3593 = vsel %vm747, %v3571, 0
      %3595 = vmatprep.subr.bf16.mxu0 0
      %3596 = vmatpush1.bf16.msra.mxu0 %v3593
      %3597 = vmatprep.subr.bf16.mxu0 0
      %3598 = vmatpush1.bf16.msra.mxu0 0
      %3599 = vmatprep.subr.bf16.mxu0 0
      %3600 = vmatpush1.bf16.msra.mxu0 0
      %3601 = vmatprep.subr.bf16.mxu0 0
      %3602 = vmatpush1.bf16.msra.mxu0 0
      %3603 = vmatprep.subr.bf16.mxu0 0
      %3604 = vmatpush1.bf16.msra.mxu0 0
      %3605 = vmatprep.subr.bf16.mxu0 0
      %3606 = vmatpush1.bf16.msra.mxu0 0
      %3607 = vmatprep.subr.bf16.mxu0 0
      %3608 = vmatpush1.bf16.msra.mxu0 0
      %3609 = vmatprep.subr.bf16.mxu0 0
      %3610 = vmatpush1.bf16.msra.mxu0 0
      %3611 = vmatprep.subr.bf16.mxu0 0
      %3612 = vmatpush1.bf16.msra.mxu0 0
      %3613 = vmatprep.subr.bf16.mxu0 0
      %3614 = vmatpush1.bf16.msra.mxu0 0
      %3615 = vmatprep.subr.bf16.mxu0 0
      %3616 = vmatpush1.bf16.msra.mxu0 0
      %3617 = vmatprep.subr.bf16.mxu0 0
      %3618 = vmatpush1.bf16.msra.mxu0 0
      %3619 = vmatprep.subr.bf16.mxu0 0
      %3620 = vmatpush1.bf16.msra.mxu0 0
      %3621 = vmatprep.subr.bf16.mxu0 0
      %3622 = vmatpush1.bf16.msra.mxu0 0
      %3623 = vmatprep.subr.bf16.mxu0 0
      %3624 = vmatpush1.bf16.msra.mxu0 0
      %3625 = vmatprep.subr.bf16.mxu0 0
      %3626 = vmatpush1.bf16.msra.mxu0 0
      %3627 = vmatprep.mubr.bf16.mxu0 0
      %3628 = vmatmul.mubr.bf16.gmra.mrb[0].mxu0 %v1317
      %v3629 = vpop.f32.mrb[0].mxu0
      %v3630 = vadd.f32 0.0, %v3629
      %v3631 = vpop.f32.mrb[0].mxu0
      %v3632 = vpop.f32.mrb[0].mxu0
      %v3633 = vadd.f32 0.0, %v3632
      %v3634 = vpop.f32.mrb[0].mxu0
      %3635 = vmatprep.mubr.bf16.mxu0 0
      %3636 = vmatmul.mubr.bf16.gmra.mrb[0].mxu0 %v1320
      %v3637 = vpop.f32.mrb[0].mxu0
      %v3638 = vadd.f32 0.0, %v3637
      %v3639 = vpop.f32.mrb[0].mxu0
      %v3640 = vpop.f32.mrb[0].mxu0
      %v3641 = vadd.f32 0.0, %v3640
      %v3642 = vpop.f32.mrb[0].mxu0
      %3643 = vmatprep.mubr.bf16.mxu0 0
      %3644 = vmatmul.mubr.bf16.gmra.mrb[0].mxu0 %v1323
      %v3645 = vpop.f32.mrb[0].mxu0
      %v3646 = vadd.f32 0.0, %v3645
      %v3647 = vpop.f32.mrb[0].mxu0
      %v3648 = vpop.f32.mrb[0].mxu0
      %v3649 = vadd.f32 0.0, %v3648
      %v3650 = vpop.f32.mrb[0].mxu0
      %3651 = vmatprep.mubr.bf16.mxu0 0
      %3652 = vmatmul.mubr.bf16.gmra.mrb[0].mxu0 %v1326
      %v3653 = vpop.f32.mrb[0].mxu0
      %v3654 = vadd.f32 0.0, %v3653
      %v3655 = vpop.f32.mrb[0].mxu0
      %v3656 = vpop.f32.mrb[0].mxu0
      %v3657 = vadd.f32 0.0, %v3656
      %v3658 = vpop.f32.mrb[0].mxu0
      %3659 = vmatprep.mubr.bf16.mxu0 0
      %3660 = vmatmul.mubr.bf16.gmra.mrb[0].mxu0 %v1329
      %v3661 = vpop.f32.mrb[0].mxu0
      %v3662 = vadd.f32 0.0, %v3661
      %v3663 = vpop.f32.mrb[0].mxu0
      %v3664 = vpop.f32.mrb[0].mxu0
      %v3665 = vadd.f32 0.0, %v3664
      %v3666 = vpop.f32.mrb[0].mxu0
      %3667 = vmatprep.mubr.bf16.mxu0 0
      %3668 = vmatmul.mubr.bf16.gmra.mrb[0].mxu0 %v1332
      %v3669 = vpop.f32.mrb[0].mxu0
      %v3670 = vadd.f32 0.0, %v3669
      %v3671 = vpop.f32.mrb[0].mxu0
      %v3672 = vpop.f32.mrb[0].mxu0
      %v3673 = vadd.f32 0.0, %v3672
      %v3674 = vpop.f32.mrb[0].mxu0
      %3675 = vmatprep.mubr.bf16.mxu0 0
      %3676 = vmatmul.mubr.bf16.gmra.mrb[0].mxu0 %v1335
      %v3677 = vpop.f32.mrb[0].mxu0
      %v3678 = vadd.f32 0.0, %v3677
      %v3679 = vpop.f32.mrb[0].mxu0
      %v3680 = vpop.f32.mrb[0].mxu0
      %v3681 = vadd.f32 0.0, %v3680
      %v3682 = vpop.f32.mrb[0].mxu0
      %3683 = vmatprep.mubr.bf16.mxu0 0
      %3684 = vmatmul.mubr.bf16.gmra.mrb[0].mxu0 %v1338
      %v3685 = vpop.f32.mrb[0].mxu0
      %v3686 = vadd.f32 0.0, %v3685
      %v3687 = vpop.f32.mrb[0].mxu0
      %v3688 = vpop.f32.mrb[0].mxu0
      %v3689 = vadd.f32 0.0, %v3688
      %v3690 = vpop.f32.mrb[0].mxu0
      %3691 = vmatprep.mubr.bf16.mxu0 0
      %3692 = vmatmul.mubr.bf16.gmra.mrb[0].mxu0 %v1341
      %v3693 = vpop.f32.mrb[0].mxu0
      %v3694 = vadd.f32 0.0, %v3693
      %v3695 = vpop.f32.mrb[0].mxu0
      %v3696 = vpop.f32.mrb[0].mxu0
      %v3697 = vadd.f32 0.0, %v3696
      %v3698 = vpop.f32.mrb[0].mxu0
      %3699 = vmatprep.mubr.bf16.mxu0 0
      %3700 = vmatmul.mubr.bf16.gmra.mrb[0].mxu0 %v1344
      %v3701 = vpop.f32.mrb[0].mxu0
      %v3702 = vadd.f32 0.0, %v3701
      %v3703 = vpop.f32.mrb[0].mxu0
      %v3704 = vpop.f32.mrb[0].mxu0
      %v3705 = vadd.f32 0.0, %v3704
      %v3706 = vpop.f32.mrb[0].mxu0
      %3707 = vmatprep.mubr.bf16.mxu0 0
      %3708 = vmatmul.mubr.bf16.gmra.mrb[0].mxu0 %v1347
      %v3709 = vpop.f32.mrb[0].mxu0
      %v3710 = vadd.f32 0.0, %v3709
      %v3711 = vpop.f32.mrb[0].mxu0
      %v3712 = vpop.f32.mrb[0].mxu0
      %v3713 = vadd.f32 0.0, %v3712
      %v3714 = vpop.f32.mrb[0].mxu0
      %3715 = vmatprep.mubr.bf16.mxu0 0
      %3716 = vmatmul.mubr.bf16.gmra.mrb[0].mxu0 %v1350
      %v3717 = vpop.f32.mrb[0].mxu0
      %v3718 = vadd.f32 0.0, %v3717
      %v3719 = vpop.f32.mrb[0].mxu0
      %v3720 = vpop.f32.mrb[0].mxu0
      %v3721 = vadd.f32 0.0, %v3720
      %v3722 = vpop.f32.mrb[0].mxu0
      %3723 = vmatprep.mubr.bf16.mxu0 0
      %3724 = vmatmul.mubr.bf16.gmra.mrb[0].mxu0 %v1353
      %v3725 = vpop.f32.mrb[0].mxu0
      %v3726 = vadd.f32 0.0, %v3725
      %v3727 = vpop.f32.mrb[0].mxu0
      %v3728 = vpop.f32.mrb[0].mxu0
      %v3729 = vadd.f32 0.0, %v3728
      %v3730 = vpop.f32.mrb[0].mxu0
      %3731 = vmatprep.mubr.bf16.mxu0 0
      %3732 = vmatmul.mubr.bf16.gmra.mrb[0].mxu0 %v1356
      %v3733 = vpop.f32.mrb[0].mxu0
      %v3734 = vadd.f32 0.0, %v3733
      %v3735 = vpop.f32.mrb[0].mxu0
      %v3736 = vpop.f32.mrb[0].mxu0
      %v3737 = vadd.f32 0.0, %v3736
      %v3738 = vpop.f32.mrb[0].mxu0
      %3739 = vmatprep.mubr.bf16.mxu0 0
      %3740 = vmatmul.mubr.bf16.gmra.mrb[0].mxu0 %v1359
      %v3741 = vpop.f32.mrb[0].mxu0
      %v3742 = vadd.f32 0.0, %v3741
      %v3743 = vpop.f32.mrb[0].mxu0
      %v3744 = vpop.f32.mrb[0].mxu0
      %v3745 = vadd.f32 0.0, %v3744
      %v3746 = vpop.f32.mrb[0].mxu0
      %3747 = vmatprep.mubr.bf16.mxu0 0
      %3748 = vmatmul.mubr.bf16.gmra.mrb[0].mxu0 %v1362
      %v3749 = vpop.f32.mrb[0].mxu0
      %v3750 = vadd.f32 0.0, %v3749
      %v3751 = vpop.f32.mrb[0].mxu0
      %v3752 = vpop.f32.mrb[0].mxu0
      %v3753 = vadd.f32 0.0, %v3752
      %v3754 = vpop.f32.mrb[0].mxu0
      %3755 = vmatprep.mubr.bf16.mxu0 0
      %3756 = vmatmul.mubr.bf16.gmra.mrb[0].mxu0 %v1365
      %v3757 = vpop.f32.mrb[0].mxu0
      %v3758 = vadd.f32 0.0, %v3757
      %v3759 = vpop.f32.mrb[0].mxu0
      %v3760 = vpop.f32.mrb[0].mxu0
      %v3761 = vadd.f32 0.0, %v3760
      %v3762 = vpop.f32.mrb[0].mxu0
      %3763 = vmatprep.mubr.bf16.mxu0 0
      %3764 = vmatmul.mubr.bf16.gmra.mrb[0].mxu0 %v1368
      %v3765 = vpop.f32.mrb[0].mxu0
      %v3766 = vadd.f32 0.0, %v3765
      %v3767 = vpop.f32.mrb[0].mxu0
      %v3768 = vpop.f32.mrb[0].mxu0
      %v3769 = vadd.f32 0.0, %v3768
      %v3770 = vpop.f32.mrb[0].mxu0
      %3771 = vmatprep.mubr.bf16.mxu0 0
      %3772 = vmatmul.mubr.bf16.gmra.mrb[0].mxu0 %v1371
      %v3773 = vpop.f32.mrb[0].mxu0
      %v3774 = vadd.f32 0.0, %v3773
      %v3775 = vpop.f32.mrb[0].mxu0
      %v3776 = vpop.f32.mrb[0].mxu0
      %v3777 = vadd.f32 0.0, %v3776
      %v3778 = vpop.f32.mrb[0].mxu0
      %3779 = vmatprep.mubr.bf16.mxu0 0
      %3780 = vmatmul.mubr.bf16.gmra.mrb[0].mxu0 %v1374
      %v3781 = vpop.f32.mrb[0].mxu0
      %v3782 = vadd.f32 0.0, %v3781
      %v3783 = vpop.f32.mrb[0].mxu0
      %v3784 = vpop.f32.mrb[0].mxu0
      %v3785 = vadd.f32 0.0, %v3784
      %v3786 = vpop.f32.mrb[0].mxu0
      %3787 = vmatprep.mubr.bf16.mxu0 0
      %3788 = vmatmul.mubr.bf16.gmra.mrb[0].mxu0 %v3581
      %v3789 = vpop.f32.mrb[0].mxu0
      %v3790 = vadd.f32 0.0, %v3789
      %v3791 = vpop.f32.mrb[0].mxu0
      %v3792 = vpop.f32.mrb[0].mxu0
      %v3793 = vadd.f32 0.0, %v3792
      %v3794 = vpop.f32.mrb[0].mxu0
      %3795 = vmatprep.mubr.bf16.mxu0 0
      %3796 = vmatmul.mubr.bf16.gmra.mrb[0].mxu0 %v3584
      %v3797 = vpop.f32.mrb[0].mxu0
      %v3798 = vadd.f32 0.0, %v3797
      %v3799 = vpop.f32.mrb[0].mxu0
      %v3800 = vpop.f32.mrb[0].mxu0
      %v3801 = vadd.f32 0.0, %v3800
      %v3802 = vpop.f32.mrb[0].mxu0
      %3803 = vmatprep.mubr.bf16.mxu0 0
      %3804 = vmatmul.mubr.bf16.gmra.mrb[0].mxu0 %v3587
      %v3805 = vpop.f32.mrb[0].mxu0
      %v3806 = vadd.f32 0.0, %v3805
      %v3807 = vpop.f32.mrb[0].mxu0
      %v3808 = vpop.f32.mrb[0].mxu0
      %v3809 = vadd.f32 0.0, %v3808
      %v3810 = vpop.f32.mrb[0].mxu0
      %3811 = vmatprep.mubr.bf16.mxu0 0
      %3812 = vmatmul.mubr.bf16.gmra.mrb[0].mxu0 %v3590
      %v3813 = vpop.f32.mrb[0].mxu0
      %v3814 = vadd.f32 0.0, %v3813
      %v3815 = vpop.f32.mrb[0].mxu0
      %v3816 = vpop.f32.mrb[0].mxu0
      %v3817 = vadd.f32 0.0, %v3816
      %v3818 = vpop.f32.mrb[0].mxu0
      %3819 = vdwg.mxu0
      %v3820 = vadd.f32 %v3522, %v3630
      %v3821 = vadd.f32 %v3523, %v3633
      %v3822 = vadd.f32 %v3524, %v3638
      %v3823 = vadd.f32 %v3525, %v3641
      %v3824 = vadd.f32 %v3526, %v3646
      %v3825 = vadd.f32 %v3527, %v3649
      %v3826 = vadd.f32 %v3528, %v3654
      %v3827 = vadd.f32 %v3529, %v3657
      %v3828 = vadd.f32 %v3530, %v3662
      %v3829 = vadd.f32 %v3531, %v3665
      %v3830 = vadd.f32 %v3532, %v3670
      %v3831 = vadd.f32 %v3533, %v3673
      %v3832 = vadd.f32 %v3534, %v3678
      %v3833 = vadd.f32 %v3535, %v3681
      %v3834 = vadd.f32 %v3536, %v3686
      %v3835 = vadd.f32 %v3537, %v3689
      %v3836 = vadd.f32 %v3538, %v3694
      %v3837 = vadd.f32 %v3539, %v3697
      %v3838 = vadd.f32 %v3540, %v3702
      %v3839 = vadd.f32 %v3541, %v3705
      %v3840 = vadd.f32 %v3542, %v3710
      %v3841 = vadd.f32 %v3543, %v3713
      %v3842 = vadd.f32 %v3544, %v3718
      %v3843 = vadd.f32 %v3545, %v3721
      %v3844 = vadd.f32 %v3546, %v3726
      %v3845 = vadd.f32 %v3547, %v3729
      %v3846 = vadd.f32 %v3548, %v3734
      %v3847 = vadd.f32 %v3549, %v3737
      %v3848 = vadd.f32 %v3550, %v3742
      %v3849 = vadd.f32 %v3551, %v3745
      %v3850 = vadd.f32 %v3552, %v3750
      %v3851 = vadd.f32 %v3553, %v3753
      %v3852 = vadd.f32 %v3554, %v3758
      %v3853 = vadd.f32 %v3555, %v3761
      %v3854 = vadd.f32 %v3556, %v3766
      %v3855 = vadd.f32 %v3557, %v3769
      %v3856 = vadd.f32 %v3558, %v3774
      %v3857 = vadd.f32 %v3559, %v3777
      %v3858 = vadd.f32 %v3560, %v3782
      %v3859 = vadd.f32 %v3561, %v3785
      %v3860 = vadd.f32 %v3562, %v3790
      %v3861 = vadd.f32 %v3563, %v3793
      %v3862 = vadd.f32 %v3564, %v3798
      %v3863 = vadd.f32 %v3565, %v3801
      %v3864 = vadd.f32 %v3566, %v3806
      %v3865 = vadd.f32 %v3567, %v3809
      %v3866 = vadd.f32 %v3568, %v3814
      %v3867 = vadd.f32 %v3569, %v3817
      %v3868 = vlaneseq
      %v3869 = vshrl.u32 %v3868, 7
      %v3870 = vadd.s32 %v3869, 8
      %v3871 = vadd.s32 %v3869, 16
      %vm3872 = vcmp.lt.s32.totalorder %v3869, 16
      %vm3873 = vcmp.lt.s32.totalorder %v3870, 16
      %vm3874 = vcmp.lt.s32.totalorder %v3871, 16
      %v3875 = vsel %vm3872, 1, 0
      %v3876 = vsel %vm3873, 1, 0
      %v3877 = vsel %vm3874, 1, 0
      %v3878 = vcvt.s32.f32 %v3875
      %v3879 = vcvt.s32.f32 %v3876
      %v3880 = vcvt.s32.f32 %v3877
      %v3881 = vmul.f32 %v3820, %v3878
      %v3882 = vmul.f32 %v3821, %v3879
      %v3883 = vmul.f32 %v3822, %v3880
      %v3884 = vmul.f32 %v3823, %v3878
      %v3885 = vmul.f32 %v3824, %v3879
      %v3886 = vmul.f32 %v3825, %v3880
      %v3887 = vmul.f32 %v3826, %v3878
      %v3888 = vmul.f32 %v3827, %v3879
      %v3889 = vmul.f32 %v3828, %v3880
      %v3890 = vmul.f32 %v3829, %v3878
      %v3891 = vmul.f32 %v3830, %v3879
      %v3892 = vmul.f32 %v3831, %v3880
      %v3893 = vmul.f32 %v3832, %v3878
      %v3894 = vmul.f32 %v3833, %v3879
      %v3895 = vmul.f32 %v3834, %v3880
      %v3896 = vmul.f32 %v3835, %v3878
      %v3897 = vmul.f32 %v3836, %v3879
      %v3898 = vmul.f32 %v3837, %v3880
      %v3899 = vmul.f32 %v3838, %v3878
      %v3900 = vmul.f32 %v3839, %v3879
      %v3901 = vmul.f32 %v3840, %v3880
      %v3902 = vmul.f32 %v3841, %v3878
      %v3903 = vmul.f32 %v3842, %v3879
      %v3904 = vmul.f32 %v3843, %v3880
      %v3905 = vmul.f32 %v3844, %v3878
      %v3906 = vmul.f32 %v3845, %v3879
      %v3907 = vmul.f32 %v3846, %v3880
      %v3908 = vmul.f32 %v3847, %v3878
      %v3909 = vmul.f32 %v3848, %v3879
      %v3910 = vmul.f32 %v3849, %v3880
      %v3911 = vmul.f32 %v3850, %v3878
      %v3912 = vmul.f32 %v3851, %v3879
      %v3913 = vmul.f32 %v3852, %v3880
      %v3914 = vmul.f32 %v3853, %v3878
      %v3915 = vmul.f32 %v3854, %v3879
      %v3916 = vmul.f32 %v3855, %v3880
      %v3917 = vmul.f32 %v3856, %v3878
      %v3918 = vmul.f32 %v3857, %v3879
      %v3919 = vmul.f32 %v3858, %v3880
      %v3920 = vmul.f32 %v3859, %v3878
      %v3921 = vmul.f32 %v3860, %v3879
      %v3922 = vmul.f32 %v3861, %v3880
      %v3923 = vmul.f32 %v3862, %v3878
      %v3924 = vmul.f32 %v3863, %v3879
      %v3925 = vmul.f32 %v3864, %v3880
      %v3926 = vmul.f32 %v3865, %v3878
      %v3927 = vmul.f32 %v3866, %v3879
      %v3928 = vmul.f32 %v3867, %v3880
      %v3929 = vsel %vm674, %v3881, 0.0
      %v3930 = vsel %vm674, %v3882, 0.0
      %v3931 = vadd.f32 %v3929, %v3930
      %v3932 = vsel %vm674, %v3883, 0.0
      %v3933 = vadd.f32 %v3931, %v3932
      %v3934 = vsel %vm674, %v3884, 0.0
      %v3935 = vadd.f32 %v3933, %v3934
      %v3936 = vsel %vm674, %v3885, 0.0
      %v3937 = vadd.f32 %v3935, %v3936
      %v3938 = vsel %vm674, %v3886, 0.0
      %v3939 = vadd.f32 %v3937, %v3938
      %v3940 = vsel %vm674, %v3887, 0.0
      %v3941 = vadd.f32 %v3939, %v3940
      %v3942 = vsel %vm674, %v3888, 0.0
      %v3943 = vadd.f32 %v3941, %v3942
      %v3944 = vsel %vm674, %v3889, 0.0
      %v3945 = vadd.f32 %v3943, %v3944
      %v3946 = vsel %vm674, %v3890, 0.0
      %v3947 = vadd.f32 %v3945, %v3946
      %v3948 = vsel %vm674, %v3891, 0.0
      %v3949 = vadd.f32 %v3947, %v3948
      %v3950 = vsel %vm674, %v3892, 0.0
      %v3951 = vadd.f32 %v3949, %v3950
      %v3952 = vsel %vm674, %v3893, 0.0
      %v3953 = vadd.f32 %v3951, %v3952
      %v3954 = vsel %vm674, %v3894, 0.0
      %v3955 = vadd.f32 %v3953, %v3954
      %v3956 = vsel %vm674, %v3895, 0.0
      %v3957 = vadd.f32 %v3955, %v3956
      %v3958 = vsel %vm674, %v3896, 0.0
      %v3959 = vadd.f32 %v3957, %v3958
      %v3960 = vsel %vm674, %v3897, 0.0
      %v3961 = vadd.f32 %v3959, %v3960
      %v3962 = vsel %vm674, %v3898, 0.0
      %v3963 = vadd.f32 %v3961, %v3962
      %v3964 = vsel %vm674, %v3899, 0.0
      %v3965 = vadd.f32 %v3963, %v3964
      %v3966 = vsel %vm674, %v3900, 0.0
      %v3967 = vadd.f32 %v3965, %v3966
      %v3968 = vsel %vm674, %v3901, 0.0
      %v3969 = vadd.f32 %v3967, %v3968
      %v3970 = vsel %vm674, %v3902, 0.0
      %v3971 = vadd.f32 %v3969, %v3970
      %v3972 = vsel %vm674, %v3903, 0.0
      %v3973 = vadd.f32 %v3971, %v3972
      %v3974 = vsel %vm674, %v3904, 0.0
      %v3975 = vadd.f32 %v3973, %v3974
      %v3976 = vsel %vm674, %v3905, 0.0
      %v3977 = vadd.f32 %v3975, %v3976
      %v3978 = vsel %vm674, %v3906, 0.0
      %v3979 = vadd.f32 %v3977, %v3978
      %v3980 = vsel %vm674, %v3907, 0.0
      %v3981 = vadd.f32 %v3979, %v3980
      %v3982 = vsel %vm674, %v3908, 0.0
      %v3983 = vadd.f32 %v3981, %v3982
      %v3984 = vsel %vm674, %v3909, 0.0
      %v3985 = vadd.f32 %v3983, %v3984
      %v3986 = vsel %vm674, %v3910, 0.0
      %v3987 = vadd.f32 %v3985, %v3986
      %v3988 = vsel %vm674, %v3911, 0.0
      %v3989 = vadd.f32 %v3987, %v3988
      %v3990 = vsel %vm674, %v3912, 0.0
      %v3991 = vadd.f32 %v3989, %v3990
      %v3992 = vsel %vm674, %v3913, 0.0
      %v3993 = vadd.f32 %v3991, %v3992
      %v3994 = vsel %vm674, %v3914, 0.0
      %v3995 = vadd.f32 %v3993, %v3994
      %v3996 = vsel %vm674, %v3915, 0.0
      %v3997 = vadd.f32 %v3995, %v3996
      %v3998 = vsel %vm674, %v3916, 0.0
      %v3999 = vadd.f32 %v3997, %v3998
      %v4000 = vsel %vm674, %v3917, 0.0
      %v4001 = vadd.f32 %v3999, %v4000
      %v4002 = vsel %vm674, %v3918, 0.0
      %v4003 = vadd.f32 %v4001, %v4002
      %v4004 = vsel %vm674, %v3919, 0.0
      %v4005 = vadd.f32 %v4003, %v4004
      %v4006 = vsel %vm674, %v3920, 0.0
      %v4007 = vadd.f32 %v4005, %v4006
      %v4008 = vsel %vm674, %v3921, 0.0
      %v4009 = vadd.f32 %v4007, %v4008
      %v4010 = vsel %vm674, %v3922, 0.0
      %v4011 = vadd.f32 %v4009, %v4010
      %v4012 = vsel %vm674, %v3923, 0.0
      %v4013 = vadd.f32 %v4011, %v4012
      %v4014 = vsel %vm674, %v3924, 0.0
      %v4015 = vadd.f32 %v4013, %v4014
      %v4016 = vsel %vm674, %v3925, 0.0
      %v4017 = vadd.f32 %v4015, %v4016
      %v4018 = vsel %vm674, %v3926, 0.0
      %v4019 = vadd.f32 %v4017, %v4018
      %v4020 = vsel %vm674, %v3927, 0.0
      %v4021 = vadd.f32 %v4019, %v4020
      %v4022 = vsel %vm674, %v3928, 0.0
      %v4023 = vadd.f32 %v4021, %v4022
      %v4024 = vrot.slane %v4023, 4
      %v4025 = vadd.f32 %v4023, %v4024
      %v4026 = vrot.slane %v4025, 2
      %v4027 = vadd.f32 %v4025, %v4026
      %v4028 = vrot.slane %v4027, 1
      %v4029 = vadd.f32 %v4027, %v4028
      %v4030 = vmul.f32 %v4029, 0.00390625
      %v4031 = vsub.f32 %v3820, %v4030
      %v4032 = vsub.f32 %v3821, %v4030
      %v4033 = vsub.f32 %v3822, %v4030
      %v4034 = vsub.f32 %v3823, %v4030
      %v4035 = vsub.f32 %v3824, %v4030
      %v4036 = vsub.f32 %v3825, %v4030
      %v4037 = vsub.f32 %v3826, %v4030
      %v4038 = vsub.f32 %v3827, %v4030
      %v4039 = vsub.f32 %v3828, %v4030
      %v4040 = vsub.f32 %v3829, %v4030
      %v4041 = vsub.f32 %v3830, %v4030
      %v4042 = vsub.f32 %v3831, %v4030
      %v4043 = vsub.f32 %v3832, %v4030
      %v4044 = vsub.f32 %v3833, %v4030
      %v4045 = vsub.f32 %v3834, %v4030
      %v4046 = vsub.f32 %v3835, %v4030
      %v4047 = vsub.f32 %v3836, %v4030
      %v4048 = vsub.f32 %v3837, %v4030
      %v4049 = vsub.f32 %v3838, %v4030
      %v4050 = vsub.f32 %v3839, %v4030
      %v4051 = vsub.f32 %v3840, %v4030
      %v4052 = vsub.f32 %v3841, %v4030
      %v4053 = vsub.f32 %v3842, %v4030
      %v4054 = vsub.f32 %v3843, %v4030
      %v4055 = vsub.f32 %v3844, %v4030
      %v4056 = vsub.f32 %v3845, %v4030
      %v4057 = vsub.f32 %v3846, %v4030
      %v4058 = vsub.f32 %v3847, %v4030
      %v4059 = vsub.f32 %v3848, %v4030
      %v4060 = vsub.f32 %v3849, %v4030
      %v4061 = vsub.f32 %v3850, %v4030
      %v4062 = vsub.f32 %v3851, %v4030
      %v4063 = vsub.f32 %v3852, %v4030
      %v4064 = vsub.f32 %v3853, %v4030
      %v4065 = vsub.f32 %v3854, %v4030
      %v4066 = vsub.f32 %v3855, %v4030
      %v4067 = vsub.f32 %v3856, %v4030
      %v4068 = vsub.f32 %v3857, %v4030
      %v4069 = vsub.f32 %v3858, %v4030
      %v4070 = vsub.f32 %v3859, %v4030
      %v4071 = vsub.f32 %v3860, %v4030
      %v4072 = vsub.f32 %v3861, %v4030
      %v4073 = vsub.f32 %v3862, %v4030
      %v4074 = vsub.f32 %v3863, %v4030
      %v4075 = vsub.f32 %v3864, %v4030
      %v4076 = vsub.f32 %v3865, %v4030
      %v4077 = vsub.f32 %v3866, %v4030
      %v4078 = vsub.f32 %v3867, %v4030
      %v4079 = vmul.f32 %v4031, %v4031
      %v4080 = vmul.f32 %v4032, %v4032
      %v4081 = vmul.f32 %v4033, %v4033
      %v4082 = vmul.f32 %v4034, %v4034
      %v4083 = vmul.f32 %v4035, %v4035
      %v4084 = vmul.f32 %v4036, %v4036
      %v4085 = vmul.f32 %v4037, %v4037
      %v4086 = vmul.f32 %v4038, %v4038
      %v4087 = vmul.f32 %v4039, %v4039
      %v4088 = vmul.f32 %v4040, %v4040
      %v4089 = vmul.f32 %v4041, %v4041
      %v4090 = vmul.f32 %v4042, %v4042
      %v4091 = vmul.f32 %v4043, %v4043
      %v4092 = vmul.f32 %v4044, %v4044
      %v4093 = vmul.f32 %v4045, %v4045
      %v4094 = vmul.f32 %v4046, %v4046
      %v4095 = vmul.f32 %v4047, %v4047
      %v4096 = vmul.f32 %v4048, %v4048
      %v4097 = vmul.f32 %v4049, %v4049
      %v4098 = vmul.f32 %v4050, %v4050
      %v4099 = vmul.f32 %v4051, %v4051
      %v4100 = vmul.f32 %v4052, %v4052
      %v4101 = vmul.f32 %v4053, %v4053
      %v4102 = vmul.f32 %v4054, %v4054
      %v4103 = vmul.f32 %v4055, %v4055
      %v4104 = vmul.f32 %v4056, %v4056
      %v4105 = vmul.f32 %v4057, %v4057
      %v4106 = vmul.f32 %v4058, %v4058
      %v4107 = vmul.f32 %v4059, %v4059
      %v4108 = vmul.f32 %v4060, %v4060
      %v4109 = vmul.f32 %v4061, %v4061
      %v4110 = vmul.f32 %v4062, %v4062
      %v4111 = vmul.f32 %v4063, %v4063
      %v4112 = vmul.f32 %v4064, %v4064
      %v4113 = vmul.f32 %v4065, %v4065
      %v4114 = vmul.f32 %v4066, %v4066
      %v4115 = vmul.f32 %v4067, %v4067
      %v4116 = vmul.f32 %v4068, %v4068
      %v4117 = vmul.f32 %v4069, %v4069
      %v4118 = vmul.f32 %v4070, %v4070
      %v4119 = vmul.f32 %v4071, %v4071
      %v4120 = vmul.f32 %v4072, %v4072
      %v4121 = vmul.f32 %v4073, %v4073
      %v4122 = vmul.f32 %v4074, %v4074
      %v4123 = vmul.f32 %v4075, %v4075
      %v4124 = vmul.f32 %v4076, %v4076
      %v4125 = vmul.f32 %v4077, %v4077
      %v4126 = vmul.f32 %v4078, %v4078
      %v4127 = vmul.f32 %v4079, %v3878
      %v4128 = vmul.f32 %v4080, %v3879
      %v4129 = vmul.f32 %v4081, %v3880
      %v4130 = vmul.f32 %v4082, %v3878
      %v4131 = vmul.f32 %v4083, %v3879
      %v4132 = vmul.f32 %v4084, %v3880
      %v4133 = vmul.f32 %v4085, %v3878
      %v4134 = vmul.f32 %v4086, %v3879
      %v4135 = vmul.f32 %v4087, %v3880
      %v4136 = vmul.f32 %v4088, %v3878
      %v4137 = vmul.f32 %v4089, %v3879
      %v4138 = vmul.f32 %v4090, %v3880
      %v4139 = vmul.f32 %v4091, %v3878
      %v4140 = vmul.f32 %v4092, %v3879
      %v4141 = vmul.f32 %v4093, %v3880
      %v4142 = vmul.f32 %v4094, %v3878
      %v4143 = vmul.f32 %v4095, %v3879
      %v4144 = vmul.f32 %v4096, %v3880
      %v4145 = vmul.f32 %v4097, %v3878
      %v4146 = vmul.f32 %v4098, %v3879
      %v4147 = vmul.f32 %v4099, %v3880
      %v4148 = vmul.f32 %v4100, %v3878
      %v4149 = vmul.f32 %v4101, %v3879
      %v4150 = vmul.f32 %v4102, %v3880
      %v4151 = vmul.f32 %v4103, %v3878
      %v4152 = vmul.f32 %v4104, %v3879
      %v4153 = vmul.f32 %v4105, %v3880
      %v4154 = vmul.f32 %v4106, %v3878
      %v4155 = vmul.f32 %v4107, %v3879
      %v4156 = vmul.f32 %v4108, %v3880
      %v4157 = vmul.f32 %v4109, %v3878
      %v4158 = vmul.f32 %v4110, %v3879
      %v4159 = vmul.f32 %v4111, %v3880
      %v4160 = vmul.f32 %v4112, %v3878
      %v4161 = vmul.f32 %v4113, %v3879
      %v4162 = vmul.f32 %v4114, %v3880
      %v4163 = vmul.f32 %v4115, %v3878
      %v4164 = vmul.f32 %v4116, %v3879
      %v4165 = vmul.f32 %v4117, %v3880
      %v4166 = vmul.f32 %v4118, %v3878
      %v4167 = vmul.f32 %v4119, %v3879
      %v4168 = vmul.f32 %v4120, %v3880
      %v4169 = vmul.f32 %v4121, %v3878
      %v4170 = vmul.f32 %v4122, %v3879
      %v4171 = vmul.f32 %v4123, %v3880
      %v4172 = vmul.f32 %v4124, %v3878
      %v4173 = vmul.f32 %v4125, %v3879
      %v4174 = vmul.f32 %v4126, %v3880
      %v4175 = vsel %vm674, %v4127, 0.0
      %v4176 = vsel %vm674, %v4128, 0.0
      %v4177 = vadd.f32 %v4175, %v4176
      %v4178 = vsel %vm674, %v4129, 0.0
      %v4179 = vadd.f32 %v4177, %v4178
      %v4180 = vsel %vm674, %v4130, 0.0
      %v4181 = vadd.f32 %v4179, %v4180
      %v4182 = vsel %vm674, %v4131, 0.0
      %v4183 = vadd.f32 %v4181, %v4182
      %v4184 = vsel %vm674, %v4132, 0.0
      %v4185 = vadd.f32 %v4183, %v4184
      %v4186 = vsel %vm674, %v4133, 0.0
      %v4187 = vadd.f32 %v4185, %v4186
      %v4188 = vsel %vm674, %v4134, 0.0
      %v4189 = vadd.f32 %v4187, %v4188
      %v4190 = vsel %vm674, %v4135, 0.0
      %v4191 = vadd.f32 %v4189, %v4190
      %v4192 = vsel %vm674, %v4136, 0.0
      %v4193 = vadd.f32 %v4191, %v4192
      %v4194 = vsel %vm674, %v4137, 0.0
      %v4195 = vadd.f32 %v4193, %v4194
      %v4196 = vsel %vm674, %v4138, 0.0
      %v4197 = vadd.f32 %v4195, %v4196
      %v4198 = vsel %vm674, %v4139, 0.0
      %v4199 = vadd.f32 %v4197, %v4198
      %v4200 = vsel %vm674, %v4140, 0.0
      %v4201 = vadd.f32 %v4199, %v4200
      %v4202 = vsel %vm674, %v4141, 0.0
      %v4203 = vadd.f32 %v4201, %v4202
      %v4204 = vsel %vm674, %v4142, 0.0
      %v4205 = vadd.f32 %v4203, %v4204
      %v4206 = vsel %vm674, %v4143, 0.0
      %v4207 = vadd.f32 %v4205, %v4206
      %v4208 = vsel %vm674, %v4144, 0.0
      %v4209 = vadd.f32 %v4207, %v4208
      %v4210 = vsel %vm674, %v4145, 0.0
      %v4211 = vadd.f32 %v4209, %v4210
      %v4212 = vsel %vm674, %v4146, 0.0
      %v4213 = vadd.f32 %v4211, %v4212
      %v4214 = vsel %vm674, %v4147, 0.0
      %v4215 = vadd.f32 %v4213, %v4214
      %v4216 = vsel %vm674, %v4148, 0.0
      %v4217 = vadd.f32 %v4215, %v4216
      %v4218 = vsel %vm674, %v4149, 0.0
      %v4219 = vadd.f32 %v4217, %v4218
      %v4220 = vsel %vm674, %v4150, 0.0
      %v4221 = vadd.f32 %v4219, %v4220
      %v4222 = vsel %vm674, %v4151, 0.0
      %v4223 = vadd.f32 %v4221, %v4222
      %v4224 = vsel %vm674, %v4152, 0.0
      %v4225 = vadd.f32 %v4223, %v4224
      %v4226 = vsel %vm674, %v4153, 0.0
      %v4227 = vadd.f32 %v4225, %v4226
      %v4228 = vsel %vm674, %v4154, 0.0
      %v4229 = vadd.f32 %v4227, %v4228
      %v4230 = vsel %vm674, %v4155, 0.0
      %v4231 = vadd.f32 %v4229, %v4230
      %v4232 = vsel %vm674, %v4156, 0.0
      %v4233 = vadd.f32 %v4231, %v4232
      %v4234 = vsel %vm674, %v4157, 0.0
      %v4235 = vadd.f32 %v4233, %v4234
      %v4236 = vsel %vm674, %v4158, 0.0
      %v4237 = vadd.f32 %v4235, %v4236
      %v4238 = vsel %vm674, %v4159, 0.0
      %v4239 = vadd.f32 %v4237, %v4238
      %v4240 = vsel %vm674, %v4160, 0.0
      %v4241 = vadd.f32 %v4239, %v4240
      %v4242 = vsel %vm674, %v4161, 0.0
      %v4243 = vadd.f32 %v4241, %v4242
      %v4244 = vsel %vm674, %v4162, 0.0
      %v4245 = vadd.f32 %v4243, %v4244
      %v4246 = vsel %vm674, %v4163, 0.0
      %v4247 = vadd.f32 %v4245, %v4246
      %v4248 = vsel %vm674, %v4164, 0.0
      %v4249 = vadd.f32 %v4247, %v4248
      %v4250 = vsel %vm674, %v4165, 0.0
      %v4251 = vadd.f32 %v4249, %v4250
      %v4252 = vsel %vm674, %v4166, 0.0
      %v4253 = vadd.f32 %v4251, %v4252
      %v4254 = vsel %vm674, %v4167, 0.0
      %v4255 = vadd.f32 %v4253, %v4254
      %v4256 = vsel %vm674, %v4168, 0.0
      %v4257 = vadd.f32 %v4255, %v4256
      %v4258 = vsel %vm674, %v4169, 0.0
      %v4259 = vadd.f32 %v4257, %v4258
      %v4260 = vsel %vm674, %v4170, 0.0
      %v4261 = vadd.f32 %v4259, %v4260
      %v4262 = vsel %vm674, %v4171, 0.0
      %v4263 = vadd.f32 %v4261, %v4262
      %v4264 = vsel %vm674, %v4172, 0.0
      %v4265 = vadd.f32 %v4263, %v4264
      %v4266 = vsel %vm674, %v4173, 0.0
      %v4267 = vadd.f32 %v4265, %v4266
      %v4268 = vsel %vm674, %v4174, 0.0
      %v4269 = vadd.f32 %v4267, %v4268
      %v4270 = vrot.slane %v4269, 4
      %v4271 = vadd.f32 %v4269, %v4270
      %v4272 = vrot.slane %v4271, 2
      %v4273 = vadd.f32 %v4271, %v4272
      %v4274 = vrot.slane %v4273, 1
      %v4275 = vadd.f32 %v4273, %v4274
      %v4276 = vmul.f32 %v4275, 0.00390625
      %v4277 = vld [vmem:[%s277] sm:$0x1]
      %v4278 = vld [vmem:[%s277 + $0x1] sm:$0x1]
      %v4279 = vadd.f32 %v4276, 1e-08
      %v4280 = vrsqrt.pop %v4279
      %v4281 = vmul.f32 %v4277, %v4280
      %v4282 = vlaneseq
      %v4283 = vshrl.u32 %v4282, 7
      %v4284 = vsub.s32 0, %v4283
      %v4285 = vrot.slane %v4281, %v4284
      %v4286 = vmul.f32 %v4031, %v4285
      %v4287 = vmul.f32 %v4032, %v4285
      %v4288 = vmul.f32 %v4033, %v4285
      %v4289 = vmul.f32 %v4034, %v4285
      %v4290 = vmul.f32 %v4035, %v4285
      %v4291 = vmul.f32 %v4036, %v4285
      %v4292 = vmul.f32 %v4037, %v4285
      %v4293 = vmul.f32 %v4038, %v4285
      %v4294 = vmul.f32 %v4039, %v4285
      %v4295 = vmul.f32 %v4040, %v4285
      %v4296 = vmul.f32 %v4041, %v4285
      %v4297 = vmul.f32 %v4042, %v4285
      %v4298 = vmul.f32 %v4043, %v4285
      %v4299 = vmul.f32 %v4044, %v4285
      %v4300 = vmul.f32 %v4045, %v4285
      %v4301 = vmul.f32 %v4046, %v4285
      %v4302 = vmul.f32 %v4047, %v4285
      %v4303 = vmul.f32 %v4048, %v4285
      %v4304 = vmul.f32 %v4049, %v4285
      %v4305 = vmul.f32 %v4050, %v4285
      %v4306 = vmul.f32 %v4051, %v4285
      %v4307 = vmul.f32 %v4052, %v4285
      %v4308 = vmul.f32 %v4053, %v4285
      %v4309 = vmul.f32 %v4054, %v4285
      %v4310 = vmul.f32 %v4055, %v4285
      %v4311 = vmul.f32 %v4056, %v4285
      %v4312 = vmul.f32 %v4057, %v4285
      %v4313 = vmul.f32 %v4058, %v4285
      %v4314 = vmul.f32 %v4059, %v4285
      %v4315 = vmul.f32 %v4060, %v4285
      %v4316 = vmul.f32 %v4061, %v4285
      %v4317 = vmul.f32 %v4062, %v4285
      %v4318 = vmul.f32 %v4063, %v4285
      %v4319 = vmul.f32 %v4064, %v4285
      %v4320 = vmul.f32 %v4065, %v4285
      %v4321 = vmul.f32 %v4066, %v4285
      %v4322 = vmul.f32 %v4067, %v4285
      %v4323 = vmul.f32 %v4068, %v4285
      %v4324 = vmul.f32 %v4069, %v4285
      %v4325 = vmul.f32 %v4070, %v4285
      %v4326 = vmul.f32 %v4071, %v4285
      %v4327 = vmul.f32 %v4072, %v4285
      %v4328 = vmul.f32 %v4073, %v4285
      %v4329 = vmul.f32 %v4074, %v4285
      %v4330 = vmul.f32 %v4075, %v4285
      %v4331 = vmul.f32 %v4076, %v4285
      %v4332 = vmul.f32 %v4077, %v4285
      %v4333 = vmul.f32 %v4078, %v4285
      %v4334 = vlaneseq
      %v4335 = vshrl.u32 %v4334, 7
      %v4336 = vsub.s32 0, %v4335
      %v4337 = vrot.slane %v4278, %v4336
      %v4338 = vadd.f32 %v4286, %v4337
      %v4339 = vadd.f32 %v4287, %v4337
      %v4340 = vadd.f32 %v4288, %v4337
      %v4341 = vadd.f32 %v4289, %v4337
      %v4342 = vadd.f32 %v4290, %v4337
      %v4343 = vadd.f32 %v4291, %v4337
      %v4344 = vadd.f32 %v4292, %v4337
      %v4345 = vadd.f32 %v4293, %v4337
      %v4346 = vadd.f32 %v4294, %v4337
      %v4347 = vadd.f32 %v4295, %v4337
      %v4348 = vadd.f32 %v4296, %v4337
      %v4349 = vadd.f32 %v4297, %v4337
      %v4350 = vadd.f32 %v4298, %v4337
      %v4351 = vadd.f32 %v4299, %v4337
      %v4352 = vadd.f32 %v4300, %v4337
      %v4353 = vadd.f32 %v4301, %v4337
      %v4354 = vadd.f32 %v4302, %v4337
      %v4355 = vadd.f32 %v4303, %v4337
      %v4356 = vadd.f32 %v4304, %v4337
      %v4357 = vadd.f32 %v4305, %v4337
      %v4358 = vadd.f32 %v4306, %v4337
      %v4359 = vadd.f32 %v4307, %v4337
      %v4360 = vadd.f32 %v4308, %v4337
      %v4361 = vadd.f32 %v4309, %v4337
      %v4362 = vadd.f32 %v4310, %v4337
      %v4363 = vadd.f32 %v4311, %v4337
      %v4364 = vadd.f32 %v4312, %v4337
      %v4365 = vadd.f32 %v4313, %v4337
      %v4366 = vadd.f32 %v4314, %v4337
      %v4367 = vadd.f32 %v4315, %v4337
      %v4368 = vadd.f32 %v4316, %v4337
      %v4369 = vadd.f32 %v4317, %v4337
      %v4370 = vadd.f32 %v4318, %v4337
      %v4371 = vadd.f32 %v4319, %v4337
      %v4372 = vadd.f32 %v4320, %v4337
      %v4373 = vadd.f32 %v4321, %v4337
      %v4374 = vadd.f32 %v4322, %v4337
      %v4375 = vadd.f32 %v4323, %v4337
      %v4376 = vadd.f32 %v4324, %v4337
      %v4377 = vadd.f32 %v4325, %v4337
      %v4378 = vadd.f32 %v4326, %v4337
      %v4379 = vadd.f32 %v4327, %v4337
      %v4380 = vadd.f32 %v4328, %v4337
      %v4381 = vadd.f32 %v4329, %v4337
      %v4382 = vadd.f32 %v4330, %v4337
      %v4383 = vadd.f32 %v4331, %v4337
      %v4384 = vadd.f32 %v4332, %v4337
      %v4385 = vadd.f32 %v4333, %v4337
      %v4386 = vld [vmem:[%s285] sm:$0xff]
      %v4387 = vld [vmem:[%s285 + $0x8] sm:$0xff]
      %v4388 = vld [vmem:[%s285 + $0x10] sm:$0xff]
      %v4389 = vld [vmem:[%s285 + $0x18] sm:$0xff]
      %v4390 = vld [vmem:[%s285 + $0x20] sm:$0xff]
      %v4391 = vld [vmem:[%s285 + $0x28] sm:$0xff]
      %v4392 = vld [vmem:[%s285 + $0x30] sm:$0xff]
      %v4393 = vld [vmem:[%s285 + $0x38] sm:$0xff]
      %v4394 = vld [vmem:[%s285 + $0x40] sm:$0xff]
      %v4395 = vld [vmem:[%s285 + $0x48] sm:$0xff]
      %v4396 = vld [vmem:[%s285 + $0x50] sm:$0xff]
      %v4397 = vld [vmem:[%s285 + $0x58] sm:$0xff]
      %v4398 = vld [vmem:[%s285 + $0x60] sm:$0xff]
      %v4399 = vld [vmem:[%s285 + $0x68] sm:$0xff]
      %v4400 = vld [vmem:[%s285 + $0x70] sm:$0xff]
      %v4401 = vld [vmem:[%s285 + $0x78] sm:$0xff]
      %v4402 = vld [vmem:[%s285 + $0x80] sm:$0xff]
      %v4403 = vld [vmem:[%s285 + $0x88] sm:$0xff]
      %v4404 = vld [vmem:[%s285 + $0x90] sm:$0xff]
      %v4405 = vld [vmem:[%s285 + $0x98] sm:$0xff]
      %v4406 = vld [vmem:[%s285 + $0xa0] sm:$0xff]
      %v4407 = vld [vmem:[%s285 + $0xa8] sm:$0xff]
      %v4408 = vld [vmem:[%s285 + $0xb0] sm:$0xff]
      %v4409 = vld [vmem:[%s285 + $0xb8] sm:$0xff]
      %v4410 = vld [vmem:[%s285 + $0xc0] sm:$0xff]
      %v4411 = vld [vmem:[%s285 + $0xc8] sm:$0xff]
      %v4412 = vld [vmem:[%s285 + $0xd0] sm:$0xff]
      %v4413 = vld [vmem:[%s285 + $0xd8] sm:$0xff]
      %v4414 = vld [vmem:[%s285 + $0xe0] sm:$0xff]
      %v4415 = vld [vmem:[%s285 + $0xe8] sm:$0xff]
      %v4416 = vld [vmem:[%s285 + $0xf0] sm:$0xff]
      %v4417 = vld [vmem:[%s285 + $0xf8] sm:$0xff]
      %v4418 = vld [vmem:[%s285 + $0x100] sm:$0xff]
      %v4419 = vld [vmem:[%s285 + $0x108] sm:$0xff]
      %v4420 = vld [vmem:[%s285 + $0x110] sm:$0xff]
      %v4421 = vld [vmem:[%s285 + $0x118] sm:$0xff]
      %v4422 = vld [vmem:[%s285 + $0x120] sm:$0xff]
      %v4423 = vld [vmem:[%s285 + $0x128] sm:$0xff]
      %v4424 = vld [vmem:[%s285 + $0x130] sm:$0xff]
      %v4425 = vld [vmem:[%s285 + $0x138] sm:$0xff]
      %v4426 = vld [vmem:[%s285 + $0x140] sm:$0xff]
      %v4427 = vld [vmem:[%s285 + $0x148] sm:$0xff]
      %v4428 = vld [vmem:[%s285 + $0x150] sm:$0xff]
      %v4429 = vld [vmem:[%s285 + $0x158] sm:$0xff]
      %v4430 = vld [vmem:[%s285 + $0x160] sm:$0xff]
      %v4431 = vld [vmem:[%s285 + $0x168] sm:$0xff]
      %v4432 = vld [vmem:[%s285 + $0x170] sm:$0xff]
      %v4433 = vld [vmem:[%s285 + $0x178] sm:$0xff]
      %v4434 = vadd.f32 %v4338, %v4386
      %v4435 = vadd.f32 %v4339, %v4387
      %v4436 = vadd.f32 %v4340, %v4388
      %v4437 = vadd.f32 %v4341, %v4389
      %v4438 = vadd.f32 %v4342, %v4390
      %v4439 = vadd.f32 %v4343, %v4391
      %v4440 = vadd.f32 %v4344, %v4392
      %v4441 = vadd.f32 %v4345, %v4393
      %v4442 = vadd.f32 %v4346, %v4394
      %v4443 = vadd.f32 %v4347, %v4395
      %v4444 = vadd.f32 %v4348, %v4396
      %v4445 = vadd.f32 %v4349, %v4397
      %v4446 = vadd.f32 %v4350, %v4398
      %v4447 = vadd.f32 %v4351, %v4399
      %v4448 = vadd.f32 %v4352, %v4400
      %v4449 = vadd.f32 %v4353, %v4401
      %v4450 = vadd.f32 %v4354, %v4402
      %v4451 = vadd.f32 %v4355, %v4403
      %v4452 = vadd.f32 %v4356, %v4404
      %v4453 = vadd.f32 %v4357, %v4405
      %v4454 = vadd.f32 %v4358, %v4406
      %v4455 = vadd.f32 %v4359, %v4407
      %v4456 = vadd.f32 %v4360, %v4408
      %v4457 = vadd.f32 %v4361, %v4409
      %v4458 = vadd.f32 %v4362, %v4410
      %v4459 = vadd.f32 %v4363, %v4411
      %v4460 = vadd.f32 %v4364, %v4412
      %v4461 = vadd.f32 %v4365, %v4413
      %v4462 = vadd.f32 %v4366, %v4414
      %v4463 = vadd.f32 %v4367, %v4415
      %v4464 = vadd.f32 %v4368, %v4416
      %v4465 = vadd.f32 %v4369, %v4417
      %v4466 = vadd.f32 %v4370, %v4418
      %v4467 = vadd.f32 %v4371, %v4419
      %v4468 = vadd.f32 %v4372, %v4420
      %v4469 = vadd.f32 %v4373, %v4421
      %v4470 = vadd.f32 %v4374, %v4422
      %v4471 = vadd.f32 %v4375, %v4423
      %v4472 = vadd.f32 %v4376, %v4424
      %v4473 = vadd.f32 %v4377, %v4425
      %v4474 = vadd.f32 %v4378, %v4426
      %v4475 = vadd.f32 %v4379, %v4427
      %v4476 = vadd.f32 %v4380, %v4428
      %v4477 = vadd.f32 %v4381, %v4429
      %v4478 = vadd.f32 %v4382, %v4430
      %v4479 = vadd.f32 %v4383, %v4431
      %v4480 = vadd.f32 %v4384, %v4432
      %v4481 = vadd.f32 %v4385, %v4433
      %4482 = vst.msk [vmem:[%s293] sm:$0xff] %vm674, %v4434
      %4483 = vst.msk [vmem:[%s293 + $0x8] sm:$0xff] %vm674, %v4435
      %4484 = vst.msk [vmem:[%s293 + $0x10] sm:$0xff] %vm674, %v4436
      %4485 = vst.msk [vmem:[%s293 + $0x18] sm:$0xff] %vm674, %v4437
      %4486 = vst.msk [vmem:[%s293 + $0x20] sm:$0xff] %vm674, %v4438
      %4487 = vst.msk [vmem:[%s293 + $0x28] sm:$0xff] %vm674, %v4439
      %4488 = vst.msk [vmem:[%s293 + $0x30] sm:$0xff] %vm674, %v4440
      %4489 = vst.msk [vmem:[%s293 + $0x38] sm:$0xff] %vm674, %v4441
      %4490 = vst.msk [vmem:[%s293 + $0x40] sm:$0xff] %vm674, %v4442
      %4491 = vst.msk [vmem:[%s293 + $0x48] sm:$0xff] %vm674, %v4443
      %4492 = vst.msk [vmem:[%s293 + $0x50] sm:$0xff] %vm674, %v4444
      %4493 = vst.msk [vmem:[%s293 + $0x58] sm:$0xff] %vm674, %v4445
      %4494 = vst.msk [vmem:[%s293 + $0x60] sm:$0xff] %vm674, %v4446
      %4495 = vst.msk [vmem:[%s293 + $0x68] sm:$0xff] %vm674, %v4447
      %4496 = vst.msk [vmem:[%s293 + $0x70] sm:$0xff] %vm674, %v4448
      %4497 = vst.msk [vmem:[%s293 + $0x78] sm:$0xff] %vm674, %v4449
      %4498 = vst.msk [vmem:[%s293 + $0x80] sm:$0xff] %vm674, %v4450
      %4499 = vst.msk [vmem:[%s293 + $0x88] sm:$0xff] %vm674, %v4451
      %4500 = vst.msk [vmem:[%s293 + $0x90] sm:$0xff] %vm674, %v4452
      %4501 = vst.msk [vmem:[%s293 + $0x98] sm:$0xff] %vm674, %v4453
      %4502 = vst.msk [vmem:[%s293 + $0xa0] sm:$0xff] %vm674, %v4454
      %4503 = vst.msk [vmem:[%s293 + $0xa8] sm:$0xff] %vm674, %v4455
      %4504 = vst.msk [vmem:[%s293 + $0xb0] sm:$0xff] %vm674, %v4456
      %4505 = vst.msk [vmem:[%s293 + $0xb8] sm:$0xff] %vm674, %v4457
      %4506 = vst.msk [vmem:[%s293 + $0xc0] sm:$0xff] %vm674, %v4458
      %4507 = vst.msk [vmem:[%s293 + $0xc8] sm:$0xff] %vm674, %v4459
      %4508 = vst.msk [vmem:[%s293 + $0xd0] sm:$0xff] %vm674, %v4460
      %4509 = vst.msk [vmem:[%s293 + $0xd8] sm:$0xff] %vm674, %v4461
      %4510 = vst.msk [vmem:[%s293 + $0xe0] sm:$0xff] %vm674, %v4462
      %4511 = vst.msk [vmem:[%s293 + $0xe8] sm:$0xff] %vm674, %v4463
      %4512 = vst.msk [vmem:[%s293 + $0xf0] sm:$0xff] %vm674, %v4464
      %4513 = vst.msk [vmem:[%s293 + $0xf8] sm:$0xff] %vm674, %v4465
      %4514 = vst.msk [vmem:[%s293 + $0x100] sm:$0xff] %vm674, %v4466
      %4515 = vst.msk [vmem:[%s293 + $0x108] sm:$0xff] %vm674, %v4467
      %4516 = vst.msk [vmem:[%s293 + $0x110] sm:$0xff] %vm674, %v4468
      %4517 = vst.msk [vmem:[%s293 + $0x118] sm:$0xff] %vm674, %v4469
      %4518 = vst.msk [vmem:[%s293 + $0x120] sm:$0xff] %vm674, %v4470
      %4519 = vst.msk [vmem:[%s293 + $0x128] sm:$0xff] %vm674, %v4471
      %4520 = vst.msk [vmem:[%s293 + $0x130] sm:$0xff] %vm674, %v4472
      %4521 = vst.msk [vmem:[%s293 + $0x138] sm:$0xff] %vm674, %v4473
      %4522 = vst.msk [vmem:[%s293 + $0x140] sm:$0xff] %vm674, %v4474
      %4523 = vst.msk [vmem:[%s293 + $0x148] sm:$0xff] %vm674, %v4475
      %4524 = vst.msk [vmem:[%s293 + $0x150] sm:$0xff] %vm674, %v4476
      %4525 = vst.msk [vmem:[%s293 + $0x158] sm:$0xff] %vm674, %v4477
      %4526 = vst.msk [vmem:[%s293 + $0x160] sm:$0xff] %vm674, %v4478
      %4527 = vst.msk [vmem:[%s293 + $0x168] sm:$0xff] %vm674, %v4479
      %4528 = vst.msk [vmem:[%s293 + $0x170] sm:$0xff] %vm674, %v4480
      %4529 = vst.msk [vmem:[%s293 + $0x178] sm:$0xff] %vm674, %v4481
      %p4530 = scmp.lt.s32.totalorder %s19, 1
      %s4531 = scalar_select %p4530, %s19, 1
      %p4532 = scmp.lt.s32.totalorder %s20, 0
      %s4533 = scalar_select %p4532, %s20, 0
      %s4534 = smul.addr %s4531, 48
      %s4535 = sadd.s32 %s4533, %s4534
      %s4536 = smul.addr %s4535, 8
      %s4537 = scalar_lea.vmem %s4, %s4536
      // Predicated region
      $region37: #{resnet_block_adain.3} parent=35 // pred_check
        %p4538 = pneg %p155
      $region38: #{resnet_block_adain.3} parent=35 // pred_check_branch
        %4540 = sbr.rel (%p4538) target = $region40
      $region39: #{resnet_block_adain.3} parent=35 // pred_region
        _
      $region40: #{resnet_block_adain.3} parent=35 // pred_fallthru
        _
    $region36: #{resnet_block_adain.3} parent=5 // pred_fallthru
      _
    %p4541 = scmp.le.s32.totalorder 2, %s10
    // Predicated region
    $region41: #{resnet_block_adain.3} parent=5 // pred_check
      %p4542 = pneg %p4541
    $region42: #{resnet_block_adain.3} parent=5 // pred_check_branch
      %4544 = sbr.rel (%p4542) target = $region44
    $region43: #{resnet_block_adain.3} parent=5 // pred_region
      %s4545 = ssub.s32 %s10, 2
      // Predicated region
      $region45: #{resnet_block_adain.3} parent=43 // pred_check
        %p4546 = pneg %p161
      $region46: #{resnet_block_adain.3} parent=43 // pred_check_branch
        %4548 = sbr.rel (%p4546) target = $region48
      $region47: #{resnet_block_adain.3} parent=43 // pred_region
        %p4549 = scmp.lt.s32.totalorder %s21, 1
        %s4550 = scalar_select %p4549, %s21, 1
        %p4551 = scmp.lt.s32.totalorder %s22, 0
        %s4552 = scalar_select %p4551, %s22, 0
        %s4553 = smul.addr %s4550, 48
        %s4554 = sadd.s32 %s4552, %s4553
        %s4555 = smul.addr %s4554, 8
        %s4556 = scalar_lea.vmem %s4, %s4555
      $region48: #{resnet_block_adain.3} parent=43 // pred_fallthru
        _
    $region44: #{resnet_block_adain.3} parent=5 // pred_fallthru
      _
  $region6: #{resnet_block_adain.3} parent=0 // loop_footer
    %s14 = sadd.s32 1, %s10
  $region7: #{resnet_block_adain.3} parent=0 // loop_footer_branch
    %9 = sbr.rel target = $region3
  $region8: #{resnet_block_adain.3} parent=0 // loop_exit
    _

</llo_original>
